<compile_context>
chip_gen: v7x
topology: tpu7x:2x2x1
jax: 0.10.0
libtpu: 0.0.40
codegen_flags: <defaults>
</compile_context>

<pallas_src>
import functools

import jax
import jax.numpy as jnp
from jax import lax
from jax.experimental import pallas as pl
from jax.experimental.pallas import tpu as pltpu

EPS = 1e-5
# Raise the scoped-VMEM default (16/32 MiB) while staying under v7x's 64 MiB physical VMEM.
VMEM_LIMIT_BYTES = 48 * 1024 * 1024
# Rows per grid step for the flattened (M, C) matmul stages (multiple of 8; 256-1024 is the
# sweet spot from tile-size sweeps).
DEFAULT_ROW_TILE = 256


def _compiler_params(semantics):
    return pltpu.CompilerParams(dimension_semantics=semantics,
                                vmem_limit_bytes=VMEM_LIMIT_BYTES)


def _round_up(x, m):
    return ((x + m - 1) // m) * m


def _pad_rows(a, mp):
    m = a.shape[0]
    if mp == m:
        return a
    return jnp.pad(a, ((0, mp - m), (0, 0)))


def _sum_sumsq(y):
    """Per-channel (sum, sum of squares) of a (rows, C) f32 tile -> (2, C)."""
    return jnp.concatenate([jnp.sum(y, axis=0, keepdims=True),
                            jnp.sum(y * y, axis=0, keepdims=True)], axis=0)


def _affine_from_stats(stats, gamma, beta, count):
    """Fold training-mode BN stats (sum, sumsq over N*H*W) + affine into (scale, shift)."""
    mean = stats[0] / count
    var = stats[1] / count - mean * mean          # biased batch variance (torch BN forward)
    scale = gamma * lax.rsqrt(var + EPS)
    shift = beta - mean * scale
    return jnp.stack([scale, shift], axis=0).astype(jnp.float32)   # (2, C)


# --------------------------- stage 1: conv1 (1x1) + bn1 stats ---------------------------
def _make_conv1x1_stats_kernel(tm, m_true, need_mask):
    def kernel(x_ref, w_ref, y_ref, stats_ref):
        i = pl.program_id(0)

        @pl.when(i == 0)
        def _init():
            stats_ref[...] = jnp.zeros_like(stats_ref)

        # bf16 operands -> f32 MXU accumulation.
        y = jnp.dot(x_ref[...].astype(jnp.bfloat16), w_ref[...],
                    preferred_element_type=jnp.float32)
        y_ref[...] = y
        if need_mask:  # mask zero-padded rows out of the BN statistics
            rows = i * tm + lax.broadcasted_iota(jnp.int32, (tm, 1), 0)
            y = jnp.where(rows < m_true, y, 0.0)
        stats_ref[...] += _sum_sumsq(y)

    return kernel


# ------------------- stage 2: bn1+relu -> conv2 (3x3, pad=1, stride) + bn2 stats ---------
def _make_conv3x3_kernel(H, W, Cmid, stride):
    Ho = (H - 1) // stride + 1
    Wo = (W - 1) // stride + 1

    def kernel(y1_ref, s1_ref, w2_ref, y2_ref, stats_ref, pad_ref, acc_ref):
        n = pl.program_id(0)

        @pl.when(n == 0)
        def _init():
            stats_ref[...] = jnp.zeros_like(stats_ref)
            # Zero the padded scratch once; only the interior is overwritten per step, so
            # the 1-pixel zero border persists across the (sequential) grid.
            pad_ref[...] = jnp.zeros_like(pad_ref)

        # bn1 affine (precomputed scale/shift) + relu, written straight into the interior
        # of the persistent padded VMEM scratch (no full-tensor .at[].set copy).
        y1n = jnp.maximum(y1_ref[0] * s1_ref[0, :] + s1_ref[1, :], 0.0)
        pad_ref[1:H + 1, 1:W + 1, :] = y1n

        # 3x3 conv as 9 shifted (Ho*Wo, Cmid) @ (Cmid, Cmid) matmuls accumulated into a
        # VMEM scratch accumulator (bounds live ranges; no 9 carried temporaries).
        acc_ref[...] = jnp.zeros_like(acc_ref)
        if stride == 1:
            for dy in range(3):
                for dx in range(3):
                    win = pad_ref[dy:dy + Ho, dx:dx + Wo, :]
                    acc_ref[...] += jnp.dot(
                        win.reshape(Ho * Wo, Cmid).astype(jnp.bfloat16),
                        w2_ref[dy, dx], preferred_element_type=jnp.float32)
        else:
            # TODO(synk): stride>1 taps use value-level strided slices (in-core relayout)
            # rather than strided DMA-level indexing.
            padv = pad_ref[...]
            for dy in range(3):
                for dx in range(3):
                    win = lax.slice(padv, (dy, dx, 0),
                                    (dy + (Ho - 1) * stride + 1,
                                     dx + (Wo - 1) * stride + 1, Cmid),
                                    (stride, stride, 1))
                    acc_ref[...] += jnp.dot(
                        win.reshape(Ho * Wo, Cmid).astype(jnp.bfloat16),
                        w2_ref[dy, dx], preferred_element_type=jnp.float32)

        y2 = acc_ref[...]
        y2_ref[0] = y2.reshape(Ho, Wo, Cmid)
        stats_ref[...] += _sum_sumsq(y2)

    return kernel, Ho, Wo


# ---------- stage 3: bn2+relu -> conv3 (1x1) + bn3 stats (+ downsample conv + its stats) --
def _make_stage3_kernel(tm, m_true, need_mask, has_ds):
    def kernel(*refs):
        if has_ds:
            (y2_ref, s2_ref, w3_ref, xs_ref, wd_ref,
             y3_ref, st3_ref, r_ref, std_ref) = refs
        else:
            y2_ref, s2_ref, w3_ref, y3_ref, st3_ref = refs

        i = pl.program_id(0)

        @pl.when(i == 0)
        def _init():
            st3_ref[...] = jnp.zeros_like(st3_ref)
            if has_ds:
                std_ref[...] = jnp.zeros_like(std_ref)

        y2n = jnp.maximum(y2_ref[...] * s2_ref[0, :] + s2_ref[1, :], 0.0)
        y3 = jnp.dot(y2n.astype(jnp.bfloat16), w3_ref[...],
                     preferred_element_type=jnp.float32)
        y3_ref[...] = y3

        if has_ds:
            r = jnp.dot(xs_ref[...].astype(jnp.bfloat16), wd_ref[...],
                        preferred_element_type=jnp.float32)
            r_ref[...] = r

        if need_mask:  # zero-padded rows acquire bn2's shift after the affine -> mask stats
            rows = i * tm + lax.broadcasted_iota(jnp.int32, (tm, 1), 0)
            valid = rows < m_true
            y3 = jnp.where(valid, y3, 0.0)
            if has_ds:
                r = jnp.where(valid, r, 0.0)
        st3_ref[...] += _sum_sumsq(y3)
        if has_ds:
            std_ref[...] += _sum_sumsq(r)

    return kernel


# --------------------------- stage 4: bn3 + residual add + relu --------------------------
def _make_final_kernel(has_ds):
    if has_ds:
        def kernel(y3_ref, s3_ref, r_ref, sd_ref, o_ref):
            y3n = y3_ref[...] * s3_ref[0, :] + s3_ref[1, :]
            r = r_ref[...] * sd_ref[0, :] + sd_ref[1, :]
            o_ref[...] = jnp.maximum(y3n + r, 0.0)
    else:
        def kernel(y3_ref, s3_ref, r_ref, o_ref):
            y3n = y3_ref[...] * s3_ref[0, :] + s3_ref[1, :]
            o_ref[...] = jnp.maximum(y3n + r_ref[...], 0.0)
    return kernel


# ------------------------------------- wrapper -------------------------------------------
@functools.partial(jax.jit, static_argnames=("stride", "row_tile"))
def bottleneck_forward(x_nhwc, params, stride=1, row_tile=DEFAULT_ROW_TILE):
    f32, bf16 = jnp.float32, jnp.bfloat16
    N, H, W, Cin = x_nhwc.shape
    Cmid = params["w1"].shape[1]
    Cout = 4 * Cmid
    has_ds = "wd" in params
    Ho = (H - 1) // stride + 1
    Wo = (W - 1) // stride + 1
    M1 = N * H * W
    M2 = N * Ho * Wo

    # Pre-cast weights once to bf16 (halves weight DMA, feeds the MXU's fast path).
    w1 = params["w1"].astype(bf16)
    w2 = params["w2"].astype(bf16)
    w3 = params["w3"].astype(bf16)

    # -------- stage 1: conv1 + bn1 stats (grid tiled over M1 rows, "arbitrary") --------
    tm1 = min(row_tile, M1)
    M1p = _round_up(M1, tm1)
    x_flat = _pad_rows(x_nhwc.reshape(M1, Cin).astype(f32), M1p)
    k1 = _make_conv1x1_stats_kernel(tm1, M1, need_mask=False)  # zero pad rows -> zero output
    y1_raw, stats1 = pl.pallas_call(
        k1,
        grid=(M1p // tm1,),
        in_specs=[pl.BlockSpec((tm1, Cin), lambda i: (i, 0)),
                  pl.BlockSpec((Cin, Cmid), lambda i: (0, 0))],
        out_specs=[pl.BlockSpec((tm1, Cmid), lambda i: (i, 0)),
                   pl.BlockSpec((2, Cmid), lambda i: (0, 0))],
        out_shape=(jax.ShapeDtypeStruct((M1p, Cmid), f32),
                   jax.ShapeDtypeStruct((2, Cmid), f32)),
        compiler_params=_compiler_params(("arbitrary",)),
    )(x_flat, w1)
    ss1 = _affine_from_stats(stats1, params["g1"], params["b1"], M1)

    # -------- stage 2: bn1+relu -> 3x3 conv + bn2 stats (grid over batch N) --------
    y1_sp = y1_raw[:M1].reshape(N, H, W, Cmid)
    k2, _, _ = _make_conv3x3_kernel(H, W, Cmid, stride)
    y2_raw, stats2 = pl.pallas_call(
        k2,
        grid=(N,),
        in_specs=[pl.BlockSpec((1, H, W, Cmid), lambda n: (n, 0, 0, 0)),
                  pl.BlockSpec((2, Cmid), lambda n: (0, 0)),
                  pl.BlockSpec((3, 3, Cmid, Cmid), lambda n: (0, 0, 0, 0))],
        out_specs=[pl.BlockSpec((1, Ho, Wo, Cmid), lambda n: (n, 0, 0, 0)),
                   pl.BlockSpec((2, Cmid), lambda n: (0, 0))],
        out_shape=(jax.ShapeDtypeStruct((N, Ho, Wo, Cmid), f32),
                   jax.ShapeDtypeStruct((2, Cmid), f32)),
        scratch_shapes=[pltpu.VMEM((H + 2, W + 2, Cmid), f32),   # persistent zero-padded y1
                        pltpu.VMEM((Ho * Wo, Cmid), f32)],       # 9-tap accumulator
        compiler_params=_compiler_params(("arbitrary",)),
    )(y1_sp, ss1, w2)
    ss2 = _affine_from_stats(stats2, params["g2"], params["b2"], M2)

    # -------- stage 3: bn2+relu -> conv3 (+ downsample conv) + stats (grid over M2 rows) --
    tm2 = min(row_tile, M2)
    M2p = _round_up(M2, tm2)
    need_mask = (M2p != M2)
    y2_flat = _pad_rows(y2_raw.reshape(M2, Cmid), M2p)
    k3 = _make_stage3_kernel(tm2, M2, need_mask, has_ds)

    in_specs3 = [pl.BlockSpec((tm2, Cmid), lambda i: (i, 0)),
                 pl.BlockSpec((2, Cmid), lambda i: (0, 0)),
                 pl.BlockSpec((Cmid, Cout), lambda i: (0, 0))]
    args3 = [y2_flat, ss2, w3]
    out_specs3 = [pl.BlockSpec((tm2, Cout), lambda i: (i, 0)),
                  pl.BlockSpec((2, Cout), lambda i: (0, 0))]
    out_shape3 = [jax.ShapeDtypeStruct((M2p, Cout), f32),
                  jax.ShapeDtypeStruct((2, Cout), f32)]
    if has_ds:
        # Fold the 1x1-downsample stride into a wrapper-side subsample (no in-kernel
        # strided slicing along sublane dims).
        xs_flat = _pad_rows(
            x_nhwc[:, ::stride, ::stride, :].reshape(M2, Cin).astype(f32), M2p)
        wd = params["wd"].astype(bf16)
        in_specs3 += [pl.BlockSpec((tm2, Cin), lambda i: (i, 0)),
                      pl.BlockSpec((Cin, Cout), lambda i: (0, 0))]
        args3 += [xs_flat, wd]
        out_specs3 += [pl.BlockSpec((tm2, Cout), lambda i: (i, 0)),
                       pl.BlockSpec((2, Cout), lambda i: (0, 0))]
        out_shape3 += [jax.ShapeDtypeStruct((M2p, Cout), f32),
                       jax.ShapeDtypeStruct((2, Cout), f32)]

    outs3 = pl.pallas_call(
        k3,
        grid=(M2p // tm2,),
        in_specs=in_specs3,
        out_specs=out_specs3,
        out_shape=tuple(out_shape3),
        compiler_params=_compiler_params(("arbitrary",)),
    )(*args3)
    if has_ds:
        y3_raw, stats3, r_raw, statsd = outs3
    else:
        y3_raw, stats3 = outs3
    ss3 = _affine_from_stats(stats3, params["g3"], params["b3"], M2)

    # -------- stage 4: bn3 + residual + relu (pure VPU, "parallel" grid) --------
    k4 = _make_final_kernel(has_ds)
    in_specs4 = [pl.BlockSpec((tm2, Cout), lambda i: (i, 0)),
                 pl.BlockSpec((2, Cout), lambda i: (0, 0))]
    args4 = [y3_raw, ss3]
    if has_ds:
        ssd = _affine_from_stats(statsd, params["gd"], params["bd"], M2)
        in_specs4 += [pl.BlockSpec((tm2, Cout), lambda i: (i, 0)),
                      pl.BlockSpec((2, Cout), lambda i: (0, 0))]
        args4 += [r_raw, ssd]
    else:
        # Identity residual (Cin == Cout, stride == 1).
        x_id = _pad_rows(x_nhwc.reshape(M2, Cout).astype(f32), M2p)
        in_specs4 += [pl.BlockSpec((tm2, Cout), lambda i: (i, 0))]
        args4 += [x_id]

    out_flat = pl.pallas_call(
        k4,
        grid=(M2p // tm2,),
        in_specs=in_specs4,
        out_specs=pl.BlockSpec((tm2, Cout), lambda i: (i, 0)),
        out_shape=jax.ShapeDtypeStruct((M2p, Cout), f32),
        compiler_params=_compiler_params(("parallel",)),
    )(*args4)

    return out_flat[:M2].reshape(N, Ho, Wo, Cout)


# ----------------------------- plain-JAX reference -----------------------------
def reference_forward(x_nhwc, params, stride):
    def bn(xn, g, b):
        mean = jnp.mean(xn, axis=(0, 1, 2), keepdims=True)
        var = jnp.mean(jnp.square(xn - mean), axis=(0, 1, 2), keepdims=True)
        return ((xn - mean) * lax.rsqrt(var + EPS)
                * g.reshape(1, 1, 1, -1) + b.reshape(1, 1, 1, -1))

    def conv(xn, w_hwio, s, pad):
        return lax.conv_general_dilated(
            xn, w_hwio, (s, s), pad,
            dimension_numbers=("NHWC", "HWIO", "NHWC"),
            precision=lax.Precision.HIGHEST)

    Cin = x_nhwc.shape[-1]
    Cmid = params["w1"].shape[1]
    Cout = 4 * Cmid
    y = conv(x_nhwc, params["w1"].reshape(1, 1, Cin, Cmid), 1, "VALID")
    y = jax.nn.relu(bn(y, params["g1"], params["b1"]))
    y = conv(y, params["w2"], stride, [(1, 1), (1, 1)])
    y = jax.nn.relu(bn(y, params["g2"], params["b2"]))
    y = conv(y, params["w3"].reshape(1, 1, Cmid, Cout), 1, "VALID")
    y = bn(y, params["g3"], params["b3"])
    if "wd" in params:
        r = conv(x_nhwc, params["wd"].reshape(1, 1, Cin, Cout), stride, "VALID")
        r = bn(r, params["gd"], params["bd"])
    else:
        r = x_nhwc
    return jax.nn.relu(y + r)


def make_params(key, cin, cmid, stride):
    cout = 4 * cmid
    ks = jax.random.split(key, 12)

    def nrm(k, shape, scale=0.1):
        return (scale * jax.random.normal(k, shape)).astype(jnp.float32)

    p = {
        "w1": nrm(ks[0], (cin, cmid)),
        "g1": 1.0 + nrm(ks[1], (cmid,)),
        "b1": nrm(ks[2], (cmid,)),
        "w2": nrm(ks[3], (3, 3, cmid, cmid)),
        "g2": 1.0 + nrm(ks[4], (cmid,)),
        "b2": nrm(ks[5], (cmid,)),
        "w3": nrm(ks[6], (cmid, cout)),
        "g3": 1.0 + nrm(ks[7], (cout,)),
        "b3": nrm(ks[8], (cout,)),
    }
    if cin != cout or stride != 1:
        p["wd"] = nrm(ks[9], (cin, cout))
        p["gd"] = 1.0 + nrm(ks[10], (cout,))
        p["bd"] = nrm(ks[11], (cout,))
    return p


if __name__ == "__main__":
    key = jax.random.PRNGKey(0)
    # (N, Cin, Cmid, H, W, stride)  -> Cout = 4 * Cmid
    configs = [
        (2, 4, 4, 16, 16, 1),    # BottleneckBlock(4, 4): projection (downsample) residual
        (2, 16, 4, 16, 16, 1),   # BottleneckBlock(16, 4): identity residual
    ]
    for idx, (N, Cin, Cmid, H, W, stride) in enumerate(configs):
        kp, kx = jax.random.split(jax.random.fold_in(key, idx))
        params = make_params(kp, Cin, Cmid, stride)

        x_nchw = jax.random.normal(kx, (N, Cin, H, W), dtype=jnp.float32)  # PyTorch layout
        x_nhwc = jnp.transpose(x_nchw, (0, 2, 3, 1))                       # kernel layout

        out = bottleneck_forward(x_nhwc, params, stride=stride)
        out = jax.block_until_ready(out)

        ref = reference_forward(x_nhwc, params, stride)
        Ho = (H - 1) // stride + 1
        Wo = (W - 1) // stride + 1
        assert out.shape == ref.shape == (N, Ho, Wo, 4 * Cmid)
        # Normalized error metric: tolerant of bf16 MXU operands, tight enough to catch
        # real bugs (which produce O(1) errors).
        err = float(jnp.max(jnp.abs(out - ref) / (1.0 + jnp.abs(ref))))
        assert err < 5e-2, f"config {idx}: normalized max abs err too large: {err}"
    print("KERNEL_OK")
</pallas_src>

<mosaic_0001>
module attributes {stable_mosaic.version = 11 : i64} {
  func.func @kernel(%arg0: i32, %arg1: memref<256x4xf32, #tpu.memory_space<vmem>>, %arg2: memref<4x4xbf16, #tpu.memory_space<vmem>>, %arg3: memref<256x4xf32, #tpu.memory_space<vmem>>, %arg4: memref<2x4xf32, #tpu.memory_space<vmem>>) attributes {dimension_semantics = [#tpu.dimension_semantics<arbitrary>], iteration_bounds = array<i64: 2>, scalar_prefetch = 0 : i64, scratch_operands = 0 : i64, tpu.core_type = #tpu.core_type<tc>, window_params = [{transform_indices = @transform_0, window_bounds = array<i64: 256, 4>}, {pipeline_mode = #tpu.pipeline_mode<synchronous>, transform_indices = @transform_1, window_bounds = array<i64: 4, 4>}, {transform_indices = @transform_2, window_bounds = array<i64: 256, 4>}, {pipeline_mode = #tpu.pipeline_mode<synchronous>, transform_indices = @transform_3, window_bounds = array<i64: 2, 4>}]} {
    %c0_i32 = arith.constant 0 : i32
    %0 = arith.cmpi eq, %arg0, %c0_i32 : i32
    %1 = arith.extui %0 : i1 to i32
    %c0_i32_0 = arith.constant 0 : i32
    %2 = arith.cmpi ne, %1, %c0_i32_0 : i32
    scf.if %2 {
      %cst_12 = arith.constant 0.000000e+00 : f32
      %17 = vector.broadcast %cst_12 : f32 to vector<2x4xf32>
      %c0_13 = arith.constant 0 : index
      %c0_14 = arith.constant 0 : index
      %18 = vector.load %arg4[%c0_13, %c0_14] : memref<2x4xf32, #tpu.memory_space<vmem>>, vector<2x4xf32>
      tpu.vector_store %arg4[%c0_13, %c0_14], %17 {strides = array<i32>} : memref<2x4xf32, #tpu.memory_space<vmem>>, vector<2x4xf32>,
    } else {
    }
    %c0 = arith.constant 0 : index
    %c0_1 = arith.constant 0 : index
    %3 = vector.load %arg1[%c0, %c0_1] : memref<256x4xf32, #tpu.memory_space<vmem>>, vector<256x4xf32>
    %4 = arith.truncf %3 : vector<256x4xf32> to vector<256x4xbf16>
    %c0_2 = arith.constant 0 : index
    %c0_3 = arith.constant 0 : index
    %5 = vector.load %arg2[%c0_2, %c0_3] : memref<4x4xbf16, #tpu.memory_space<vmem>>, vector<4x4xbf16>
    %cst = arith.constant dense<0.000000e+00> : vector<256x4xf32>
    %6 = tpu.matmul %4, %5, %cst {dimension_numbers = #tpu.dot_dimension_numbers<[1], [0], [0], [1], [0, 0, 1, 1], [], []>} : vector<256x4xbf16>, vector<4x4xbf16>, vector<256x4xf32> -> vector<256x4xf32>
    %c0_4 = arith.constant 0 : index
    %c0_5 = arith.constant 0 : index
    %7 = vector.load %arg3[%c0_4, %c0_5] : memref<256x4xf32, #tpu.memory_space<vmem>>, vector<256x4xf32>
    tpu.vector_store %arg3[%c0_4, %c0_5], %6 {strides = array<i32>} : memref<256x4xf32, #tpu.memory_space<vmem>>, vector<256x4xf32>,
    %c0_6 = arith.constant 0 : index
    %c0_7 = arith.constant 0 : index
    %8 = vector.load %arg4[%c0_6, %c0_7] : memref<2x4xf32, #tpu.memory_space<vmem>>, vector<2x4xf32>
    %cst_8 = arith.constant dense<0.000000e+00> : vector<4xf32>
    %9 = vector.multi_reduction <add>, %6, %cst_8 [0] : vector<256x4xf32> to vector<4xf32>
    %10 = vector.shape_cast %9 : vector<4xf32> to vector<1x4xf32>
    %11 = arith.mulf %6, %6 : vector<256x4xf32>
    %cst_9 = arith.constant dense<0.000000e+00> : vector<4xf32>
    %12 = vector.multi_reduction <add>, %11, %cst_9 [0] : vector<256x4xf32> to vector<4xf32>
    %13 = vector.shape_cast %12 : vector<4xf32> to vector<1x4xf32>
    %14 = tpu.concatenate %10, %13 in 0 : vector<1x4xf32>, vector<1x4xf32> -> vector<2x4xf32>
    %15 = arith.addf %8, %14 : vector<2x4xf32>
    %c0_10 = arith.constant 0 : index
    %c0_11 = arith.constant 0 : index
    %16 = vector.load %arg4[%c0_10, %c0_11] : memref<2x4xf32, #tpu.memory_space<vmem>>, vector<2x4xf32>
    tpu.vector_store %arg4[%c0_10, %c0_11], %15 {strides = array<i32>} : memref<2x4xf32, #tpu.memory_space<vmem>>, vector<2x4xf32>,
    return
  }
  func.func @transform_0(%arg0: i32) -> (i32, i32) {
    %c0_i32 = arith.constant 0 : i32
    %c0_i32_0 = arith.constant 0 : i32
    return %arg0, %c0_i32 : i32, i32
  }
  func.func @transform_1(%arg0: i32) -> (i32, i32) {
    %c0_i32 = arith.constant 0 : i32
    %c0_i32_0 = arith.constant 0 : i32
    %c0_i32_1 = arith.constant 0 : i32
    return %c0_i32, %c0_i32_0 : i32, i32
  }
  func.func @transform_2(%arg0: i32) -> (i32, i32) {
    %c0_i32 = arith.constant 0 : i32
    %c0_i32_0 = arith.constant 0 : i32
    return %arg0, %c0_i32 : i32, i32
  }
  func.func @transform_3(%arg0: i32) -> (i32, i32) {
    %c0_i32 = arith.constant 0 : i32
    %c0_i32_0 = arith.constant 0 : i32
    %c0_i32_1 = arith.constant 0 : i32
    return %c0_i32, %c0_i32_0 : i32, i32
  }
}

module attributes {stable_mosaic.version = 11 : i64} {
  func.func @kernel(%arg0: i32, %arg1: memref<256x4xf32, #tpu.memory_space<vmem>>, %arg2: memref<2x4xf32, #tpu.memory_space<vmem>>, %arg3: memref<4x16xbf16, #tpu.memory_space<vmem>>, %arg4: memref<256x4xf32, #tpu.memory_space<vmem>>, %arg5: memref<4x16xbf16, #tpu.memory_space<vmem>>, %arg6: memref<256x16xf32, #tpu.memory_space<vmem>>, %arg7: memref<2x16xf32, #tpu.memory_space<vmem>>, %arg8: memref<256x16xf32, #tpu.memory_space<vmem>>, %arg9: memref<2x16xf32, #tpu.memory_space<vmem>>) attributes {dimension_semantics = [#tpu.dimension_semantics<arbitrary>], iteration_bounds = array<i64: 2>, scalar_prefetch = 0 : i64, scratch_operands = 0 : i64, tpu.core_type = #tpu.core_type<tc>, window_params = [{transform_indices = @transform_0, window_bounds = array<i64: 256, 4>}, {pipeline_mode = #tpu.pipeline_mode<synchronous>, transform_indices = @transform_1, window_bounds = array<i64: 2, 4>}, {pipeline_mode = #tpu.pipeline_mode<synchronous>, transform_indices = @transform_2, window_bounds = array<i64: 4, 16>}, {transform_indices = @transform_3, window_bounds = array<i64: 256, 4>}, {pipeline_mode = #tpu.pipeline_mode<synchronous>, transform_indices = @transform_4, window_bounds = array<i64: 4, 16>}, {transform_indices = @transform_5, window_bounds = array<i64: 256, 16>}, {pipeline_mode = #tpu.pipeline_mode<synchronous>, transform_indices = @transform_6, window_bounds = array<i64: 2, 16>}, {transform_indices = @transform_7, window_bounds = array<i64: 256, 16>}, {pipeline_mode = #tpu.pipeline_mode<synchronous>, transform_indices = @transform_8, window_bounds = array<i64: 2, 16>}]} {
    %c0_i32 = arith.constant 0 : i32
    %0 = arith.cmpi eq, %arg0, %c0_i32 : i32
    %1 = arith.extui %0 : i1 to i32
    %c0_i32_0 = arith.constant 0 : i32
    %2 = arith.cmpi ne, %1, %c0_i32_0 : i32
    scf.if %2 {
      %cst_29 = arith.constant 0.000000e+00 : f32
      %43 = vector.broadcast %cst_29 : f32 to vector<2x16xf32>
      %c0_30 = arith.constant 0 : index
      %c0_31 = arith.constant 0 : index
      %44 = vector.load %arg7[%c0_30, %c0_31] : memref<2x16xf32, #tpu.memory_space<vmem>>, vector<2x16xf32>
      tpu.vector_store %arg7[%c0_30, %c0_31], %43 {strides = array<i32>} : memref<2x16xf32, #tpu.memory_space<vmem>>, vector<2x16xf32>,
      %cst_32 = arith.constant 0.000000e+00 : f32
      %45 = vector.broadcast %cst_32 : f32 to vector<2x16xf32>
      %c0_33 = arith.constant 0 : index
      %c0_34 = arith.constant 0 : index
      %46 = vector.load %arg9[%c0_33, %c0_34] : memref<2x16xf32, #tpu.memory_space<vmem>>, vector<2x16xf32>
      tpu.vector_store %arg9[%c0_33, %c0_34], %45 {strides = array<i32>} : memref<2x16xf32, #tpu.memory_space<vmem>>, vector<2x16xf32>,
    } else {
    }
    %c0 = arith.constant 0 : index
    %c0_1 = arith.constant 0 : index
    %3 = vector.load %arg1[%c0, %c0_1] : memref<256x4xf32, #tpu.memory_space<vmem>>, vector<256x4xf32>
    %c0_2 = arith.constant 0 : index
    %c0_3 = arith.constant 0 : index
    %4 = vector.load %arg2[%c0_2, %c0_3] : memref<2x4xf32, #tpu.memory_space<vmem>>, vector<1x4xf32>
    %5 = vector.shape_cast %4 : vector<1x4xf32> to vector<4xf32>
    %6 = vector.shape_cast %5 : vector<4xf32> to vector<1x4xf32>
    %7 = vector.broadcast %6 : vector<1x4xf32> to vector<256x4xf32>
    %8 = arith.mulf %3, %7 : vector<256x4xf32>
    %c1 = arith.constant 1 : index
    %c0_4 = arith.constant 0 : index
    %9 = vector.load %arg2[%c1, %c0_4] : memref<2x4xf32, #tpu.memory_space<vmem>>, vector<1x4xf32>
    %10 = vector.shape_cast %9 : vector<1x4xf32> to vector<4xf32>
    %11 = vector.shape_cast %10 : vector<4xf32> to vector<1x4xf32>
    %12 = vector.broadcast %11 : vector<1x4xf32> to vector<256x4xf32>
    %13 = arith.addf %8, %12 : vector<256x4xf32>
    %cst = arith.constant 0.000000e+00 : f32
    %14 = vector.broadcast %cst : f32 to vector<256x4xf32>
    %15 = arith.maximumf %13, %14 : vector<256x4xf32>
    %16 = arith.truncf %15 : vector<256x4xf32> to vector<256x4xbf16>
    %c0_5 = arith.constant 0 : index
    %c0_6 = arith.constant 0 : index
    %17 = vector.load %arg3[%c0_5, %c0_6] : memref<4x16xbf16, #tpu.memory_space<vmem>>, vector<4x16xbf16>
    %cst_7 = arith.constant dense<0.000000e+00> : vector<256x16xf32>
    %18 = tpu.matmul %16, %17, %cst_7 {dimension_numbers = #tpu.dot_dimension_numbers<[1], [0], [0], [1], [0, 0, 1, 1], [], []>} : vector<256x4xbf16>, vector<4x16xbf16>, vector<256x16xf32> -> vector<256x16xf32>
    %c0_8 = arith.constant 0 : index
    %c0_9 = arith.constant 0 : index
    %19 = vector.load %arg6[%c0_8, %c0_9] : memref<256x16xf32, #tpu.memory_space<vmem>>, vector<256x16xf32>
    tpu.vector_store %arg6[%c0_8, %c0_9], %18 {strides = array<i32>} : memref<256x16xf32, #tpu.memory_space<vmem>>, vector<256x16xf32>,
    %c0_10 = arith.constant 0 : index
    %c0_11 = arith.constant 0 : index
    %20 = vector.load %arg4[%c0_10, %c0_11] : memref<256x4xf32, #tpu.memory_space<vmem>>, vector<256x4xf32>
    %21 = arith.truncf %20 : vector<256x4xf32> to vector<256x4xbf16>
    %c0_12 = arith.constant 0 : index
    %c0_13 = arith.constant 0 : index
    %22 = vector.load %arg5[%c0_12, %c0_13] : memref<4x16xbf16, #tpu.memory_space<vmem>>, vector<4x16xbf16>
    %cst_14 = arith.constant dense<0.000000e+00> : vector<256x16xf32>
    %23 = tpu.matmul %21, %22, %cst_14 {dimension_numbers = #tpu.dot_dimension_numbers<[1], [0], [0], [1], [0, 0, 1, 1], [], []>} : vector<256x4xbf16>, vector<4x16xbf16>, vector<256x16xf32> -> vector<256x16xf32>
    %c0_15 = arith.constant 0 : index
    %c0_16 = arith.constant 0 : index
    %24 = vector.load %arg8[%c0_15, %c0_16] : memref<256x16xf32, #tpu.memory_space<vmem>>, vector<256x16xf32>
    tpu.vector_store %arg8[%c0_15, %c0_16], %23 {strides = array<i32>} : memref<256x16xf32, #tpu.memory_space<vmem>>, vector<256x16xf32>,
    %c0_17 = arith.constant 0 : index
    %c0_18 = arith.constant 0 : index
    %25 = vector.load %arg7[%c0_17, %c0_18] : memref<2x16xf32, #tpu.memory_space<vmem>>, vector<2x16xf32>
    %cst_19 = arith.constant dense<0.000000e+00> : vector<16xf32>
    %26 = vector.multi_reduction <add>, %18, %cst_19 [0] : vector<256x16xf32> to vector<16xf32>
    %27 = vector.shape_cast %26 : vector<16xf32> to vector<1x16xf32>
    %28 = arith.mulf %18, %18 : vector<256x16xf32>
    %cst_20 = arith.constant dense<0.000000e+00> : vector<16xf32>
    %29 = vector.multi_reduction <add>, %28, %cst_20 [0] : vector<256x16xf32> to vector<16xf32>
    %30 = vector.shape_cast %29 : vector<16xf32> to vector<1x16xf32>
    %31 = tpu.concatenate %27, %30 in 0 : vector<1x16xf32>, vector<1x16xf32> -> vector<2x16xf32>
    %32 = arith.addf %25, %31 : vector<2x16xf32>
    %c0_21 = arith.constant 0 : index
    %c0_22 = arith.constant 0 : index
    %33 = vector.load %arg7[%c0_21, %c0_22] : memref<2x16xf32, #tpu.memory_space<vmem>>, vector<2x16xf32>
    tpu.vector_store %arg7[%c0_21, %c0_22], %32 {strides = array<i32>} : memref<2x16xf32, #tpu.memory_space<vmem>>, vector<2x16xf32>,
    %c0_23 = arith.constant 0 : index
    %c0_24 = arith.constant 0 : index
    %34 = vector.load %arg9[%c0_23, %c0_24] : memref<2x16xf32, #tpu.memory_space<vmem>>, vector<2x16xf32>
    %cst_25 = arith.constant dense<0.000000e+00> : vector<16xf32>
    %35 = vector.multi_reduction <add>, %23, %cst_25 [0] : vector<256x16xf32> to vector<16xf32>
    %36 = vector.shape_cast %35 : vector<16xf32> to vector<1x16xf32>
    %37 = arith.mulf %23, %23 : vector<256x16xf32>
    %cst_26 = arith.constant dense<0.000000e+00> : vector<16xf32>
    %38 = vector.multi_reduction <add>, %37, %cst_26 [0] : vector<256x16xf32> to vector<16xf32>
    %39 = vector.shape_cast %38 : vector<16xf32> to vector<1x16xf32>
    %40 = tpu.concatenate %36, %39 in 0 : vector<1x16xf32>, vector<1x16xf32> -> vector<2x16xf32>
    %41 = arith.addf %34, %40 : vector<2x16xf32>
    %c0_27 = arith.constant 0 : index
    %c0_28 = arith.constant 0 : index
    %42 = vector.load %arg9[%c0_27, %c0_28] : memref<2x16xf32, #tpu.memory_space<vmem>>, vector<2x16xf32>
    tpu.vector_store %arg9[%c0_27, %c0_28], %41 {strides = array<i32>} : memref<2x16xf32, #tpu.memory_space<vmem>>, vector<2x16xf32>,
    return
  }
  func.func @transform_0(%arg0: i32) -> (i32, i32) {
    %c0_i32 = arith.constant 0 : i32
    %c0_i32_0 = arith.constant 0 : i32
    return %arg0, %c0_i32 : i32, i32
  }
  func.func @transform_1(%arg0: i32) -> (i32, i32) {
    %c0_i32 = arith.constant 0 : i32
    %c0_i32_0 = arith.constant 0 : i32
    %c0_i32_1 = arith.constant 0 : i32
    return %c0_i32, %c0_i32_0 : i32, i32
  }
  func.func @transform_2(%arg0: i32) -> (i32, i32) {
    %c0_i32 = arith.constant 0 : i32
    %c0_i32_0 = arith.constant 0 : i32
    %c0_i32_1 = arith.constant 0 : i32
    return %c0_i32, %c0_i32_0 : i32, i32
  }
  func.func @transform_3(%arg0: i32) -> (i32, i32) {
    %c0_i32 = arith.constant 0 : i32
    %c0_i32_0 = arith.constant 0 : i32
    return %arg0, %c0_i32 : i32, i32
  }
  func.func @transform_4(%arg0: i32) -> (i32, i32) {
    %c0_i32 = arith.constant 0 : i32
    %c0_i32_0 = arith.constant 0 : i32
    %c0_i32_1 = arith.constant 0 : i32
    return %c0_i32, %c0_i32_0 : i32, i32
  }
  func.func @transform_5(%arg0: i32) -> (i32, i32) {
    %c0_i32 = arith.constant 0 : i32
    %c0_i32_0 = arith.constant 0 : i32
    return %arg0, %c0_i32 : i32, i32
  }
  func.func @transform_6(%arg0: i32) -> (i32, i32) {
    %c0_i32 = arith.constant 0 : i32
    %c0_i32_0 = arith.constant 0 : i32
    %c0_i32_1 = arith.constant 0 : i32
    return %c0_i32, %c0_i32_0 : i32, i32
  }
  func.func @transform_7(%arg0: i32) -> (i32, i32) {
    %c0_i32 = arith.constant 0 : i32
    %c0_i32_0 = arith.constant 0 : i32
    return %arg0, %c0_i32 : i32, i32
  }
  func.func @transform_8(%arg0: i32) -> (i32, i32) {
    %c0_i32 = arith.constant 0 : i32
    %c0_i32_0 = arith.constant 0 : i32
    %c0_i32_1 = arith.constant 0 : i32
    return %c0_i32, %c0_i32_0 : i32, i32
  }
}

module attributes {stable_mosaic.version = 11 : i64} {
  func.func @kernel(%arg0: i32, %arg1: memref<1x16x16x4xf32, #tpu.memory_space<vmem>>, %arg2: memref<2x4xf32, #tpu.memory_space<vmem>>, %arg3: memref<3x3x4x4xbf16, #tpu.memory_space<vmem>>, %arg4: memref<1x16x16x4xf32, #tpu.memory_space<vmem>>, %arg5: memref<2x4xf32, #tpu.memory_space<vmem>>, %arg6: memref<18x18x4xf32, #tpu.memory_space<vmem>>, %arg7: memref<256x4xf32, #tpu.memory_space<vmem>>) attributes {dimension_semantics = [#tpu.dimension_semantics<arbitrary>], iteration_bounds = array<i64: 2>, scalar_prefetch = 0 : i64, scratch_operands = 2 : i64, tpu.core_type = #tpu.core_type<tc>, window_params = [{transform_indices = @transform_0, window_bounds = array<i64: 1, 16, 16, 4>}, {pipeline_mode = #tpu.pipeline_mode<synchronous>, transform_indices = @transform_1, window_bounds = array<i64: 2, 4>}, {pipeline_mode = #tpu.pipeline_mode<synchronous>, transform_indices = @transform_2, window_bounds = array<i64: 3, 3, 4, 4>}, {transform_indices = @transform_3, window_bounds = array<i64: 1, 16, 16, 4>}, {pipeline_mode = #tpu.pipeline_mode<synchronous>, transform_indices = @transform_4, window_bounds = array<i64: 2, 4>}]} {
    %c0_i32 = arith.constant 0 : i32
    %0 = arith.cmpi eq, %arg0, %c0_i32 : i32
    %1 = arith.extui %0 : i1 to i32
    %c0_i32_0 = arith.constant 0 : i32
    %2 = arith.cmpi ne, %1, %c0_i32_0 : i32
    scf.if %2 {
      %cst_132 = arith.constant 0.000000e+00 : f32
      %115 = vector.broadcast %cst_132 : f32 to vector<2x4xf32>
      %c0_133 = arith.constant 0 : index
      %c0_134 = arith.constant 0 : index
      %116 = vector.load %arg5[%c0_133, %c0_134] : memref<2x4xf32, #tpu.memory_space<vmem>>, vector<2x4xf32>
      tpu.vector_store %arg5[%c0_133, %c0_134], %115 {strides = array<i32>} : memref<2x4xf32, #tpu.memory_space<vmem>>, vector<2x4xf32>,
      %cst_135 = arith.constant 0.000000e+00 : f32
      %117 = vector.broadcast %cst_135 : f32 to vector<18x18x4xf32>
      %c0_136 = arith.constant 0 : index
      %c0_137 = arith.constant 0 : index
      %c0_138 = arith.constant 0 : index
      %118 = vector.load %arg6[%c0_136, %c0_137, %c0_138] : memref<18x18x4xf32, #tpu.memory_space<vmem>>, vector<18x18x4xf32>
      tpu.vector_store %arg6[%c0_136, %c0_137, %c0_138], %117 {strides = array<i32>} : memref<18x18x4xf32, #tpu.memory_space<vmem>>, vector<18x18x4xf32>,
    } else {
    }
    %c0 = arith.constant 0 : index
    %c0_1 = arith.constant 0 : index
    %c0_2 = arith.constant 0 : index
    %c0_3 = arith.constant 0 : index
    %3 = vector.load %arg1[%c0, %c0_1, %c0_2, %c0_3] : memref<1x16x16x4xf32, #tpu.memory_space<vmem>>, vector<1x16x16x4xf32>
    %4 = vector.shape_cast %3 : vector<1x16x16x4xf32> to vector<16x16x4xf32>
    %c0_4 = arith.constant 0 : index
    %c0_5 = arith.constant 0 : index
    %5 = vector.load %arg2[%c0_4, %c0_5] : memref<2x4xf32, #tpu.memory_space<vmem>>, vector<1x4xf32>
    %6 = vector.shape_cast %5 : vector<1x4xf32> to vector<4xf32>
    %7 = vector.shape_cast %6 : vector<4xf32> to vector<1x1x4xf32>
    %8 = vector.broadcast %7 : vector<1x1x4xf32> to vector<16x16x4xf32>
    %9 = arith.mulf %4, %8 : vector<16x16x4xf32>
    %c1 = arith.constant 1 : index
    %c0_6 = arith.constant 0 : index
    %10 = vector.load %arg2[%c1, %c0_6] : memref<2x4xf32, #tpu.memory_space<vmem>>, vector<1x4xf32>
    %11 = vector.shape_cast %10 : vector<1x4xf32> to vector<4xf32>
    %12 = vector.shape_cast %11 : vector<4xf32> to vector<1x1x4xf32>
    %13 = vector.broadcast %12 : vector<1x1x4xf32> to vector<16x16x4xf32>
    %14 = arith.addf %9, %13 : vector<16x16x4xf32>
    %cst = arith.constant 0.000000e+00 : f32
    %15 = vector.broadcast %cst : f32 to vector<16x16x4xf32>
    %16 = arith.maximumf %14, %15 : vector<16x16x4xf32>
    %c1_7 = arith.constant 1 : index
    %c1_8 = arith.constant 1 : index
    %c0_9 = arith.constant 0 : index
    %17 = vector.load %arg6[%c1_7, %c1_8, %c0_9] : memref<18x18x4xf32, #tpu.memory_space<vmem>>, vector<16x16x4xf32>
    tpu.vector_store %arg6[%c1_7, %c1_8, %c0_9], %16 {strides = array<i32>} : memref<18x18x4xf32, #tpu.memory_space<vmem>>, vector<16x16x4xf32>,
    %cst_10 = arith.constant 0.000000e+00 : f32
    %18 = vector.broadcast %cst_10 : f32 to vector<256x4xf32>
    %c0_11 = arith.constant 0 : index
    %c0_12 = arith.constant 0 : index
    %19 = vector.load %arg7[%c0_11, %c0_12] : memref<256x4xf32, #tpu.memory_space<vmem>>, vector<256x4xf32>
    tpu.vector_store %arg7[%c0_11, %c0_12], %18 {strides = array<i32>} : memref<256x4xf32, #tpu.memory_space<vmem>>, vector<256x4xf32>,
    %c0_13 = arith.constant 0 : index
    %c0_14 = arith.constant 0 : index
    %c0_15 = arith.constant 0 : index
    %20 = vector.load %arg6[%c0_13, %c0_14, %c0_15] : memref<18x18x4xf32, #tpu.memory_space<vmem>>, vector<16x16x4xf32>
    %c0_16 = arith.constant 0 : index
    %c0_17 = arith.constant 0 : index
    %21 = vector.load %arg7[%c0_16, %c0_17] : memref<256x4xf32, #tpu.memory_space<vmem>>, vector<256x4xf32>
    %22 = vector.shape_cast %20 : vector<16x16x4xf32> to vector<256x4xf32>
    %23 = arith.truncf %22 : vector<256x4xf32> to vector<256x4xbf16>
    %c0_18 = arith.constant 0 : index
    %c0_19 = arith.constant 0 : index
    %c0_20 = arith.constant 0 : index
    %c0_21 = arith.constant 0 : index
    %24 = vector.load %arg3[%c0_18, %c0_19, %c0_20, %c0_21] : memref<3x3x4x4xbf16, #tpu.memory_space<vmem>>, vector<1x1x4x4xbf16>
    %25 = vector.shape_cast %24 : vector<1x1x4x4xbf16> to vector<4x4xbf16>
    %cst_22 = arith.constant dense<0.000000e+00> : vector<256x4xf32>
    %26 = tpu.matmul %23, %25, %cst_22 {dimension_numbers = #tpu.dot_dimension_numbers<[1], [0], [0], [1], [0, 0, 1, 1], [], []>} : vector<256x4xbf16>, vector<4x4xbf16>, vector<256x4xf32> -> vector<256x4xf32>
    %27 = arith.addf %21, %26 : vector<256x4xf32>
    %c0_23 = arith.constant 0 : index
    %c0_24 = arith.constant 0 : index
    %28 = vector.load %arg7[%c0_23, %c0_24] : memref<256x4xf32, #tpu.memory_space<vmem>>, vector<256x4xf32>
    tpu.vector_store %arg7[%c0_23, %c0_24], %27 {strides = array<i32>} : memref<256x4xf32, #tpu.memory_space<vmem>>, vector<256x4xf32>,
    %c0_25 = arith.constant 0 : index
    %c1_26 = arith.constant 1 : index
    %c0_27 = arith.constant 0 : index
    %29 = vector.load %arg6[%c0_25, %c1_26, %c0_27] : memref<18x18x4xf32, #tpu.memory_space<vmem>>, vector<16x16x4xf32>
    %c0_28 = arith.constant 0 : index
    %c0_29 = arith.constant 0 : index
    %30 = vector.load %arg7[%c0_28, %c0_29] : memref<256x4xf32, #tpu.memory_space<vmem>>, vector<256x4xf32>
    %31 = vector.shape_cast %29 : vector<16x16x4xf32> to vector<256x4xf32>
    %32 = arith.truncf %31 : vector<256x4xf32> to vector<256x4xbf16>
    %c0_30 = arith.constant 0 : index
    %c1_31 = arith.constant 1 : index
    %c0_32 = arith.constant 0 : index
    %c0_33 = arith.constant 0 : index
    %33 = vector.load %arg3[%c0_30, %c1_31, %c0_32, %c0_33] : memref<3x3x4x4xbf16, #tpu.memory_space<vmem>>, vector<1x1x4x4xbf16>
    %34 = vector.shape_cast %33 : vector<1x1x4x4xbf16> to vector<4x4xbf16>
    %cst_34 = arith.constant dense<0.000000e+00> : vector<256x4xf32>
    %35 = tpu.matmul %32, %34, %cst_34 {dimension_numbers = #tpu.dot_dimension_numbers<[1], [0], [0], [1], [0, 0, 1, 1], [], []>} : vector<256x4xbf16>, vector<4x4xbf16>, vector<256x4xf32> -> vector<256x4xf32>
    %36 = arith.addf %30, %35 : vector<256x4xf32>
    %c0_35 = arith.constant 0 : index
    %c0_36 = arith.constant 0 : index
    %37 = vector.load %arg7[%c0_35, %c0_36] : memref<256x4xf32, #tpu.memory_space<vmem>>, vector<256x4xf32>
    tpu.vector_store %arg7[%c0_35, %c0_36], %36 {strides = array<i32>} : memref<256x4xf32, #tpu.memory_space<vmem>>, vector<256x4xf32>,
    %c0_37 = arith.constant 0 : index
    %c2 = arith.constant 2 : index
    %c0_38 = arith.constant 0 : index
    %38 = vector.load %arg6[%c0_37, %c2, %c0_38] : memref<18x18x4xf32, #tpu.memory_space<vmem>>, vector<16x16x4xf32>
    %c0_39 = arith.constant 0 : index
    %c0_40 = arith.constant 0 : index
    %39 = vector.load %arg7[%c0_39, %c0_40] : memref<256x4xf32, #tpu.memory_space<vmem>>, vector<256x4xf32>
    %40 = vector.shape_cast %38 : vector<16x16x4xf32> to vector<256x4xf32>
    %41 = arith.truncf %40 : vector<256x4xf32> to vector<256x4xbf16>
    %c0_41 = arith.constant 0 : index
    %c2_42 = arith.constant 2 : index
    %c0_43 = arith.constant 0 : index
    %c0_44 = arith.constant 0 : index
    %42 = vector.load %arg3[%c0_41, %c2_42, %c0_43, %c0_44] : memref<3x3x4x4xbf16, #tpu.memory_space<vmem>>, vector<1x1x4x4xbf16>
    %43 = vector.shape_cast %42 : vector<1x1x4x4xbf16> to vector<4x4xbf16>
    %cst_45 = arith.constant dense<0.000000e+00> : vector<256x4xf32>
    %44 = tpu.matmul %41, %43, %cst_45 {dimension_numbers = #tpu.dot_dimension_numbers<[1], [0], [0], [1], [0, 0, 1, 1], [], []>} : vector<256x4xbf16>, vector<4x4xbf16>, vector<256x4xf32> -> vector<256x4xf32>
    %45 = arith.addf %39, %44 : vector<256x4xf32>
    %c0_46 = arith.constant 0 : index
    %c0_47 = arith.constant 0 : index
    %46 = vector.load %arg7[%c0_46, %c0_47] : memref<256x4xf32, #tpu.memory_space<vmem>>, vector<256x4xf32>
    tpu.vector_store %arg7[%c0_46, %c0_47], %45 {strides = array<i32>} : memref<256x4xf32, #tpu.memory_space<vmem>>, vector<256x4xf32>,
    %c1_48 = arith.constant 1 : index
    %c0_49 = arith.constant 0 : index
    %c0_50 = arith.constant 0 : index
    %47 = vector.load %arg6[%c1_48, %c0_49, %c0_50] : memref<18x18x4xf32, #tpu.memory_space<vmem>>, vector<16x16x4xf32>
    %c0_51 = arith.constant 0 : index
    %c0_52 = arith.constant 0 : index
    %48 = vector.load %arg7[%c0_51, %c0_52] : memref<256x4xf32, #tpu.memory_space<vmem>>, vector<256x4xf32>
    %49 = vector.shape_cast %47 : vector<16x16x4xf32> to vector<256x4xf32>
    %50 = arith.truncf %49 : vector<256x4xf32> to vector<256x4xbf16>
    %c1_53 = arith.constant 1 : index
    %c0_54 = arith.constant 0 : index
    %c0_55 = arith.constant 0 : index
    %c0_56 = arith.constant 0 : index
    %51 = vector.load %arg3[%c1_53, %c0_54, %c0_55, %c0_56] : memref<3x3x4x4xbf16, #tpu.memory_space<vmem>>, vector<1x1x4x4xbf16>
    %52 = vector.shape_cast %51 : vector<1x1x4x4xbf16> to vector<4x4xbf16>
    %cst_57 = arith.constant dense<0.000000e+00> : vector<256x4xf32>
    %53 = tpu.matmul %50, %52, %cst_57 {dimension_numbers = #tpu.dot_dimension_numbers<[1], [0], [0], [1], [0, 0, 1, 1], [], []>} : vector<256x4xbf16>, vector<4x4xbf16>, vector<256x4xf32> -> vector<256x4xf32>
    %54 = arith.addf %48, %53 : vector<256x4xf32>
    %c0_58 = arith.constant 0 : index
    %c0_59 = arith.constant 0 : index
    %55 = vector.load %arg7[%c0_58, %c0_59] : memref<256x4xf32, #tpu.memory_space<vmem>>, vector<256x4xf32>
    tpu.vector_store %arg7[%c0_58, %c0_59], %54 {strides = array<i32>} : memref<256x4xf32, #tpu.memory_space<vmem>>, vector<256x4xf32>,
    %c1_60 = arith.constant 1 : index
    %c1_61 = arith.constant 1 : index
    %c0_62 = arith.constant 0 : index
    %56 = vector.load %arg6[%c1_60, %c1_61, %c0_62] : memref<18x18x4xf32, #tpu.memory_space<vmem>>, vector<16x16x4xf32>
    %c0_63 = arith.constant 0 : index
    %c0_64 = arith.constant 0 : index
    %57 = vector.load %arg7[%c0_63, %c0_64] : memref<256x4xf32, #tpu.memory_space<vmem>>, vector<256x4xf32>
    %58 = vector.shape_cast %56 : vector<16x16x4xf32> to vector<256x4xf32>
    %59 = arith.truncf %58 : vector<256x4xf32> to vector<256x4xbf16>
    %c1_65 = arith.constant 1 : index
    %c1_66 = arith.constant 1 : index
    %c0_67 = arith.constant 0 : index
    %c0_68 = arith.constant 0 : index
    %60 = vector.load %arg3[%c1_65, %c1_66, %c0_67, %c0_68] : memref<3x3x4x4xbf16, #tpu.memory_space<vmem>>, vector<1x1x4x4xbf16>
    %61 = vector.shape_cast %60 : vector<1x1x4x4xbf16> to vector<4x4xbf16>
    %cst_69 = arith.constant dense<0.000000e+00> : vector<256x4xf32>
    %62 = tpu.matmul %59, %61, %cst_69 {dimension_numbers = #tpu.dot_dimension_numbers<[1], [0], [0], [1], [0, 0, 1, 1], [], []>} : vector<256x4xbf16>, vector<4x4xbf16>, vector<256x4xf32> -> vector<256x4xf32>
    %63 = arith.addf %57, %62 : vector<256x4xf32>
    %c0_70 = arith.constant 0 : index
    %c0_71 = arith.constant 0 : index
    %64 = vector.load %arg7[%c0_70, %c0_71] : memref<256x4xf32, #tpu.memory_space<vmem>>, vector<256x4xf32>
    tpu.vector_store %arg7[%c0_70, %c0_71], %63 {strides = array<i32>} : memref<256x4xf32, #tpu.memory_space<vmem>>, vector<256x4xf32>,
    %c1_72 = arith.constant 1 : index
    %c2_73 = arith.constant 2 : index
    %c0_74 = arith.constant 0 : index
    %65 = vector.load %arg6[%c1_72, %c2_73, %c0_74] : memref<18x18x4xf32, #tpu.memory_space<vmem>>, vector<16x16x4xf32>
    %c0_75 = arith.constant 0 : index
    %c0_76 = arith.constant 0 : index
    %66 = vector.load %arg7[%c0_75, %c0_76] : memref<256x4xf32, #tpu.memory_space<vmem>>, vector<256x4xf32>
    %67 = vector.shape_cast %65 : vector<16x16x4xf32> to vector<256x4xf32>
    %68 = arith.truncf %67 : vector<256x4xf32> to vector<256x4xbf16>
    %c1_77 = arith.constant 1 : index
    %c2_78 = arith.constant 2 : index
    %c0_79 = arith.constant 0 : index
    %c0_80 = arith.constant 0 : index
    %69 = vector.load %arg3[%c1_77, %c2_78, %c0_79, %c0_80] : memref<3x3x4x4xbf16, #tpu.memory_space<vmem>>, vector<1x1x4x4xbf16>
    %70 = vector.shape_cast %69 : vector<1x1x4x4xbf16> to vector<4x4xbf16>
    %cst_81 = arith.constant dense<0.000000e+00> : vector<256x4xf32>
    %71 = tpu.matmul %68, %70, %cst_81 {dimension_numbers = #tpu.dot_dimension_numbers<[1], [0], [0], [1], [0, 0, 1, 1], [], []>} : vector<256x4xbf16>, vector<4x4xbf16>, vector<256x4xf32> -> vector<256x4xf32>
    %72 = arith.addf %66, %71 : vector<256x4xf32>
    %c0_82 = arith.constant 0 : index
    %c0_83 = arith.constant 0 : index
    %73 = vector.load %arg7[%c0_82, %c0_83] : memref<256x4xf32, #tpu.memory_space<vmem>>, vector<256x4xf32>
    tpu.vector_store %arg7[%c0_82, %c0_83], %72 {strides = array<i32>} : memref<256x4xf32, #tpu.memory_space<vmem>>, vector<256x4xf32>,
    %c2_84 = arith.constant 2 : index
    %c0_85 = arith.constant 0 : index
    %c0_86 = arith.constant 0 : index
    %74 = vector.load %arg6[%c2_84, %c0_85, %c0_86] : memref<18x18x4xf32, #tpu.memory_space<vmem>>, vector<16x16x4xf32>
    %c0_87 = arith.constant 0 : index
    %c0_88 = arith.constant 0 : index
    %75 = vector.load %arg7[%c0_87, %c0_88] : memref<256x4xf32, #tpu.memory_space<vmem>>, vector<256x4xf32>
    %76 = vector.shape_cast %74 : vector<16x16x4xf32> to vector<256x4xf32>
    %77 = arith.truncf %76 : vector<256x4xf32> to vector<256x4xbf16>
    %c2_89 = arith.constant 2 : index
    %c0_90 = arith.constant 0 : index
    %c0_91 = arith.constant 0 : index
    %c0_92 = arith.constant 0 : index
    %78 = vector.load %arg3[%c2_89, %c0_90, %c0_91, %c0_92] : memref<3x3x4x4xbf16, #tpu.memory_space<vmem>>, vector<1x1x4x4xbf16>
    %79 = vector.shape_cast %78 : vector<1x1x4x4xbf16> to vector<4x4xbf16>
    %cst_93 = arith.constant dense<0.000000e+00> : vector<256x4xf32>
    %80 = tpu.matmul %77, %79, %cst_93 {dimension_numbers = #tpu.dot_dimension_numbers<[1], [0], [0], [1], [0, 0, 1, 1], [], []>} : vector<256x4xbf16>, vector<4x4xbf16>, vector<256x4xf32> -> vector<256x4xf32>
    %81 = arith.addf %75, %80 : vector<256x4xf32>
    %c0_94 = arith.constant 0 : index
    %c0_95 = arith.constant 0 : index
    %82 = vector.load %arg7[%c0_94, %c0_95] : memref<256x4xf32, #tpu.memory_space<vmem>>, vector<256x4xf32>
    tpu.vector_store %arg7[%c0_94, %c0_95], %81 {strides = array<i32>} : memref<256x4xf32, #tpu.memory_space<vmem>>, vector<256x4xf32>,
    %c2_96 = arith.constant 2 : index
    %c1_97 = arith.constant 1 : index
    %c0_98 = arith.constant 0 : index
    %83 = vector.load %arg6[%c2_96, %c1_97, %c0_98] : memref<18x18x4xf32, #tpu.memory_space<vmem>>, vector<16x16x4xf32>
    %c0_99 = arith.constant 0 : index
    %c0_100 = arith.constant 0 : index
    %84 = vector.load %arg7[%c0_99, %c0_100] : memref<256x4xf32, #tpu.memory_space<vmem>>, vector<256x4xf32>
    %85 = vector.shape_cast %83 : vector<16x16x4xf32> to vector<256x4xf32>
    %86 = arith.truncf %85 : vector<256x4xf32> to vector<256x4xbf16>
    %c2_101 = arith.constant 2 : index
    %c1_102 = arith.constant 1 : index
    %c0_103 = arith.constant 0 : index
    %c0_104 = arith.constant 0 : index
    %87 = vector.load %arg3[%c2_101, %c1_102, %c0_103, %c0_104] : memref<3x3x4x4xbf16, #tpu.memory_space<vmem>>, vector<1x1x4x4xbf16>
    %88 = vector.shape_cast %87 : vector<1x1x4x4xbf16> to vector<4x4xbf16>
    %cst_105 = arith.constant dense<0.000000e+00> : vector<256x4xf32>
    %89 = tpu.matmul %86, %88, %cst_105 {dimension_numbers = #tpu.dot_dimension_numbers<[1], [0], [0], [1], [0, 0, 1, 1], [], []>} : vector<256x4xbf16>, vector<4x4xbf16>, vector<256x4xf32> -> vector<256x4xf32>
    %90 = arith.addf %84, %89 : vector<256x4xf32>
    %c0_106 = arith.constant 0 : index
    %c0_107 = arith.constant 0 : index
    %91 = vector.load %arg7[%c0_106, %c0_107] : memref<256x4xf32, #tpu.memory_space<vmem>>, vector<256x4xf32>
    tpu.vector_store %arg7[%c0_106, %c0_107], %90 {strides = array<i32>} : memref<256x4xf32, #tpu.memory_space<vmem>>, vector<256x4xf32>,
    %c2_108 = arith.constant 2 : index
    %c2_109 = arith.constant 2 : index
    %c0_110 = arith.constant 0 : index
    %92 = vector.load %arg6[%c2_108, %c2_109, %c0_110] : memref<18x18x4xf32, #tpu.memory_space<vmem>>, vector<16x16x4xf32>
    %c0_111 = arith.constant 0 : index
    %c0_112 = arith.constant 0 : index
    %93 = vector.load %arg7[%c0_111, %c0_112] : memref<256x4xf32, #tpu.memory_space<vmem>>, vector<256x4xf32>
    %94 = vector.shape_cast %92 : vector<16x16x4xf32> to vector<256x4xf32>
    %95 = arith.truncf %94 : vector<256x4xf32> to vector<256x4xbf16>
    %c2_113 = arith.constant 2 : index
    %c2_114 = arith.constant 2 : index
    %c0_115 = arith.constant 0 : index
    %c0_116 = arith.constant 0 : index
    %96 = vector.load %arg3[%c2_113, %c2_114, %c0_115, %c0_116] : memref<3x3x4x4xbf16, #tpu.memory_space<vmem>>, vector<1x1x4x4xbf16>
    %97 = vector.shape_cast %96 : vector<1x1x4x4xbf16> to vector<4x4xbf16>
    %cst_117 = arith.constant dense<0.000000e+00> : vector<256x4xf32>
    %98 = tpu.matmul %95, %97, %cst_117 {dimension_numbers = #tpu.dot_dimension_numbers<[1], [0], [0], [1], [0, 0, 1, 1], [], []>} : vector<256x4xbf16>, vector<4x4xbf16>, vector<256x4xf32> -> vector<256x4xf32>
    %99 = arith.addf %93, %98 : vector<256x4xf32>
    %c0_118 = arith.constant 0 : index
    %c0_119 = arith.constant 0 : index
    %100 = vector.load %arg7[%c0_118, %c0_119] : memref<256x4xf32, #tpu.memory_space<vmem>>, vector<256x4xf32>
    tpu.vector_store %arg7[%c0_118, %c0_119], %99 {strides = array<i32>} : memref<256x4xf32, #tpu.memory_space<vmem>>, vector<256x4xf32>,
    %c0_120 = arith.constant 0 : index
    %c0_121 = arith.constant 0 : index
    %101 = vector.load %arg7[%c0_120, %c0_121] : memref<256x4xf32, #tpu.memory_space<vmem>>, vector<256x4xf32>
    %102 = vector.shape_cast %101 : vector<256x4xf32> to vector<16x16x4xf32>
    %c0_122 = arith.constant 0 : index
    %c0_123 = arith.constant 0 : index
    %c0_124 = arith.constant 0 : index
    %c0_125 = arith.constant 0 : index
    %103 = vector.load %arg4[%c0_122, %c0_123, %c0_124, %c0_125] : memref<1x16x16x4xf32, #tpu.memory_space<vmem>>, vector<1x16x16x4xf32>
    %104 = vector.shape_cast %103 : vector<1x16x16x4xf32> to vector<16x16x4xf32>
    %105 = vector.shape_cast %102 : vector<16x16x4xf32> to vector<1x16x16x4xf32>
    tpu.vector_store %arg4[%c0_122, %c0_123, %c0_124, %c0_125], %105 {strides = array<i32>} : memref<1x16x16x4xf32, #tpu.memory_space<vmem>>, vector<1x16x16x4xf32>,
    %c0_126 = arith.constant 0 : index
    %c0_127 = arith.constant 0 : index
    %106 = vector.load %arg5[%c0_126, %c0_127] : memref<2x4xf32, #tpu.memory_space<vmem>>, vector<2x4xf32>
    %cst_128 = arith.constant dense<0.000000e+00> : vector<4xf32>
    %107 = vector.multi_reduction <add>, %101, %cst_128 [0] : vector<256x4xf32> to vector<4xf32>
    %108 = vector.shape_cast %107 : vector<4xf32> to vector<1x4xf32>
    %109 = arith.mulf %101, %101 : vector<256x4xf32>
    %cst_129 = arith.constant dense<0.000000e+00> : vector<4xf32>
    %110 = vector.multi_reduction <add>, %109, %cst_129 [0] : vector<256x4xf32> to vector<4xf32>
    %111 = vector.shape_cast %110 : vector<4xf32> to vector<1x4xf32>
    %112 = tpu.concatenate %108, %111 in 0 : vector<1x4xf32>, vector<1x4xf32> -> vector<2x4xf32>
    %113 = arith.addf %106, %112 : vector<2x4xf32>
    %c0_130 = arith.constant 0 : index
    %c0_131 = arith.constant 0 : index
    %114 = vector.load %arg5[%c0_130, %c0_131] : memref<2x4xf32, #tpu.memory_space<vmem>>, vector<2x4xf32>
    tpu.vector_store %arg5[%c0_130, %c0_131], %113 {strides = array<i32>} : memref<2x4xf32, #tpu.memory_space<vmem>>, vector<2x4xf32>,
    return
  }
  func.func @transform_0(%arg0: i32) -> (i32, i32, i32, i32) {
    %c0_i32 = arith.constant 0 : i32
    %c0_i32_0 = arith.constant 0 : i32
    %c0_i32_1 = arith.constant 0 : i32
    %c0_i32_2 = arith.constant 0 : i32
    return %arg0, %c0_i32, %c0_i32_0, %c0_i32_1 : i32, i32, i32, i32
  }
  func.func @transform_1(%arg0: i32) -> (i32, i32) {
    %c0_i32 = arith.constant 0 : i32
    %c0_i32_0 = arith.constant 0 : i32
    %c0_i32_1 = arith.constant 0 : i32
    return %c0_i32, %c0_i32_0 : i32, i32
  }
  func.func @transform_2(%arg0: i32) -> (i32, i32, i32, i32) {
    %c0_i32 = arith.constant 0 : i32
    %c0_i32_0 = arith.constant 0 : i32
    %c0_i32_1 = arith.constant 0 : i32
    %c0_i32_2 = arith.constant 0 : i32
    %c0_i32_3 = arith.constant 0 : i32
    return %c0_i32, %c0_i32_0, %c0_i32_1, %c0_i32_2 : i32, i32, i32, i32
  }
  func.func @transform_3(%arg0: i32) -> (i32, i32, i32, i32) {
    %c0_i32 = arith.constant 0 : i32
    %c0_i32_0 = arith.constant 0 : i32
    %c0_i32_1 = arith.constant 0 : i32
    %c0_i32_2 = arith.constant 0 : i32
    return %arg0, %c0_i32, %c0_i32_0, %c0_i32_1 : i32, i32, i32, i32
  }
  func.func @transform_4(%arg0: i32) -> (i32, i32) {
    %c0_i32 = arith.constant 0 : i32
    %c0_i32_0 = arith.constant 0 : i32
    %c0_i32_1 = arith.constant 0 : i32
    return %c0_i32, %c0_i32_0 : i32, i32
  }
}

module attributes {stable_mosaic.version = 11 : i64} {
  func.func @kernel(%arg0: i32, %arg1: memref<256x16xf32, #tpu.memory_space<vmem>>, %arg2: memref<2x16xf32, #tpu.memory_space<vmem>>, %arg3: memref<256x16xf32, #tpu.memory_space<vmem>>, %arg4: memref<2x16xf32, #tpu.memory_space<vmem>>, %arg5: memref<256x16xf32, #tpu.memory_space<vmem>>) attributes {dimension_semantics = [#tpu.dimension_semantics<parallel>], iteration_bounds = array<i64: 2>, scalar_prefetch = 0 : i64, scratch_operands = 0 : i64, tpu.core_type = #tpu.core_type<tc>, window_params = [{transform_indices = @transform_0, window_bounds = array<i64: 256, 16>}, {pipeline_mode = #tpu.pipeline_mode<synchronous>, transform_indices = @transform_1, window_bounds = array<i64: 2, 16>}, {transform_indices = @transform_2, window_bounds = array<i64: 256, 16>}, {pipeline_mode = #tpu.pipeline_mode<synchronous>, transform_indices = @transform_3, window_bounds = array<i64: 2, 16>}, {transform_indices = @transform_4, window_bounds = array<i64: 256, 16>}]} {
    %c0 = arith.constant 0 : index
    %c0_0 = arith.constant 0 : index
    %0 = vector.load %arg1[%c0, %c0_0] : memref<256x16xf32, #tpu.memory_space<vmem>>, vector<256x16xf32>
    %c0_1 = arith.constant 0 : index
    %c0_2 = arith.constant 0 : index
    %1 = vector.load %arg2[%c0_1, %c0_2] : memref<2x16xf32, #tpu.memory_space<vmem>>, vector<1x16xf32>
    %2 = vector.shape_cast %1 : vector<1x16xf32> to vector<16xf32>
    %3 = vector.shape_cast %2 : vector<16xf32> to vector<1x16xf32>
    %4 = vector.broadcast %3 : vector<1x16xf32> to vector<256x16xf32>
    %5 = arith.mulf %0, %4 : vector<256x16xf32>
    %c1 = arith.constant 1 : index
    %c0_3 = arith.constant 0 : index
    %6 = vector.load %arg2[%c1, %c0_3] : memref<2x16xf32, #tpu.memory_space<vmem>>, vector<1x16xf32>
    %7 = vector.shape_cast %6 : vector<1x16xf32> to vector<16xf32>
    %8 = vector.shape_cast %7 : vector<16xf32> to vector<1x16xf32>
    %9 = vector.broadcast %8 : vector<1x16xf32> to vector<256x16xf32>
    %10 = arith.addf %5, %9 : vector<256x16xf32>
    %c0_4 = arith.constant 0 : index
    %c0_5 = arith.constant 0 : index
    %11 = vector.load %arg3[%c0_4, %c0_5] : memref<256x16xf32, #tpu.memory_space<vmem>>, vector<256x16xf32>
    %c0_6 = arith.constant 0 : index
    %c0_7 = arith.constant 0 : index
    %12 = vector.load %arg4[%c0_6, %c0_7] : memref<2x16xf32, #tpu.memory_space<vmem>>, vector<1x16xf32>
    %13 = vector.shape_cast %12 : vector<1x16xf32> to vector<16xf32>
    %14 = vector.shape_cast %13 : vector<16xf32> to vector<1x16xf32>
    %15 = vector.broadcast %14 : vector<1x16xf32> to vector<256x16xf32>
    %16 = arith.mulf %11, %15 : vector<256x16xf32>
    %c1_8 = arith.constant 1 : index
    %c0_9 = arith.constant 0 : index
    %17 = vector.load %arg4[%c1_8, %c0_9] : memref<2x16xf32, #tpu.memory_space<vmem>>, vector<1x16xf32>
    %18 = vector.shape_cast %17 : vector<1x16xf32> to vector<16xf32>
    %19 = vector.shape_cast %18 : vector<16xf32> to vector<1x16xf32>
    %20 = vector.broadcast %19 : vector<1x16xf32> to vector<256x16xf32>
    %21 = arith.addf %16, %20 : vector<256x16xf32>
    %22 = arith.addf %10, %21 : vector<256x16xf32>
    %cst = arith.constant 0.000000e+00 : f32
    %23 = vector.broadcast %cst : f32 to vector<256x16xf32>
    %24 = arith.maximumf %22, %23 : vector<256x16xf32>
    %c0_10 = arith.constant 0 : index
    %c0_11 = arith.constant 0 : index
    %25 = vector.load %arg5[%c0_10, %c0_11] : memref<256x16xf32, #tpu.memory_space<vmem>>, vector<256x16xf32>
    tpu.vector_store %arg5[%c0_10, %c0_11], %24 {strides = array<i32>} : memref<256x16xf32, #tpu.memory_space<vmem>>, vector<256x16xf32>,
    return
  }
  func.func @transform_0(%arg0: i32) -> (i32, i32) {
    %c0_i32 = arith.constant 0 : i32
    %c0_i32_0 = arith.constant 0 : i32
    return %arg0, %c0_i32 : i32, i32
  }
  func.func @transform_1(%arg0: i32) -> (i32, i32) {
    %c0_i32 = arith.constant 0 : i32
    %c0_i32_0 = arith.constant 0 : i32
    %c0_i32_1 = arith.constant 0 : i32
    return %c0_i32, %c0_i32_0 : i32, i32
  }
  func.func @transform_2(%arg0: i32) -> (i32, i32) {
    %c0_i32 = arith.constant 0 : i32
    %c0_i32_0 = arith.constant 0 : i32
    return %arg0, %c0_i32 : i32, i32
  }
  func.func @transform_3(%arg0: i32) -> (i32, i32) {
    %c0_i32 = arith.constant 0 : i32
    %c0_i32_0 = arith.constant 0 : i32
    %c0_i32_1 = arith.constant 0 : i32
    return %c0_i32, %c0_i32_0 : i32, i32
  }
  func.func @transform_4(%arg0: i32) -> (i32, i32) {
    %c0_i32 = arith.constant 0 : i32
    %c0_i32_0 = arith.constant 0 : i32
    return %arg0, %c0_i32 : i32, i32
  }
}

</mosaic_0001>

<llo_original>
// kernel: bottleneck_forward.7
$region0: #{bottleneck_forward.7}
  #allocation0 [shape = 'u32[]', space=smem, size = 0x4, offset = 0x4, fixed_abs, tag = 'smem constant byte address 0x4 - core index']
  #allocation1 [shape = 'u32[144,128]{1,0:T(1,128)}', space=vmem, size = 0x12000, scoped, tag = 'internal scratch']
  %s0 = inlined_call_operand.vmem [shape: f32[512,16], index: 0, kind: input, shape index: {}]
  %s1 = inlined_call_operand.vmem [shape: f32[2,16], index: 1, kind: input, shape index: {}]
  %s2 = inlined_call_operand.vmem [shape: f32[512,16], index: 2, kind: input, shape index: {}]
  %s3 = inlined_call_operand.vmem [shape: f32[2,16], index: 3, kind: input, shape index: {}]
  %s4 = inlined_call_operand.hbm [shape: f32[512,16], index: 4, kind: output, shape index: {}]
  %s5 = sld [smem:[#allocation0]]
  $region49: #{bottleneck_forward.7} parent=0
    _
  %s7 = ssub.s32 1, %s5
  %s8 = scalar_select 0, %s7, %s5
  $region1: #{bottleneck_forward.7} parent=0
    #allocation2 [shape = 'u8[262144]{0}', space=vmem, size = 0x40000, scoped, tag = 'output window, operand 0']
    #allocation3 [shape = 's32[2]{0}', space=sflag, size = 0x8, scoped, tag = 'scoped memory for bottleneck_forward.7']
    %9 = vsyncpa [#allocation3], 0
    %s10 = scalar_lea.sflag [#allocation3], 1
    %11 = vsyncpa %s10, 0
    loop: start=0, step=1, limit=4
    $region2: #{bottleneck_forward.7} parent=1 // loop_pre_header
      _
    $region3: #{bottleneck_forward.7} parent=1 // loop_header
      %s13 = sphi 0, %s17
      %p14 = scmp.ge.s32.totalorder %s13, 4
      %s23 = sphi 0, %s25
      %s26 = sphi 0, %s23
      %s27 = sphi 0, %s26
      %s43 = sphi 0, %s27
      %s47 = sphi 0, %s47
      %s49 = sphi 0, %s47
      %s50 = sphi 0, %s49
      %s64 = sphi 0, %s50
      %s70 = sphi 0, %s72
      %s73 = sphi 0, %s70
      %s74 = sphi 0, %s73
      %s90 = sphi 0, %s74
      %s94 = sphi 0, %s94
      %s96 = sphi 0, %s94
      %s97 = sphi 0, %s96
      %s111 = sphi 0, %s97
      %s117 = sphi 0, %s119
      %s120 = sphi 0, %s117
      %s121 = sphi 0, %s120
      %s137 = sphi 0, %s121
    $region4: #{bottleneck_forward.7} parent=1 // loop_header_branch
      %16 = sbr.rel (%p14) target = $region8
    $region5: #{bottleneck_forward.7} parent=1 // loop_body
      %s18 = ssub.s32 %s13, 1
      %s19 = ssub.s32 %s13, 2
      %s20 = sadd.s32 %s13, 1
      %s21 = ssub.s32 %s13, %s20
      %p22 = scmp.eq.s32.totalorder %s21, 0
      %s24 = sadd.s32 %s23, 1
      %s25 = scalar_select %p22, %s23, %s24
      %p28 = pneg %p22
      %p29 = scmp.eq.s32.totalorder %s13, 1
      %p30 = por %p28, %p29
      %p31 = scmp.ne.s32.totalorder %s23, %s26
      %p32 = scmp.eq.s32.totalorder %s13, 0
      %p33 = por %p31, %p32
      %p34 = scmp.ne.s32.totalorder %s23, %s26
      %p35 = scmp.eq.s32.totalorder %s18, 1
      %p36 = por %p34, %p35
      %p37 = scmp.ne.s32.totalorder %s26, %s27
      %p38 = scmp.eq.s32.totalorder %s18, 0
      %p39 = por %p37, %p38
      %p40 = scmp.ne.s32.totalorder %s26, %s27
      %p41 = scmp.eq.s32.totalorder %s19, 1
      %p42 = por %p40, %p41
      %p44 = scmp.ne.s32.totalorder %s27, %s43
      %p45 = scmp.eq.s32.totalorder %s19, 0
      %p46 = por %p44, %p45
      %s48 = sadd.s32 %s47, 1
      %p51 = scmp.eq.s32.totalorder %s13, 1
      %p52 = scmp.ne.s32.totalorder %s47, %s49
      %p53 = scmp.eq.s32.totalorder %s13, 0
      %p54 = por %p52, %p53
      %p55 = scmp.ne.s32.totalorder %s47, %s49
      %p56 = scmp.eq.s32.totalorder %s18, 1
      %p57 = por %p55, %p56
      %p58 = scmp.ne.s32.totalorder %s49, %s50
      %p59 = scmp.eq.s32.totalorder %s18, 0
      %p60 = por %p58, %p59
      %p61 = scmp.ne.s32.totalorder %s49, %s50
      %p62 = scmp.eq.s32.totalorder %s19, 1
      %p63 = por %p61, %p62
      %p65 = scmp.ne.s32.totalorder %s50, %s64
      %p66 = scmp.eq.s32.totalorder %s19, 0
      %p67 = por %p65, %p66
      %s68 = ssub.s32 %s13, %s20
      %p69 = scmp.eq.s32.totalorder %s68, 0
      %s71 = sadd.s32 %s70, 1
      %s72 = scalar_select %p69, %s70, %s71
      %p75 = pneg %p69
      %p76 = scmp.eq.s32.totalorder %s13, 1
      %p77 = por %p75, %p76
      %p78 = scmp.ne.s32.totalorder %s70, %s73
      %p79 = scmp.eq.s32.totalorder %s13, 0
      %p80 = por %p78, %p79
      %p81 = scmp.ne.s32.totalorder %s70, %s73
      %p82 = scmp.eq.s32.totalorder %s18, 1
      %p83 = por %p81, %p82
      %p84 = scmp.ne.s32.totalorder %s73, %s74
      %p85 = scmp.eq.s32.totalorder %s18, 0
      %p86 = por %p84, %p85
      %p87 = scmp.ne.s32.totalorder %s73, %s74
      %p88 = scmp.eq.s32.totalorder %s19, 1
      %p89 = por %p87, %p88
      %p91 = scmp.ne.s32.totalorder %s74, %s90
      %p92 = scmp.eq.s32.totalorder %s19, 0
      %p93 = por %p91, %p92
      %s95 = sadd.s32 %s94, 1
      %p98 = scmp.eq.s32.totalorder %s13, 1
      %p99 = scmp.ne.s32.totalorder %s94, %s96
      %p100 = scmp.eq.s32.totalorder %s13, 0
      %p101 = por %p99, %p100
      %p102 = scmp.ne.s32.totalorder %s94, %s96
      %p103 = scmp.eq.s32.totalorder %s18, 1
      %p104 = por %p102, %p103
      %p105 = scmp.ne.s32.totalorder %s96, %s97
      %p106 = scmp.eq.s32.totalorder %s18, 0
      %p107 = por %p105, %p106
      %p108 = scmp.ne.s32.totalorder %s96, %s97
      %p109 = scmp.eq.s32.totalorder %s19, 1
      %p110 = por %p108, %p109
      %p112 = scmp.ne.s32.totalorder %s97, %s111
      %p113 = scmp.eq.s32.totalorder %s19, 0
      %p114 = por %p112, %p113
      %s115 = ssub.s32 %s13, %s20
      %p116 = scmp.eq.s32.totalorder %s115, 0
      %s118 = sadd.s32 %s117, 1
      %s119 = scalar_select %p116, %s117, %s118
      %p122 = pneg %p116
      %p123 = scmp.eq.s32.totalorder %s13, 1
      %p124 = por %p122, %p123
      %p125 = scmp.ne.s32.totalorder %s117, %s120
      %p126 = scmp.eq.s32.totalorder %s13, 0
      %p127 = por %p125, %p126
      %p128 = scmp.ne.s32.totalorder %s117, %s120
      %p129 = scmp.eq.s32.totalorder %s18, 1
      %p130 = por %p128, %p129
      %p131 = scmp.ne.s32.totalorder %s120, %s121
      %p132 = scmp.eq.s32.totalorder %s18, 0
      %p133 = por %p131, %p132
      %p134 = scmp.ne.s32.totalorder %s120, %s121
      %p135 = scmp.eq.s32.totalorder %s19, 1
      %p136 = por %p134, %p135
      %p138 = scmp.ne.s32.totalorder %s121, %s137
      %p139 = scmp.eq.s32.totalorder %s19, 0
      %p140 = por %p138, %p139
      %p141 = scmp.le.s32.totalorder 1, %s13
      %p142 = scmp.lt.s32.totalorder %s13, 3
      %p143 = pnand %p141, %p142
      %p144 = pneg %p143
      // Predicated region
      $region9: #{bottleneck_forward.7} parent=5 // pred_check
        _
      $region10: #{bottleneck_forward.7} parent=5 // pred_check_branch
        %146 = sbr.rel (%p143) target = $region12
      $region11: #{bottleneck_forward.7} parent=5 // pred_region
        %s147 = ssub.s32 %s13, 1
        // Predicated region
        $region13: #{bottleneck_forward.7} parent=11 // pred_check
          %p148 = pneg %p60
        $region14: #{bottleneck_forward.7} parent=11 // pred_check_branch
          %150 = sbr.rel (%p148) target = $region16
        $region15: #{bottleneck_forward.7} parent=11 // pred_region
          _
        $region16: #{bottleneck_forward.7} parent=11 // pred_fallthru
          _
        // Predicated region
        $region17: #{bottleneck_forward.7} parent=11 // pred_check
          %p151 = pneg %p107
        $region18: #{bottleneck_forward.7} parent=11 // pred_check_branch
          %153 = sbr.rel (%p151) target = $region20
        $region19: #{bottleneck_forward.7} parent=11 // pred_region
          _
        $region20: #{bottleneck_forward.7} parent=11 // pred_fallthru
          _
      $region12: #{bottleneck_forward.7} parent=5 // pred_fallthru
        _
      %p154 = scmp.lt.s32.totalorder %s13, 2
      // Predicated region
      $region21: #{bottleneck_forward.7} parent=5 // pred_check
        %p155 = pneg %p154
      $region22: #{bottleneck_forward.7} parent=5 // pred_check_branch
        %157 = sbr.rel (%p155) target = $region24
      $region23: #{bottleneck_forward.7} parent=5 // pred_region
        // Predicated region
        $region25: #{bottleneck_forward.7} parent=23 // pred_check
          %p158 = pneg %p33
        $region26: #{bottleneck_forward.7} parent=23 // pred_check_branch
          %160 = sbr.rel (%p158) target = $region28
        $region27: #{bottleneck_forward.7} parent=23 // pred_region
          %s161 = smul.u32 32, %s13
          %p162 = scmp.lt.s32.totalorder %s161, 63
          %s163 = scalar_select %p162, %s161, 63
          %s164 = smul.addr %s163, 8
          %s165 = scalar_lea.vmem %s0, %s164
          %s166 = smul.u32 32, %s13
        $region28: #{bottleneck_forward.7} parent=23 // pred_fallthru
          _
        // Predicated region
        $region29: #{bottleneck_forward.7} parent=23 // pred_check
          %p167 = pneg %p80
        $region30: #{bottleneck_forward.7} parent=23 // pred_check_branch
          %169 = sbr.rel (%p167) target = $region32
        $region31: #{bottleneck_forward.7} parent=23 // pred_region
          %s170 = smul.u32 32, %s13
          %p171 = scmp.lt.s32.totalorder %s170, 63
          %s172 = scalar_select %p171, %s170, 63
          %s173 = smul.addr %s172, 8
          %s174 = scalar_lea.vmem %s2, %s173
          %s175 = smul.u32 32, %s13
        $region32: #{bottleneck_forward.7} parent=23 // pred_fallthru
          _
      $region24: #{bottleneck_forward.7} parent=5 // pred_fallthru
        _
      %p176 = scmp.le.s32.totalorder 1, %s13
      %p177 = scmp.lt.s32.totalorder %s13, 3
      %p178 = pnand %p176, %p177
      %p179 = pneg %p178
      // Predicated region
      $region33: #{bottleneck_forward.7} parent=5 // pred_check
        _
      $region34: #{bottleneck_forward.7} parent=5 // pred_check_branch
        %181 = sbr.rel (%p178) target = $region36
      $region35: #{bottleneck_forward.7} parent=5 // pred_region
        %s182 = ssub.s32 %s13, 1
        %s183 = smul.u32 32, %s18
        %p184 = scmp.lt.s32.totalorder %s183, 63
        %s185 = scalar_select %p184, %s183, 63
        %s186 = smul.addr %s185, 8
        %s187 = scalar_lea.vmem %s0, %s186
        %p188 = pneg %p39
        %p189 = pneg %p36
        %p190 = pneg %p60
        %p191 = pneg %p57
        %s192 = smul.u32 32, %s18
        %p193 = scmp.lt.s32.totalorder %s192, 63
        %s194 = scalar_select %p193, %s192, 63
        %s195 = smul.addr %s194, 8
        %s196 = scalar_lea.vmem %s2, %s195
        %p197 = pneg %p86
        %p198 = pneg %p83
        %p199 = pneg %p107
        %p200 = pneg %p104
        %p201 = pneg %p133
        %p202 = pneg %p130
        %s203 = sand.u32 %s120, 1
        %s204 = scalar_lea.sflag [#allocation3], %s203
        %s205 = sand.u32 %s120, 1
        %s206 = smul.addr %s205, 256
        %s207 = scalar_lea.vmem [#allocation2], %s206
        %s208 = smul.u32 32, %s18
        %p209 = scmp.lt.s32.totalorder %s208, 63
        %s210 = scalar_select %p209, %s208, 63
        %s211 = smul.addr %s210, 8
        %s212 = scalar_lea.vmem %s0, %s211
        %s213 = smul.u32 32, %s18
        %s214 = smul.u32 32, %s18
        %p215 = scmp.lt.s32.totalorder %s214, 63
        %s216 = scalar_select %p215, %s214, 63
        %s217 = smul.addr %s216, 8
        %s218 = scalar_lea.vmem %s2, %s217
        %s219 = smul.u32 32, %s18
        %s220 = smul.u32 32, %s18
        %v221 = vld [vmem:[%s212] sm:$0xff]
        %v222 = vld [vmem:[%s212 + $0x8] sm:$0xff]
        %v223 = vld [vmem:[%s212 + $0x10] sm:$0xff]
        %v224 = vld [vmem:[%s212 + $0x18] sm:$0xff]
        %v225 = vld [vmem:[%s212 + $0x20] sm:$0xff]
        %v226 = vld [vmem:[%s212 + $0x28] sm:$0xff]
        %v227 = vld [vmem:[%s212 + $0x30] sm:$0xff]
        %v228 = vld [vmem:[%s212 + $0x38] sm:$0xff]
        %v229 = vld [vmem:[%s212 + $0x40] sm:$0xff]
        %v230 = vld [vmem:[%s212 + $0x48] sm:$0xff]
        %v231 = vld [vmem:[%s212 + $0x50] sm:$0xff]
        %v232 = vld [vmem:[%s212 + $0x58] sm:$0xff]
        %v233 = vld [vmem:[%s212 + $0x60] sm:$0xff]
        %v234 = vld [vmem:[%s212 + $0x68] sm:$0xff]
        %v235 = vld [vmem:[%s212 + $0x70] sm:$0xff]
        %v236 = vld [vmem:[%s212 + $0x78] sm:$0xff]
        %v237 = vld [vmem:[%s212 + $0x80] sm:$0xff]
        %v238 = vld [vmem:[%s212 + $0x88] sm:$0xff]
        %v239 = vld [vmem:[%s212 + $0x90] sm:$0xff]
        %v240 = vld [vmem:[%s212 + $0x98] sm:$0xff]
        %v241 = vld [vmem:[%s212 + $0xa0] sm:$0xff]
        %v242 = vld [vmem:[%s212 + $0xa8] sm:$0xff]
        %v243 = vld [vmem:[%s212 + $0xb0] sm:$0xff]
        %v244 = vld [vmem:[%s212 + $0xb8] sm:$0xff]
        %v245 = vld [vmem:[%s212 + $0xc0] sm:$0xff]
        %v246 = vld [vmem:[%s212 + $0xc8] sm:$0xff]
        %v247 = vld [vmem:[%s212 + $0xd0] sm:$0xff]
        %v248 = vld [vmem:[%s212 + $0xd8] sm:$0xff]
        %v249 = vld [vmem:[%s212 + $0xe0] sm:$0xff]
        %v250 = vld [vmem:[%s212 + $0xe8] sm:$0xff]
        %v251 = vld [vmem:[%s212 + $0xf0] sm:$0xff]
        %v252 = vld [vmem:[%s212 + $0xf8] sm:$0xff]
        %v253 = vld [vmem:[%s1] sm:$0x1]
        %v254 = vlaneseq
        %v255 = vshrl.u32 %v254, 7
        %v256 = vsub.s32 0, %v255
        %v257 = vrot.slane %v253, %v256
        %v258 = vmul.f32 %v221, %v257
        %v259 = vmul.f32 %v222, %v257
        %v260 = vmul.f32 %v223, %v257
        %v261 = vmul.f32 %v224, %v257
        %v262 = vmul.f32 %v225, %v257
        %v263 = vmul.f32 %v226, %v257
        %v264 = vmul.f32 %v227, %v257
        %v265 = vmul.f32 %v228, %v257
        %v266 = vmul.f32 %v229, %v257
        %v267 = vmul.f32 %v230, %v257
        %v268 = vmul.f32 %v231, %v257
        %v269 = vmul.f32 %v232, %v257
        %v270 = vmul.f32 %v233, %v257
        %v271 = vmul.f32 %v234, %v257
        %v272 = vmul.f32 %v235, %v257
        %v273 = vmul.f32 %v236, %v257
        %v274 = vmul.f32 %v237, %v257
        %v275 = vmul.f32 %v238, %v257
        %v276 = vmul.f32 %v239, %v257
        %v277 = vmul.f32 %v240, %v257
        %v278 = vmul.f32 %v241, %v257
        %v279 = vmul.f32 %v242, %v257
        %v280 = vmul.f32 %v243, %v257
        %v281 = vmul.f32 %v244, %v257
        %v282 = vmul.f32 %v245, %v257
        %v283 = vmul.f32 %v246, %v257
        %v284 = vmul.f32 %v247, %v257
        %v285 = vmul.f32 %v248, %v257
        %v286 = vmul.f32 %v249, %v257
        %v287 = vmul.f32 %v250, %v257
        %v288 = vmul.f32 %v251, %v257
        %v289 = vmul.f32 %v252, %v257
        %v290 = vld [vmem:[%s1 + $0x1] sm:$0x1]
        %v291 = vlaneseq
        %v292 = vshrl.u32 %v291, 7
        %v293 = vsub.s32 0, %v292
        %v294 = vrot.slane %v290, %v293
        %v295 = vadd.f32 %v258, %v294
        %v296 = vadd.f32 %v259, %v294
        %v297 = vadd.f32 %v260, %v294
        %v298 = vadd.f32 %v261, %v294
        %v299 = vadd.f32 %v262, %v294
        %v300 = vadd.f32 %v263, %v294
        %v301 = vadd.f32 %v264, %v294
        %v302 = vadd.f32 %v265, %v294
        %v303 = vadd.f32 %v266, %v294
        %v304 = vadd.f32 %v267, %v294
        %v305 = vadd.f32 %v268, %v294
        %v306 = vadd.f32 %v269, %v294
        %v307 = vadd.f32 %v270, %v294
        %v308 = vadd.f32 %v271, %v294
        %v309 = vadd.f32 %v272, %v294
        %v310 = vadd.f32 %v273, %v294
        %v311 = vadd.f32 %v274, %v294
        %v312 = vadd.f32 %v275, %v294
        %v313 = vadd.f32 %v276, %v294
        %v314 = vadd.f32 %v277, %v294
        %v315 = vadd.f32 %v278, %v294
        %v316 = vadd.f32 %v279, %v294
        %v317 = vadd.f32 %v280, %v294
        %v318 = vadd.f32 %v281, %v294
        %v319 = vadd.f32 %v282, %v294
        %v320 = vadd.f32 %v283, %v294
        %v321 = vadd.f32 %v284, %v294
        %v322 = vadd.f32 %v285, %v294
        %v323 = vadd.f32 %v286, %v294
        %v324 = vadd.f32 %v287, %v294
        %v325 = vadd.f32 %v288, %v294
        %v326 = vadd.f32 %v289, %v294
        %v327 = vld [vmem:[%s218] sm:$0xff]
        %v328 = vld [vmem:[%s218 + $0x8] sm:$0xff]
        %v329 = vld [vmem:[%s218 + $0x10] sm:$0xff]
        %v330 = vld [vmem:[%s218 + $0x18] sm:$0xff]
        %v331 = vld [vmem:[%s218 + $0x20] sm:$0xff]
        %v332 = vld [vmem:[%s218 + $0x28] sm:$0xff]
        %v333 = vld [vmem:[%s218 + $0x30] sm:$0xff]
        %v334 = vld [vmem:[%s218 + $0x38] sm:$0xff]
        %v335 = vld [vmem:[%s218 + $0x40] sm:$0xff]
        %v336 = vld [vmem:[%s218 + $0x48] sm:$0xff]
        %v337 = vld [vmem:[%s218 + $0x50] sm:$0xff]
        %v338 = vld [vmem:[%s218 + $0x58] sm:$0xff]
        %v339 = vld [vmem:[%s218 + $0x60] sm:$0xff]
        %v340 = vld [vmem:[%s218 + $0x68] sm:$0xff]
        %v341 = vld [vmem:[%s218 + $0x70] sm:$0xff]
        %v342 = vld [vmem:[%s218 + $0x78] sm:$0xff]
        %v343 = vld [vmem:[%s218 + $0x80] sm:$0xff]
        %v344 = vld [vmem:[%s218 + $0x88] sm:$0xff]
        %v345 = vld [vmem:[%s218 + $0x90] sm:$0xff]
        %v346 = vld [vmem:[%s218 + $0x98] sm:$0xff]
        %v347 = vld [vmem:[%s218 + $0xa0] sm:$0xff]
        %v348 = vld [vmem:[%s218 + $0xa8] sm:$0xff]
        %v349 = vld [vmem:[%s218 + $0xb0] sm:$0xff]
        %v350 = vld [vmem:[%s218 + $0xb8] sm:$0xff]
        %v351 = vld [vmem:[%s218 + $0xc0] sm:$0xff]
        %v352 = vld [vmem:[%s218 + $0xc8] sm:$0xff]
        %v353 = vld [vmem:[%s218 + $0xd0] sm:$0xff]
        %v354 = vld [vmem:[%s218 + $0xd8] sm:$0xff]
        %v355 = vld [vmem:[%s218 + $0xe0] sm:$0xff]
        %v356 = vld [vmem:[%s218 + $0xe8] sm:$0xff]
        %v357 = vld [vmem:[%s218 + $0xf0] sm:$0xff]
        %v358 = vld [vmem:[%s218 + $0xf8] sm:$0xff]
        %v359 = vld [vmem:[%s3] sm:$0x1]
        %v360 = vlaneseq
        %v361 = vshrl.u32 %v360, 7
        %v362 = vsub.s32 0, %v361
        %v363 = vrot.slane %v359, %v362
        %v364 = vmul.f32 %v327, %v363
        %v365 = vmul.f32 %v328, %v363
        %v366 = vmul.f32 %v329, %v363
        %v367 = vmul.f32 %v330, %v363
        %v368 = vmul.f32 %v331, %v363
        %v369 = vmul.f32 %v332, %v363
        %v370 = vmul.f32 %v333, %v363
        %v371 = vmul.f32 %v334, %v363
        %v372 = vmul.f32 %v335, %v363
        %v373 = vmul.f32 %v336, %v363
        %v374 = vmul.f32 %v337, %v363
        %v375 = vmul.f32 %v338, %v363
        %v376 = vmul.f32 %v339, %v363
        %v377 = vmul.f32 %v340, %v363
        %v378 = vmul.f32 %v341, %v363
        %v379 = vmul.f32 %v342, %v363
        %v380 = vmul.f32 %v343, %v363
        %v381 = vmul.f32 %v344, %v363
        %v382 = vmul.f32 %v345, %v363
        %v383 = vmul.f32 %v346, %v363
        %v384 = vmul.f32 %v347, %v363
        %v385 = vmul.f32 %v348, %v363
        %v386 = vmul.f32 %v349, %v363
        %v387 = vmul.f32 %v350, %v363
        %v388 = vmul.f32 %v351, %v363
        %v389 = vmul.f32 %v352, %v363
        %v390 = vmul.f32 %v353, %v363
        %v391 = vmul.f32 %v354, %v363
        %v392 = vmul.f32 %v355, %v363
        %v393 = vmul.f32 %v356, %v363
        %v394 = vmul.f32 %v357, %v363
        %v395 = vmul.f32 %v358, %v363
        %v396 = vld [vmem:[%s3 + $0x1] sm:$0x1]
        %v397 = vlaneseq
        %v398 = vshrl.u32 %v397, 7
        %v399 = vsub.s32 0, %v398
        %v400 = vrot.slane %v396, %v399
        %v401 = vadd.f32 %v364, %v400
        %v402 = vadd.f32 %v365, %v400
        %v403 = vadd.f32 %v366, %v400
        %v404 = vadd.f32 %v367, %v400
        %v405 = vadd.f32 %v368, %v400
        %v406 = vadd.f32 %v369, %v400
        %v407 = vadd.f32 %v370, %v400
        %v408 = vadd.f32 %v371, %v400
        %v409 = vadd.f32 %v372, %v400
        %v410 = vadd.f32 %v373, %v400
        %v411 = vadd.f32 %v374, %v400
        %v412 = vadd.f32 %v375, %v400
        %v413 = vadd.f32 %v376, %v400
        %v414 = vadd.f32 %v377, %v400
        %v415 = vadd.f32 %v378, %v400
        %v416 = vadd.f32 %v379, %v400
        %v417 = vadd.f32 %v380, %v400
        %v418 = vadd.f32 %v381, %v400
        %v419 = vadd.f32 %v382, %v400
        %v420 = vadd.f32 %v383, %v400
        %v421 = vadd.f32 %v384, %v400
        %v422 = vadd.f32 %v385, %v400
        %v423 = vadd.f32 %v386, %v400
        %v424 = vadd.f32 %v387, %v400
        %v425 = vadd.f32 %v388, %v400
        %v426 = vadd.f32 %v389, %v400
        %v427 = vadd.f32 %v390, %v400
        %v428 = vadd.f32 %v391, %v400
        %v429 = vadd.f32 %v392, %v400
        %v430 = vadd.f32 %v393, %v400
        %v431 = vadd.f32 %v394, %v400
        %v432 = vadd.f32 %v395, %v400
        %v433 = vadd.f32 %v295, %v401
        %v434 = vadd.f32 %v296, %v402
        %v435 = vadd.f32 %v297, %v403
        %v436 = vadd.f32 %v298, %v404
        %v437 = vadd.f32 %v299, %v405
        %v438 = vadd.f32 %v300, %v406
        %v439 = vadd.f32 %v301, %v407
        %v440 = vadd.f32 %v302, %v408
        %v441 = vadd.f32 %v303, %v409
        %v442 = vadd.f32 %v304, %v410
        %v443 = vadd.f32 %v305, %v411
        %v444 = vadd.f32 %v306, %v412
        %v445 = vadd.f32 %v307, %v413
        %v446 = vadd.f32 %v308, %v414
        %v447 = vadd.f32 %v309, %v415
        %v448 = vadd.f32 %v310, %v416
        %v449 = vadd.f32 %v311, %v417
        %v450 = vadd.f32 %v312, %v418
        %v451 = vadd.f32 %v313, %v419
        %v452 = vadd.f32 %v314, %v420
        %v453 = vadd.f32 %v315, %v421
        %v454 = vadd.f32 %v316, %v422
        %v455 = vadd.f32 %v317, %v423
        %v456 = vadd.f32 %v318, %v424
        %v457 = vadd.f32 %v319, %v425
        %v458 = vadd.f32 %v320, %v426
        %v459 = vadd.f32 %v321, %v427
        %v460 = vadd.f32 %v322, %v428
        %v461 = vadd.f32 %v323, %v429
        %v462 = vadd.f32 %v324, %v430
        %v463 = vadd.f32 %v325, %v431
        %v464 = vadd.f32 %v326, %v432
        %v465 = vmax.f32 %v433, 0.0
        %v466 = vmax.f32 %v434, 0.0
        %v467 = vmax.f32 %v435, 0.0
        %v468 = vmax.f32 %v436, 0.0
        %v469 = vmax.f32 %v437, 0.0
        %v470 = vmax.f32 %v438, 0.0
        %v471 = vmax.f32 %v439, 0.0
        %v472 = vmax.f32 %v440, 0.0
        %v473 = vmax.f32 %v441, 0.0
        %v474 = vmax.f32 %v442, 0.0
        %v475 = vmax.f32 %v443, 0.0
        %v476 = vmax.f32 %v444, 0.0
        %v477 = vmax.f32 %v445, 0.0
        %v478 = vmax.f32 %v446, 0.0
        %v479 = vmax.f32 %v447, 0.0
        %v480 = vmax.f32 %v448, 0.0
        %v481 = vmax.f32 %v449, 0.0
        %v482 = vmax.f32 %v450, 0.0
        %v483 = vmax.f32 %v451, 0.0
        %v484 = vmax.f32 %v452, 0.0
        %v485 = vmax.f32 %v453, 0.0
        %v486 = vmax.f32 %v454, 0.0
        %v487 = vmax.f32 %v455, 0.0
        %v488 = vmax.f32 %v456, 0.0
        %v489 = vmax.f32 %v457, 0.0
        %v490 = vmax.f32 %v458, 0.0
        %v491 = vmax.f32 %v459, 0.0
        %v492 = vmax.f32 %v460, 0.0
        %v493 = vmax.f32 %v461, 0.0
        %v494 = vmax.f32 %v462, 0.0
        %v495 = vmax.f32 %v463, 0.0
        %v496 = vmax.f32 %v464, 0.0
        %vm497 = vcmask 130048
        %498 = vst.msk [vmem:[%s207] sm:$0xff] %vm497, %v465
        %499 = vst.msk [vmem:[%s207 + $0x8] sm:$0xff] %vm497, %v466
        %500 = vst.msk [vmem:[%s207 + $0x10] sm:$0xff] %vm497, %v467
        %501 = vst.msk [vmem:[%s207 + $0x18] sm:$0xff] %vm497, %v468
        %502 = vst.msk [vmem:[%s207 + $0x20] sm:$0xff] %vm497, %v469
        %503 = vst.msk [vmem:[%s207 + $0x28] sm:$0xff] %vm497, %v470
        %504 = vst.msk [vmem:[%s207 + $0x30] sm:$0xff] %vm497, %v471
        %505 = vst.msk [vmem:[%s207 + $0x38] sm:$0xff] %vm497, %v472
        %506 = vst.msk [vmem:[%s207 + $0x40] sm:$0xff] %vm497, %v473
        %507 = vst.msk [vmem:[%s207 + $0x48] sm:$0xff] %vm497, %v474
        %508 = vst.msk [vmem:[%s207 + $0x50] sm:$0xff] %vm497, %v475
        %509 = vst.msk [vmem:[%s207 + $0x58] sm:$0xff] %vm497, %v476
        %510 = vst.msk [vmem:[%s207 + $0x60] sm:$0xff] %vm497, %v477
        %511 = vst.msk [vmem:[%s207 + $0x68] sm:$0xff] %vm497, %v478
        %512 = vst.msk [vmem:[%s207 + $0x70] sm:$0xff] %vm497, %v479
        %513 = vst.msk [vmem:[%s207 + $0x78] sm:$0xff] %vm497, %v480
        %514 = vst.msk [vmem:[%s207 + $0x80] sm:$0xff] %vm497, %v481
        %515 = vst.msk [vmem:[%s207 + $0x88] sm:$0xff] %vm497, %v482
        %516 = vst.msk [vmem:[%s207 + $0x90] sm:$0xff] %vm497, %v483
        %517 = vst.msk [vmem:[%s207 + $0x98] sm:$0xff] %vm497, %v484
        %518 = vst.msk [vmem:[%s207 + $0xa0] sm:$0xff] %vm497, %v485
        %519 = vst.msk [vmem:[%s207 + $0xa8] sm:$0xff] %vm497, %v486
        %520 = vst.msk [vmem:[%s207 + $0xb0] sm:$0xff] %vm497, %v487
        %521 = vst.msk [vmem:[%s207 + $0xb8] sm:$0xff] %vm497, %v488
        %522 = vst.msk [vmem:[%s207 + $0xc0] sm:$0xff] %vm497, %v489
        %523 = vst.msk [vmem:[%s207 + $0xc8] sm:$0xff] %vm497, %v490
        %524 = vst.msk [vmem:[%s207 + $0xd0] sm:$0xff] %vm497, %v491
        %525 = vst.msk [vmem:[%s207 + $0xd8] sm:$0xff] %vm497, %v492
        %526 = vst.msk [vmem:[%s207 + $0xe0] sm:$0xff] %vm497, %v493
        %527 = vst.msk [vmem:[%s207 + $0xe8] sm:$0xff] %vm497, %v494
        %528 = vst.msk [vmem:[%s207 + $0xf0] sm:$0xff] %vm497, %v495
        %529 = vst.msk [vmem:[%s207 + $0xf8] sm:$0xff] %vm497, %v496
        %s530 = sand.u32 %s120, 1
        %s531 = scalar_lea.sflag [#allocation3], %s530
        %s532 = sand.u32 %s120, 1
        %s533 = smul.addr %s532, 256
        %s534 = scalar_lea.vmem [#allocation2], %s533
        // Predicated region
        $region37: #{bottleneck_forward.7} parent=35 // pred_check
          %p535 = pneg %p130
        $region38: #{bottleneck_forward.7} parent=35 // pred_check_branch
          %537 = sbr.rel (%p535) target = $region40
        $region39: #{bottleneck_forward.7} parent=35 // pred_region
          %s538 = smul.u32 32, %s18
          %s540 = ssub.s32 4096, 4096
          %541 = vsyncadd %s531, %s540
          %s542 = smul.addr %s538, 128
          %s543 = scalar_lea.hbm %s4, %s542
          %s544 = sshll.u32 %s534, 4
          %s545 = int_to_ptr.vmem [resolvable:$true] %s544
          %550 = dma.vmem_to_hbm [thread:$0]  %s545, 4096, %s543, %s531, 128, 128, 8
        $region40: #{bottleneck_forward.7} parent=35 // pred_fallthru
          _
      $region36: #{bottleneck_forward.7} parent=5 // pred_fallthru
        _
      %p551 = scmp.le.s32.totalorder 2, %s13
      // Predicated region
      $region41: #{bottleneck_forward.7} parent=5 // pred_check
        %p552 = pneg %p551
      $region42: #{bottleneck_forward.7} parent=5 // pred_check_branch
        %554 = sbr.rel (%p552) target = $region44
      $region43: #{bottleneck_forward.7} parent=5 // pred_region
        %s555 = ssub.s32 %s13, 2
        // Predicated region
        $region45: #{bottleneck_forward.7} parent=43 // pred_check
          %p556 = pneg %p136
        $region46: #{bottleneck_forward.7} parent=43 // pred_check_branch
          %558 = sbr.rel (%p556) target = $region48
        $region47: #{bottleneck_forward.7} parent=43 // pred_region
          %s559 = sand.u32 %s121, 1
          %s560 = scalar_lea.sflag [#allocation3], %s559
          %s561 = sand.u32 %s121, 1
          %s562 = smul.addr %s561, 256
          %s563 = scalar_lea.vmem [#allocation2], %s562
          %564 = dma.done %s560, 4096
        $region48: #{bottleneck_forward.7} parent=43 // pred_fallthru
          _
      $region44: #{bottleneck_forward.7} parent=5 // pred_fallthru
        _
    $region6: #{bottleneck_forward.7} parent=1 // loop_footer
      %s17 = sadd.s32 1, %s13
    $region7: #{bottleneck_forward.7} parent=1 // loop_footer_branch
      %12 = sbr.rel target = $region3
    $region8: #{bottleneck_forward.7} parent=1 // loop_exit
      _
    %565 = vsyncpa [#allocation3], 1
    %s566 = scalar_lea.sflag [#allocation3], 1
    %567 = vsyncpa %s566, 1

// kernel: bottleneck_forward.4
$region0: #{bottleneck_forward.4}
  #allocation0 [shape = 'u32[]', space=smem, size = 0x4, offset = 0x4, fixed_abs, tag = 'smem constant byte address 0x4 - core index']
  #allocation1 [shape = 'u32[144,128]{1,0:T(1,128)}', space=vmem, size = 0x12000, scoped, tag = 'internal scratch']
  %s0 = inlined_call_operand.vmem [shape: f32[512,4], index: 0, kind: input, shape index: {}]
  %s1 = inlined_call_operand.vmem [shape: bf16[4,4], index: 1, kind: input, shape index: {}]
  %s2 = inlined_call_operand.vmem [shape: f32[512,4], index: 2, kind: output, shape index: {0}]
  %s3 = inlined_call_operand.vmem [shape: f32[2,4], index: 3, kind: output, shape index: {1}]
  %4 = xla_tuple %s2, %s3
  %s5 = sld [smem:[#allocation0]]
  $region53: #{bottleneck_forward.4} parent=0
    _
  %s7 = ssub.s32 1, %s5
  %s8 = scalar_select 0, %s7, %s5
  loop: start=0, step=1, limit=4
  $region2: #{bottleneck_forward.4} parent=0 // loop_pre_header
    _
  $region3: #{bottleneck_forward.4} parent=0 // loop_header
    %s10 = sphi 0, %s14
    %p11 = scmp.ge.s32.totalorder %s10, 4
    %s20 = sphi 0, %s22
    %s23 = sphi 0, %s20
    %s24 = sphi 0, %s23
    %s40 = sphi 0, %s24
    %s44 = sphi 0, %s44
    %s46 = sphi 0, %s44
    %s47 = sphi 0, %s46
    %s61 = sphi 0, %s47
    %s67 = sphi 0, %s69
    %s70 = sphi 0, %s67
    %s71 = sphi 0, %s70
    %s87 = sphi 0, %s71
    %s91 = sphi 0, %s91
    %s93 = sphi 0, %s91
    %s94 = sphi 0, %s93
    %s108 = sphi 0, %s94
  $region4: #{bottleneck_forward.4} parent=0 // loop_header_branch
    %13 = sbr.rel (%p11) target = $region8
  $region5: #{bottleneck_forward.4} parent=0 // loop_body
    %s15 = ssub.s32 %s10, 1
    %s16 = ssub.s32 %s10, 2
    %s17 = sadd.s32 %s10, 1
    %s18 = ssub.s32 %s10, %s17
    %p19 = scmp.eq.s32.totalorder %s18, 0
    %s21 = sadd.s32 %s20, 1
    %s22 = scalar_select %p19, %s20, %s21
    %p25 = pneg %p19
    %p26 = scmp.eq.s32.totalorder %s10, 1
    %p27 = por %p25, %p26
    %p28 = scmp.ne.s32.totalorder %s20, %s23
    %p29 = scmp.eq.s32.totalorder %s10, 0
    %p30 = por %p28, %p29
    %p31 = scmp.ne.s32.totalorder %s20, %s23
    %p32 = scmp.eq.s32.totalorder %s15, 1
    %p33 = por %p31, %p32
    %p34 = scmp.ne.s32.totalorder %s23, %s24
    %p35 = scmp.eq.s32.totalorder %s15, 0
    %p36 = por %p34, %p35
    %p37 = scmp.ne.s32.totalorder %s23, %s24
    %p38 = scmp.eq.s32.totalorder %s16, 1
    %p39 = por %p37, %p38
    %p41 = scmp.ne.s32.totalorder %s24, %s40
    %p42 = scmp.eq.s32.totalorder %s16, 0
    %p43 = por %p41, %p42
    %s45 = sadd.s32 %s44, 1
    %p48 = scmp.eq.s32.totalorder %s10, 1
    %p49 = scmp.ne.s32.totalorder %s44, %s46
    %p50 = scmp.eq.s32.totalorder %s10, 0
    %p51 = por %p49, %p50
    %p52 = scmp.ne.s32.totalorder %s44, %s46
    %p53 = scmp.eq.s32.totalorder %s15, 1
    %p54 = por %p52, %p53
    %p55 = scmp.ne.s32.totalorder %s46, %s47
    %p56 = scmp.eq.s32.totalorder %s15, 0
    %p57 = por %p55, %p56
    %p58 = scmp.ne.s32.totalorder %s46, %s47
    %p59 = scmp.eq.s32.totalorder %s16, 1
    %p60 = por %p58, %p59
    %p62 = scmp.ne.s32.totalorder %s47, %s61
    %p63 = scmp.eq.s32.totalorder %s16, 0
    %p64 = por %p62, %p63
    %s65 = ssub.s32 %s10, %s17
    %p66 = scmp.eq.s32.totalorder %s65, 0
    %s68 = sadd.s32 %s67, 1
    %s69 = scalar_select %p66, %s67, %s68
    %p72 = pneg %p66
    %p73 = scmp.eq.s32.totalorder %s10, 1
    %p74 = por %p72, %p73
    %p75 = scmp.ne.s32.totalorder %s67, %s70
    %p76 = scmp.eq.s32.totalorder %s10, 0
    %p77 = por %p75, %p76
    %p78 = scmp.ne.s32.totalorder %s67, %s70
    %p79 = scmp.eq.s32.totalorder %s15, 1
    %p80 = por %p78, %p79
    %p81 = scmp.ne.s32.totalorder %s70, %s71
    %p82 = scmp.eq.s32.totalorder %s15, 0
    %p83 = por %p81, %p82
    %p84 = scmp.ne.s32.totalorder %s70, %s71
    %p85 = scmp.eq.s32.totalorder %s16, 1
    %p86 = por %p84, %p85
    %p88 = scmp.ne.s32.totalorder %s71, %s87
    %p89 = scmp.eq.s32.totalorder %s16, 0
    %p90 = por %p88, %p89
    %s92 = sadd.s32 %s91, 1
    %p95 = scmp.eq.s32.totalorder %s10, 1
    %p96 = scmp.ne.s32.totalorder %s91, %s93
    %p97 = scmp.eq.s32.totalorder %s10, 0
    %p98 = por %p96, %p97
    %p99 = scmp.ne.s32.totalorder %s91, %s93
    %p100 = scmp.eq.s32.totalorder %s15, 1
    %p101 = por %p99, %p100
    %p102 = scmp.ne.s32.totalorder %s93, %s94
    %p103 = scmp.eq.s32.totalorder %s15, 0
    %p104 = por %p102, %p103
    %p105 = scmp.ne.s32.totalorder %s93, %s94
    %p106 = scmp.eq.s32.totalorder %s16, 1
    %p107 = por %p105, %p106
    %p109 = scmp.ne.s32.totalorder %s94, %s108
    %p110 = scmp.eq.s32.totalorder %s16, 0
    %p111 = por %p109, %p110
    %p112 = scmp.le.s32.totalorder 1, %s10
    %p113 = scmp.lt.s32.totalorder %s10, 3
    %p114 = pnand %p112, %p113
    %p115 = pneg %p114
    // Predicated region
    $region9: #{bottleneck_forward.4} parent=5 // pred_check
      _
    $region10: #{bottleneck_forward.4} parent=5 // pred_check_branch
      %117 = sbr.rel (%p114) target = $region12
    $region11: #{bottleneck_forward.4} parent=5 // pred_region
      %s118 = ssub.s32 %s10, 1
      // Predicated region
      $region13: #{bottleneck_forward.4} parent=11 // pred_check
        %p119 = pneg %p57
      $region14: #{bottleneck_forward.4} parent=11 // pred_check_branch
        %121 = sbr.rel (%p119) target = $region16
      $region15: #{bottleneck_forward.4} parent=11 // pred_region
        _
      $region16: #{bottleneck_forward.4} parent=11 // pred_fallthru
        _
    $region12: #{bottleneck_forward.4} parent=5 // pred_fallthru
      _
    %p122 = scmp.lt.s32.totalorder %s10, 2
    // Predicated region
    $region17: #{bottleneck_forward.4} parent=5 // pred_check
      %p123 = pneg %p122
    $region18: #{bottleneck_forward.4} parent=5 // pred_check_branch
      %125 = sbr.rel (%p123) target = $region20
    $region19: #{bottleneck_forward.4} parent=5 // pred_region
      // Predicated region
      $region21: #{bottleneck_forward.4} parent=19 // pred_check
        %p126 = pneg %p30
      $region22: #{bottleneck_forward.4} parent=19 // pred_check_branch
        %128 = sbr.rel (%p126) target = $region24
      $region23: #{bottleneck_forward.4} parent=19 // pred_region
        %s129 = smul.u32 32, %s10
        %p130 = scmp.lt.s32.totalorder %s129, 63
        %s131 = scalar_select %p130, %s129, 63
        %s132 = smul.addr %s131, 8
        %s133 = scalar_lea.vmem %s0, %s132
        %s134 = smul.u32 32, %s10
      $region24: #{bottleneck_forward.4} parent=19 // pred_fallthru
        _
    $region20: #{bottleneck_forward.4} parent=5 // pred_fallthru
      _
    %p135 = scmp.le.s32.totalorder 1, %s10
    %p136 = scmp.lt.s32.totalorder %s10, 3
    %p137 = pnand %p135, %p136
    %p138 = pneg %p137
    // Predicated region
    $region25: #{bottleneck_forward.4} parent=5 // pred_check
      _
    $region26: #{bottleneck_forward.4} parent=5 // pred_check_branch
      %140 = sbr.rel (%p137) target = $region28
    $region27: #{bottleneck_forward.4} parent=5 // pred_region
      %s141 = ssub.s32 %s10, 1
      %s142 = smul.u32 32, %s15
      %p143 = scmp.lt.s32.totalorder %s142, 63
      %s144 = scalar_select %p143, %s142, 63
      %s145 = smul.addr %s144, 8
      %s146 = scalar_lea.vmem %s0, %s145
      %p147 = pneg %p36
      %p148 = pneg %p33
      %p149 = pneg %p57
      %p150 = pneg %p54
      %p151 = pneg %p83
      %p152 = pneg %p80
      %s153 = smul.u32 32, %s15
      %p154 = scmp.lt.s32.totalorder %s153, 63
      %s155 = scalar_select %p154, %s153, 63
      %s156 = smul.addr %s155, 8
      %s157 = scalar_lea.vmem %s2, %s156
      %p158 = pneg %p104
      %p159 = pneg %p101
      %s160 = smul.u32 32, %s15
      %p161 = scmp.lt.s32.totalorder %s160, 63
      %s162 = scalar_select %p161, %s160, 63
      %s163 = smul.addr %s162, 8
      %s164 = scalar_lea.vmem %s0, %s163
      %s165 = smul.u32 32, %s15
      %s166 = smul.u32 32, %s15
      %p167 = scmp.lt.s32.totalorder %s166, 63
      %s168 = scalar_select %p167, %s166, 63
      %s169 = smul.addr %s168, 8
      %s170 = scalar_lea.vmem %s2, %s169
      %s171 = smul.u32 32, %s15
      %p173 = scmp.eq.s32.totalorder %s15, 0
      // Predicated region
      $region29: #{bottleneck_forward.4} parent=27 // pred_check
        %p174 = pneg %p173
      $region30: #{bottleneck_forward.4} parent=27 // pred_check_branch
        %176 = sbr.rel (%p174) target = $region32
      $region31: #{bottleneck_forward.4} parent=27 // pred_region
        %vm177 = vcmask 25600
        %178 = vst.msk [vmem:[%s3] sm:$0x3] %vm177, 0.0
      $region32: #{bottleneck_forward.4} parent=27 // pred_fallthru
        _
      %v179 = vld [vmem:[%s164] sm:$0xff]
      %v180 = vld [vmem:[%s164 + $0x8] sm:$0xff]
      %v181 = vld [vmem:[%s164 + $0x10] sm:$0xff]
      %v182 = vld [vmem:[%s164 + $0x18] sm:$0xff]
      %v183 = vld [vmem:[%s164 + $0x20] sm:$0xff]
      %v184 = vld [vmem:[%s164 + $0x28] sm:$0xff]
      %v185 = vld [vmem:[%s164 + $0x30] sm:$0xff]
      %v186 = vld [vmem:[%s164 + $0x38] sm:$0xff]
      %v187 = vld [vmem:[%s164 + $0x40] sm:$0xff]
      %v188 = vld [vmem:[%s164 + $0x48] sm:$0xff]
      %v189 = vld [vmem:[%s164 + $0x50] sm:$0xff]
      %v190 = vld [vmem:[%s164 + $0x58] sm:$0xff]
      %v191 = vld [vmem:[%s164 + $0x60] sm:$0xff]
      %v192 = vld [vmem:[%s164 + $0x68] sm:$0xff]
      %v193 = vld [vmem:[%s164 + $0x70] sm:$0xff]
      %v194 = vld [vmem:[%s164 + $0x78] sm:$0xff]
      %v195 = vld [vmem:[%s164 + $0x80] sm:$0xff]
      %v196 = vld [vmem:[%s164 + $0x88] sm:$0xff]
      %v197 = vld [vmem:[%s164 + $0x90] sm:$0xff]
      %v198 = vld [vmem:[%s164 + $0x98] sm:$0xff]
      %v199 = vld [vmem:[%s164 + $0xa0] sm:$0xff]
      %v200 = vld [vmem:[%s164 + $0xa8] sm:$0xff]
      %v201 = vld [vmem:[%s164 + $0xb0] sm:$0xff]
      %v202 = vld [vmem:[%s164 + $0xb8] sm:$0xff]
      %v203 = vld [vmem:[%s164 + $0xc0] sm:$0xff]
      %v204 = vld [vmem:[%s164 + $0xc8] sm:$0xff]
      %v205 = vld [vmem:[%s164 + $0xd0] sm:$0xff]
      %v206 = vld [vmem:[%s164 + $0xd8] sm:$0xff]
      %v207 = vld [vmem:[%s164 + $0xe0] sm:$0xff]
      %v208 = vld [vmem:[%s164 + $0xe8] sm:$0xff]
      %v209 = vld [vmem:[%s164 + $0xf0] sm:$0xff]
      %v210 = vld [vmem:[%s164 + $0xf8] sm:$0xff]
      %v211 = vpack.c.bf16 %v180, %v179
      %v212 = vpack.c.bf16 %v182, %v181
      %v213 = vpack.c.bf16 %v184, %v183
      %v214 = vpack.c.bf16 %v186, %v185
      %v215 = vpack.c.bf16 %v188, %v187
      %v216 = vpack.c.bf16 %v190, %v189
      %v217 = vpack.c.bf16 %v192, %v191
      %v218 = vpack.c.bf16 %v194, %v193
      %v219 = vpack.c.bf16 %v196, %v195
      %v220 = vpack.c.bf16 %v198, %v197
      %v221 = vpack.c.bf16 %v200, %v199
      %v222 = vpack.c.bf16 %v202, %v201
      %v223 = vpack.c.bf16 %v204, %v203
      %v224 = vpack.c.bf16 %v206, %v205
      %v225 = vpack.c.bf16 %v208, %v207
      %v226 = vpack.c.bf16 %v210, %v209
      %v227 = vld [vmem:[%s1] sm:$0x3]
      %vm228 = vcmask 31744
      %v230 = vsel %vm228, %v211, 0
      %v233 = vsel %vm228, %v212, 0
      %v236 = vsel %vm228, %v213, 0
      %v239 = vsel %vm228, %v214, 0
      %v242 = vsel %vm228, %v215, 0
      %v245 = vsel %vm228, %v216, 0
      %v248 = vsel %vm228, %v217, 0
      %v251 = vsel %vm228, %v218, 0
      %v254 = vsel %vm228, %v219, 0
      %v257 = vsel %vm228, %v220, 0
      %v260 = vsel %vm228, %v221, 0
      %v263 = vsel %vm228, %v222, 0
      %v266 = vsel %vm228, %v223, 0
      %v269 = vsel %vm228, %v224, 0
      %v272 = vsel %vm228, %v225, 0
      %v275 = vsel %vm228, %v226, 0
      %vm277 = vcmask 1041408
      %v279 = vsel %vm277, %v227, 0
      %281 = vmatprep.subr.bf16.mxu0 0
      %282 = vmatpush1.bf16.msra.mxu0 %v279
      %283 = vmatprep.subr.bf16.mxu0 0
      %284 = vmatpush1.bf16.msra.mxu0 0
      %285 = vmatprep.subr.bf16.mxu0 0
      %286 = vmatpush1.bf16.msra.mxu0 0
      %287 = vmatprep.subr.bf16.mxu0 0
      %288 = vmatpush1.bf16.msra.mxu0 0
      %289 = vmatprep.subr.bf16.mxu0 0
      %290 = vmatpush1.bf16.msra.mxu0 0
      %291 = vmatprep.subr.bf16.mxu0 0
      %292 = vmatpush1.bf16.msra.mxu0 0
      %293 = vmatprep.subr.bf16.mxu0 0
      %294 = vmatpush1.bf16.msra.mxu0 0
      %295 = vmatprep.subr.bf16.mxu0 0
      %296 = vmatpush1.bf16.msra.mxu0 0
      %297 = vmatprep.subr.bf16.mxu0 0
      %298 = vmatpush1.bf16.msra.mxu0 0
      %299 = vmatprep.subr.bf16.mxu0 0
      %300 = vmatpush1.bf16.msra.mxu0 0
      %301 = vmatprep.subr.bf16.mxu0 0
      %302 = vmatpush1.bf16.msra.mxu0 0
      %303 = vmatprep.subr.bf16.mxu0 0
      %304 = vmatpush1.bf16.msra.mxu0 0
      %305 = vmatprep.subr.bf16.mxu0 0
      %306 = vmatpush1.bf16.msra.mxu0 0
      %307 = vmatprep.subr.bf16.mxu0 0
      %308 = vmatpush1.bf16.msra.mxu0 0
      %309 = vmatprep.subr.bf16.mxu0 0
      %310 = vmatpush1.bf16.msra.mxu0 0
      %311 = vmatprep.subr.bf16.mxu0 0
      %312 = vmatpush1.bf16.msra.mxu0 0
      %313 = vmatprep.mubr.bf16.mxu0 0
      %314 = vmatmul.mubr.bf16.gmra.mrb[0].mxu0 %v230
      %v315 = vpop.f32.mrb[0].mxu0
      %v316 = vadd.f32 0.0, %v315
      %v317 = vpop.f32.mrb[0].mxu0
      %v318 = vpop.f32.mrb[0].mxu0
      %v319 = vadd.f32 0.0, %v318
      %v320 = vpop.f32.mrb[0].mxu0
      %321 = vmatprep.mubr.bf16.mxu0 0
      %322 = vmatmul.mubr.bf16.gmra.mrb[0].mxu0 %v233
      %v323 = vpop.f32.mrb[0].mxu0
      %v324 = vadd.f32 0.0, %v323
      %v325 = vpop.f32.mrb[0].mxu0
      %v326 = vpop.f32.mrb[0].mxu0
      %v327 = vadd.f32 0.0, %v326
      %v328 = vpop.f32.mrb[0].mxu0
      %329 = vmatprep.mubr.bf16.mxu0 0
      %330 = vmatmul.mubr.bf16.gmra.mrb[0].mxu0 %v236
      %v331 = vpop.f32.mrb[0].mxu0
      %v332 = vadd.f32 0.0, %v331
      %v333 = vpop.f32.mrb[0].mxu0
      %v334 = vpop.f32.mrb[0].mxu0
      %v335 = vadd.f32 0.0, %v334
      %v336 = vpop.f32.mrb[0].mxu0
      %337 = vmatprep.mubr.bf16.mxu0 0
      %338 = vmatmul.mubr.bf16.gmra.mrb[0].mxu0 %v239
      %v339 = vpop.f32.mrb[0].mxu0
      %v340 = vadd.f32 0.0, %v339
      %v341 = vpop.f32.mrb[0].mxu0
      %v342 = vpop.f32.mrb[0].mxu0
      %v343 = vadd.f32 0.0, %v342
      %v344 = vpop.f32.mrb[0].mxu0
      %345 = vmatprep.mubr.bf16.mxu0 0
      %346 = vmatmul.mubr.bf16.gmra.mrb[0].mxu0 %v242
      %v347 = vpop.f32.mrb[0].mxu0
      %v348 = vadd.f32 0.0, %v347
      %v349 = vpop.f32.mrb[0].mxu0
      %v350 = vpop.f32.mrb[0].mxu0
      %v351 = vadd.f32 0.0, %v350
      %v352 = vpop.f32.mrb[0].mxu0
      %353 = vmatprep.mubr.bf16.mxu0 0
      %354 = vmatmul.mubr.bf16.gmra.mrb[0].mxu0 %v245
      %v355 = vpop.f32.mrb[0].mxu0
      %v356 = vadd.f32 0.0, %v355
      %v357 = vpop.f32.mrb[0].mxu0
      %v358 = vpop.f32.mrb[0].mxu0
      %v359 = vadd.f32 0.0, %v358
      %v360 = vpop.f32.mrb[0].mxu0
      %361 = vmatprep.mubr.bf16.mxu0 0
      %362 = vmatmul.mubr.bf16.gmra.mrb[0].mxu0 %v248
      %v363 = vpop.f32.mrb[0].mxu0
      %v364 = vadd.f32 0.0, %v363
      %v365 = vpop.f32.mrb[0].mxu0
      %v366 = vpop.f32.mrb[0].mxu0
      %v367 = vadd.f32 0.0, %v366
      %v368 = vpop.f32.mrb[0].mxu0
      %369 = vmatprep.mubr.bf16.mxu0 0
      %370 = vmatmul.mubr.bf16.gmra.mrb[0].mxu0 %v251
      %v371 = vpop.f32.mrb[0].mxu0
      %v372 = vadd.f32 0.0, %v371
      %v373 = vpop.f32.mrb[0].mxu0
      %v374 = vpop.f32.mrb[0].mxu0
      %v375 = vadd.f32 0.0, %v374
      %v376 = vpop.f32.mrb[0].mxu0
      %377 = vmatprep.mubr.bf16.mxu0 0
      %378 = vmatmul.mubr.bf16.gmra.mrb[0].mxu0 %v254
      %v379 = vpop.f32.mrb[0].mxu0
      %v380 = vadd.f32 0.0, %v379
      %v381 = vpop.f32.mrb[0].mxu0
      %v382 = vpop.f32.mrb[0].mxu0
      %v383 = vadd.f32 0.0, %v382
      %v384 = vpop.f32.mrb[0].mxu0
      %385 = vmatprep.mubr.bf16.mxu0 0
      %386 = vmatmul.mubr.bf16.gmra.mrb[0].mxu0 %v257
      %v387 = vpop.f32.mrb[0].mxu0
      %v388 = vadd.f32 0.0, %v387
      %v389 = vpop.f32.mrb[0].mxu0
      %v390 = vpop.f32.mrb[0].mxu0
      %v391 = vadd.f32 0.0, %v390
      %v392 = vpop.f32.mrb[0].mxu0
      %393 = vmatprep.mubr.bf16.mxu0 0
      %394 = vmatmul.mubr.bf16.gmra.mrb[0].mxu0 %v260
      %v395 = vpop.f32.mrb[0].mxu0
      %v396 = vadd.f32 0.0, %v395
      %v397 = vpop.f32.mrb[0].mxu0
      %v398 = vpop.f32.mrb[0].mxu0
      %v399 = vadd.f32 0.0, %v398
      %v400 = vpop.f32.mrb[0].mxu0
      %401 = vmatprep.mubr.bf16.mxu0 0
      %402 = vmatmul.mubr.bf16.gmra.mrb[0].mxu0 %v263
      %v403 = vpop.f32.mrb[0].mxu0
      %v404 = vadd.f32 0.0, %v403
      %v405 = vpop.f32.mrb[0].mxu0
      %v406 = vpop.f32.mrb[0].mxu0
      %v407 = vadd.f32 0.0, %v406
      %v408 = vpop.f32.mrb[0].mxu0
      %409 = vmatprep.mubr.bf16.mxu0 0
      %410 = vmatmul.mubr.bf16.gmra.mrb[0].mxu0 %v266
      %v411 = vpop.f32.mrb[0].mxu0
      %v412 = vadd.f32 0.0, %v411
      %v413 = vpop.f32.mrb[0].mxu0
      %v414 = vpop.f32.mrb[0].mxu0
      %v415 = vadd.f32 0.0, %v414
      %v416 = vpop.f32.mrb[0].mxu0
      %417 = vmatprep.mubr.bf16.mxu0 0
      %418 = vmatmul.mubr.bf16.gmra.mrb[0].mxu0 %v269
      %v419 = vpop.f32.mrb[0].mxu0
      %v420 = vadd.f32 0.0, %v419
      %v421 = vpop.f32.mrb[0].mxu0
      %v422 = vpop.f32.mrb[0].mxu0
      %v423 = vadd.f32 0.0, %v422
      %v424 = vpop.f32.mrb[0].mxu0
      %425 = vmatprep.mubr.bf16.mxu0 0
      %426 = vmatmul.mubr.bf16.gmra.mrb[0].mxu0 %v272
      %v427 = vpop.f32.mrb[0].mxu0
      %v428 = vadd.f32 0.0, %v427
      %v429 = vpop.f32.mrb[0].mxu0
      %v430 = vpop.f32.mrb[0].mxu0
      %v431 = vadd.f32 0.0, %v430
      %v432 = vpop.f32.mrb[0].mxu0
      %433 = vmatprep.mubr.bf16.mxu0 0
      %434 = vmatmul.mubr.bf16.gmra.mrb[0].mxu0 %v275
      %v435 = vpop.f32.mrb[0].mxu0
      %v436 = vadd.f32 0.0, %v435
      %v437 = vpop.f32.mrb[0].mxu0
      %v438 = vpop.f32.mrb[0].mxu0
      %v439 = vadd.f32 0.0, %v438
      %v440 = vpop.f32.mrb[0].mxu0
      %441 = vdwg.mxu0
      %442 = vst.msk [vmem:[%s170] sm:$0xff] %vm228, %v316
      %443 = vst.msk [vmem:[%s170 + $0x8] sm:$0xff] %vm228, %v319
      %444 = vst.msk [vmem:[%s170 + $0x10] sm:$0xff] %vm228, %v324
      %445 = vst.msk [vmem:[%s170 + $0x18] sm:$0xff] %vm228, %v327
      %446 = vst.msk [vmem:[%s170 + $0x20] sm:$0xff] %vm228, %v332
      %447 = vst.msk [vmem:[%s170 + $0x28] sm:$0xff] %vm228, %v335
      %448 = vst.msk [vmem:[%s170 + $0x30] sm:$0xff] %vm228, %v340
      %449 = vst.msk [vmem:[%s170 + $0x38] sm:$0xff] %vm228, %v343
      %450 = vst.msk [vmem:[%s170 + $0x40] sm:$0xff] %vm228, %v348
      %451 = vst.msk [vmem:[%s170 + $0x48] sm:$0xff] %vm228, %v351
      %452 = vst.msk [vmem:[%s170 + $0x50] sm:$0xff] %vm228, %v356
      %453 = vst.msk [vmem:[%s170 + $0x58] sm:$0xff] %vm228, %v359
      %454 = vst.msk [vmem:[%s170 + $0x60] sm:$0xff] %vm228, %v364
      %455 = vst.msk [vmem:[%s170 + $0x68] sm:$0xff] %vm228, %v367
      %456 = vst.msk [vmem:[%s170 + $0x70] sm:$0xff] %vm228, %v372
      %457 = vst.msk [vmem:[%s170 + $0x78] sm:$0xff] %vm228, %v375
      %458 = vst.msk [vmem:[%s170 + $0x80] sm:$0xff] %vm228, %v380
      %459 = vst.msk [vmem:[%s170 + $0x88] sm:$0xff] %vm228, %v383
      %460 = vst.msk [vmem:[%s170 + $0x90] sm:$0xff] %vm228, %v388
      %461 = vst.msk [vmem:[%s170 + $0x98] sm:$0xff] %vm228, %v391
      %462 = vst.msk [vmem:[%s170 + $0xa0] sm:$0xff] %vm228, %v396
      %463 = vst.msk [vmem:[%s170 + $0xa8] sm:$0xff] %vm228, %v399
      %464 = vst.msk [vmem:[%s170 + $0xb0] sm:$0xff] %vm228, %v404
      %465 = vst.msk [vmem:[%s170 + $0xb8] sm:$0xff] %vm228, %v407
      %466 = vst.msk [vmem:[%s170 + $0xc0] sm:$0xff] %vm228, %v412
      %467 = vst.msk [vmem:[%s170 + $0xc8] sm:$0xff] %vm228, %v415
      %468 = vst.msk [vmem:[%s170 + $0xd0] sm:$0xff] %vm228, %v420
      %469 = vst.msk [vmem:[%s170 + $0xd8] sm:$0xff] %vm228, %v423
      %470 = vst.msk [vmem:[%s170 + $0xe0] sm:$0xff] %vm228, %v428
      %471 = vst.msk [vmem:[%s170 + $0xe8] sm:$0xff] %vm228, %v431
      %472 = vst.msk [vmem:[%s170 + $0xf0] sm:$0xff] %vm228, %v436
      %473 = vst.msk [vmem:[%s170 + $0xf8] sm:$0xff] %vm228, %v439
      %v474 = vld [vmem:[%s3] sm:$0x3]
      %v475 = vsel %vm228, %v316, 0.0
      %v476 = vsel %vm228, %v319, 0.0
      %v477 = vadd.f32 %v475, %v476
      %v478 = vsel %vm228, %v324, 0.0
      %v479 = vadd.f32 %v477, %v478
      %v480 = vsel %vm228, %v327, 0.0
      %v481 = vadd.f32 %v479, %v480
      %v482 = vsel %vm228, %v332, 0.0
      %v483 = vadd.f32 %v481, %v482
      %v484 = vsel %vm228, %v335, 0.0
      %v485 = vadd.f32 %v483, %v484
      %v486 = vsel %vm228, %v340, 0.0
      %v487 = vadd.f32 %v485, %v486
      %v488 = vsel %vm228, %v343, 0.0
      %v489 = vadd.f32 %v487, %v488
      %v490 = vsel %vm228, %v348, 0.0
      %v491 = vadd.f32 %v489, %v490
      %v492 = vsel %vm228, %v351, 0.0
      %v493 = vadd.f32 %v491, %v492
      %v494 = vsel %vm228, %v356, 0.0
      %v495 = vadd.f32 %v493, %v494
      %v496 = vsel %vm228, %v359, 0.0
      %v497 = vadd.f32 %v495, %v496
      %v498 = vsel %vm228, %v364, 0.0
      %v499 = vadd.f32 %v497, %v498
      %v500 = vsel %vm228, %v367, 0.0
      %v501 = vadd.f32 %v499, %v500
      %v502 = vsel %vm228, %v372, 0.0
      %v503 = vadd.f32 %v501, %v502
      %v504 = vsel %vm228, %v375, 0.0
      %v505 = vadd.f32 %v503, %v504
      %v506 = vsel %vm228, %v380, 0.0
      %v507 = vadd.f32 %v505, %v506
      %v508 = vsel %vm228, %v383, 0.0
      %v509 = vadd.f32 %v507, %v508
      %v510 = vsel %vm228, %v388, 0.0
      %v511 = vadd.f32 %v509, %v510
      %v512 = vsel %vm228, %v391, 0.0
      %v513 = vadd.f32 %v511, %v512
      %v514 = vsel %vm228, %v396, 0.0
      %v515 = vadd.f32 %v513, %v514
      %v516 = vsel %vm228, %v399, 0.0
      %v517 = vadd.f32 %v515, %v516
      %v518 = vsel %vm228, %v404, 0.0
      %v519 = vadd.f32 %v517, %v518
      %v520 = vsel %vm228, %v407, 0.0
      %v521 = vadd.f32 %v519, %v520
      %v522 = vsel %vm228, %v412, 0.0
      %v523 = vadd.f32 %v521, %v522
      %v524 = vsel %vm228, %v415, 0.0
      %v525 = vadd.f32 %v523, %v524
      %v526 = vsel %vm228, %v420, 0.0
      %v527 = vadd.f32 %v525, %v526
      %v528 = vsel %vm228, %v423, 0.0
      %v529 = vadd.f32 %v527, %v528
      %v530 = vsel %vm228, %v428, 0.0
      %v531 = vadd.f32 %v529, %v530
      %v532 = vsel %vm228, %v431, 0.0
      %v533 = vadd.f32 %v531, %v532
      %v534 = vsel %vm228, %v436, 0.0
      %v535 = vadd.f32 %v533, %v534
      %v536 = vsel %vm228, %v439, 0.0
      %v537 = vadd.f32 %v535, %v536
      %v538 = vrot.slane %v537, 4
      %v539 = vadd.f32 %v537, %v538
      %v540 = vrot.slane %v539, 2
      %v541 = vadd.f32 %v539, %v540
      %v542 = vrot.slane %v541, 1
      %v543 = vadd.f32 %v541, %v542
      %v544 = vmul.f32 %v316, %v316
      %v545 = vmul.f32 %v319, %v319
      %v546 = vmul.f32 %v324, %v324
      %v547 = vmul.f32 %v327, %v327
      %v548 = vmul.f32 %v332, %v332
      %v549 = vmul.f32 %v335, %v335
      %v550 = vmul.f32 %v340, %v340
      %v551 = vmul.f32 %v343, %v343
      %v552 = vmul.f32 %v348, %v348
      %v553 = vmul.f32 %v351, %v351
      %v554 = vmul.f32 %v356, %v356
      %v555 = vmul.f32 %v359, %v359
      %v556 = vmul.f32 %v364, %v364
      %v557 = vmul.f32 %v367, %v367
      %v558 = vmul.f32 %v372, %v372
      %v559 = vmul.f32 %v375, %v375
      %v560 = vmul.f32 %v380, %v380
      %v561 = vmul.f32 %v383, %v383
      %v562 = vmul.f32 %v388, %v388
      %v563 = vmul.f32 %v391, %v391
      %v564 = vmul.f32 %v396, %v396
      %v565 = vmul.f32 %v399, %v399
      %v566 = vmul.f32 %v404, %v404
      %v567 = vmul.f32 %v407, %v407
      %v568 = vmul.f32 %v412, %v412
      %v569 = vmul.f32 %v415, %v415
      %v570 = vmul.f32 %v420, %v420
      %v571 = vmul.f32 %v423, %v423
      %v572 = vmul.f32 %v428, %v428
      %v573 = vmul.f32 %v431, %v431
      %v574 = vmul.f32 %v436, %v436
      %v575 = vmul.f32 %v439, %v439
      %v576 = vsel %vm228, %v544, 0.0
      %v577 = vsel %vm228, %v545, 0.0
      %v578 = vadd.f32 %v576, %v577
      %v579 = vsel %vm228, %v546, 0.0
      %v580 = vadd.f32 %v578, %v579
      %v581 = vsel %vm228, %v547, 0.0
      %v582 = vadd.f32 %v580, %v581
      %v583 = vsel %vm228, %v548, 0.0
      %v584 = vadd.f32 %v582, %v583
      %v585 = vsel %vm228, %v549, 0.0
      %v586 = vadd.f32 %v584, %v585
      %v587 = vsel %vm228, %v550, 0.0
      %v588 = vadd.f32 %v586, %v587
      %v589 = vsel %vm228, %v551, 0.0
      %v590 = vadd.f32 %v588, %v589
      %v591 = vsel %vm228, %v552, 0.0
      %v592 = vadd.f32 %v590, %v591
      %v593 = vsel %vm228, %v553, 0.0
      %v594 = vadd.f32 %v592, %v593
      %v595 = vsel %vm228, %v554, 0.0
      %v596 = vadd.f32 %v594, %v595
      %v597 = vsel %vm228, %v555, 0.0
      %v598 = vadd.f32 %v596, %v597
      %v599 = vsel %vm228, %v556, 0.0
      %v600 = vadd.f32 %v598, %v599
      %v601 = vsel %vm228, %v557, 0.0
      %v602 = vadd.f32 %v600, %v601
      %v603 = vsel %vm228, %v558, 0.0
      %v604 = vadd.f32 %v602, %v603
      %v605 = vsel %vm228, %v559, 0.0
      %v606 = vadd.f32 %v604, %v605
      %v607 = vsel %vm228, %v560, 0.0
      %v608 = vadd.f32 %v606, %v607
      %v609 = vsel %vm228, %v561, 0.0
      %v610 = vadd.f32 %v608, %v609
      %v611 = vsel %vm228, %v562, 0.0
      %v612 = vadd.f32 %v610, %v611
      %v613 = vsel %vm228, %v563, 0.0
      %v614 = vadd.f32 %v612, %v613
      %v615 = vsel %vm228, %v564, 0.0
      %v616 = vadd.f32 %v614, %v615
      %v617 = vsel %vm228, %v565, 0.0
      %v618 = vadd.f32 %v616, %v617
      %v619 = vsel %vm228, %v566, 0.0
      %v620 = vadd.f32 %v618, %v619
      %v621 = vsel %vm228, %v567, 0.0
      %v622 = vadd.f32 %v620, %v621
      %v623 = vsel %vm228, %v568, 0.0
      %v624 = vadd.f32 %v622, %v623
      %v625 = vsel %vm228, %v569, 0.0
      %v626 = vadd.f32 %v624, %v625
      %v627 = vsel %vm228, %v570, 0.0
      %v628 = vadd.f32 %v626, %v627
      %v629 = vsel %vm228, %v571, 0.0
      %v630 = vadd.f32 %v628, %v629
      %v631 = vsel %vm228, %v572, 0.0
      %v632 = vadd.f32 %v630, %v631
      %v633 = vsel %vm228, %v573, 0.0
      %v634 = vadd.f32 %v632, %v633
      %v635 = vsel %vm228, %v574, 0.0
      %v636 = vadd.f32 %v634, %v635
      %v637 = vsel %vm228, %v575, 0.0
      %v638 = vadd.f32 %v636, %v637
      %v639 = vrot.slane %v638, 4
      %v640 = vadd.f32 %v638, %v639
      %v641 = vrot.slane %v640, 2
      %v642 = vadd.f32 %v640, %v641
      %v643 = vrot.slane %v642, 1
      %v644 = vadd.f32 %v642, %v643
      %vm645 = vcmask 1040384
      %v646 = vsel %vm645, %v543, %v644
      %v647 = vadd.f32 %v474, %v646
      %vm648 = vcmask 25600
      %649 = vst.msk [vmem:[%s3] sm:$0x3] %vm648, %v647
      %s650 = smul.u32 32, %s15
      %p651 = scmp.lt.s32.totalorder %s650, 63
      %s652 = scalar_select %p651, %s650, 63
      %s653 = smul.addr %s652, 8
      %s654 = scalar_lea.vmem %s2, %s653
      // Predicated region
      $region33: #{bottleneck_forward.4} parent=27 // pred_check
        %p655 = pneg %p80
      $region34: #{bottleneck_forward.4} parent=27 // pred_check_branch
        %657 = sbr.rel (%p655) target = $region36
      $region35: #{bottleneck_forward.4} parent=27 // pred_region
        %s658 = smul.u32 32, %s15
      $region36: #{bottleneck_forward.4} parent=27 // pred_fallthru
        _
      // Predicated region
      $region37: #{bottleneck_forward.4} parent=27 // pred_check
        %p659 = pneg %p101
      $region38: #{bottleneck_forward.4} parent=27 // pred_check_branch
        %661 = sbr.rel (%p659) target = $region40
      $region39: #{bottleneck_forward.4} parent=27 // pred_region
        _
      $region40: #{bottleneck_forward.4} parent=27 // pred_fallthru
        _
      // Predicated region
      $region41: #{bottleneck_forward.4} parent=27 // pred_check
        %p662 = pneg %p101
      $region42: #{bottleneck_forward.4} parent=27 // pred_check_branch
        %664 = sbr.rel (%p662) target = $region44
      $region43: #{bottleneck_forward.4} parent=27 // pred_region
        _
      $region44: #{bottleneck_forward.4} parent=27 // pred_fallthru
        _
    $region28: #{bottleneck_forward.4} parent=5 // pred_fallthru
      _
    %p665 = scmp.le.s32.totalorder 2, %s10
    // Predicated region
    $region45: #{bottleneck_forward.4} parent=5 // pred_check
      %p666 = pneg %p665
    $region46: #{bottleneck_forward.4} parent=5 // pred_check_branch
      %668 = sbr.rel (%p666) target = $region48
    $region47: #{bottleneck_forward.4} parent=5 // pred_region
      %s669 = ssub.s32 %s10, 2
      // Predicated region
      $region49: #{bottleneck_forward.4} parent=47 // pred_check
        %p670 = pneg %p86
      $region50: #{bottleneck_forward.4} parent=47 // pred_check_branch
        %672 = sbr.rel (%p670) target = $region52
      $region51: #{bottleneck_forward.4} parent=47 // pred_region
        %s673 = smul.u32 32, %s16
        %p674 = scmp.lt.s32.totalorder %s673, 63
        %s675 = scalar_select %p674, %s673, 63
        %s676 = smul.addr %s675, 8
        %s677 = scalar_lea.vmem %s2, %s676
      $region52: #{bottleneck_forward.4} parent=47 // pred_fallthru
        _
    $region48: #{bottleneck_forward.4} parent=5 // pred_fallthru
      _
  $region6: #{bottleneck_forward.4} parent=0 // loop_footer
    %s14 = sadd.s32 1, %s10
  $region7: #{bottleneck_forward.4} parent=0 // loop_footer_branch
    %9 = sbr.rel target = $region3
  $region8: #{bottleneck_forward.4} parent=0 // loop_exit
    _

// kernel: bottleneck_forward.6
$region0: #{bottleneck_forward.6}
  #allocation0 [shape = 'u32[]', space=smem, size = 0x4, offset = 0x4, fixed_abs, tag = 'smem constant byte address 0x4 - core index']
  #allocation1 [shape = 'u32[144,128]{1,0:T(1,128)}', space=vmem, size = 0x12000, scoped, tag = 'internal scratch']
  %s0 = inlined_call_operand.vmem [shape: f32[512,4], index: 0, kind: input, shape index: {}]
  %s1 = inlined_call_operand.vmem [shape: f32[2,4], index: 1, kind: input, shape index: {}]
  %s2 = inlined_call_operand.vmem [shape: bf16[4,16], index: 2, kind: input, shape index: {}]
  %s3 = inlined_call_operand.vmem [shape: f32[512,4], index: 3, kind: input, shape index: {}]
  %s4 = inlined_call_operand.vmem [shape: bf16[4,16], index: 4, kind: input, shape index: {}]
  %s5 = inlined_call_operand.vmem [shape: f32[512,16], index: 5, kind: output, shape index: {0}]
  %s6 = inlined_call_operand.vmem [shape: f32[2,16], index: 6, kind: output, shape index: {1}]
  %s7 = inlined_call_operand.vmem [shape: f32[512,16], index: 7, kind: output, shape index: {2}]
  %s8 = inlined_call_operand.vmem [shape: f32[2,16], index: 8, kind: output, shape index: {3}]
  %9 = xla_tuple %s5, %s6, %s7, %s8
  %s10 = sld [smem:[#allocation0]]
  $region81: #{bottleneck_forward.6} parent=0
    _
  %s12 = ssub.s32 1, %s10
  %s13 = scalar_select 0, %s12, %s10
  loop: start=0, step=1, limit=4
  $region2: #{bottleneck_forward.6} parent=0 // loop_pre_header
    _
  $region3: #{bottleneck_forward.6} parent=0 // loop_header
    %s15 = sphi 0, %s19
    %p16 = scmp.ge.s32.totalorder %s15, 4
    %s25 = sphi 0, %s27
    %s28 = sphi 0, %s25
    %s29 = sphi 0, %s28
    %s45 = sphi 0, %s29
    %s49 = sphi 0, %s49
    %s51 = sphi 0, %s49
    %s52 = sphi 0, %s51
    %s66 = sphi 0, %s52
    %s70 = sphi 0, %s70
    %s72 = sphi 0, %s70
    %s73 = sphi 0, %s72
    %s87 = sphi 0, %s73
    %s93 = sphi 0, %s95
    %s96 = sphi 0, %s93
    %s97 = sphi 0, %s96
    %s113 = sphi 0, %s97
    %s117 = sphi 0, %s117
    %s119 = sphi 0, %s117
    %s120 = sphi 0, %s119
    %s134 = sphi 0, %s120
    %s140 = sphi 0, %s142
    %s143 = sphi 0, %s140
    %s144 = sphi 0, %s143
    %s160 = sphi 0, %s144
    %s164 = sphi 0, %s164
    %s166 = sphi 0, %s164
    %s167 = sphi 0, %s166
    %s181 = sphi 0, %s167
    %s187 = sphi 0, %s189
    %s190 = sphi 0, %s187
    %s191 = sphi 0, %s190
    %s207 = sphi 0, %s191
    %s211 = sphi 0, %s211
    %s213 = sphi 0, %s211
    %s214 = sphi 0, %s213
    %s228 = sphi 0, %s214
  $region4: #{bottleneck_forward.6} parent=0 // loop_header_branch
    %18 = sbr.rel (%p16) target = $region8
  $region5: #{bottleneck_forward.6} parent=0 // loop_body
    %s20 = ssub.s32 %s15, 1
    %s21 = ssub.s32 %s15, 2
    %s22 = sadd.s32 %s15, 1
    %s23 = ssub.s32 %s15, %s22
    %p24 = scmp.eq.s32.totalorder %s23, 0
    %s26 = sadd.s32 %s25, 1
    %s27 = scalar_select %p24, %s25, %s26
    %p30 = pneg %p24
    %p31 = scmp.eq.s32.totalorder %s15, 1
    %p32 = por %p30, %p31
    %p33 = scmp.ne.s32.totalorder %s25, %s28
    %p34 = scmp.eq.s32.totalorder %s15, 0
    %p35 = por %p33, %p34
    %p36 = scmp.ne.s32.totalorder %s25, %s28
    %p37 = scmp.eq.s32.totalorder %s20, 1
    %p38 = por %p36, %p37
    %p39 = scmp.ne.s32.totalorder %s28, %s29
    %p40 = scmp.eq.s32.totalorder %s20, 0
    %p41 = por %p39, %p40
    %p42 = scmp.ne.s32.totalorder %s28, %s29
    %p43 = scmp.eq.s32.totalorder %s21, 1
    %p44 = por %p42, %p43
    %p46 = scmp.ne.s32.totalorder %s29, %s45
    %p47 = scmp.eq.s32.totalorder %s21, 0
    %p48 = por %p46, %p47
    %s50 = sadd.s32 %s49, 1
    %p53 = scmp.eq.s32.totalorder %s15, 1
    %p54 = scmp.ne.s32.totalorder %s49, %s51
    %p55 = scmp.eq.s32.totalorder %s15, 0
    %p56 = por %p54, %p55
    %p57 = scmp.ne.s32.totalorder %s49, %s51
    %p58 = scmp.eq.s32.totalorder %s20, 1
    %p59 = por %p57, %p58
    %p60 = scmp.ne.s32.totalorder %s51, %s52
    %p61 = scmp.eq.s32.totalorder %s20, 0
    %p62 = por %p60, %p61
    %p63 = scmp.ne.s32.totalorder %s51, %s52
    %p64 = scmp.eq.s32.totalorder %s21, 1
    %p65 = por %p63, %p64
    %p67 = scmp.ne.s32.totalorder %s52, %s66
    %p68 = scmp.eq.s32.totalorder %s21, 0
    %p69 = por %p67, %p68
    %s71 = sadd.s32 %s70, 1
    %p74 = scmp.eq.s32.totalorder %s15, 1
    %p75 = scmp.ne.s32.totalorder %s70, %s72
    %p76 = scmp.eq.s32.totalorder %s15, 0
    %p77 = por %p75, %p76
    %p78 = scmp.ne.s32.totalorder %s70, %s72
    %p79 = scmp.eq.s32.totalorder %s20, 1
    %p80 = por %p78, %p79
    %p81 = scmp.ne.s32.totalorder %s72, %s73
    %p82 = scmp.eq.s32.totalorder %s20, 0
    %p83 = por %p81, %p82
    %p84 = scmp.ne.s32.totalorder %s72, %s73
    %p85 = scmp.eq.s32.totalorder %s21, 1
    %p86 = por %p84, %p85
    %p88 = scmp.ne.s32.totalorder %s73, %s87
    %p89 = scmp.eq.s32.totalorder %s21, 0
    %p90 = por %p88, %p89
    %s91 = ssub.s32 %s15, %s22
    %p92 = scmp.eq.s32.totalorder %s91, 0
    %s94 = sadd.s32 %s93, 1
    %s95 = scalar_select %p92, %s93, %s94
    %p98 = pneg %p92
    %p99 = scmp.eq.s32.totalorder %s15, 1
    %p100 = por %p98, %p99
    %p101 = scmp.ne.s32.totalorder %s93, %s96
    %p102 = scmp.eq.s32.totalorder %s15, 0
    %p103 = por %p101, %p102
    %p104 = scmp.ne.s32.totalorder %s93, %s96
    %p105 = scmp.eq.s32.totalorder %s20, 1
    %p106 = por %p104, %p105
    %p107 = scmp.ne.s32.totalorder %s96, %s97
    %p108 = scmp.eq.s32.totalorder %s20, 0
    %p109 = por %p107, %p108
    %p110 = scmp.ne.s32.totalorder %s96, %s97
    %p111 = scmp.eq.s32.totalorder %s21, 1
    %p112 = por %p110, %p111
    %p114 = scmp.ne.s32.totalorder %s97, %s113
    %p115 = scmp.eq.s32.totalorder %s21, 0
    %p116 = por %p114, %p115
    %s118 = sadd.s32 %s117, 1
    %p121 = scmp.eq.s32.totalorder %s15, 1
    %p122 = scmp.ne.s32.totalorder %s117, %s119
    %p123 = scmp.eq.s32.totalorder %s15, 0
    %p124 = por %p122, %p123
    %p125 = scmp.ne.s32.totalorder %s117, %s119
    %p126 = scmp.eq.s32.totalorder %s20, 1
    %p127 = por %p125, %p126
    %p128 = scmp.ne.s32.totalorder %s119, %s120
    %p129 = scmp.eq.s32.totalorder %s20, 0
    %p130 = por %p128, %p129
    %p131 = scmp.ne.s32.totalorder %s119, %s120
    %p132 = scmp.eq.s32.totalorder %s21, 1
    %p133 = por %p131, %p132
    %p135 = scmp.ne.s32.totalorder %s120, %s134
    %p136 = scmp.eq.s32.totalorder %s21, 0
    %p137 = por %p135, %p136
    %s138 = ssub.s32 %s15, %s22
    %p139 = scmp.eq.s32.totalorder %s138, 0
    %s141 = sadd.s32 %s140, 1
    %s142 = scalar_select %p139, %s140, %s141
    %p145 = pneg %p139
    %p146 = scmp.eq.s32.totalorder %s15, 1
    %p147 = por %p145, %p146
    %p148 = scmp.ne.s32.totalorder %s140, %s143
    %p149 = scmp.eq.s32.totalorder %s15, 0
    %p150 = por %p148, %p149
    %p151 = scmp.ne.s32.totalorder %s140, %s143
    %p152 = scmp.eq.s32.totalorder %s20, 1
    %p153 = por %p151, %p152
    %p154 = scmp.ne.s32.totalorder %s143, %s144
    %p155 = scmp.eq.s32.totalorder %s20, 0
    %p156 = por %p154, %p155
    %p157 = scmp.ne.s32.totalorder %s143, %s144
    %p158 = scmp.eq.s32.totalorder %s21, 1
    %p159 = por %p157, %p158
    %p161 = scmp.ne.s32.totalorder %s144, %s160
    %p162 = scmp.eq.s32.totalorder %s21, 0
    %p163 = por %p161, %p162
    %s165 = sadd.s32 %s164, 1
    %p168 = scmp.eq.s32.totalorder %s15, 1
    %p169 = scmp.ne.s32.totalorder %s164, %s166
    %p170 = scmp.eq.s32.totalorder %s15, 0
    %p171 = por %p169, %p170
    %p172 = scmp.ne.s32.totalorder %s164, %s166
    %p173 = scmp.eq.s32.totalorder %s20, 1
    %p174 = por %p172, %p173
    %p175 = scmp.ne.s32.totalorder %s166, %s167
    %p176 = scmp.eq.s32.totalorder %s20, 0
    %p177 = por %p175, %p176
    %p178 = scmp.ne.s32.totalorder %s166, %s167
    %p179 = scmp.eq.s32.totalorder %s21, 1
    %p180 = por %p178, %p179
    %p182 = scmp.ne.s32.totalorder %s167, %s181
    %p183 = scmp.eq.s32.totalorder %s21, 0
    %p184 = por %p182, %p183
    %s185 = ssub.s32 %s15, %s22
    %p186 = scmp.eq.s32.totalorder %s185, 0
    %s188 = sadd.s32 %s187, 1
    %s189 = scalar_select %p186, %s187, %s188
    %p192 = pneg %p186
    %p193 = scmp.eq.s32.totalorder %s15, 1
    %p194 = por %p192, %p193
    %p195 = scmp.ne.s32.totalorder %s187, %s190
    %p196 = scmp.eq.s32.totalorder %s15, 0
    %p197 = por %p195, %p196
    %p198 = scmp.ne.s32.totalorder %s187, %s190
    %p199 = scmp.eq.s32.totalorder %s20, 1
    %p200 = por %p198, %p199
    %p201 = scmp.ne.s32.totalorder %s190, %s191
    %p202 = scmp.eq.s32.totalorder %s20, 0
    %p203 = por %p201, %p202
    %p204 = scmp.ne.s32.totalorder %s190, %s191
    %p205 = scmp.eq.s32.totalorder %s21, 1
    %p206 = por %p204, %p205
    %p208 = scmp.ne.s32.totalorder %s191, %s207
    %p209 = scmp.eq.s32.totalorder %s21, 0
    %p210 = por %p208, %p209
    %s212 = sadd.s32 %s211, 1
    %p215 = scmp.eq.s32.totalorder %s15, 1
    %p216 = scmp.ne.s32.totalorder %s211, %s213
    %p217 = scmp.eq.s32.totalorder %s15, 0
    %p218 = por %p216, %p217
    %p219 = scmp.ne.s32.totalorder %s211, %s213
    %p220 = scmp.eq.s32.totalorder %s20, 1
    %p221 = por %p219, %p220
    %p222 = scmp.ne.s32.totalorder %s213, %s214
    %p223 = scmp.eq.s32.totalorder %s20, 0
    %p224 = por %p222, %p223
    %p225 = scmp.ne.s32.totalorder %s213, %s214
    %p226 = scmp.eq.s32.totalorder %s21, 1
    %p227 = por %p225, %p226
    %p229 = scmp.ne.s32.totalorder %s214, %s228
    %p230 = scmp.eq.s32.totalorder %s21, 0
    %p231 = por %p229, %p230
    %p232 = scmp.le.s32.totalorder 1, %s15
    %p233 = scmp.lt.s32.totalorder %s15, 3
    %p234 = pnand %p232, %p233
    %p235 = pneg %p234
    // Predicated region
    $region9: #{bottleneck_forward.6} parent=5 // pred_check
      _
    $region10: #{bottleneck_forward.6} parent=5 // pred_check_branch
      %237 = sbr.rel (%p234) target = $region12
    $region11: #{bottleneck_forward.6} parent=5 // pred_region
      %s238 = ssub.s32 %s15, 1
      // Predicated region
      $region13: #{bottleneck_forward.6} parent=11 // pred_check
        %p239 = pneg %p62
      $region14: #{bottleneck_forward.6} parent=11 // pred_check_branch
        %241 = sbr.rel (%p239) target = $region16
      $region15: #{bottleneck_forward.6} parent=11 // pred_region
        _
      $region16: #{bottleneck_forward.6} parent=11 // pred_fallthru
        _
      // Predicated region
      $region17: #{bottleneck_forward.6} parent=11 // pred_check
        %p242 = pneg %p83
      $region18: #{bottleneck_forward.6} parent=11 // pred_check_branch
        %244 = sbr.rel (%p242) target = $region20
      $region19: #{bottleneck_forward.6} parent=11 // pred_region
        _
      $region20: #{bottleneck_forward.6} parent=11 // pred_fallthru
        _
      // Predicated region
      $region21: #{bottleneck_forward.6} parent=11 // pred_check
        %p245 = pneg %p130
      $region22: #{bottleneck_forward.6} parent=11 // pred_check_branch
        %247 = sbr.rel (%p245) target = $region24
      $region23: #{bottleneck_forward.6} parent=11 // pred_region
        _
      $region24: #{bottleneck_forward.6} parent=11 // pred_fallthru
        _
    $region12: #{bottleneck_forward.6} parent=5 // pred_fallthru
      _
    %p248 = scmp.lt.s32.totalorder %s15, 2
    // Predicated region
    $region25: #{bottleneck_forward.6} parent=5 // pred_check
      %p249 = pneg %p248
    $region26: #{bottleneck_forward.6} parent=5 // pred_check_branch
      %251 = sbr.rel (%p249) target = $region28
    $region27: #{bottleneck_forward.6} parent=5 // pred_region
      // Predicated region
      $region29: #{bottleneck_forward.6} parent=27 // pred_check
        %p252 = pneg %p35
      $region30: #{bottleneck_forward.6} parent=27 // pred_check_branch
        %254 = sbr.rel (%p252) target = $region32
      $region31: #{bottleneck_forward.6} parent=27 // pred_region
        %s255 = smul.u32 32, %s15
        %p256 = scmp.lt.s32.totalorder %s255, 63
        %s257 = scalar_select %p256, %s255, 63
        %s258 = smul.addr %s257, 8
        %s259 = scalar_lea.vmem %s0, %s258
        %s260 = smul.u32 32, %s15
      $region32: #{bottleneck_forward.6} parent=27 // pred_fallthru
        _
      // Predicated region
      $region33: #{bottleneck_forward.6} parent=27 // pred_check
        %p261 = pneg %p103
      $region34: #{bottleneck_forward.6} parent=27 // pred_check_branch
        %263 = sbr.rel (%p261) target = $region36
      $region35: #{bottleneck_forward.6} parent=27 // pred_region
        %s264 = smul.u32 32, %s15
        %p265 = scmp.lt.s32.totalorder %s264, 63
        %s266 = scalar_select %p265, %s264, 63
        %s267 = smul.addr %s266, 8
        %s268 = scalar_lea.vmem %s3, %s267
        %s269 = smul.u32 32, %s15
      $region36: #{bottleneck_forward.6} parent=27 // pred_fallthru
        _
    $region28: #{bottleneck_forward.6} parent=5 // pred_fallthru
      _
    %p270 = scmp.le.s32.totalorder 1, %s15
    %p271 = scmp.lt.s32.totalorder %s15, 3
    %p272 = pnand %p270, %p271
    %p273 = pneg %p272
    // Predicated region
    $region37: #{bottleneck_forward.6} parent=5 // pred_check
      _
    $region38: #{bottleneck_forward.6} parent=5 // pred_check_branch
      %275 = sbr.rel (%p272) target = $region40
    $region39: #{bottleneck_forward.6} parent=5 // pred_region
      %s276 = ssub.s32 %s15, 1
      %s277 = smul.u32 32, %s20
      %p278 = scmp.lt.s32.totalorder %s277, 63
      %s279 = scalar_select %p278, %s277, 63
      %s280 = smul.addr %s279, 8
      %s281 = scalar_lea.vmem %s0, %s280
      %p282 = pneg %p41
      %p283 = pneg %p38
      %p284 = pneg %p62
      %p285 = pneg %p59
      %p286 = pneg %p83
      %p287 = pneg %p80
      %s288 = smul.u32 32, %s20
      %p289 = scmp.lt.s32.totalorder %s288, 63
      %s290 = scalar_select %p289, %s288, 63
      %s291 = smul.addr %s290, 8
      %s292 = scalar_lea.vmem %s3, %s291
      %p293 = pneg %p109
      %p294 = pneg %p106
      %p295 = pneg %p130
      %p296 = pneg %p127
      %p297 = pneg %p156
      %p298 = pneg %p153
      %s299 = smul.u32 32, %s20
      %p300 = scmp.lt.s32.totalorder %s299, 63
      %s301 = scalar_select %p300, %s299, 63
      %s302 = smul.addr %s301, 8
      %s303 = scalar_lea.vmem %s5, %s302
      %p304 = pneg %p177
      %p305 = pneg %p174
      %p306 = pneg %p203
      %p307 = pneg %p200
      %s308 = smul.u32 32, %s20
      %p309 = scmp.lt.s32.totalorder %s308, 63
      %s310 = scalar_select %p309, %s308, 63
      %s311 = smul.addr %s310, 8
      %s312 = scalar_lea.vmem %s7, %s311
      %p313 = pneg %p224
      %p314 = pneg %p221
      %s315 = smul.u32 32, %s20
      %p316 = scmp.lt.s32.totalorder %s315, 63
      %s317 = scalar_select %p316, %s315, 63
      %s318 = smul.addr %s317, 8
      %s319 = scalar_lea.vmem %s0, %s318
      %s320 = smul.u32 32, %s20
      %s321 = smul.u32 32, %s20
      %p322 = scmp.lt.s32.totalorder %s321, 63
      %s323 = scalar_select %p322, %s321, 63
      %s324 = smul.addr %s323, 8
      %s325 = scalar_lea.vmem %s3, %s324
      %s326 = smul.u32 32, %s20
      %s327 = smul.u32 32, %s20
      %p328 = scmp.lt.s32.totalorder %s327, 63
      %s329 = scalar_select %p328, %s327, 63
      %s330 = smul.addr %s329, 8
      %s331 = scalar_lea.vmem %s5, %s330
      %s332 = smul.u32 32, %s20
      %s333 = smul.u32 32, %s20
      %p334 = scmp.lt.s32.totalorder %s333, 63
      %s335 = scalar_select %p334, %s333, 63
      %s336 = smul.addr %s335, 8
      %s337 = scalar_lea.vmem %s7, %s336
      %s338 = smul.u32 32, %s20
      %p340 = scmp.eq.s32.totalorder %s20, 0
      // Predicated region
      $region41: #{bottleneck_forward.6} parent=39 // pred_check
        %p341 = pneg %p340
      $region42: #{bottleneck_forward.6} parent=39 // pred_check_branch
        %343 = sbr.rel (%p341) target = $region44
      $region43: #{bottleneck_forward.6} parent=39 // pred_region
        %vm344 = vcmask 123904
        %345 = vst.msk [vmem:[%s6] sm:$0x3] %vm344, 0.0
        %346 = vst.msk [vmem:[%s8] sm:$0x3] %vm344, 0.0
      $region44: #{bottleneck_forward.6} parent=39 // pred_fallthru
        _
      %v347 = vld [vmem:[%s319] sm:$0xff]
      %v348 = vld [vmem:[%s319 + $0x8] sm:$0xff]
      %v349 = vld [vmem:[%s319 + $0x10] sm:$0xff]
      %v350 = vld [vmem:[%s319 + $0x18] sm:$0xff]
      %v351 = vld [vmem:[%s319 + $0x20] sm:$0xff]
      %v352 = vld [vmem:[%s319 + $0x28] sm:$0xff]
      %v353 = vld [vmem:[%s319 + $0x30] sm:$0xff]
      %v354 = vld [vmem:[%s319 + $0x38] sm:$0xff]
      %v355 = vld [vmem:[%s319 + $0x40] sm:$0xff]
      %v356 = vld [vmem:[%s319 + $0x48] sm:$0xff]
      %v357 = vld [vmem:[%s319 + $0x50] sm:$0xff]
      %v358 = vld [vmem:[%s319 + $0x58] sm:$0xff]
      %v359 = vld [vmem:[%s319 + $0x60] sm:$0xff]
      %v360 = vld [vmem:[%s319 + $0x68] sm:$0xff]
      %v361 = vld [vmem:[%s319 + $0x70] sm:$0xff]
      %v362 = vld [vmem:[%s319 + $0x78] sm:$0xff]
      %v363 = vld [vmem:[%s319 + $0x80] sm:$0xff]
      %v364 = vld [vmem:[%s319 + $0x88] sm:$0xff]
      %v365 = vld [vmem:[%s319 + $0x90] sm:$0xff]
      %v366 = vld [vmem:[%s319 + $0x98] sm:$0xff]
      %v367 = vld [vmem:[%s319 + $0xa0] sm:$0xff]
      %v368 = vld [vmem:[%s319 + $0xa8] sm:$0xff]
      %v369 = vld [vmem:[%s319 + $0xb0] sm:$0xff]
      %v370 = vld [vmem:[%s319 + $0xb8] sm:$0xff]
      %v371 = vld [vmem:[%s319 + $0xc0] sm:$0xff]
      %v372 = vld [vmem:[%s319 + $0xc8] sm:$0xff]
      %v373 = vld [vmem:[%s319 + $0xd0] sm:$0xff]
      %v374 = vld [vmem:[%s319 + $0xd8] sm:$0xff]
      %v375 = vld [vmem:[%s319 + $0xe0] sm:$0xff]
      %v376 = vld [vmem:[%s319 + $0xe8] sm:$0xff]
      %v377 = vld [vmem:[%s319 + $0xf0] sm:$0xff]
      %v378 = vld [vmem:[%s319 + $0xf8] sm:$0xff]
      %v379 = vld [vmem:[%s1] sm:$0x1]
      %v380 = vlaneseq
      %v381 = vshrl.u32 %v380, 7
      %v382 = vsub.s32 0, %v381
      %v383 = vrot.slane %v379, %v382
      %v384 = vmul.f32 %v347, %v383
      %v385 = vmul.f32 %v348, %v383
      %v386 = vmul.f32 %v349, %v383
      %v387 = vmul.f32 %v350, %v383
      %v388 = vmul.f32 %v351, %v383
      %v389 = vmul.f32 %v352, %v383
      %v390 = vmul.f32 %v353, %v383
      %v391 = vmul.f32 %v354, %v383
      %v392 = vmul.f32 %v355, %v383
      %v393 = vmul.f32 %v356, %v383
      %v394 = vmul.f32 %v357, %v383
      %v395 = vmul.f32 %v358, %v383
      %v396 = vmul.f32 %v359, %v383
      %v397 = vmul.f32 %v360, %v383
      %v398 = vmul.f32 %v361, %v383
      %v399 = vmul.f32 %v362, %v383
      %v400 = vmul.f32 %v363, %v383
      %v401 = vmul.f32 %v364, %v383
      %v402 = vmul.f32 %v365, %v383
      %v403 = vmul.f32 %v366, %v383
      %v404 = vmul.f32 %v367, %v383
      %v405 = vmul.f32 %v368, %v383
      %v406 = vmul.f32 %v369, %v383
      %v407 = vmul.f32 %v370, %v383
      %v408 = vmul.f32 %v371, %v383
      %v409 = vmul.f32 %v372, %v383
      %v410 = vmul.f32 %v373, %v383
      %v411 = vmul.f32 %v374, %v383
      %v412 = vmul.f32 %v375, %v383
      %v413 = vmul.f32 %v376, %v383
      %v414 = vmul.f32 %v377, %v383
      %v415 = vmul.f32 %v378, %v383
      %v416 = vld [vmem:[%s1 + $0x1] sm:$0x1]
      %v417 = vlaneseq
      %v418 = vshrl.u32 %v417, 7
      %v419 = vsub.s32 0, %v418
      %v420 = vrot.slane %v416, %v419
      %v421 = vadd.f32 %v384, %v420
      %v422 = vadd.f32 %v385, %v420
      %v423 = vadd.f32 %v386, %v420
      %v424 = vadd.f32 %v387, %v420
      %v425 = vadd.f32 %v388, %v420
      %v426 = vadd.f32 %v389, %v420
      %v427 = vadd.f32 %v390, %v420
      %v428 = vadd.f32 %v391, %v420
      %v429 = vadd.f32 %v392, %v420
      %v430 = vadd.f32 %v393, %v420
      %v431 = vadd.f32 %v394, %v420
      %v432 = vadd.f32 %v395, %v420
      %v433 = vadd.f32 %v396, %v420
      %v434 = vadd.f32 %v397, %v420
      %v435 = vadd.f32 %v398, %v420
      %v436 = vadd.f32 %v399, %v420
      %v437 = vadd.f32 %v400, %v420
      %v438 = vadd.f32 %v401, %v420
      %v439 = vadd.f32 %v402, %v420
      %v440 = vadd.f32 %v403, %v420
      %v441 = vadd.f32 %v404, %v420
      %v442 = vadd.f32 %v405, %v420
      %v443 = vadd.f32 %v406, %v420
      %v444 = vadd.f32 %v407, %v420
      %v445 = vadd.f32 %v408, %v420
      %v446 = vadd.f32 %v409, %v420
      %v447 = vadd.f32 %v410, %v420
      %v448 = vadd.f32 %v411, %v420
      %v449 = vadd.f32 %v412, %v420
      %v450 = vadd.f32 %v413, %v420
      %v451 = vadd.f32 %v414, %v420
      %v452 = vadd.f32 %v415, %v420
      %v453 = vmax.f32 %v421, 0.0
      %v454 = vmax.f32 %v422, 0.0
      %v455 = vmax.f32 %v423, 0.0
      %v456 = vmax.f32 %v424, 0.0
      %v457 = vmax.f32 %v425, 0.0
      %v458 = vmax.f32 %v426, 0.0
      %v459 = vmax.f32 %v427, 0.0
      %v460 = vmax.f32 %v428, 0.0
      %v461 = vmax.f32 %v429, 0.0
      %v462 = vmax.f32 %v430, 0.0
      %v463 = vmax.f32 %v431, 0.0
      %v464 = vmax.f32 %v432, 0.0
      %v465 = vmax.f32 %v433, 0.0
      %v466 = vmax.f32 %v434, 0.0
      %v467 = vmax.f32 %v435, 0.0
      %v468 = vmax.f32 %v436, 0.0
      %v469 = vmax.f32 %v437, 0.0
      %v470 = vmax.f32 %v438, 0.0
      %v471 = vmax.f32 %v439, 0.0
      %v472 = vmax.f32 %v440, 0.0
      %v473 = vmax.f32 %v441, 0.0
      %v474 = vmax.f32 %v442, 0.0
      %v475 = vmax.f32 %v443, 0.0
      %v476 = vmax.f32 %v444, 0.0
      %v477 = vmax.f32 %v445, 0.0
      %v478 = vmax.f32 %v446, 0.0
      %v479 = vmax.f32 %v447, 0.0
      %v480 = vmax.f32 %v448, 0.0
      %v481 = vmax.f32 %v449, 0.0
      %v482 = vmax.f32 %v450, 0.0
      %v483 = vmax.f32 %v451, 0.0
      %v484 = vmax.f32 %v452, 0.0
      %v485 = vpack.c.bf16 %v454, %v453
      %v486 = vpack.c.bf16 %v456, %v455
      %v487 = vpack.c.bf16 %v458, %v457
      %v488 = vpack.c.bf16 %v460, %v459
      %v489 = vpack.c.bf16 %v462, %v461
      %v490 = vpack.c.bf16 %v464, %v463
      %v491 = vpack.c.bf16 %v466, %v465
      %v492 = vpack.c.bf16 %v468, %v467
      %v493 = vpack.c.bf16 %v470, %v469
      %v494 = vpack.c.bf16 %v472, %v471
      %v495 = vpack.c.bf16 %v474, %v473
      %v496 = vpack.c.bf16 %v476, %v475
      %v497 = vpack.c.bf16 %v478, %v477
      %v498 = vpack.c.bf16 %v480, %v479
      %v499 = vpack.c.bf16 %v482, %v481
      %v500 = vpack.c.bf16 %v484, %v483
      %v501 = vld [vmem:[%s2] sm:$0x3]
      %vm502 = vcmask 31744
      %v504 = vsel %vm502, %v485, 0
      %v507 = vsel %vm502, %v486, 0
      %v510 = vsel %vm502, %v487, 0
      %v513 = vsel %vm502, %v488, 0
      %v516 = vsel %vm502, %v489, 0
      %v519 = vsel %vm502, %v490, 0
      %v522 = vsel %vm502, %v491, 0
      %v525 = vsel %vm502, %v492, 0
      %v528 = vsel %vm502, %v493, 0
      %v531 = vsel %vm502, %v494, 0
      %v534 = vsel %vm502, %v495, 0
      %v537 = vsel %vm502, %v496, 0
      %v540 = vsel %vm502, %v497, 0
      %v543 = vsel %vm502, %v498, 0
      %v546 = vsel %vm502, %v499, 0
      %v549 = vsel %vm502, %v500, 0
      %vm551 = vcmask 1041408
      %v553 = vsel %vm551, %v501, 0
      %555 = vmatprep.subr.bf16.mxu0 0
      %556 = vmatpush1.bf16.msra.mxu0 %v553
      %557 = vmatprep.subr.bf16.mxu0 0
      %558 = vmatpush1.bf16.msra.mxu0 0
      %559 = vmatprep.subr.bf16.mxu0 0
      %560 = vmatpush1.bf16.msra.mxu0 0
      %561 = vmatprep.subr.bf16.mxu0 0
      %562 = vmatpush1.bf16.msra.mxu0 0
      %563 = vmatprep.subr.bf16.mxu0 0
      %564 = vmatpush1.bf16.msra.mxu0 0
      %565 = vmatprep.subr.bf16.mxu0 0
      %566 = vmatpush1.bf16.msra.mxu0 0
      %567 = vmatprep.subr.bf16.mxu0 0
      %568 = vmatpush1.bf16.msra.mxu0 0
      %569 = vmatprep.subr.bf16.mxu0 0
      %570 = vmatpush1.bf16.msra.mxu0 0
      %571 = vmatprep.subr.bf16.mxu0 0
      %572 = vmatpush1.bf16.msra.mxu0 0
      %573 = vmatprep.subr.bf16.mxu0 0
      %574 = vmatpush1.bf16.msra.mxu0 0
      %575 = vmatprep.subr.bf16.mxu0 0
      %576 = vmatpush1.bf16.msra.mxu0 0
      %577 = vmatprep.subr.bf16.mxu0 0
      %578 = vmatpush1.bf16.msra.mxu0 0
      %579 = vmatprep.subr.bf16.mxu0 0
      %580 = vmatpush1.bf16.msra.mxu0 0
      %581 = vmatprep.subr.bf16.mxu0 0
      %582 = vmatpush1.bf16.msra.mxu0 0
      %583 = vmatprep.subr.bf16.mxu0 0
      %584 = vmatpush1.bf16.msra.mxu0 0
      %585 = vmatprep.subr.bf16.mxu0 0
      %586 = vmatpush1.bf16.msra.mxu0 0
      %587 = vmatprep.mubr.bf16.mxu0 0
      %588 = vmatmul.mubr.bf16.gmra.mrb[0].mxu0 %v504
      %v589 = vpop.f32.mrb[0].mxu0
      %v590 = vadd.f32 0.0, %v589
      %v591 = vpop.f32.mrb[0].mxu0
      %v592 = vpop.f32.mrb[0].mxu0
      %v593 = vadd.f32 0.0, %v592
      %v594 = vpop.f32.mrb[0].mxu0
      %595 = vmatprep.mubr.bf16.mxu0 0
      %596 = vmatmul.mubr.bf16.gmra.mrb[0].mxu0 %v507
      %v597 = vpop.f32.mrb[0].mxu0
      %v598 = vadd.f32 0.0, %v597
      %v599 = vpop.f32.mrb[0].mxu0
      %v600 = vpop.f32.mrb[0].mxu0
      %v601 = vadd.f32 0.0, %v600
      %v602 = vpop.f32.mrb[0].mxu0
      %603 = vmatprep.mubr.bf16.mxu0 0
      %604 = vmatmul.mubr.bf16.gmra.mrb[0].mxu0 %v510
      %v605 = vpop.f32.mrb[0].mxu0
      %v606 = vadd.f32 0.0, %v605
      %v607 = vpop.f32.mrb[0].mxu0
      %v608 = vpop.f32.mrb[0].mxu0
      %v609 = vadd.f32 0.0, %v608
      %v610 = vpop.f32.mrb[0].mxu0
      %611 = vmatprep.mubr.bf16.mxu0 0
      %612 = vmatmul.mubr.bf16.gmra.mrb[0].mxu0 %v513
      %v613 = vpop.f32.mrb[0].mxu0
      %v614 = vadd.f32 0.0, %v613
      %v615 = vpop.f32.mrb[0].mxu0
      %v616 = vpop.f32.mrb[0].mxu0
      %v617 = vadd.f32 0.0, %v616
      %v618 = vpop.f32.mrb[0].mxu0
      %619 = vmatprep.mubr.bf16.mxu0 0
      %620 = vmatmul.mubr.bf16.gmra.mrb[0].mxu0 %v516
      %v621 = vpop.f32.mrb[0].mxu0
      %v622 = vadd.f32 0.0, %v621
      %v623 = vpop.f32.mrb[0].mxu0
      %v624 = vpop.f32.mrb[0].mxu0
      %v625 = vadd.f32 0.0, %v624
      %v626 = vpop.f32.mrb[0].mxu0
      %627 = vmatprep.mubr.bf16.mxu0 0
      %628 = vmatmul.mubr.bf16.gmra.mrb[0].mxu0 %v519
      %v629 = vpop.f32.mrb[0].mxu0
      %v630 = vadd.f32 0.0, %v629
      %v631 = vpop.f32.mrb[0].mxu0
      %v632 = vpop.f32.mrb[0].mxu0
      %v633 = vadd.f32 0.0, %v632
      %v634 = vpop.f32.mrb[0].mxu0
      %635 = vmatprep.mubr.bf16.mxu0 0
      %636 = vmatmul.mubr.bf16.gmra.mrb[0].mxu0 %v522
      %v637 = vpop.f32.mrb[0].mxu0
      %v638 = vadd.f32 0.0, %v637
      %v639 = vpop.f32.mrb[0].mxu0
      %v640 = vpop.f32.mrb[0].mxu0
      %v641 = vadd.f32 0.0, %v640
      %v642 = vpop.f32.mrb[0].mxu0
      %643 = vmatprep.mubr.bf16.mxu0 0
      %644 = vmatmul.mubr.bf16.gmra.mrb[0].mxu0 %v525
      %v645 = vpop.f32.mrb[0].mxu0
      %v646 = vadd.f32 0.0, %v645
      %v647 = vpop.f32.mrb[0].mxu0
      %v648 = vpop.f32.mrb[0].mxu0
      %v649 = vadd.f32 0.0, %v648
      %v650 = vpop.f32.mrb[0].mxu0
      %651 = vmatprep.mubr.bf16.mxu0 0
      %652 = vmatmul.mubr.bf16.gmra.mrb[0].mxu0 %v528
      %v653 = vpop.f32.mrb[0].mxu0
      %v654 = vadd.f32 0.0, %v653
      %v655 = vpop.f32.mrb[0].mxu0
      %v656 = vpop.f32.mrb[0].mxu0
      %v657 = vadd.f32 0.0, %v656
      %v658 = vpop.f32.mrb[0].mxu0
      %659 = vmatprep.mubr.bf16.mxu0 0
      %660 = vmatmul.mubr.bf16.gmra.mrb[0].mxu0 %v531
      %v661 = vpop.f32.mrb[0].mxu0
      %v662 = vadd.f32 0.0, %v661
      %v663 = vpop.f32.mrb[0].mxu0
      %v664 = vpop.f32.mrb[0].mxu0
      %v665 = vadd.f32 0.0, %v664
      %v666 = vpop.f32.mrb[0].mxu0
      %667 = vmatprep.mubr.bf16.mxu0 0
      %668 = vmatmul.mubr.bf16.gmra.mrb[0].mxu0 %v534
      %v669 = vpop.f32.mrb[0].mxu0
      %v670 = vadd.f32 0.0, %v669
      %v671 = vpop.f32.mrb[0].mxu0
      %v672 = vpop.f32.mrb[0].mxu0
      %v673 = vadd.f32 0.0, %v672
      %v674 = vpop.f32.mrb[0].mxu0
      %675 = vmatprep.mubr.bf16.mxu0 0
      %676 = vmatmul.mubr.bf16.gmra.mrb[0].mxu0 %v537
      %v677 = vpop.f32.mrb[0].mxu0
      %v678 = vadd.f32 0.0, %v677
      %v679 = vpop.f32.mrb[0].mxu0
      %v680 = vpop.f32.mrb[0].mxu0
      %v681 = vadd.f32 0.0, %v680
      %v682 = vpop.f32.mrb[0].mxu0
      %683 = vmatprep.mubr.bf16.mxu0 0
      %684 = vmatmul.mubr.bf16.gmra.mrb[0].mxu0 %v540
      %v685 = vpop.f32.mrb[0].mxu0
      %v686 = vadd.f32 0.0, %v685
      %v687 = vpop.f32.mrb[0].mxu0
      %v688 = vpop.f32.mrb[0].mxu0
      %v689 = vadd.f32 0.0, %v688
      %v690 = vpop.f32.mrb[0].mxu0
      %691 = vmatprep.mubr.bf16.mxu0 0
      %692 = vmatmul.mubr.bf16.gmra.mrb[0].mxu0 %v543
      %v693 = vpop.f32.mrb[0].mxu0
      %v694 = vadd.f32 0.0, %v693
      %v695 = vpop.f32.mrb[0].mxu0
      %v696 = vpop.f32.mrb[0].mxu0
      %v697 = vadd.f32 0.0, %v696
      %v698 = vpop.f32.mrb[0].mxu0
      %699 = vmatprep.mubr.bf16.mxu0 0
      %700 = vmatmul.mubr.bf16.gmra.mrb[0].mxu0 %v546
      %v701 = vpop.f32.mrb[0].mxu0
      %v702 = vadd.f32 0.0, %v701
      %v703 = vpop.f32.mrb[0].mxu0
      %v704 = vpop.f32.mrb[0].mxu0
      %v705 = vadd.f32 0.0, %v704
      %v706 = vpop.f32.mrb[0].mxu0
      %707 = vmatprep.mubr.bf16.mxu0 0
      %708 = vmatmul.mubr.bf16.gmra.mrb[0].mxu0 %v549
      %v709 = vpop.f32.mrb[0].mxu0
      %v710 = vadd.f32 0.0, %v709
      %v711 = vpop.f32.mrb[0].mxu0
      %v712 = vpop.f32.mrb[0].mxu0
      %v713 = vadd.f32 0.0, %v712
      %v714 = vpop.f32.mrb[0].mxu0
      %715 = vdwg.mxu0
      %vm716 = vcmask 130048
      %717 = vst.msk [vmem:[%s331] sm:$0xff] %vm716, %v590
      %718 = vst.msk [vmem:[%s331 + $0x8] sm:$0xff] %vm716, %v593
      %719 = vst.msk [vmem:[%s331 + $0x10] sm:$0xff] %vm716, %v598
      %720 = vst.msk [vmem:[%s331 + $0x18] sm:$0xff] %vm716, %v601
      %721 = vst.msk [vmem:[%s331 + $0x20] sm:$0xff] %vm716, %v606
      %722 = vst.msk [vmem:[%s331 + $0x28] sm:$0xff] %vm716, %v609
      %723 = vst.msk [vmem:[%s331 + $0x30] sm:$0xff] %vm716, %v614
      %724 = vst.msk [vmem:[%s331 + $0x38] sm:$0xff] %vm716, %v617
      %725 = vst.msk [vmem:[%s331 + $0x40] sm:$0xff] %vm716, %v622
      %726 = vst.msk [vmem:[%s331 + $0x48] sm:$0xff] %vm716, %v625
      %727 = vst.msk [vmem:[%s331 + $0x50] sm:$0xff] %vm716, %v630
      %728 = vst.msk [vmem:[%s331 + $0x58] sm:$0xff] %vm716, %v633
      %729 = vst.msk [vmem:[%s331 + $0x60] sm:$0xff] %vm716, %v638
      %730 = vst.msk [vmem:[%s331 + $0x68] sm:$0xff] %vm716, %v641
      %731 = vst.msk [vmem:[%s331 + $0x70] sm:$0xff] %vm716, %v646
      %732 = vst.msk [vmem:[%s331 + $0x78] sm:$0xff] %vm716, %v649
      %733 = vst.msk [vmem:[%s331 + $0x80] sm:$0xff] %vm716, %v654
      %734 = vst.msk [vmem:[%s331 + $0x88] sm:$0xff] %vm716, %v657
      %735 = vst.msk [vmem:[%s331 + $0x90] sm:$0xff] %vm716, %v662
      %736 = vst.msk [vmem:[%s331 + $0x98] sm:$0xff] %vm716, %v665
      %737 = vst.msk [vmem:[%s331 + $0xa0] sm:$0xff] %vm716, %v670
      %738 = vst.msk [vmem:[%s331 + $0xa8] sm:$0xff] %vm716, %v673
      %739 = vst.msk [vmem:[%s331 + $0xb0] sm:$0xff] %vm716, %v678
      %740 = vst.msk [vmem:[%s331 + $0xb8] sm:$0xff] %vm716, %v681
      %741 = vst.msk [vmem:[%s331 + $0xc0] sm:$0xff] %vm716, %v686
      %742 = vst.msk [vmem:[%s331 + $0xc8] sm:$0xff] %vm716, %v689
      %743 = vst.msk [vmem:[%s331 + $0xd0] sm:$0xff] %vm716, %v694
      %744 = vst.msk [vmem:[%s331 + $0xd8] sm:$0xff] %vm716, %v697
      %745 = vst.msk [vmem:[%s331 + $0xe0] sm:$0xff] %vm716, %v702
      %746 = vst.msk [vmem:[%s331 + $0xe8] sm:$0xff] %vm716, %v705
      %747 = vst.msk [vmem:[%s331 + $0xf0] sm:$0xff] %vm716, %v710
      %748 = vst.msk [vmem:[%s331 + $0xf8] sm:$0xff] %vm716, %v713
      %v749 = vld [vmem:[%s325] sm:$0xff]
      %v750 = vld [vmem:[%s325 + $0x8] sm:$0xff]
      %v751 = vld [vmem:[%s325 + $0x10] sm:$0xff]
      %v752 = vld [vmem:[%s325 + $0x18] sm:$0xff]
      %v753 = vld [vmem:[%s325 + $0x20] sm:$0xff]
      %v754 = vld [vmem:[%s325 + $0x28] sm:$0xff]
      %v755 = vld [vmem:[%s325 + $0x30] sm:$0xff]
      %v756 = vld [vmem:[%s325 + $0x38] sm:$0xff]
      %v757 = vld [vmem:[%s325 + $0x40] sm:$0xff]
      %v758 = vld [vmem:[%s325 + $0x48] sm:$0xff]
      %v759 = vld [vmem:[%s325 + $0x50] sm:$0xff]
      %v760 = vld [vmem:[%s325 + $0x58] sm:$0xff]
      %v761 = vld [vmem:[%s325 + $0x60] sm:$0xff]
      %v762 = vld [vmem:[%s325 + $0x68] sm:$0xff]
      %v763 = vld [vmem:[%s325 + $0x70] sm:$0xff]
      %v764 = vld [vmem:[%s325 + $0x78] sm:$0xff]
      %v765 = vld [vmem:[%s325 + $0x80] sm:$0xff]
      %v766 = vld [vmem:[%s325 + $0x88] sm:$0xff]
      %v767 = vld [vmem:[%s325 + $0x90] sm:$0xff]
      %v768 = vld [vmem:[%s325 + $0x98] sm:$0xff]
      %v769 = vld [vmem:[%s325 + $0xa0] sm:$0xff]
      %v770 = vld [vmem:[%s325 + $0xa8] sm:$0xff]
      %v771 = vld [vmem:[%s325 + $0xb0] sm:$0xff]
      %v772 = vld [vmem:[%s325 + $0xb8] sm:$0xff]
      %v773 = vld [vmem:[%s325 + $0xc0] sm:$0xff]
      %v774 = vld [vmem:[%s325 + $0xc8] sm:$0xff]
      %v775 = vld [vmem:[%s325 + $0xd0] sm:$0xff]
      %v776 = vld [vmem:[%s325 + $0xd8] sm:$0xff]
      %v777 = vld [vmem:[%s325 + $0xe0] sm:$0xff]
      %v778 = vld [vmem:[%s325 + $0xe8] sm:$0xff]
      %v779 = vld [vmem:[%s325 + $0xf0] sm:$0xff]
      %v780 = vld [vmem:[%s325 + $0xf8] sm:$0xff]
      %v781 = vpack.c.bf16 %v750, %v749
      %v782 = vpack.c.bf16 %v752, %v751
      %v783 = vpack.c.bf16 %v754, %v753
      %v784 = vpack.c.bf16 %v756, %v755
      %v785 = vpack.c.bf16 %v758, %v757
      %v786 = vpack.c.bf16 %v760, %v759
      %v787 = vpack.c.bf16 %v762, %v761
      %v788 = vpack.c.bf16 %v764, %v763
      %v789 = vpack.c.bf16 %v766, %v765
      %v790 = vpack.c.bf16 %v768, %v767
      %v791 = vpack.c.bf16 %v770, %v769
      %v792 = vpack.c.bf16 %v772, %v771
      %v793 = vpack.c.bf16 %v774, %v773
      %v794 = vpack.c.bf16 %v776, %v775
      %v795 = vpack.c.bf16 %v778, %v777
      %v796 = vpack.c.bf16 %v780, %v779
      %v797 = vld [vmem:[%s4] sm:$0x3]
      %v799 = vsel %vm502, %v781, 0
      %v802 = vsel %vm502, %v782, 0
      %v805 = vsel %vm502, %v783, 0
      %v808 = vsel %vm502, %v784, 0
      %v811 = vsel %vm502, %v785, 0
      %v814 = vsel %vm502, %v786, 0
      %v817 = vsel %vm502, %v787, 0
      %v820 = vsel %vm502, %v788, 0
      %v823 = vsel %vm502, %v789, 0
      %v826 = vsel %vm502, %v790, 0
      %v829 = vsel %vm502, %v791, 0
      %v832 = vsel %vm502, %v792, 0
      %v835 = vsel %vm502, %v793, 0
      %v838 = vsel %vm502, %v794, 0
      %v841 = vsel %vm502, %v795, 0
      %v844 = vsel %vm502, %v796, 0
      %v847 = vsel %vm551, %v797, 0
      %849 = vmatprep.subr.bf16.mxu0 0
      %850 = vmatpush1.bf16.msra.mxu0 %v847
      %851 = vmatprep.subr.bf16.mxu0 0
      %852 = vmatpush1.bf16.msra.mxu0 0
      %853 = vmatprep.subr.bf16.mxu0 0
      %854 = vmatpush1.bf16.msra.mxu0 0
      %855 = vmatprep.subr.bf16.mxu0 0
      %856 = vmatpush1.bf16.msra.mxu0 0
      %857 = vmatprep.subr.bf16.mxu0 0
      %858 = vmatpush1.bf16.msra.mxu0 0
      %859 = vmatprep.subr.bf16.mxu0 0
      %860 = vmatpush1.bf16.msra.mxu0 0
      %861 = vmatprep.subr.bf16.mxu0 0
      %862 = vmatpush1.bf16.msra.mxu0 0
      %863 = vmatprep.subr.bf16.mxu0 0
      %864 = vmatpush1.bf16.msra.mxu0 0
      %865 = vmatprep.subr.bf16.mxu0 0
      %866 = vmatpush1.bf16.msra.mxu0 0
      %867 = vmatprep.subr.bf16.mxu0 0
      %868 = vmatpush1.bf16.msra.mxu0 0
      %869 = vmatprep.subr.bf16.mxu0 0
      %870 = vmatpush1.bf16.msra.mxu0 0
      %871 = vmatprep.subr.bf16.mxu0 0
      %872 = vmatpush1.bf16.msra.mxu0 0
      %873 = vmatprep.subr.bf16.mxu0 0
      %874 = vmatpush1.bf16.msra.mxu0 0
      %875 = vmatprep.subr.bf16.mxu0 0
      %876 = vmatpush1.bf16.msra.mxu0 0
      %877 = vmatprep.subr.bf16.mxu0 0
      %878 = vmatpush1.bf16.msra.mxu0 0
      %879 = vmatprep.subr.bf16.mxu0 0
      %880 = vmatpush1.bf16.msra.mxu0 0
      %881 = vmatprep.mubr.bf16.mxu0 0
      %882 = vmatmul.mubr.bf16.gmra.mrb[0].mxu0 %v799
      %v883 = vpop.f32.mrb[0].mxu0
      %v884 = vadd.f32 0.0, %v883
      %v885 = vpop.f32.mrb[0].mxu0
      %v886 = vpop.f32.mrb[0].mxu0
      %v887 = vadd.f32 0.0, %v886
      %v888 = vpop.f32.mrb[0].mxu0
      %889 = vmatprep.mubr.bf16.mxu0 0
      %890 = vmatmul.mubr.bf16.gmra.mrb[0].mxu0 %v802
      %v891 = vpop.f32.mrb[0].mxu0
      %v892 = vadd.f32 0.0, %v891
      %v893 = vpop.f32.mrb[0].mxu0
      %v894 = vpop.f32.mrb[0].mxu0
      %v895 = vadd.f32 0.0, %v894
      %v896 = vpop.f32.mrb[0].mxu0
      %897 = vmatprep.mubr.bf16.mxu0 0
      %898 = vmatmul.mubr.bf16.gmra.mrb[0].mxu0 %v805
      %v899 = vpop.f32.mrb[0].mxu0
      %v900 = vadd.f32 0.0, %v899
      %v901 = vpop.f32.mrb[0].mxu0
      %v902 = vpop.f32.mrb[0].mxu0
      %v903 = vadd.f32 0.0, %v902
      %v904 = vpop.f32.mrb[0].mxu0
      %905 = vmatprep.mubr.bf16.mxu0 0
      %906 = vmatmul.mubr.bf16.gmra.mrb[0].mxu0 %v808
      %v907 = vpop.f32.mrb[0].mxu0
      %v908 = vadd.f32 0.0, %v907
      %v909 = vpop.f32.mrb[0].mxu0
      %v910 = vpop.f32.mrb[0].mxu0
      %v911 = vadd.f32 0.0, %v910
      %v912 = vpop.f32.mrb[0].mxu0
      %913 = vmatprep.mubr.bf16.mxu0 0
      %914 = vmatmul.mubr.bf16.gmra.mrb[0].mxu0 %v811
      %v915 = vpop.f32.mrb[0].mxu0
      %v916 = vadd.f32 0.0, %v915
      %v917 = vpop.f32.mrb[0].mxu0
      %v918 = vpop.f32.mrb[0].mxu0
      %v919 = vadd.f32 0.0, %v918
      %v920 = vpop.f32.mrb[0].mxu0
      %921 = vmatprep.mubr.bf16.mxu0 0
      %922 = vmatmul.mubr.bf16.gmra.mrb[0].mxu0 %v814
      %v923 = vpop.f32.mrb[0].mxu0
      %v924 = vadd.f32 0.0, %v923
      %v925 = vpop.f32.mrb[0].mxu0
      %v926 = vpop.f32.mrb[0].mxu0
      %v927 = vadd.f32 0.0, %v926
      %v928 = vpop.f32.mrb[0].mxu0
      %929 = vmatprep.mubr.bf16.mxu0 0
      %930 = vmatmul.mubr.bf16.gmra.mrb[0].mxu0 %v817
      %v931 = vpop.f32.mrb[0].mxu0
      %v932 = vadd.f32 0.0, %v931
      %v933 = vpop.f32.mrb[0].mxu0
      %v934 = vpop.f32.mrb[0].mxu0
      %v935 = vadd.f32 0.0, %v934
      %v936 = vpop.f32.mrb[0].mxu0
      %937 = vmatprep.mubr.bf16.mxu0 0
      %938 = vmatmul.mubr.bf16.gmra.mrb[0].mxu0 %v820
      %v939 = vpop.f32.mrb[0].mxu0
      %v940 = vadd.f32 0.0, %v939
      %v941 = vpop.f32.mrb[0].mxu0
      %v942 = vpop.f32.mrb[0].mxu0
      %v943 = vadd.f32 0.0, %v942
      %v944 = vpop.f32.mrb[0].mxu0
      %945 = vmatprep.mubr.bf16.mxu0 0
      %946 = vmatmul.mubr.bf16.gmra.mrb[0].mxu0 %v823
      %v947 = vpop.f32.mrb[0].mxu0
      %v948 = vadd.f32 0.0, %v947
      %v949 = vpop.f32.mrb[0].mxu0
      %v950 = vpop.f32.mrb[0].mxu0
      %v951 = vadd.f32 0.0, %v950
      %v952 = vpop.f32.mrb[0].mxu0
      %953 = vmatprep.mubr.bf16.mxu0 0
      %954 = vmatmul.mubr.bf16.gmra.mrb[0].mxu0 %v826
      %v955 = vpop.f32.mrb[0].mxu0
      %v956 = vadd.f32 0.0, %v955
      %v957 = vpop.f32.mrb[0].mxu0
      %v958 = vpop.f32.mrb[0].mxu0
      %v959 = vadd.f32 0.0, %v958
      %v960 = vpop.f32.mrb[0].mxu0
      %961 = vmatprep.mubr.bf16.mxu0 0
      %962 = vmatmul.mubr.bf16.gmra.mrb[0].mxu0 %v829
      %v963 = vpop.f32.mrb[0].mxu0
      %v964 = vadd.f32 0.0, %v963
      %v965 = vpop.f32.mrb[0].mxu0
      %v966 = vpop.f32.mrb[0].mxu0
      %v967 = vadd.f32 0.0, %v966
      %v968 = vpop.f32.mrb[0].mxu0
      %969 = vmatprep.mubr.bf16.mxu0 0
      %970 = vmatmul.mubr.bf16.gmra.mrb[0].mxu0 %v832
      %v971 = vpop.f32.mrb[0].mxu0
      %v972 = vadd.f32 0.0, %v971
      %v973 = vpop.f32.mrb[0].mxu0
      %v974 = vpop.f32.mrb[0].mxu0
      %v975 = vadd.f32 0.0, %v974
      %v976 = vpop.f32.mrb[0].mxu0
      %977 = vmatprep.mubr.bf16.mxu0 0
      %978 = vmatmul.mubr.bf16.gmra.mrb[0].mxu0 %v835
      %v979 = vpop.f32.mrb[0].mxu0
      %v980 = vadd.f32 0.0, %v979
      %v981 = vpop.f32.mrb[0].mxu0
      %v982 = vpop.f32.mrb[0].mxu0
      %v983 = vadd.f32 0.0, %v982
      %v984 = vpop.f32.mrb[0].mxu0
      %985 = vmatprep.mubr.bf16.mxu0 0
      %986 = vmatmul.mubr.bf16.gmra.mrb[0].mxu0 %v838
      %v987 = vpop.f32.mrb[0].mxu0
      %v988 = vadd.f32 0.0, %v987
      %v989 = vpop.f32.mrb[0].mxu0
      %v990 = vpop.f32.mrb[0].mxu0
      %v991 = vadd.f32 0.0, %v990
      %v992 = vpop.f32.mrb[0].mxu0
      %993 = vmatprep.mubr.bf16.mxu0 0
      %994 = vmatmul.mubr.bf16.gmra.mrb[0].mxu0 %v841
      %v995 = vpop.f32.mrb[0].mxu0
      %v996 = vadd.f32 0.0, %v995
      %v997 = vpop.f32.mrb[0].mxu0
      %v998 = vpop.f32.mrb[0].mxu0
      %v999 = vadd.f32 0.0, %v998
      %v1000 = vpop.f32.mrb[0].mxu0
      %1001 = vmatprep.mubr.bf16.mxu0 0
      %1002 = vmatmul.mubr.bf16.gmra.mrb[0].mxu0 %v844
      %v1003 = vpop.f32.mrb[0].mxu0
      %v1004 = vadd.f32 0.0, %v1003
      %v1005 = vpop.f32.mrb[0].mxu0
      %v1006 = vpop.f32.mrb[0].mxu0
      %v1007 = vadd.f32 0.0, %v1006
      %v1008 = vpop.f32.mrb[0].mxu0
      %1009 = vdwg.mxu0
      %1010 = vst.msk [vmem:[%s337] sm:$0xff] %vm716, %v884
      %1011 = vst.msk [vmem:[%s337 + $0x8] sm:$0xff] %vm716, %v887
      %1012 = vst.msk [vmem:[%s337 + $0x10] sm:$0xff] %vm716, %v892
      %1013 = vst.msk [vmem:[%s337 + $0x18] sm:$0xff] %vm716, %v895
      %1014 = vst.msk [vmem:[%s337 + $0x20] sm:$0xff] %vm716, %v900
      %1015 = vst.msk [vmem:[%s337 + $0x28] sm:$0xff] %vm716, %v903
      %1016 = vst.msk [vmem:[%s337 + $0x30] sm:$0xff] %vm716, %v908
      %1017 = vst.msk [vmem:[%s337 + $0x38] sm:$0xff] %vm716, %v911
      %1018 = vst.msk [vmem:[%s337 + $0x40] sm:$0xff] %vm716, %v916
      %1019 = vst.msk [vmem:[%s337 + $0x48] sm:$0xff] %vm716, %v919
      %1020 = vst.msk [vmem:[%s337 + $0x50] sm:$0xff] %vm716, %v924
      %1021 = vst.msk [vmem:[%s337 + $0x58] sm:$0xff] %vm716, %v927
      %1022 = vst.msk [vmem:[%s337 + $0x60] sm:$0xff] %vm716, %v932
      %1023 = vst.msk [vmem:[%s337 + $0x68] sm:$0xff] %vm716, %v935
      %1024 = vst.msk [vmem:[%s337 + $0x70] sm:$0xff] %vm716, %v940
      %1025 = vst.msk [vmem:[%s337 + $0x78] sm:$0xff] %vm716, %v943
      %1026 = vst.msk [vmem:[%s337 + $0x80] sm:$0xff] %vm716, %v948
      %1027 = vst.msk [vmem:[%s337 + $0x88] sm:$0xff] %vm716, %v951
      %1028 = vst.msk [vmem:[%s337 + $0x90] sm:$0xff] %vm716, %v956
      %1029 = vst.msk [vmem:[%s337 + $0x98] sm:$0xff] %vm716, %v959
      %1030 = vst.msk [vmem:[%s337 + $0xa0] sm:$0xff] %vm716, %v964
      %1031 = vst.msk [vmem:[%s337 + $0xa8] sm:$0xff] %vm716, %v967
      %1032 = vst.msk [vmem:[%s337 + $0xb0] sm:$0xff] %vm716, %v972
      %1033 = vst.msk [vmem:[%s337 + $0xb8] sm:$0xff] %vm716, %v975
      %1034 = vst.msk [vmem:[%s337 + $0xc0] sm:$0xff] %vm716, %v980
      %1035 = vst.msk [vmem:[%s337 + $0xc8] sm:$0xff] %vm716, %v983
      %1036 = vst.msk [vmem:[%s337 + $0xd0] sm:$0xff] %vm716, %v988
      %1037 = vst.msk [vmem:[%s337 + $0xd8] sm:$0xff] %vm716, %v991
      %1038 = vst.msk [vmem:[%s337 + $0xe0] sm:$0xff] %vm716, %v996
      %1039 = vst.msk [vmem:[%s337 + $0xe8] sm:$0xff] %vm716, %v999
      %1040 = vst.msk [vmem:[%s337 + $0xf0] sm:$0xff] %vm716, %v1004
      %1041 = vst.msk [vmem:[%s337 + $0xf8] sm:$0xff] %vm716, %v1007
      %v1042 = vld [vmem:[%s6] sm:$0x3]
      %v1043 = vsel %vm716, %v590, 0.0
      %v1044 = vsel %vm716, %v593, 0.0
      %v1045 = vadd.f32 %v1043, %v1044
      %v1046 = vsel %vm716, %v598, 0.0
      %v1047 = vadd.f32 %v1045, %v1046
      %v1048 = vsel %vm716, %v601, 0.0
      %v1049 = vadd.f32 %v1047, %v1048
      %v1050 = vsel %vm716, %v606, 0.0
      %v1051 = vadd.f32 %v1049, %v1050
      %v1052 = vsel %vm716, %v609, 0.0
      %v1053 = vadd.f32 %v1051, %v1052
      %v1054 = vsel %vm716, %v614, 0.0
      %v1055 = vadd.f32 %v1053, %v1054
      %v1056 = vsel %vm716, %v617, 0.0
      %v1057 = vadd.f32 %v1055, %v1056
      %v1058 = vsel %vm716, %v622, 0.0
      %v1059 = vadd.f32 %v1057, %v1058
      %v1060 = vsel %vm716, %v625, 0.0
      %v1061 = vadd.f32 %v1059, %v1060
      %v1062 = vsel %vm716, %v630, 0.0
      %v1063 = vadd.f32 %v1061, %v1062
      %v1064 = vsel %vm716, %v633, 0.0
      %v1065 = vadd.f32 %v1063, %v1064
      %v1066 = vsel %vm716, %v638, 0.0
      %v1067 = vadd.f32 %v1065, %v1066
      %v1068 = vsel %vm716, %v641, 0.0
      %v1069 = vadd.f32 %v1067, %v1068
      %v1070 = vsel %vm716, %v646, 0.0
      %v1071 = vadd.f32 %v1069, %v1070
      %v1072 = vsel %vm716, %v649, 0.0
      %v1073 = vadd.f32 %v1071, %v1072
      %v1074 = vsel %vm716, %v654, 0.0
      %v1075 = vadd.f32 %v1073, %v1074
      %v1076 = vsel %vm716, %v657, 0.0
      %v1077 = vadd.f32 %v1075, %v1076
      %v1078 = vsel %vm716, %v662, 0.0
      %v1079 = vadd.f32 %v1077, %v1078
      %v1080 = vsel %vm716, %v665, 0.0
      %v1081 = vadd.f32 %v1079, %v1080
      %v1082 = vsel %vm716, %v670, 0.0
      %v1083 = vadd.f32 %v1081, %v1082
      %v1084 = vsel %vm716, %v673, 0.0
      %v1085 = vadd.f32 %v1083, %v1084
      %v1086 = vsel %vm716, %v678, 0.0
      %v1087 = vadd.f32 %v1085, %v1086
      %v1088 = vsel %vm716, %v681, 0.0
      %v1089 = vadd.f32 %v1087, %v1088
      %v1090 = vsel %vm716, %v686, 0.0
      %v1091 = vadd.f32 %v1089, %v1090
      %v1092 = vsel %vm716, %v689, 0.0
      %v1093 = vadd.f32 %v1091, %v1092
      %v1094 = vsel %vm716, %v694, 0.0
      %v1095 = vadd.f32 %v1093, %v1094
      %v1096 = vsel %vm716, %v697, 0.0
      %v1097 = vadd.f32 %v1095, %v1096
      %v1098 = vsel %vm716, %v702, 0.0
      %v1099 = vadd.f32 %v1097, %v1098
      %v1100 = vsel %vm716, %v705, 0.0
      %v1101 = vadd.f32 %v1099, %v1100
      %v1102 = vsel %vm716, %v710, 0.0
      %v1103 = vadd.f32 %v1101, %v1102
      %v1104 = vsel %vm716, %v713, 0.0
      %v1105 = vadd.f32 %v1103, %v1104
      %v1106 = vrot.slane %v1105, 4
      %v1107 = vadd.f32 %v1105, %v1106
      %v1108 = vrot.slane %v1107, 2
      %v1109 = vadd.f32 %v1107, %v1108
      %v1110 = vrot.slane %v1109, 1
      %v1111 = vadd.f32 %v1109, %v1110
      %v1112 = vmul.f32 %v590, %v590
      %v1113 = vmul.f32 %v593, %v593
      %v1114 = vmul.f32 %v598, %v598
      %v1115 = vmul.f32 %v601, %v601
      %v1116 = vmul.f32 %v606, %v606
      %v1117 = vmul.f32 %v609, %v609
      %v1118 = vmul.f32 %v614, %v614
      %v1119 = vmul.f32 %v617, %v617
      %v1120 = vmul.f32 %v622, %v622
      %v1121 = vmul.f32 %v625, %v625
      %v1122 = vmul.f32 %v630, %v630
      %v1123 = vmul.f32 %v633, %v633
      %v1124 = vmul.f32 %v638, %v638
      %v1125 = vmul.f32 %v641, %v641
      %v1126 = vmul.f32 %v646, %v646
      %v1127 = vmul.f32 %v649, %v649
      %v1128 = vmul.f32 %v654, %v654
      %v1129 = vmul.f32 %v657, %v657
      %v1130 = vmul.f32 %v662, %v662
      %v1131 = vmul.f32 %v665, %v665
      %v1132 = vmul.f32 %v670, %v670
      %v1133 = vmul.f32 %v673, %v673
      %v1134 = vmul.f32 %v678, %v678
      %v1135 = vmul.f32 %v681, %v681
      %v1136 = vmul.f32 %v686, %v686
      %v1137 = vmul.f32 %v689, %v689
      %v1138 = vmul.f32 %v694, %v694
      %v1139 = vmul.f32 %v697, %v697
      %v1140 = vmul.f32 %v702, %v702
      %v1141 = vmul.f32 %v705, %v705
      %v1142 = vmul.f32 %v710, %v710
      %v1143 = vmul.f32 %v713, %v713
      %v1144 = vsel %vm716, %v1112, 0.0
      %v1145 = vsel %vm716, %v1113, 0.0
      %v1146 = vadd.f32 %v1144, %v1145
      %v1147 = vsel %vm716, %v1114, 0.0
      %v1148 = vadd.f32 %v1146, %v1147
      %v1149 = vsel %vm716, %v1115, 0.0
      %v1150 = vadd.f32 %v1148, %v1149
      %v1151 = vsel %vm716, %v1116, 0.0
      %v1152 = vadd.f32 %v1150, %v1151
      %v1153 = vsel %vm716, %v1117, 0.0
      %v1154 = vadd.f32 %v1152, %v1153
      %v1155 = vsel %vm716, %v1118, 0.0
      %v1156 = vadd.f32 %v1154, %v1155
      %v1157 = vsel %vm716, %v1119, 0.0
      %v1158 = vadd.f32 %v1156, %v1157
      %v1159 = vsel %vm716, %v1120, 0.0
      %v1160 = vadd.f32 %v1158, %v1159
      %v1161 = vsel %vm716, %v1121, 0.0
      %v1162 = vadd.f32 %v1160, %v1161
      %v1163 = vsel %vm716, %v1122, 0.0
      %v1164 = vadd.f32 %v1162, %v1163
      %v1165 = vsel %vm716, %v1123, 0.0
      %v1166 = vadd.f32 %v1164, %v1165
      %v1167 = vsel %vm716, %v1124, 0.0
      %v1168 = vadd.f32 %v1166, %v1167
      %v1169 = vsel %vm716, %v1125, 0.0
      %v1170 = vadd.f32 %v1168, %v1169
      %v1171 = vsel %vm716, %v1126, 0.0
      %v1172 = vadd.f32 %v1170, %v1171
      %v1173 = vsel %vm716, %v1127, 0.0
      %v1174 = vadd.f32 %v1172, %v1173
      %v1175 = vsel %vm716, %v1128, 0.0
      %v1176 = vadd.f32 %v1174, %v1175
      %v1177 = vsel %vm716, %v1129, 0.0
      %v1178 = vadd.f32 %v1176, %v1177
      %v1179 = vsel %vm716, %v1130, 0.0
      %v1180 = vadd.f32 %v1178, %v1179
      %v1181 = vsel %vm716, %v1131, 0.0
      %v1182 = vadd.f32 %v1180, %v1181
      %v1183 = vsel %vm716, %v1132, 0.0
      %v1184 = vadd.f32 %v1182, %v1183
      %v1185 = vsel %vm716, %v1133, 0.0
      %v1186 = vadd.f32 %v1184, %v1185
      %v1187 = vsel %vm716, %v1134, 0.0
      %v1188 = vadd.f32 %v1186, %v1187
      %v1189 = vsel %vm716, %v1135, 0.0
      %v1190 = vadd.f32 %v1188, %v1189
      %v1191 = vsel %vm716, %v1136, 0.0
      %v1192 = vadd.f32 %v1190, %v1191
      %v1193 = vsel %vm716, %v1137, 0.0
      %v1194 = vadd.f32 %v1192, %v1193
      %v1195 = vsel %vm716, %v1138, 0.0
      %v1196 = vadd.f32 %v1194, %v1195
      %v1197 = vsel %vm716, %v1139, 0.0
      %v1198 = vadd.f32 %v1196, %v1197
      %v1199 = vsel %vm716, %v1140, 0.0
      %v1200 = vadd.f32 %v1198, %v1199
      %v1201 = vsel %vm716, %v1141, 0.0
      %v1202 = vadd.f32 %v1200, %v1201
      %v1203 = vsel %vm716, %v1142, 0.0
      %v1204 = vadd.f32 %v1202, %v1203
      %v1205 = vsel %vm716, %v1143, 0.0
      %v1206 = vadd.f32 %v1204, %v1205
      %v1207 = vrot.slane %v1206, 4
      %v1208 = vadd.f32 %v1206, %v1207
      %v1209 = vrot.slane %v1208, 2
      %v1210 = vadd.f32 %v1208, %v1209
      %v1211 = vrot.slane %v1210, 1
      %v1212 = vadd.f32 %v1210, %v1211
      %vm1213 = vcmask 1040384
      %v1214 = vsel %vm1213, %v1111, %v1212
      %v1215 = vadd.f32 %v1042, %v1214
      %vm1216 = vcmask 123904
      %1217 = vst.msk [vmem:[%s6] sm:$0x3] %vm1216, %v1215
      %v1218 = vld [vmem:[%s8] sm:$0x3]
      %v1219 = vsel %vm716, %v884, 0.0
      %v1220 = vsel %vm716, %v887, 0.0
      %v1221 = vadd.f32 %v1219, %v1220
      %v1222 = vsel %vm716, %v892, 0.0
      %v1223 = vadd.f32 %v1221, %v1222
      %v1224 = vsel %vm716, %v895, 0.0
      %v1225 = vadd.f32 %v1223, %v1224
      %v1226 = vsel %vm716, %v900, 0.0
      %v1227 = vadd.f32 %v1225, %v1226
      %v1228 = vsel %vm716, %v903, 0.0
      %v1229 = vadd.f32 %v1227, %v1228
      %v1230 = vsel %vm716, %v908, 0.0
      %v1231 = vadd.f32 %v1229, %v1230
      %v1232 = vsel %vm716, %v911, 0.0
      %v1233 = vadd.f32 %v1231, %v1232
      %v1234 = vsel %vm716, %v916, 0.0
      %v1235 = vadd.f32 %v1233, %v1234
      %v1236 = vsel %vm716, %v919, 0.0
      %v1237 = vadd.f32 %v1235, %v1236
      %v1238 = vsel %vm716, %v924, 0.0
      %v1239 = vadd.f32 %v1237, %v1238
      %v1240 = vsel %vm716, %v927, 0.0
      %v1241 = vadd.f32 %v1239, %v1240
      %v1242 = vsel %vm716, %v932, 0.0
      %v1243 = vadd.f32 %v1241, %v1242
      %v1244 = vsel %vm716, %v935, 0.0
      %v1245 = vadd.f32 %v1243, %v1244
      %v1246 = vsel %vm716, %v940, 0.0
      %v1247 = vadd.f32 %v1245, %v1246
      %v1248 = vsel %vm716, %v943, 0.0
      %v1249 = vadd.f32 %v1247, %v1248
      %v1250 = vsel %vm716, %v948, 0.0
      %v1251 = vadd.f32 %v1249, %v1250
      %v1252 = vsel %vm716, %v951, 0.0
      %v1253 = vadd.f32 %v1251, %v1252
      %v1254 = vsel %vm716, %v956, 0.0
      %v1255 = vadd.f32 %v1253, %v1254
      %v1256 = vsel %vm716, %v959, 0.0
      %v1257 = vadd.f32 %v1255, %v1256
      %v1258 = vsel %vm716, %v964, 0.0
      %v1259 = vadd.f32 %v1257, %v1258
      %v1260 = vsel %vm716, %v967, 0.0
      %v1261 = vadd.f32 %v1259, %v1260
      %v1262 = vsel %vm716, %v972, 0.0
      %v1263 = vadd.f32 %v1261, %v1262
      %v1264 = vsel %vm716, %v975, 0.0
      %v1265 = vadd.f32 %v1263, %v1264
      %v1266 = vsel %vm716, %v980, 0.0
      %v1267 = vadd.f32 %v1265, %v1266
      %v1268 = vsel %vm716, %v983, 0.0
      %v1269 = vadd.f32 %v1267, %v1268
      %v1270 = vsel %vm716, %v988, 0.0
      %v1271 = vadd.f32 %v1269, %v1270
      %v1272 = vsel %vm716, %v991, 0.0
      %v1273 = vadd.f32 %v1271, %v1272
      %v1274 = vsel %vm716, %v996, 0.0
      %v1275 = vadd.f32 %v1273, %v1274
      %v1276 = vsel %vm716, %v999, 0.0
      %v1277 = vadd.f32 %v1275, %v1276
      %v1278 = vsel %vm716, %v1004, 0.0
      %v1279 = vadd.f32 %v1277, %v1278
      %v1280 = vsel %vm716, %v1007, 0.0
      %v1281 = vadd.f32 %v1279, %v1280
      %v1282 = vrot.slane %v1281, 4
      %v1283 = vadd.f32 %v1281, %v1282
      %v1284 = vrot.slane %v1283, 2
      %v1285 = vadd.f32 %v1283, %v1284
      %v1286 = vrot.slane %v1285, 1
      %v1287 = vadd.f32 %v1285, %v1286
      %v1288 = vmul.f32 %v884, %v884
      %v1289 = vmul.f32 %v887, %v887
      %v1290 = vmul.f32 %v892, %v892
      %v1291 = vmul.f32 %v895, %v895
      %v1292 = vmul.f32 %v900, %v900
      %v1293 = vmul.f32 %v903, %v903
      %v1294 = vmul.f32 %v908, %v908
      %v1295 = vmul.f32 %v911, %v911
      %v1296 = vmul.f32 %v916, %v916
      %v1297 = vmul.f32 %v919, %v919
      %v1298 = vmul.f32 %v924, %v924
      %v1299 = vmul.f32 %v927, %v927
      %v1300 = vmul.f32 %v932, %v932
      %v1301 = vmul.f32 %v935, %v935
      %v1302 = vmul.f32 %v940, %v940
      %v1303 = vmul.f32 %v943, %v943
      %v1304 = vmul.f32 %v948, %v948
      %v1305 = vmul.f32 %v951, %v951
      %v1306 = vmul.f32 %v956, %v956
      %v1307 = vmul.f32 %v959, %v959
      %v1308 = vmul.f32 %v964, %v964
      %v1309 = vmul.f32 %v967, %v967
      %v1310 = vmul.f32 %v972, %v972
      %v1311 = vmul.f32 %v975, %v975
      %v1312 = vmul.f32 %v980, %v980
      %v1313 = vmul.f32 %v983, %v983
      %v1314 = vmul.f32 %v988, %v988
      %v1315 = vmul.f32 %v991, %v991
      %v1316 = vmul.f32 %v996, %v996
      %v1317 = vmul.f32 %v999, %v999
      %v1318 = vmul.f32 %v1004, %v1004
      %v1319 = vmul.f32 %v1007, %v1007
      %v1320 = vsel %vm716, %v1288, 0.0
      %v1321 = vsel %vm716, %v1289, 0.0
      %v1322 = vadd.f32 %v1320, %v1321
      %v1323 = vsel %vm716, %v1290, 0.0
      %v1324 = vadd.f32 %v1322, %v1323
      %v1325 = vsel %vm716, %v1291, 0.0
      %v1326 = vadd.f32 %v1324, %v1325
      %v1327 = vsel %vm716, %v1292, 0.0
      %v1328 = vadd.f32 %v1326, %v1327
      %v1329 = vsel %vm716, %v1293, 0.0
      %v1330 = vadd.f32 %v1328, %v1329
      %v1331 = vsel %vm716, %v1294, 0.0
      %v1332 = vadd.f32 %v1330, %v1331
      %v1333 = vsel %vm716, %v1295, 0.0
      %v1334 = vadd.f32 %v1332, %v1333
      %v1335 = vsel %vm716, %v1296, 0.0
      %v1336 = vadd.f32 %v1334, %v1335
      %v1337 = vsel %vm716, %v1297, 0.0
      %v1338 = vadd.f32 %v1336, %v1337
      %v1339 = vsel %vm716, %v1298, 0.0
      %v1340 = vadd.f32 %v1338, %v1339
      %v1341 = vsel %vm716, %v1299, 0.0
      %v1342 = vadd.f32 %v1340, %v1341
      %v1343 = vsel %vm716, %v1300, 0.0
      %v1344 = vadd.f32 %v1342, %v1343
      %v1345 = vsel %vm716, %v1301, 0.0
      %v1346 = vadd.f32 %v1344, %v1345
      %v1347 = vsel %vm716, %v1302, 0.0
      %v1348 = vadd.f32 %v1346, %v1347
      %v1349 = vsel %vm716, %v1303, 0.0
      %v1350 = vadd.f32 %v1348, %v1349
      %v1351 = vsel %vm716, %v1304, 0.0
      %v1352 = vadd.f32 %v1350, %v1351
      %v1353 = vsel %vm716, %v1305, 0.0
      %v1354 = vadd.f32 %v1352, %v1353
      %v1355 = vsel %vm716, %v1306, 0.0
      %v1356 = vadd.f32 %v1354, %v1355
      %v1357 = vsel %vm716, %v1307, 0.0
      %v1358 = vadd.f32 %v1356, %v1357
      %v1359 = vsel %vm716, %v1308, 0.0
      %v1360 = vadd.f32 %v1358, %v1359
      %v1361 = vsel %vm716, %v1309, 0.0
      %v1362 = vadd.f32 %v1360, %v1361
      %v1363 = vsel %vm716, %v1310, 0.0
      %v1364 = vadd.f32 %v1362, %v1363
      %v1365 = vsel %vm716, %v1311, 0.0
      %v1366 = vadd.f32 %v1364, %v1365
      %v1367 = vsel %vm716, %v1312, 0.0
      %v1368 = vadd.f32 %v1366, %v1367
      %v1369 = vsel %vm716, %v1313, 0.0
      %v1370 = vadd.f32 %v1368, %v1369
      %v1371 = vsel %vm716, %v1314, 0.0
      %v1372 = vadd.f32 %v1370, %v1371
      %v1373 = vsel %vm716, %v1315, 0.0
      %v1374 = vadd.f32 %v1372, %v1373
      %v1375 = vsel %vm716, %v1316, 0.0
      %v1376 = vadd.f32 %v1374, %v1375
      %v1377 = vsel %vm716, %v1317, 0.0
      %v1378 = vadd.f32 %v1376, %v1377
      %v1379 = vsel %vm716, %v1318, 0.0
      %v1380 = vadd.f32 %v1378, %v1379
      %v1381 = vsel %vm716, %v1319, 0.0
      %v1382 = vadd.f32 %v1380, %v1381
      %v1383 = vrot.slane %v1382, 4
      %v1384 = vadd.f32 %v1382, %v1383
      %v1385 = vrot.slane %v1384, 2
      %v1386 = vadd.f32 %v1384, %v1385
      %v1387 = vrot.slane %v1386, 1
      %v1388 = vadd.f32 %v1386, %v1387
      %v1389 = vsel %vm1213, %v1287, %v1388
      %v1390 = vadd.f32 %v1218, %v1389
      %1391 = vst.msk [vmem:[%s8] sm:$0x3] %vm1216, %v1390
      %s1392 = smul.u32 32, %s20
      %p1393 = scmp.lt.s32.totalorder %s1392, 63
      %s1394 = scalar_select %p1393, %s1392, 63
      %s1395 = smul.addr %s1394, 8
      %s1396 = scalar_lea.vmem %s5, %s1395
      %s1397 = smul.u32 32, %s20
      %p1398 = scmp.lt.s32.totalorder %s1397, 63
      %s1399 = scalar_select %p1398, %s1397, 63
      %s1400 = smul.addr %s1399, 8
      %s1401 = scalar_lea.vmem %s7, %s1400
      // Predicated region
      $region45: #{bottleneck_forward.6} parent=39 // pred_check
        %p1402 = pneg %p153
      $region46: #{bottleneck_forward.6} parent=39 // pred_check_branch
        %1404 = sbr.rel (%p1402) target = $region48
      $region47: #{bottleneck_forward.6} parent=39 // pred_region
        %s1405 = smul.u32 32, %s20
      $region48: #{bottleneck_forward.6} parent=39 // pred_fallthru
        _
      // Predicated region
      $region49: #{bottleneck_forward.6} parent=39 // pred_check
        %p1406 = pneg %p174
      $region50: #{bottleneck_forward.6} parent=39 // pred_check_branch
        %1408 = sbr.rel (%p1406) target = $region52
      $region51: #{bottleneck_forward.6} parent=39 // pred_region
        _
      $region52: #{bottleneck_forward.6} parent=39 // pred_fallthru
        _
      // Predicated region
      $region53: #{bottleneck_forward.6} parent=39 // pred_check
        %p1409 = pneg %p200
      $region54: #{bottleneck_forward.6} parent=39 // pred_check_branch
        %1411 = sbr.rel (%p1409) target = $region56
      $region55: #{bottleneck_forward.6} parent=39 // pred_region
        %s1412 = smul.u32 32, %s20
      $region56: #{bottleneck_forward.6} parent=39 // pred_fallthru
        _
      // Predicated region
      $region57: #{bottleneck_forward.6} parent=39 // pred_check
        %p1413 = pneg %p221
      $region58: #{bottleneck_forward.6} parent=39 // pred_check_branch
        %1415 = sbr.rel (%p1413) target = $region60
      $region59: #{bottleneck_forward.6} parent=39 // pred_region
        _
      $region60: #{bottleneck_forward.6} parent=39 // pred_fallthru
        _
      // Predicated region
      $region61: #{bottleneck_forward.6} parent=39 // pred_check
        %p1416 = pneg %p174
      $region62: #{bottleneck_forward.6} parent=39 // pred_check_branch
        %1418 = sbr.rel (%p1416) target = $region64
      $region63: #{bottleneck_forward.6} parent=39 // pred_region
        _
      $region64: #{bottleneck_forward.6} parent=39 // pred_fallthru
        _
      // Predicated region
      $region65: #{bottleneck_forward.6} parent=39 // pred_check
        %p1419 = pneg %p221
      $region66: #{bottleneck_forward.6} parent=39 // pred_check_branch
        %1421 = sbr.rel (%p1419) target = $region68
      $region67: #{bottleneck_forward.6} parent=39 // pred_region
        _
      $region68: #{bottleneck_forward.6} parent=39 // pred_fallthru
        _
    $region40: #{bottleneck_forward.6} parent=5 // pred_fallthru
      _
    %p1422 = scmp.le.s32.totalorder 2, %s15
    // Predicated region
    $region69: #{bottleneck_forward.6} parent=5 // pred_check
      %p1423 = pneg %p1422
    $region70: #{bottleneck_forward.6} parent=5 // pred_check_branch
      %1425 = sbr.rel (%p1423) target = $region72
    $region71: #{bottleneck_forward.6} parent=5 // pred_region
      %s1426 = ssub.s32 %s15, 2
      // Predicated region
      $region73: #{bottleneck_forward.6} parent=71 // pred_check
        %p1427 = pneg %p159
      $region74: #{bottleneck_forward.6} parent=71 // pred_check_branch
        %1429 = sbr.rel (%p1427) target = $region76
      $region75: #{bottleneck_forward.6} parent=71 // pred_region
        %s1430 = smul.u32 32, %s21
        %p1431 = scmp.lt.s32.totalorder %s1430, 63
        %s1432 = scalar_select %p1431, %s1430, 63
        %s1433 = smul.addr %s1432, 8
        %s1434 = scalar_lea.vmem %s5, %s1433
      $region76: #{bottleneck_forward.6} parent=71 // pred_fallthru
        _
      // Predicated region
      $region77: #{bottleneck_forward.6} parent=71 // pred_check
        %p1435 = pneg %p206
      $region78: #{bottleneck_forward.6} parent=71 // pred_check_branch
        %1437 = sbr.rel (%p1435) target = $region80
      $region79: #{bottleneck_forward.6} parent=71 // pred_region
        %s1438 = smul.u32 32, %s21
        %p1439 = scmp.lt.s32.totalorder %s1438, 63
        %s1440 = scalar_select %p1439, %s1438, 63
        %s1441 = smul.addr %s1440, 8
        %s1442 = scalar_lea.vmem %s7, %s1441
      $region80: #{bottleneck_forward.6} parent=71 // pred_fallthru
        _
    $region72: #{bottleneck_forward.6} parent=5 // pred_fallthru
      _
  $region6: #{bottleneck_forward.6} parent=0 // loop_footer
    %s19 = sadd.s32 1, %s15
  $region7: #{bottleneck_forward.6} parent=0 // loop_footer_branch
    %14 = sbr.rel target = $region3
  $region8: #{bottleneck_forward.6} parent=0 // loop_exit
    _

// kernel: bottleneck_forward.5
$region0: #{bottleneck_forward.5}
  #allocation0 [shape = 'u32[]', space=smem, size = 0x4, offset = 0x4, fixed_abs, tag = 'smem constant byte address 0x4 - core index']
  #allocation1 [shape = 'u32[144,128]{1,0:T(1,128)}', space=vmem, size = 0x12000, scoped, tag = 'internal scratch']
  #allocation2 [shape = 'f32[18,18,4]{2,1,0:T(8,128)}', space=vmem, size = 0x36000, scoped, tag = 'scratch operand']
  #allocation3 [shape = 'f32[256,4]{1,0:T(8,128)}', space=vmem, size = 0x20000, scoped, tag = 'scratch operand']
  %s0 = inlined_call_operand.vmem [shape: f32[2,16,16,4], index: 0, kind: input, shape index: {}]
  %s1 = inlined_call_operand.vmem [shape: f32[2,4], index: 1, kind: input, shape index: {}]
  %s2 = inlined_call_operand.vmem [shape: bf16[3,3,4,4], index: 2, kind: input, shape index: {}]
  %s3 = inlined_call_operand.vmem [shape: f32[2,16,16,4], index: 3, kind: output, shape index: {0}]
  %s4 = inlined_call_operand.vmem [shape: f32[2,4], index: 4, kind: output, shape index: {1}]
  %5 = xla_tuple %s3, %s4
  %s6 = sld [smem:[#allocation0]]
  $region57: #{bottleneck_forward.5} parent=0
    _
  %s8 = ssub.s32 1, %s6
  %s9 = scalar_select 0, %s8, %s6
  loop: start=0, step=1, limit=4
  $region2: #{bottleneck_forward.5} parent=0 // loop_pre_header
    _
  $region3: #{bottleneck_forward.5} parent=0 // loop_header
    %s11 = sphi 0, %s15
    %p12 = scmp.ge.s32.totalorder %s11, 4
    %s21 = sphi 0, %s23
    %s24 = sphi 0, %s21
    %s25 = sphi 0, %s24
    %s41 = sphi 0, %s25
    %s45 = sphi 0, %s45
    %s47 = sphi 0, %s45
    %s48 = sphi 0, %s47
    %s62 = sphi 0, %s48
    %s66 = sphi 0, %s66
    %s68 = sphi 0, %s66
    %s69 = sphi 0, %s68
    %s83 = sphi 0, %s69
    %s89 = sphi 0, %s91
    %s92 = sphi 0, %s89
    %s93 = sphi 0, %s92
    %s109 = sphi 0, %s93
    %s113 = sphi 0, %s113
    %s115 = sphi 0, %s113
    %s116 = sphi 0, %s115
    %s130 = sphi 0, %s116
  $region4: #{bottleneck_forward.5} parent=0 // loop_header_branch
    %14 = sbr.rel (%p12) target = $region8
  $region5: #{bottleneck_forward.5} parent=0 // loop_body
    %s16 = ssub.s32 %s11, 1
    %s17 = ssub.s32 %s11, 2
    %s18 = sadd.s32 %s11, 1
    %s19 = ssub.s32 %s11, %s18
    %p20 = scmp.eq.s32.totalorder %s19, 0
    %s22 = sadd.s32 %s21, 1
    %s23 = scalar_select %p20, %s21, %s22
    %p26 = pneg %p20
    %p27 = scmp.eq.s32.totalorder %s11, 1
    %p28 = por %p26, %p27
    %p29 = scmp.ne.s32.totalorder %s21, %s24
    %p30 = scmp.eq.s32.totalorder %s11, 0
    %p31 = por %p29, %p30
    %p32 = scmp.ne.s32.totalorder %s21, %s24
    %p33 = scmp.eq.s32.totalorder %s16, 1
    %p34 = por %p32, %p33
    %p35 = scmp.ne.s32.totalorder %s24, %s25
    %p36 = scmp.eq.s32.totalorder %s16, 0
    %p37 = por %p35, %p36
    %p38 = scmp.ne.s32.totalorder %s24, %s25
    %p39 = scmp.eq.s32.totalorder %s17, 1
    %p40 = por %p38, %p39
    %p42 = scmp.ne.s32.totalorder %s25, %s41
    %p43 = scmp.eq.s32.totalorder %s17, 0
    %p44 = por %p42, %p43
    %s46 = sadd.s32 %s45, 1
    %p49 = scmp.eq.s32.totalorder %s11, 1
    %p50 = scmp.ne.s32.totalorder %s45, %s47
    %p51 = scmp.eq.s32.totalorder %s11, 0
    %p52 = por %p50, %p51
    %p53 = scmp.ne.s32.totalorder %s45, %s47
    %p54 = scmp.eq.s32.totalorder %s16, 1
    %p55 = por %p53, %p54
    %p56 = scmp.ne.s32.totalorder %s47, %s48
    %p57 = scmp.eq.s32.totalorder %s16, 0
    %p58 = por %p56, %p57
    %p59 = scmp.ne.s32.totalorder %s47, %s48
    %p60 = scmp.eq.s32.totalorder %s17, 1
    %p61 = por %p59, %p60
    %p63 = scmp.ne.s32.totalorder %s48, %s62
    %p64 = scmp.eq.s32.totalorder %s17, 0
    %p65 = por %p63, %p64
    %s67 = sadd.s32 %s66, 1
    %p70 = scmp.eq.s32.totalorder %s11, 1
    %p71 = scmp.ne.s32.totalorder %s66, %s68
    %p72 = scmp.eq.s32.totalorder %s11, 0
    %p73 = por %p71, %p72
    %p74 = scmp.ne.s32.totalorder %s66, %s68
    %p75 = scmp.eq.s32.totalorder %s16, 1
    %p76 = por %p74, %p75
    %p77 = scmp.ne.s32.totalorder %s68, %s69
    %p78 = scmp.eq.s32.totalorder %s16, 0
    %p79 = por %p77, %p78
    %p80 = scmp.ne.s32.totalorder %s68, %s69
    %p81 = scmp.eq.s32.totalorder %s17, 1
    %p82 = por %p80, %p81
    %p84 = scmp.ne.s32.totalorder %s69, %s83
    %p85 = scmp.eq.s32.totalorder %s17, 0
    %p86 = por %p84, %p85
    %s87 = ssub.s32 %s11, %s18
    %p88 = scmp.eq.s32.totalorder %s87, 0
    %s90 = sadd.s32 %s89, 1
    %s91 = scalar_select %p88, %s89, %s90
    %p94 = pneg %p88
    %p95 = scmp.eq.s32.totalorder %s11, 1
    %p96 = por %p94, %p95
    %p97 = scmp.ne.s32.totalorder %s89, %s92
    %p98 = scmp.eq.s32.totalorder %s11, 0
    %p99 = por %p97, %p98
    %p100 = scmp.ne.s32.totalorder %s89, %s92
    %p101 = scmp.eq.s32.totalorder %s16, 1
    %p102 = por %p100, %p101
    %p103 = scmp.ne.s32.totalorder %s92, %s93
    %p104 = scmp.eq.s32.totalorder %s16, 0
    %p105 = por %p103, %p104
    %p106 = scmp.ne.s32.totalorder %s92, %s93
    %p107 = scmp.eq.s32.totalorder %s17, 1
    %p108 = por %p106, %p107
    %p110 = scmp.ne.s32.totalorder %s93, %s109
    %p111 = scmp.eq.s32.totalorder %s17, 0
    %p112 = por %p110, %p111
    %s114 = sadd.s32 %s113, 1
    %p117 = scmp.eq.s32.totalorder %s11, 1
    %p118 = scmp.ne.s32.totalorder %s113, %s115
    %p119 = scmp.eq.s32.totalorder %s11, 0
    %p120 = por %p118, %p119
    %p121 = scmp.ne.s32.totalorder %s113, %s115
    %p122 = scmp.eq.s32.totalorder %s16, 1
    %p123 = por %p121, %p122
    %p124 = scmp.ne.s32.totalorder %s115, %s116
    %p125 = scmp.eq.s32.totalorder %s16, 0
    %p126 = por %p124, %p125
    %p127 = scmp.ne.s32.totalorder %s115, %s116
    %p128 = scmp.eq.s32.totalorder %s17, 1
    %p129 = por %p127, %p128
    %p131 = scmp.ne.s32.totalorder %s116, %s130
    %p132 = scmp.eq.s32.totalorder %s17, 0
    %p133 = por %p131, %p132
    %p134 = scmp.le.s32.totalorder 1, %s11
    %p135 = scmp.lt.s32.totalorder %s11, 3
    %p136 = pnand %p134, %p135
    %p137 = pneg %p136
    // Predicated region
    $region9: #{bottleneck_forward.5} parent=5 // pred_check
      _
    $region10: #{bottleneck_forward.5} parent=5 // pred_check_branch
      %139 = sbr.rel (%p136) target = $region12
    $region11: #{bottleneck_forward.5} parent=5 // pred_region
      %s140 = ssub.s32 %s11, 1
      // Predicated region
      $region13: #{bottleneck_forward.5} parent=11 // pred_check
        %p141 = pneg %p58
      $region14: #{bottleneck_forward.5} parent=11 // pred_check_branch
        %143 = sbr.rel (%p141) target = $region16
      $region15: #{bottleneck_forward.5} parent=11 // pred_region
        _
      $region16: #{bottleneck_forward.5} parent=11 // pred_fallthru
        _
      // Predicated region
      $region17: #{bottleneck_forward.5} parent=11 // pred_check
        %p144 = pneg %p79
      $region18: #{bottleneck_forward.5} parent=11 // pred_check_branch
        %146 = sbr.rel (%p144) target = $region20
      $region19: #{bottleneck_forward.5} parent=11 // pred_region
        _
      $region20: #{bottleneck_forward.5} parent=11 // pred_fallthru
        _
    $region12: #{bottleneck_forward.5} parent=5 // pred_fallthru
      _
    %p147 = scmp.lt.s32.totalorder %s11, 2
    // Predicated region
    $region21: #{bottleneck_forward.5} parent=5 // pred_check
      %p148 = pneg %p147
    $region22: #{bottleneck_forward.5} parent=5 // pred_check_branch
      %150 = sbr.rel (%p148) target = $region24
    $region23: #{bottleneck_forward.5} parent=5 // pred_region
      // Predicated region
      $region25: #{bottleneck_forward.5} parent=23 // pred_check
        %p151 = pneg %p31
      $region26: #{bottleneck_forward.5} parent=23 // pred_check_branch
        %153 = sbr.rel (%p151) target = $region28
      $region27: #{bottleneck_forward.5} parent=23 // pred_region
        %p154 = scmp.lt.s32.totalorder %s11, 1
        %s155 = scalar_select %p154, %s11, 1
        %s156 = smul.addr %s155, 32
        %s157 = smul.addr %s156, 8
        %s158 = scalar_lea.vmem %s0, %s157
      $region28: #{bottleneck_forward.5} parent=23 // pred_fallthru
        _
    $region24: #{bottleneck_forward.5} parent=5 // pred_fallthru
      _
    %p159 = scmp.le.s32.totalorder 1, %s11
    %p160 = scmp.lt.s32.totalorder %s11, 3
    %p161 = pnand %p159, %p160
    %p162 = pneg %p161
    // Predicated region
    $region29: #{bottleneck_forward.5} parent=5 // pred_check
      _
    $region30: #{bottleneck_forward.5} parent=5 // pred_check_branch
      %164 = sbr.rel (%p161) target = $region32
    $region31: #{bottleneck_forward.5} parent=5 // pred_region
      %s165 = ssub.s32 %s11, 1
      %p166 = scmp.lt.s32.totalorder %s16, 1
      %s167 = scalar_select %p166, %s16, 1
      %s168 = smul.addr %s167, 32
      %s169 = smul.addr %s168, 8
      %s170 = scalar_lea.vmem %s0, %s169
      %p171 = pneg %p37
      %p172 = pneg %p34
      %p173 = pneg %p58
      %p174 = pneg %p55
      %p175 = pneg %p79
      %p176 = pneg %p76
      %p177 = pneg %p105
      %p178 = pneg %p102
      %p179 = scmp.lt.s32.totalorder %s16, 1
      %s180 = scalar_select %p179, %s16, 1
      %s181 = smul.addr %s180, 32
      %s182 = smul.addr %s181, 8
      %s183 = scalar_lea.vmem %s3, %s182
      %p184 = pneg %p126
      %p185 = pneg %p123
      %p186 = scmp.lt.s32.totalorder %s16, 1
      %s187 = scalar_select %p186, %s16, 1
      %s188 = smul.addr %s187, 32
      %s189 = smul.addr %s188, 8
      %s190 = scalar_lea.vmem %s0, %s189
      %p191 = scmp.lt.s32.totalorder %s16, 1
      %s192 = scalar_select %p191, %s16, 1
      %s193 = smul.addr %s192, 32
      %s194 = smul.addr %s193, 8
      %s195 = scalar_lea.vmem %s3, %s194
      %p197 = scmp.eq.s32.totalorder %s16, 0
      // Predicated region
      $region33: #{bottleneck_forward.5} parent=31 // pred_check
        %p198 = pneg %p197
      $region34: #{bottleneck_forward.5} parent=31 // pred_check_branch
        %200 = sbr.rel (%p198) target = $region36
      $region35: #{bottleneck_forward.5} parent=31 // pred_region
        %vm201 = vcmask 25600
        %202 = vst.msk [vmem:[%s4] sm:$0x3] %vm201, 0.0
        %vm203 = vcmask 31744
        %204 = vst.msk [vmem:[#allocation2] sm:$0xff] %vm203, 0.0
        %205 = vst.msk [vmem:[#allocation2 + $0x8] sm:$0xff] %vm203, 0.0
        %206 = vst.msk [vmem:[#allocation2 + $0x10] sm:$0x3] %vm201, 0.0
        %207 = vst.msk [vmem:[#allocation2 + $0x18] sm:$0xff] %vm203, 0.0
        %208 = vst.msk [vmem:[#allocation2 + $0x20] sm:$0xff] %vm203, 0.0
        %209 = vst.msk [vmem:[#allocation2 + $0x28] sm:$0x3] %vm201, 0.0
        %210 = vst.msk [vmem:[#allocation2 + $0x30] sm:$0xff] %vm203, 0.0
        %211 = vst.msk [vmem:[#allocation2 + $0x38] sm:$0xff] %vm203, 0.0
        %212 = vst.msk [vmem:[#allocation2 + $0x40] sm:$0x3] %vm201, 0.0
        %213 = vst.msk [vmem:[#allocation2 + $0x48] sm:$0xff] %vm203, 0.0
        %214 = vst.msk [vmem:[#allocation2 + $0x50] sm:$0xff] %vm203, 0.0
        %215 = vst.msk [vmem:[#allocation2 + $0x58] sm:$0x3] %vm201, 0.0
        %216 = vst.msk [vmem:[#allocation2 + $0x60] sm:$0xff] %vm203, 0.0
        %217 = vst.msk [vmem:[#allocation2 + $0x68] sm:$0xff] %vm203, 0.0
        %218 = vst.msk [vmem:[#allocation2 + $0x70] sm:$0x3] %vm201, 0.0
        %219 = vst.msk [vmem:[#allocation2 + $0x78] sm:$0xff] %vm203, 0.0
        %220 = vst.msk [vmem:[#allocation2 + $0x80] sm:$0xff] %vm203, 0.0
        %221 = vst.msk [vmem:[#allocation2 + $0x88] sm:$0x3] %vm201, 0.0
        %222 = vst.msk [vmem:[#allocation2 + $0x90] sm:$0xff] %vm203, 0.0
        %223 = vst.msk [vmem:[#allocation2 + $0x98] sm:$0xff] %vm203, 0.0
        %224 = vst.msk [vmem:[#allocation2 + $0xa0] sm:$0x3] %vm201, 0.0
        %225 = vst.msk [vmem:[#allocation2 + $0xa8] sm:$0xff] %vm203, 0.0
        %226 = vst.msk [vmem:[#allocation2 + $0xb0] sm:$0xff] %vm203, 0.0
        %227 = vst.msk [vmem:[#allocation2 + $0xb8] sm:$0x3] %vm201, 0.0
        %228 = vst.msk [vmem:[#allocation2 + $0xc0] sm:$0xff] %vm203, 0.0
        %229 = vst.msk [vmem:[#allocation2 + $0xc8] sm:$0xff] %vm203, 0.0
        %230 = vst.msk [vmem:[#allocation2 + $0xd0] sm:$0x3] %vm201, 0.0
        %231 = vst.msk [vmem:[#allocation2 + $0xd8] sm:$0xff] %vm203, 0.0
        %232 = vst.msk [vmem:[#allocation2 + $0xe0] sm:$0xff] %vm203, 0.0
        %233 = vst.msk [vmem:[#allocation2 + $0xe8] sm:$0x3] %vm201, 0.0
        %234 = vst.msk [vmem:[#allocation2 + $0xf0] sm:$0xff] %vm203, 0.0
        %235 = vst.msk [vmem:[#allocation2 + $0xf8] sm:$0xff] %vm203, 0.0
        %236 = vst.msk [vmem:[#allocation2 + $0x100] sm:$0x3] %vm201, 0.0
        %237 = vst.msk [vmem:[#allocation2 + $0x108] sm:$0xff] %vm203, 0.0
        %238 = vst.msk [vmem:[#allocation2 + $0x110] sm:$0xff] %vm203, 0.0
        %239 = vst.msk [vmem:[#allocation2 + $0x118] sm:$0x3] %vm201, 0.0
        %240 = vst.msk [vmem:[#allocation2 + $0x120] sm:$0xff] %vm203, 0.0
        %241 = vst.msk [vmem:[#allocation2 + $0x128] sm:$0xff] %vm203, 0.0
        %242 = vst.msk [vmem:[#allocation2 + $0x130] sm:$0x3] %vm201, 0.0
        %243 = vst.msk [vmem:[#allocation2 + $0x138] sm:$0xff] %vm203, 0.0
        %244 = vst.msk [vmem:[#allocation2 + $0x140] sm:$0xff] %vm203, 0.0
        %245 = vst.msk [vmem:[#allocation2 + $0x148] sm:$0x3] %vm201, 0.0
        %246 = vst.msk [vmem:[#allocation2 + $0x150] sm:$0xff] %vm203, 0.0
        %247 = vst.msk [vmem:[#allocation2 + $0x158] sm:$0xff] %vm203, 0.0
        %248 = vst.msk [vmem:[#allocation2 + $0x160] sm:$0x3] %vm201, 0.0
        %249 = vst.msk [vmem:[#allocation2 + $0x168] sm:$0xff] %vm203, 0.0
        %250 = vst.msk [vmem:[#allocation2 + $0x170] sm:$0xff] %vm203, 0.0
        %251 = vst.msk [vmem:[#allocation2 + $0x178] sm:$0x3] %vm201, 0.0
        %252 = vst.msk [vmem:[#allocation2 + $0x180] sm:$0xff] %vm203, 0.0
        %253 = vst.msk [vmem:[#allocation2 + $0x188] sm:$0xff] %vm203, 0.0
        %254 = vst.msk [vmem:[#allocation2 + $0x190] sm:$0x3] %vm201, 0.0
        %255 = vst.msk [vmem:[#allocation2 + $0x198] sm:$0xff] %vm203, 0.0
        %256 = vst.msk [vmem:[#allocation2 + $0x1a0] sm:$0xff] %vm203, 0.0
        %257 = vst.msk [vmem:[#allocation2 + $0x1a8] sm:$0x3] %vm201, 0.0
      $region36: #{bottleneck_forward.5} parent=31 // pred_fallthru
        _
      %v258 = vld [vmem:[%s190] sm:$0xff]
      %v259 = vld [vmem:[%s190 + $0x8] sm:$0xff]
      %v260 = vld [vmem:[%s190 + $0x10] sm:$0xff]
      %v261 = vld [vmem:[%s190 + $0x18] sm:$0xff]
      %v262 = vld [vmem:[%s190 + $0x20] sm:$0xff]
      %v263 = vld [vmem:[%s190 + $0x28] sm:$0xff]
      %v264 = vld [vmem:[%s190 + $0x30] sm:$0xff]
      %v265 = vld [vmem:[%s190 + $0x38] sm:$0xff]
      %v266 = vld [vmem:[%s190 + $0x40] sm:$0xff]
      %v267 = vld [vmem:[%s190 + $0x48] sm:$0xff]
      %v268 = vld [vmem:[%s190 + $0x50] sm:$0xff]
      %v269 = vld [vmem:[%s190 + $0x58] sm:$0xff]
      %v270 = vld [vmem:[%s190 + $0x60] sm:$0xff]
      %v271 = vld [vmem:[%s190 + $0x68] sm:$0xff]
      %v272 = vld [vmem:[%s190 + $0x70] sm:$0xff]
      %v273 = vld [vmem:[%s190 + $0x78] sm:$0xff]
      %v274 = vld [vmem:[%s190 + $0x80] sm:$0xff]
      %v275 = vld [vmem:[%s190 + $0x88] sm:$0xff]
      %v276 = vld [vmem:[%s190 + $0x90] sm:$0xff]
      %v277 = vld [vmem:[%s190 + $0x98] sm:$0xff]
      %v278 = vld [vmem:[%s190 + $0xa0] sm:$0xff]
      %v279 = vld [vmem:[%s190 + $0xa8] sm:$0xff]
      %v280 = vld [vmem:[%s190 + $0xb0] sm:$0xff]
      %v281 = vld [vmem:[%s190 + $0xb8] sm:$0xff]
      %v282 = vld [vmem:[%s190 + $0xc0] sm:$0xff]
      %v283 = vld [vmem:[%s190 + $0xc8] sm:$0xff]
      %v284 = vld [vmem:[%s190 + $0xd0] sm:$0xff]
      %v285 = vld [vmem:[%s190 + $0xd8] sm:$0xff]
      %v286 = vld [vmem:[%s190 + $0xe0] sm:$0xff]
      %v287 = vld [vmem:[%s190 + $0xe8] sm:$0xff]
      %v288 = vld [vmem:[%s190 + $0xf0] sm:$0xff]
      %v289 = vld [vmem:[%s190 + $0xf8] sm:$0xff]
      %v290 = vld [vmem:[%s1] sm:$0x1]
      %v291 = vlaneseq
      %v292 = vshrl.u32 %v291, 7
      %v293 = vsub.s32 0, %v292
      %v294 = vrot.slane %v290, %v293
      %v295 = vmul.f32 %v258, %v294
      %v296 = vmul.f32 %v259, %v294
      %v297 = vmul.f32 %v260, %v294
      %v298 = vmul.f32 %v261, %v294
      %v299 = vmul.f32 %v262, %v294
      %v300 = vmul.f32 %v263, %v294
      %v301 = vmul.f32 %v264, %v294
      %v302 = vmul.f32 %v265, %v294
      %v303 = vmul.f32 %v266, %v294
      %v304 = vmul.f32 %v267, %v294
      %v305 = vmul.f32 %v268, %v294
      %v306 = vmul.f32 %v269, %v294
      %v307 = vmul.f32 %v270, %v294
      %v308 = vmul.f32 %v271, %v294
      %v309 = vmul.f32 %v272, %v294
      %v310 = vmul.f32 %v273, %v294
      %v311 = vmul.f32 %v274, %v294
      %v312 = vmul.f32 %v275, %v294
      %v313 = vmul.f32 %v276, %v294
      %v314 = vmul.f32 %v277, %v294
      %v315 = vmul.f32 %v278, %v294
      %v316 = vmul.f32 %v279, %v294
      %v317 = vmul.f32 %v280, %v294
      %v318 = vmul.f32 %v281, %v294
      %v319 = vmul.f32 %v282, %v294
      %v320 = vmul.f32 %v283, %v294
      %v321 = vmul.f32 %v284, %v294
      %v322 = vmul.f32 %v285, %v294
      %v323 = vmul.f32 %v286, %v294
      %v324 = vmul.f32 %v287, %v294
      %v325 = vmul.f32 %v288, %v294
      %v326 = vmul.f32 %v289, %v294
      %v327 = vld [vmem:[%s1 + $0x1] sm:$0x1]
      %v328 = vlaneseq
      %v329 = vshrl.u32 %v328, 7
      %v330 = vsub.s32 0, %v329
      %v331 = vrot.slane %v327, %v330
      %v332 = vadd.f32 %v295, %v331
      %v333 = vadd.f32 %v296, %v331
      %v334 = vadd.f32 %v297, %v331
      %v335 = vadd.f32 %v298, %v331
      %v336 = vadd.f32 %v299, %v331
      %v337 = vadd.f32 %v300, %v331
      %v338 = vadd.f32 %v301, %v331
      %v339 = vadd.f32 %v302, %v331
      %v340 = vadd.f32 %v303, %v331
      %v341 = vadd.f32 %v304, %v331
      %v342 = vadd.f32 %v305, %v331
      %v343 = vadd.f32 %v306, %v331
      %v344 = vadd.f32 %v307, %v331
      %v345 = vadd.f32 %v308, %v331
      %v346 = vadd.f32 %v309, %v331
      %v347 = vadd.f32 %v310, %v331
      %v348 = vadd.f32 %v311, %v331
      %v349 = vadd.f32 %v312, %v331
      %v350 = vadd.f32 %v313, %v331
      %v351 = vadd.f32 %v314, %v331
      %v352 = vadd.f32 %v315, %v331
      %v353 = vadd.f32 %v316, %v331
      %v354 = vadd.f32 %v317, %v331
      %v355 = vadd.f32 %v318, %v331
      %v356 = vadd.f32 %v319, %v331
      %v357 = vadd.f32 %v320, %v331
      %v358 = vadd.f32 %v321, %v331
      %v359 = vadd.f32 %v322, %v331
      %v360 = vadd.f32 %v323, %v331
      %v361 = vadd.f32 %v324, %v331
      %v362 = vadd.f32 %v325, %v331
      %v363 = vadd.f32 %v326, %v331
      %v364 = vmax.f32 %v332, 0.0
      %v365 = vmax.f32 %v333, 0.0
      %v366 = vmax.f32 %v334, 0.0
      %v367 = vmax.f32 %v335, 0.0
      %v368 = vmax.f32 %v336, 0.0
      %v369 = vmax.f32 %v337, 0.0
      %v370 = vmax.f32 %v338, 0.0
      %v371 = vmax.f32 %v339, 0.0
      %v372 = vmax.f32 %v340, 0.0
      %v373 = vmax.f32 %v341, 0.0
      %v374 = vmax.f32 %v342, 0.0
      %v375 = vmax.f32 %v343, 0.0
      %v376 = vmax.f32 %v344, 0.0
      %v377 = vmax.f32 %v345, 0.0
      %v378 = vmax.f32 %v346, 0.0
      %v379 = vmax.f32 %v347, 0.0
      %v380 = vmax.f32 %v348, 0.0
      %v381 = vmax.f32 %v349, 0.0
      %v382 = vmax.f32 %v350, 0.0
      %v383 = vmax.f32 %v351, 0.0
      %v384 = vmax.f32 %v352, 0.0
      %v385 = vmax.f32 %v353, 0.0
      %v386 = vmax.f32 %v354, 0.0
      %v387 = vmax.f32 %v355, 0.0
      %v388 = vmax.f32 %v356, 0.0
      %v389 = vmax.f32 %v357, 0.0
      %v390 = vmax.f32 %v358, 0.0
      %v391 = vmax.f32 %v359, 0.0
      %v392 = vmax.f32 %v360, 0.0
      %v393 = vmax.f32 %v361, 0.0
      %v394 = vmax.f32 %v362, 0.0
      %v395 = vmax.f32 %v363, 0.0
      %s396 = scalar_lea.vmem [#allocation2], 24
      %vm397 = vcmask 31744
      %398 = vst.msk [vmem:[%s396 + $0x1] sm:$0xff] %vm397, %v364
      %399 = vst.msk [vmem:[%s396 + $0x9] sm:$0xff] %vm397, %v365
      %400 = vst.msk [vmem:[%s396 + $0x19] sm:$0xff] %vm397, %v366
      %401 = vst.msk [vmem:[%s396 + $0x21] sm:$0xff] %vm397, %v367
      %402 = vst.msk [vmem:[%s396 + $0x31] sm:$0xff] %vm397, %v368
      %403 = vst.msk [vmem:[%s396 + $0x39] sm:$0xff] %vm397, %v369
      %404 = vst.msk [vmem:[%s396 + $0x49] sm:$0xff] %vm397, %v370
      %405 = vst.msk [vmem:[%s396 + $0x51] sm:$0xff] %vm397, %v371
      %406 = vst.msk [vmem:[%s396 + $0x61] sm:$0xff] %vm397, %v372
      %407 = vst.msk [vmem:[%s396 + $0x69] sm:$0xff] %vm397, %v373
      %408 = vst.msk [vmem:[%s396 + $0x79] sm:$0xff] %vm397, %v374
      %409 = vst.msk [vmem:[%s396 + $0x81] sm:$0xff] %vm397, %v375
      %410 = vst.msk [vmem:[%s396 + $0x91] sm:$0xff] %vm397, %v376
      %411 = vst.msk [vmem:[%s396 + $0x99] sm:$0xff] %vm397, %v377
      %412 = vst.msk [vmem:[%s396 + $0xa9] sm:$0xff] %vm397, %v378
      %413 = vst.msk [vmem:[%s396 + $0xb1] sm:$0xff] %vm397, %v379
      %414 = vst.msk [vmem:[%s396 + $0xc1] sm:$0xff] %vm397, %v380
      %415 = vst.msk [vmem:[%s396 + $0xc9] sm:$0xff] %vm397, %v381
      %416 = vst.msk [vmem:[%s396 + $0xd9] sm:$0xff] %vm397, %v382
      %417 = vst.msk [vmem:[%s396 + $0xe1] sm:$0xff] %vm397, %v383
      %418 = vst.msk [vmem:[%s396 + $0xf1] sm:$0xff] %vm397, %v384
      %419 = vst.msk [vmem:[%s396 + $0xf9] sm:$0xff] %vm397, %v385
      %420 = vst.msk [vmem:[%s396 + $0x109] sm:$0xff] %vm397, %v386
      %421 = vst.msk [vmem:[%s396 + $0x111] sm:$0xff] %vm397, %v387
      %422 = vst.msk [vmem:[%s396 + $0x121] sm:$0xff] %vm397, %v388
      %423 = vst.msk [vmem:[%s396 + $0x129] sm:$0xff] %vm397, %v389
      %424 = vst.msk [vmem:[%s396 + $0x139] sm:$0xff] %vm397, %v390
      %425 = vst.msk [vmem:[%s396 + $0x141] sm:$0xff] %vm397, %v391
      %426 = vst.msk [vmem:[%s396 + $0x151] sm:$0xff] %vm397, %v392
      %427 = vst.msk [vmem:[%s396 + $0x159] sm:$0xff] %vm397, %v393
      %428 = vst.msk [vmem:[%s396 + $0x169] sm:$0xff] %vm397, %v394
      %429 = vst.msk [vmem:[%s396 + $0x171] sm:$0xff] %vm397, %v395
      %430 = vst.msk [vmem:[#allocation3] sm:$0xff] %vm397, 0.0
      %431 = vst.msk [vmem:[#allocation3 + $0x8] sm:$0xff] %vm397, 0.0
      %432 = vst.msk [vmem:[#allocation3 + $0x10] sm:$0xff] %vm397, 0.0
      %433 = vst.msk [vmem:[#allocation3 + $0x18] sm:$0xff] %vm397, 0.0
      %434 = vst.msk [vmem:[#allocation3 + $0x20] sm:$0xff] %vm397, 0.0
      %435 = vst.msk [vmem:[#allocation3 + $0x28] sm:$0xff] %vm397, 0.0
      %436 = vst.msk [vmem:[#allocation3 + $0x30] sm:$0xff] %vm397, 0.0
      %437 = vst.msk [vmem:[#allocation3 + $0x38] sm:$0xff] %vm397, 0.0
      %438 = vst.msk [vmem:[#allocation3 + $0x40] sm:$0xff] %vm397, 0.0
      %439 = vst.msk [vmem:[#allocation3 + $0x48] sm:$0xff] %vm397, 0.0
      %440 = vst.msk [vmem:[#allocation3 + $0x50] sm:$0xff] %vm397, 0.0
      %441 = vst.msk [vmem:[#allocation3 + $0x58] sm:$0xff] %vm397, 0.0
      %442 = vst.msk [vmem:[#allocation3 + $0x60] sm:$0xff] %vm397, 0.0
      %443 = vst.msk [vmem:[#allocation3 + $0x68] sm:$0xff] %vm397, 0.0
      %444 = vst.msk [vmem:[#allocation3 + $0x70] sm:$0xff] %vm397, 0.0
      %445 = vst.msk [vmem:[#allocation3 + $0x78] sm:$0xff] %vm397, 0.0
      %446 = vst.msk [vmem:[#allocation3 + $0x80] sm:$0xff] %vm397, 0.0
      %447 = vst.msk [vmem:[#allocation3 + $0x88] sm:$0xff] %vm397, 0.0
      %448 = vst.msk [vmem:[#allocation3 + $0x90] sm:$0xff] %vm397, 0.0
      %449 = vst.msk [vmem:[#allocation3 + $0x98] sm:$0xff] %vm397, 0.0
      %450 = vst.msk [vmem:[#allocation3 + $0xa0] sm:$0xff] %vm397, 0.0
      %451 = vst.msk [vmem:[#allocation3 + $0xa8] sm:$0xff] %vm397, 0.0
      %452 = vst.msk [vmem:[#allocation3 + $0xb0] sm:$0xff] %vm397, 0.0
      %453 = vst.msk [vmem:[#allocation3 + $0xb8] sm:$0xff] %vm397, 0.0
      %454 = vst.msk [vmem:[#allocation3 + $0xc0] sm:$0xff] %vm397, 0.0
      %455 = vst.msk [vmem:[#allocation3 + $0xc8] sm:$0xff] %vm397, 0.0
      %456 = vst.msk [vmem:[#allocation3 + $0xd0] sm:$0xff] %vm397, 0.0
      %457 = vst.msk [vmem:[#allocation3 + $0xd8] sm:$0xff] %vm397, 0.0
      %458 = vst.msk [vmem:[#allocation3 + $0xe0] sm:$0xff] %vm397, 0.0
      %459 = vst.msk [vmem:[#allocation3 + $0xe8] sm:$0xff] %vm397, 0.0
      %460 = vst.msk [vmem:[#allocation3 + $0xf0] sm:$0xff] %vm397, 0.0
      %461 = vst.msk [vmem:[#allocation3 + $0xf8] sm:$0xff] %vm397, 0.0
      %v462 = vld [vmem:[#allocation2] sm:$0xff]
      %v463 = vld [vmem:[#allocation2 + $0x8] sm:$0xff]
      %v464 = vld [vmem:[#allocation2 + $0x18] sm:$0xff]
      %v465 = vld [vmem:[#allocation2 + $0x20] sm:$0xff]
      %v466 = vld [vmem:[#allocation2 + $0x30] sm:$0xff]
      %v467 = vld [vmem:[#allocation2 + $0x38] sm:$0xff]
      %v468 = vld [vmem:[#allocation2 + $0x48] sm:$0xff]
      %v469 = vld [vmem:[#allocation2 + $0x50] sm:$0xff]
      %v470 = vld [vmem:[#allocation2 + $0x60] sm:$0xff]
      %v471 = vld [vmem:[#allocation2 + $0x68] sm:$0xff]
      %v472 = vld [vmem:[#allocation2 + $0x78] sm:$0xff]
      %v473 = vld [vmem:[#allocation2 + $0x80] sm:$0xff]
      %v474 = vld [vmem:[#allocation2 + $0x90] sm:$0xff]
      %v475 = vld [vmem:[#allocation2 + $0x98] sm:$0xff]
      %v476 = vld [vmem:[#allocation2 + $0xa8] sm:$0xff]
      %v477 = vld [vmem:[#allocation2 + $0xb0] sm:$0xff]
      %v478 = vld [vmem:[#allocation2 + $0xc0] sm:$0xff]
      %v479 = vld [vmem:[#allocation2 + $0xc8] sm:$0xff]
      %v480 = vld [vmem:[#allocation2 + $0xd8] sm:$0xff]
      %v481 = vld [vmem:[#allocation2 + $0xe0] sm:$0xff]
      %v482 = vld [vmem:[#allocation2 + $0xf0] sm:$0xff]
      %v483 = vld [vmem:[#allocation2 + $0xf8] sm:$0xff]
      %v484 = vld [vmem:[#allocation2 + $0x108] sm:$0xff]
      %v485 = vld [vmem:[#allocation2 + $0x110] sm:$0xff]
      %v486 = vld [vmem:[#allocation2 + $0x120] sm:$0xff]
      %v487 = vld [vmem:[#allocation2 + $0x128] sm:$0xff]
      %v488 = vld [vmem:[#allocation2 + $0x138] sm:$0xff]
      %v489 = vld [vmem:[#allocation2 + $0x140] sm:$0xff]
      %v490 = vld [vmem:[#allocation2 + $0x150] sm:$0xff]
      %v491 = vld [vmem:[#allocation2 + $0x158] sm:$0xff]
      %v492 = vld [vmem:[#allocation2 + $0x168] sm:$0xff]
      %v493 = vld [vmem:[#allocation2 + $0x170] sm:$0xff]
      %v494 = vld [vmem:[#allocation3] sm:$0xff]
      %v495 = vld [vmem:[#allocation3 + $0x8] sm:$0xff]
      %v496 = vld [vmem:[#allocation3 + $0x10] sm:$0xff]
      %v497 = vld [vmem:[#allocation3 + $0x18] sm:$0xff]
      %v498 = vld [vmem:[#allocation3 + $0x20] sm:$0xff]
      %v499 = vld [vmem:[#allocation3 + $0x28] sm:$0xff]
      %v500 = vld [vmem:[#allocation3 + $0x30] sm:$0xff]
      %v501 = vld [vmem:[#allocation3 + $0x38] sm:$0xff]
      %v502 = vld [vmem:[#allocation3 + $0x40] sm:$0xff]
      %v503 = vld [vmem:[#allocation3 + $0x48] sm:$0xff]
      %v504 = vld [vmem:[#allocation3 + $0x50] sm:$0xff]
      %v505 = vld [vmem:[#allocation3 + $0x58] sm:$0xff]
      %v506 = vld [vmem:[#allocation3 + $0x60] sm:$0xff]
      %v507 = vld [vmem:[#allocation3 + $0x68] sm:$0xff]
      %v508 = vld [vmem:[#allocation3 + $0x70] sm:$0xff]
      %v509 = vld [vmem:[#allocation3 + $0x78] sm:$0xff]
      %v510 = vld [vmem:[#allocation3 + $0x80] sm:$0xff]
      %v511 = vld [vmem:[#allocation3 + $0x88] sm:$0xff]
      %v512 = vld [vmem:[#allocation3 + $0x90] sm:$0xff]
      %v513 = vld [vmem:[#allocation3 + $0x98] sm:$0xff]
      %v514 = vld [vmem:[#allocation3 + $0xa0] sm:$0xff]
      %v515 = vld [vmem:[#allocation3 + $0xa8] sm:$0xff]
      %v516 = vld [vmem:[#allocation3 + $0xb0] sm:$0xff]
      %v517 = vld [vmem:[#allocation3 + $0xb8] sm:$0xff]
      %v518 = vld [vmem:[#allocation3 + $0xc0] sm:$0xff]
      %v519 = vld [vmem:[#allocation3 + $0xc8] sm:$0xff]
      %v520 = vld [vmem:[#allocation3 + $0xd0] sm:$0xff]
      %v521 = vld [vmem:[#allocation3 + $0xd8] sm:$0xff]
      %v522 = vld [vmem:[#allocation3 + $0xe0] sm:$0xff]
      %v523 = vld [vmem:[#allocation3 + $0xe8] sm:$0xff]
      %v524 = vld [vmem:[#allocation3 + $0xf0] sm:$0xff]
      %v525 = vld [vmem:[#allocation3 + $0xf8] sm:$0xff]
      %v526 = vpack.c.bf16 %v463, %v462
      %v527 = vpack.c.bf16 %v465, %v464
      %v528 = vpack.c.bf16 %v467, %v466
      %v529 = vpack.c.bf16 %v469, %v468
      %v530 = vpack.c.bf16 %v471, %v470
      %v531 = vpack.c.bf16 %v473, %v472
      %v532 = vpack.c.bf16 %v475, %v474
      %v533 = vpack.c.bf16 %v477, %v476
      %v534 = vpack.c.bf16 %v479, %v478
      %v535 = vpack.c.bf16 %v481, %v480
      %v536 = vpack.c.bf16 %v483, %v482
      %v537 = vpack.c.bf16 %v485, %v484
      %v538 = vpack.c.bf16 %v487, %v486
      %v539 = vpack.c.bf16 %v489, %v488
      %v540 = vpack.c.bf16 %v491, %v490
      %v541 = vpack.c.bf16 %v493, %v492
      %v542 = vld [vmem:[%s2] sm:$0x3]
      %v544 = vsel %vm397, %v526, 0
      %v547 = vsel %vm397, %v527, 0
      %v550 = vsel %vm397, %v528, 0
      %v553 = vsel %vm397, %v529, 0
      %v556 = vsel %vm397, %v530, 0
      %v559 = vsel %vm397, %v531, 0
      %v562 = vsel %vm397, %v532, 0
      %v565 = vsel %vm397, %v533, 0
      %v568 = vsel %vm397, %v534, 0
      %v571 = vsel %vm397, %v535, 0
      %v574 = vsel %vm397, %v536, 0
      %v577 = vsel %vm397, %v537, 0
      %v580 = vsel %vm397, %v538, 0
      %v583 = vsel %vm397, %v539, 0
      %v586 = vsel %vm397, %v540, 0
      %v589 = vsel %vm397, %v541, 0
      %vm591 = vcmask 1041408
      %v593 = vsel %vm591, %v542, 0
      %595 = vmatprep.subr.bf16.mxu0 0
      %596 = vmatpush1.bf16.msra.mxu0 %v593
      %597 = vmatprep.subr.bf16.mxu0 0
      %598 = vmatpush1.bf16.msra.mxu0 0
      %599 = vmatprep.subr.bf16.mxu0 0
      %600 = vmatpush1.bf16.msra.mxu0 0
      %601 = vmatprep.subr.bf16.mxu0 0
      %602 = vmatpush1.bf16.msra.mxu0 0
      %603 = vmatprep.subr.bf16.mxu0 0
      %604 = vmatpush1.bf16.msra.mxu0 0
      %605 = vmatprep.subr.bf16.mxu0 0
      %606 = vmatpush1.bf16.msra.mxu0 0
      %607 = vmatprep.subr.bf16.mxu0 0
      %608 = vmatpush1.bf16.msra.mxu0 0
      %609 = vmatprep.subr.bf16.mxu0 0
      %610 = vmatpush1.bf16.msra.mxu0 0
      %611 = vmatprep.subr.bf16.mxu0 0
      %612 = vmatpush1.bf16.msra.mxu0 0
      %613 = vmatprep.subr.bf16.mxu0 0
      %614 = vmatpush1.bf16.msra.mxu0 0
      %615 = vmatprep.subr.bf16.mxu0 0
      %616 = vmatpush1.bf16.msra.mxu0 0
      %617 = vmatprep.subr.bf16.mxu0 0
      %618 = vmatpush1.bf16.msra.mxu0 0
      %619 = vmatprep.subr.bf16.mxu0 0
      %620 = vmatpush1.bf16.msra.mxu0 0
      %621 = vmatprep.subr.bf16.mxu0 0
      %622 = vmatpush1.bf16.msra.mxu0 0
      %623 = vmatprep.subr.bf16.mxu0 0
      %624 = vmatpush1.bf16.msra.mxu0 0
      %625 = vmatprep.subr.bf16.mxu0 0
      %626 = vmatpush1.bf16.msra.mxu0 0
      %627 = vmatprep.mubr.bf16.mxu0 0
      %628 = vmatmul.mubr.bf16.gmra.mrb[0].mxu0 %v544
      %v629 = vpop.f32.mrb[0].mxu0
      %v630 = vadd.f32 0.0, %v629
      %v631 = vpop.f32.mrb[0].mxu0
      %v632 = vpop.f32.mrb[0].mxu0
      %v633 = vadd.f32 0.0, %v632
      %v634 = vpop.f32.mrb[0].mxu0
      %635 = vmatprep.mubr.bf16.mxu0 0
      %636 = vmatmul.mubr.bf16.gmra.mrb[0].mxu0 %v547
      %v637 = vpop.f32.mrb[0].mxu0
      %v638 = vadd.f32 0.0, %v637
      %v639 = vpop.f32.mrb[0].mxu0
      %v640 = vpop.f32.mrb[0].mxu0
      %v641 = vadd.f32 0.0, %v640
      %v642 = vpop.f32.mrb[0].mxu0
      %643 = vmatprep.mubr.bf16.mxu0 0
      %644 = vmatmul.mubr.bf16.gmra.mrb[0].mxu0 %v550
      %v645 = vpop.f32.mrb[0].mxu0
      %v646 = vadd.f32 0.0, %v645
      %v647 = vpop.f32.mrb[0].mxu0
      %v648 = vpop.f32.mrb[0].mxu0
      %v649 = vadd.f32 0.0, %v648
      %v650 = vpop.f32.mrb[0].mxu0
      %651 = vmatprep.mubr.bf16.mxu0 0
      %652 = vmatmul.mubr.bf16.gmra.mrb[0].mxu0 %v553
      %v653 = vpop.f32.mrb[0].mxu0
      %v654 = vadd.f32 0.0, %v653
      %v655 = vpop.f32.mrb[0].mxu0
      %v656 = vpop.f32.mrb[0].mxu0
      %v657 = vadd.f32 0.0, %v656
      %v658 = vpop.f32.mrb[0].mxu0
      %659 = vmatprep.mubr.bf16.mxu0 0
      %660 = vmatmul.mubr.bf16.gmra.mrb[0].mxu0 %v556
      %v661 = vpop.f32.mrb[0].mxu0
      %v662 = vadd.f32 0.0, %v661
      %v663 = vpop.f32.mrb[0].mxu0
      %v664 = vpop.f32.mrb[0].mxu0
      %v665 = vadd.f32 0.0, %v664
      %v666 = vpop.f32.mrb[0].mxu0
      %667 = vmatprep.mubr.bf16.mxu0 0
      %668 = vmatmul.mubr.bf16.gmra.mrb[0].mxu0 %v559
      %v669 = vpop.f32.mrb[0].mxu0
      %v670 = vadd.f32 0.0, %v669
      %v671 = vpop.f32.mrb[0].mxu0
      %v672 = vpop.f32.mrb[0].mxu0
      %v673 = vadd.f32 0.0, %v672
      %v674 = vpop.f32.mrb[0].mxu0
      %675 = vmatprep.mubr.bf16.mxu0 0
      %676 = vmatmul.mubr.bf16.gmra.mrb[0].mxu0 %v562
      %v677 = vpop.f32.mrb[0].mxu0
      %v678 = vadd.f32 0.0, %v677
      %v679 = vpop.f32.mrb[0].mxu0
      %v680 = vpop.f32.mrb[0].mxu0
      %v681 = vadd.f32 0.0, %v680
      %v682 = vpop.f32.mrb[0].mxu0
      %683 = vmatprep.mubr.bf16.mxu0 0
      %684 = vmatmul.mubr.bf16.gmra.mrb[0].mxu0 %v565
      %v685 = vpop.f32.mrb[0].mxu0
      %v686 = vadd.f32 0.0, %v685
      %v687 = vpop.f32.mrb[0].mxu0
      %v688 = vpop.f32.mrb[0].mxu0
      %v689 = vadd.f32 0.0, %v688
      %v690 = vpop.f32.mrb[0].mxu0
      %691 = vmatprep.mubr.bf16.mxu0 0
      %692 = vmatmul.mubr.bf16.gmra.mrb[0].mxu0 %v568
      %v693 = vpop.f32.mrb[0].mxu0
      %v694 = vadd.f32 0.0, %v693
      %v695 = vpop.f32.mrb[0].mxu0
      %v696 = vpop.f32.mrb[0].mxu0
      %v697 = vadd.f32 0.0, %v696
      %v698 = vpop.f32.mrb[0].mxu0
      %699 = vmatprep.mubr.bf16.mxu0 0
      %700 = vmatmul.mubr.bf16.gmra.mrb[0].mxu0 %v571
      %v701 = vpop.f32.mrb[0].mxu0
      %v702 = vadd.f32 0.0, %v701
      %v703 = vpop.f32.mrb[0].mxu0
      %v704 = vpop.f32.mrb[0].mxu0
      %v705 = vadd.f32 0.0, %v704
      %v706 = vpop.f32.mrb[0].mxu0
      %707 = vmatprep.mubr.bf16.mxu0 0
      %708 = vmatmul.mubr.bf16.gmra.mrb[0].mxu0 %v574
      %v709 = vpop.f32.mrb[0].mxu0
      %v710 = vadd.f32 0.0, %v709
      %v711 = vpop.f32.mrb[0].mxu0
      %v712 = vpop.f32.mrb[0].mxu0
      %v713 = vadd.f32 0.0, %v712
      %v714 = vpop.f32.mrb[0].mxu0
      %715 = vmatprep.mubr.bf16.mxu0 0
      %716 = vmatmul.mubr.bf16.gmra.mrb[0].mxu0 %v577
      %v717 = vpop.f32.mrb[0].mxu0
      %v718 = vadd.f32 0.0, %v717
      %v719 = vpop.f32.mrb[0].mxu0
      %v720 = vpop.f32.mrb[0].mxu0
      %v721 = vadd.f32 0.0, %v720
      %v722 = vpop.f32.mrb[0].mxu0
      %723 = vmatprep.mubr.bf16.mxu0 0
      %724 = vmatmul.mubr.bf16.gmra.mrb[0].mxu0 %v580
      %v725 = vpop.f32.mrb[0].mxu0
      %v726 = vadd.f32 0.0, %v725
      %v727 = vpop.f32.mrb[0].mxu0
      %v728 = vpop.f32.mrb[0].mxu0
      %v729 = vadd.f32 0.0, %v728
      %v730 = vpop.f32.mrb[0].mxu0
      %731 = vmatprep.mubr.bf16.mxu0 0
      %732 = vmatmul.mubr.bf16.gmra.mrb[0].mxu0 %v583
      %v733 = vpop.f32.mrb[0].mxu0
      %v734 = vadd.f32 0.0, %v733
      %v735 = vpop.f32.mrb[0].mxu0
      %v736 = vpop.f32.mrb[0].mxu0
      %v737 = vadd.f32 0.0, %v736
      %v738 = vpop.f32.mrb[0].mxu0
      %739 = vmatprep.mubr.bf16.mxu0 0
      %740 = vmatmul.mubr.bf16.gmra.mrb[0].mxu0 %v586
      %v741 = vpop.f32.mrb[0].mxu0
      %v742 = vadd.f32 0.0, %v741
      %v743 = vpop.f32.mrb[0].mxu0
      %v744 = vpop.f32.mrb[0].mxu0
      %v745 = vadd.f32 0.0, %v744
      %v746 = vpop.f32.mrb[0].mxu0
      %747 = vmatprep.mubr.bf16.mxu0 0
      %748 = vmatmul.mubr.bf16.gmra.mrb[0].mxu0 %v589
      %v749 = vpop.f32.mrb[0].mxu0
      %v750 = vadd.f32 0.0, %v749
      %v751 = vpop.f32.mrb[0].mxu0
      %v752 = vpop.f32.mrb[0].mxu0
      %v753 = vadd.f32 0.0, %v752
      %v754 = vpop.f32.mrb[0].mxu0
      %755 = vdwg.mxu0
      %v756 = vadd.f32 %v494, %v630
      %v757 = vadd.f32 %v495, %v633
      %v758 = vadd.f32 %v496, %v638
      %v759 = vadd.f32 %v497, %v641
      %v760 = vadd.f32 %v498, %v646
      %v761 = vadd.f32 %v499, %v649
      %v762 = vadd.f32 %v500, %v654
      %v763 = vadd.f32 %v501, %v657
      %v764 = vadd.f32 %v502, %v662
      %v765 = vadd.f32 %v503, %v665
      %v766 = vadd.f32 %v504, %v670
      %v767 = vadd.f32 %v505, %v673
      %v768 = vadd.f32 %v506, %v678
      %v769 = vadd.f32 %v507, %v681
      %v770 = vadd.f32 %v508, %v686
      %v771 = vadd.f32 %v509, %v689
      %v772 = vadd.f32 %v510, %v694
      %v773 = vadd.f32 %v511, %v697
      %v774 = vadd.f32 %v512, %v702
      %v775 = vadd.f32 %v513, %v705
      %v776 = vadd.f32 %v514, %v710
      %v777 = vadd.f32 %v515, %v713
      %v778 = vadd.f32 %v516, %v718
      %v779 = vadd.f32 %v517, %v721
      %v780 = vadd.f32 %v518, %v726
      %v781 = vadd.f32 %v519, %v729
      %v782 = vadd.f32 %v520, %v734
      %v783 = vadd.f32 %v521, %v737
      %v784 = vadd.f32 %v522, %v742
      %v785 = vadd.f32 %v523, %v745
      %v786 = vadd.f32 %v524, %v750
      %v787 = vadd.f32 %v525, %v753
      %788 = vst.msk [vmem:[#allocation3] sm:$0xff] %vm397, %v756
      %789 = vst.msk [vmem:[#allocation3 + $0x8] sm:$0xff] %vm397, %v757
      %790 = vst.msk [vmem:[#allocation3 + $0x10] sm:$0xff] %vm397, %v758
      %791 = vst.msk [vmem:[#allocation3 + $0x18] sm:$0xff] %vm397, %v759
      %792 = vst.msk [vmem:[#allocation3 + $0x20] sm:$0xff] %vm397, %v760
      %793 = vst.msk [vmem:[#allocation3 + $0x28] sm:$0xff] %vm397, %v761
      %794 = vst.msk [vmem:[#allocation3 + $0x30] sm:$0xff] %vm397, %v762
      %795 = vst.msk [vmem:[#allocation3 + $0x38] sm:$0xff] %vm397, %v763
      %796 = vst.msk [vmem:[#allocation3 + $0x40] sm:$0xff] %vm397, %v764
      %797 = vst.msk [vmem:[#allocation3 + $0x48] sm:$0xff] %vm397, %v765
      %798 = vst.msk [vmem:[#allocation3 + $0x50] sm:$0xff] %vm397, %v766
      %799 = vst.msk [vmem:[#allocation3 + $0x58] sm:$0xff] %vm397, %v767
      %800 = vst.msk [vmem:[#allocation3 + $0x60] sm:$0xff] %vm397, %v768
      %801 = vst.msk [vmem:[#allocation3 + $0x68] sm:$0xff] %vm397, %v769
      %802 = vst.msk [vmem:[#allocation3 + $0x70] sm:$0xff] %vm397, %v770
      %803 = vst.msk [vmem:[#allocation3 + $0x78] sm:$0xff] %vm397, %v771
      %804 = vst.msk [vmem:[#allocation3 + $0x80] sm:$0xff] %vm397, %v772
      %805 = vst.msk [vmem:[#allocation3 + $0x88] sm:$0xff] %vm397, %v773
      %806 = vst.msk [vmem:[#allocation3 + $0x90] sm:$0xff] %vm397, %v774
      %807 = vst.msk [vmem:[#allocation3 + $0x98] sm:$0xff] %vm397, %v775
      %808 = vst.msk [vmem:[#allocation3 + $0xa0] sm:$0xff] %vm397, %v776
      %809 = vst.msk [vmem:[#allocation3 + $0xa8] sm:$0xff] %vm397, %v777
      %810 = vst.msk [vmem:[#allocation3 + $0xb0] sm:$0xff] %vm397, %v778
      %811 = vst.msk [vmem:[#allocation3 + $0xb8] sm:$0xff] %vm397, %v779
      %812 = vst.msk [vmem:[#allocation3 + $0xc0] sm:$0xff] %vm397, %v780
      %813 = vst.msk [vmem:[#allocation3 + $0xc8] sm:$0xff] %vm397, %v781
      %814 = vst.msk [vmem:[#allocation3 + $0xd0] sm:$0xff] %vm397, %v782
      %815 = vst.msk [vmem:[#allocation3 + $0xd8] sm:$0xff] %vm397, %v783
      %816 = vst.msk [vmem:[#allocation3 + $0xe0] sm:$0xff] %vm397, %v784
      %817 = vst.msk [vmem:[#allocation3 + $0xe8] sm:$0xff] %vm397, %v785
      %818 = vst.msk [vmem:[#allocation3 + $0xf0] sm:$0xff] %vm397, %v786
      %819 = vst.msk [vmem:[#allocation3 + $0xf8] sm:$0xff] %vm397, %v787
      %v820 = vld [vmem:[#allocation2 + $0x1] sm:$0xff]
      %v821 = vld [vmem:[#allocation2 + $0x9] sm:$0xff]
      %v822 = vld [vmem:[#allocation2 + $0x19] sm:$0xff]
      %v823 = vld [vmem:[#allocation2 + $0x21] sm:$0xff]
      %v824 = vld [vmem:[#allocation2 + $0x31] sm:$0xff]
      %v825 = vld [vmem:[#allocation2 + $0x39] sm:$0xff]
      %v826 = vld [vmem:[#allocation2 + $0x49] sm:$0xff]
      %v827 = vld [vmem:[#allocation2 + $0x51] sm:$0xff]
      %v828 = vld [vmem:[#allocation2 + $0x61] sm:$0xff]
      %v829 = vld [vmem:[#allocation2 + $0x69] sm:$0xff]
      %v830 = vld [vmem:[#allocation2 + $0x79] sm:$0xff]
      %v831 = vld [vmem:[#allocation2 + $0x81] sm:$0xff]
      %v832 = vld [vmem:[#allocation2 + $0x91] sm:$0xff]
      %v833 = vld [vmem:[#allocation2 + $0x99] sm:$0xff]
      %v834 = vld [vmem:[#allocation2 + $0xa9] sm:$0xff]
      %v835 = vld [vmem:[#allocation2 + $0xb1] sm:$0xff]
      %v836 = vld [vmem:[#allocation2 + $0xc1] sm:$0xff]
      %v837 = vld [vmem:[#allocation2 + $0xc9] sm:$0xff]
      %v838 = vld [vmem:[#allocation2 + $0xd9] sm:$0xff]
      %v839 = vld [vmem:[#allocation2 + $0xe1] sm:$0xff]
      %v840 = vld [vmem:[#allocation2 + $0xf1] sm:$0xff]
      %v841 = vld [vmem:[#allocation2 + $0xf9] sm:$0xff]
      %v842 = vld [vmem:[#allocation2 + $0x109] sm:$0xff]
      %v843 = vld [vmem:[#allocation2 + $0x111] sm:$0xff]
      %v844 = vld [vmem:[#allocation2 + $0x121] sm:$0xff]
      %v845 = vld [vmem:[#allocation2 + $0x129] sm:$0xff]
      %v846 = vld [vmem:[#allocation2 + $0x139] sm:$0xff]
      %v847 = vld [vmem:[#allocation2 + $0x141] sm:$0xff]
      %v848 = vld [vmem:[#allocation2 + $0x151] sm:$0xff]
      %v849 = vld [vmem:[#allocation2 + $0x159] sm:$0xff]
      %v850 = vld [vmem:[#allocation2 + $0x169] sm:$0xff]
      %v851 = vld [vmem:[#allocation2 + $0x171] sm:$0xff]
      %v852 = vld [vmem:[#allocation3] sm:$0xff]
      %v853 = vld [vmem:[#allocation3 + $0x8] sm:$0xff]
      %v854 = vld [vmem:[#allocation3 + $0x10] sm:$0xff]
      %v855 = vld [vmem:[#allocation3 + $0x18] sm:$0xff]
      %v856 = vld [vmem:[#allocation3 + $0x20] sm:$0xff]
      %v857 = vld [vmem:[#allocation3 + $0x28] sm:$0xff]
      %v858 = vld [vmem:[#allocation3 + $0x30] sm:$0xff]
      %v859 = vld [vmem:[#allocation3 + $0x38] sm:$0xff]
      %v860 = vld [vmem:[#allocation3 + $0x40] sm:$0xff]
      %v861 = vld [vmem:[#allocation3 + $0x48] sm:$0xff]
      %v862 = vld [vmem:[#allocation3 + $0x50] sm:$0xff]
      %v863 = vld [vmem:[#allocation3 + $0x58] sm:$0xff]
      %v864 = vld [vmem:[#allocation3 + $0x60] sm:$0xff]
      %v865 = vld [vmem:[#allocation3 + $0x68] sm:$0xff]
      %v866 = vld [vmem:[#allocation3 + $0x70] sm:$0xff]
      %v867 = vld [vmem:[#allocation3 + $0x78] sm:$0xff]
      %v868 = vld [vmem:[#allocation3 + $0x80] sm:$0xff]
      %v869 = vld [vmem:[#allocation3 + $0x88] sm:$0xff]
      %v870 = vld [vmem:[#allocation3 + $0x90] sm:$0xff]
      %v871 = vld [vmem:[#allocation3 + $0x98] sm:$0xff]
      %v872 = vld [vmem:[#allocation3 + $0xa0] sm:$0xff]
      %v873 = vld [vmem:[#allocation3 + $0xa8] sm:$0xff]
      %v874 = vld [vmem:[#allocation3 + $0xb0] sm:$0xff]
      %v875 = vld [vmem:[#allocation3 + $0xb8] sm:$0xff]
      %v876 = vld [vmem:[#allocation3 + $0xc0] sm:$0xff]
      %v877 = vld [vmem:[#allocation3 + $0xc8] sm:$0xff]
      %v878 = vld [vmem:[#allocation3 + $0xd0] sm:$0xff]
      %v879 = vld [vmem:[#allocation3 + $0xd8] sm:$0xff]
      %v880 = vld [vmem:[#allocation3 + $0xe0] sm:$0xff]
      %v881 = vld [vmem:[#allocation3 + $0xe8] sm:$0xff]
      %v882 = vld [vmem:[#allocation3 + $0xf0] sm:$0xff]
      %v883 = vld [vmem:[#allocation3 + $0xf8] sm:$0xff]
      %v884 = vpack.c.bf16 %v821, %v820
      %v885 = vpack.c.bf16 %v823, %v822
      %v886 = vpack.c.bf16 %v825, %v824
      %v887 = vpack.c.bf16 %v827, %v826
      %v888 = vpack.c.bf16 %v829, %v828
      %v889 = vpack.c.bf16 %v831, %v830
      %v890 = vpack.c.bf16 %v833, %v832
      %v891 = vpack.c.bf16 %v835, %v834
      %v892 = vpack.c.bf16 %v837, %v836
      %v893 = vpack.c.bf16 %v839, %v838
      %v894 = vpack.c.bf16 %v841, %v840
      %v895 = vpack.c.bf16 %v843, %v842
      %v896 = vpack.c.bf16 %v845, %v844
      %v897 = vpack.c.bf16 %v847, %v846
      %v898 = vpack.c.bf16 %v849, %v848
      %v899 = vpack.c.bf16 %v851, %v850
      %s900 = scalar_lea.vmem %s2, 2
      %v901 = vld [vmem:[%s900] sm:$0x3]
      %v903 = vsel %vm397, %v884, 0
      %v906 = vsel %vm397, %v885, 0
      %v909 = vsel %vm397, %v886, 0
      %v912 = vsel %vm397, %v887, 0
      %v915 = vsel %vm397, %v888, 0
      %v918 = vsel %vm397, %v889, 0
      %v921 = vsel %vm397, %v890, 0
      %v924 = vsel %vm397, %v891, 0
      %v927 = vsel %vm397, %v892, 0
      %v930 = vsel %vm397, %v893, 0
      %v933 = vsel %vm397, %v894, 0
      %v936 = vsel %vm397, %v895, 0
      %v939 = vsel %vm397, %v896, 0
      %v942 = vsel %vm397, %v897, 0
      %v945 = vsel %vm397, %v898, 0
      %v948 = vsel %vm397, %v899, 0
      %v951 = vsel %vm591, %v901, 0
      %953 = vmatprep.subr.bf16.mxu0 0
      %954 = vmatpush1.bf16.msra.mxu0 %v951
      %955 = vmatprep.subr.bf16.mxu0 0
      %956 = vmatpush1.bf16.msra.mxu0 0
      %957 = vmatprep.subr.bf16.mxu0 0
      %958 = vmatpush1.bf16.msra.mxu0 0
      %959 = vmatprep.subr.bf16.mxu0 0
      %960 = vmatpush1.bf16.msra.mxu0 0
      %961 = vmatprep.subr.bf16.mxu0 0
      %962 = vmatpush1.bf16.msra.mxu0 0
      %963 = vmatprep.subr.bf16.mxu0 0
      %964 = vmatpush1.bf16.msra.mxu0 0
      %965 = vmatprep.subr.bf16.mxu0 0
      %966 = vmatpush1.bf16.msra.mxu0 0
      %967 = vmatprep.subr.bf16.mxu0 0
      %968 = vmatpush1.bf16.msra.mxu0 0
      %969 = vmatprep.subr.bf16.mxu0 0
      %970 = vmatpush1.bf16.msra.mxu0 0
      %971 = vmatprep.subr.bf16.mxu0 0
      %972 = vmatpush1.bf16.msra.mxu0 0
      %973 = vmatprep.subr.bf16.mxu0 0
      %974 = vmatpush1.bf16.msra.mxu0 0
      %975 = vmatprep.subr.bf16.mxu0 0
      %976 = vmatpush1.bf16.msra.mxu0 0
      %977 = vmatprep.subr.bf16.mxu0 0
      %978 = vmatpush1.bf16.msra.mxu0 0
      %979 = vmatprep.subr.bf16.mxu0 0
      %980 = vmatpush1.bf16.msra.mxu0 0
      %981 = vmatprep.subr.bf16.mxu0 0
      %982 = vmatpush1.bf16.msra.mxu0 0
      %983 = vmatprep.subr.bf16.mxu0 0
      %984 = vmatpush1.bf16.msra.mxu0 0
      %985 = vmatprep.mubr.bf16.mxu0 0
      %986 = vmatmul.mubr.bf16.gmra.mrb[0].mxu0 %v903
      %v987 = vpop.f32.mrb[0].mxu0
      %v988 = vadd.f32 0.0, %v987
      %v989 = vpop.f32.mrb[0].mxu0
      %v990 = vpop.f32.mrb[0].mxu0
      %v991 = vadd.f32 0.0, %v990
      %v992 = vpop.f32.mrb[0].mxu0
      %993 = vmatprep.mubr.bf16.mxu0 0
      %994 = vmatmul.mubr.bf16.gmra.mrb[0].mxu0 %v906
      %v995 = vpop.f32.mrb[0].mxu0
      %v996 = vadd.f32 0.0, %v995
      %v997 = vpop.f32.mrb[0].mxu0
      %v998 = vpop.f32.mrb[0].mxu0
      %v999 = vadd.f32 0.0, %v998
      %v1000 = vpop.f32.mrb[0].mxu0
      %1001 = vmatprep.mubr.bf16.mxu0 0
      %1002 = vmatmul.mubr.bf16.gmra.mrb[0].mxu0 %v909
      %v1003 = vpop.f32.mrb[0].mxu0
      %v1004 = vadd.f32 0.0, %v1003
      %v1005 = vpop.f32.mrb[0].mxu0
      %v1006 = vpop.f32.mrb[0].mxu0
      %v1007 = vadd.f32 0.0, %v1006
      %v1008 = vpop.f32.mrb[0].mxu0
      %1009 = vmatprep.mubr.bf16.mxu0 0
      %1010 = vmatmul.mubr.bf16.gmra.mrb[0].mxu0 %v912
      %v1011 = vpop.f32.mrb[0].mxu0
      %v1012 = vadd.f32 0.0, %v1011
      %v1013 = vpop.f32.mrb[0].mxu0
      %v1014 = vpop.f32.mrb[0].mxu0
      %v1015 = vadd.f32 0.0, %v1014
      %v1016 = vpop.f32.mrb[0].mxu0
      %1017 = vmatprep.mubr.bf16.mxu0 0
      %1018 = vmatmul.mubr.bf16.gmra.mrb[0].mxu0 %v915
      %v1019 = vpop.f32.mrb[0].mxu0
      %v1020 = vadd.f32 0.0, %v1019
      %v1021 = vpop.f32.mrb[0].mxu0
      %v1022 = vpop.f32.mrb[0].mxu0
      %v1023 = vadd.f32 0.0, %v1022
      %v1024 = vpop.f32.mrb[0].mxu0
      %1025 = vmatprep.mubr.bf16.mxu0 0
      %1026 = vmatmul.mubr.bf16.gmra.mrb[0].mxu0 %v918
      %v1027 = vpop.f32.mrb[0].mxu0
      %v1028 = vadd.f32 0.0, %v1027
      %v1029 = vpop.f32.mrb[0].mxu0
      %v1030 = vpop.f32.mrb[0].mxu0
      %v1031 = vadd.f32 0.0, %v1030
      %v1032 = vpop.f32.mrb[0].mxu0
      %1033 = vmatprep.mubr.bf16.mxu0 0
      %1034 = vmatmul.mubr.bf16.gmra.mrb[0].mxu0 %v921
      %v1035 = vpop.f32.mrb[0].mxu0
      %v1036 = vadd.f32 0.0, %v1035
      %v1037 = vpop.f32.mrb[0].mxu0
      %v1038 = vpop.f32.mrb[0].mxu0
      %v1039 = vadd.f32 0.0, %v1038
      %v1040 = vpop.f32.mrb[0].mxu0
      %1041 = vmatprep.mubr.bf16.mxu0 0
      %1042 = vmatmul.mubr.bf16.gmra.mrb[0].mxu0 %v924
      %v1043 = vpop.f32.mrb[0].mxu0
      %v1044 = vadd.f32 0.0, %v1043
      %v1045 = vpop.f32.mrb[0].mxu0
      %v1046 = vpop.f32.mrb[0].mxu0
      %v1047 = vadd.f32 0.0, %v1046
      %v1048 = vpop.f32.mrb[0].mxu0
      %1049 = vmatprep.mubr.bf16.mxu0 0
      %1050 = vmatmul.mubr.bf16.gmra.mrb[0].mxu0 %v927
      %v1051 = vpop.f32.mrb[0].mxu0
      %v1052 = vadd.f32 0.0, %v1051
      %v1053 = vpop.f32.mrb[0].mxu0
      %v1054 = vpop.f32.mrb[0].mxu0
      %v1055 = vadd.f32 0.0, %v1054
      %v1056 = vpop.f32.mrb[0].mxu0
      %1057 = vmatprep.mubr.bf16.mxu0 0
      %1058 = vmatmul.mubr.bf16.gmra.mrb[0].mxu0 %v930
      %v1059 = vpop.f32.mrb[0].mxu0
      %v1060 = vadd.f32 0.0, %v1059
      %v1061 = vpop.f32.mrb[0].mxu0
      %v1062 = vpop.f32.mrb[0].mxu0
      %v1063 = vadd.f32 0.0, %v1062
      %v1064 = vpop.f32.mrb[0].mxu0
      %1065 = vmatprep.mubr.bf16.mxu0 0
      %1066 = vmatmul.mubr.bf16.gmra.mrb[0].mxu0 %v933
      %v1067 = vpop.f32.mrb[0].mxu0
      %v1068 = vadd.f32 0.0, %v1067
      %v1069 = vpop.f32.mrb[0].mxu0
      %v1070 = vpop.f32.mrb[0].mxu0
      %v1071 = vadd.f32 0.0, %v1070
      %v1072 = vpop.f32.mrb[0].mxu0
      %1073 = vmatprep.mubr.bf16.mxu0 0
      %1074 = vmatmul.mubr.bf16.gmra.mrb[0].mxu0 %v936
      %v1075 = vpop.f32.mrb[0].mxu0
      %v1076 = vadd.f32 0.0, %v1075
      %v1077 = vpop.f32.mrb[0].mxu0
      %v1078 = vpop.f32.mrb[0].mxu0
      %v1079 = vadd.f32 0.0, %v1078
      %v1080 = vpop.f32.mrb[0].mxu0
      %1081 = vmatprep.mubr.bf16.mxu0 0
      %1082 = vmatmul.mubr.bf16.gmra.mrb[0].mxu0 %v939
      %v1083 = vpop.f32.mrb[0].mxu0
      %v1084 = vadd.f32 0.0, %v1083
      %v1085 = vpop.f32.mrb[0].mxu0
      %v1086 = vpop.f32.mrb[0].mxu0
      %v1087 = vadd.f32 0.0, %v1086
      %v1088 = vpop.f32.mrb[0].mxu0
      %1089 = vmatprep.mubr.bf16.mxu0 0
      %1090 = vmatmul.mubr.bf16.gmra.mrb[0].mxu0 %v942
      %v1091 = vpop.f32.mrb[0].mxu0
      %v1092 = vadd.f32 0.0, %v1091
      %v1093 = vpop.f32.mrb[0].mxu0
      %v1094 = vpop.f32.mrb[0].mxu0
      %v1095 = vadd.f32 0.0, %v1094
      %v1096 = vpop.f32.mrb[0].mxu0
      %1097 = vmatprep.mubr.bf16.mxu0 0
      %1098 = vmatmul.mubr.bf16.gmra.mrb[0].mxu0 %v945
      %v1099 = vpop.f32.mrb[0].mxu0
      %v1100 = vadd.f32 0.0, %v1099
      %v1101 = vpop.f32.mrb[0].mxu0
      %v1102 = vpop.f32.mrb[0].mxu0
      %v1103 = vadd.f32 0.0, %v1102
      %v1104 = vpop.f32.mrb[0].mxu0
      %1105 = vmatprep.mubr.bf16.mxu0 0
      %1106 = vmatmul.mubr.bf16.gmra.mrb[0].mxu0 %v948
      %v1107 = vpop.f32.mrb[0].mxu0
      %v1108 = vadd.f32 0.0, %v1107
      %v1109 = vpop.f32.mrb[0].mxu0
      %v1110 = vpop.f32.mrb[0].mxu0
      %v1111 = vadd.f32 0.0, %v1110
      %v1112 = vpop.f32.mrb[0].mxu0
      %1113 = vdwg.mxu0
      %v1114 = vadd.f32 %v852, %v988
      %v1115 = vadd.f32 %v853, %v991
      %v1116 = vadd.f32 %v854, %v996
      %v1117 = vadd.f32 %v855, %v999
      %v1118 = vadd.f32 %v856, %v1004
      %v1119 = vadd.f32 %v857, %v1007
      %v1120 = vadd.f32 %v858, %v1012
      %v1121 = vadd.f32 %v859, %v1015
      %v1122 = vadd.f32 %v860, %v1020
      %v1123 = vadd.f32 %v861, %v1023
      %v1124 = vadd.f32 %v862, %v1028
      %v1125 = vadd.f32 %v863, %v1031
      %v1126 = vadd.f32 %v864, %v1036
      %v1127 = vadd.f32 %v865, %v1039
      %v1128 = vadd.f32 %v866, %v1044
      %v1129 = vadd.f32 %v867, %v1047
      %v1130 = vadd.f32 %v868, %v1052
      %v1131 = vadd.f32 %v869, %v1055
      %v1132 = vadd.f32 %v870, %v1060
      %v1133 = vadd.f32 %v871, %v1063
      %v1134 = vadd.f32 %v872, %v1068
      %v1135 = vadd.f32 %v873, %v1071
      %v1136 = vadd.f32 %v874, %v1076
      %v1137 = vadd.f32 %v875, %v1079
      %v1138 = vadd.f32 %v876, %v1084
      %v1139 = vadd.f32 %v877, %v1087
      %v1140 = vadd.f32 %v878, %v1092
      %v1141 = vadd.f32 %v879, %v1095
      %v1142 = vadd.f32 %v880, %v1100
      %v1143 = vadd.f32 %v881, %v1103
      %v1144 = vadd.f32 %v882, %v1108
      %v1145 = vadd.f32 %v883, %v1111
      %1146 = vst.msk [vmem:[#allocation3] sm:$0xff] %vm397, %v1114
      %1147 = vst.msk [vmem:[#allocation3 + $0x8] sm:$0xff] %vm397, %v1115
      %1148 = vst.msk [vmem:[#allocation3 + $0x10] sm:$0xff] %vm397, %v1116
      %1149 = vst.msk [vmem:[#allocation3 + $0x18] sm:$0xff] %vm397, %v1117
      %1150 = vst.msk [vmem:[#allocation3 + $0x20] sm:$0xff] %vm397, %v1118
      %1151 = vst.msk [vmem:[#allocation3 + $0x28] sm:$0xff] %vm397, %v1119
      %1152 = vst.msk [vmem:[#allocation3 + $0x30] sm:$0xff] %vm397, %v1120
      %1153 = vst.msk [vmem:[#allocation3 + $0x38] sm:$0xff] %vm397, %v1121
      %1154 = vst.msk [vmem:[#allocation3 + $0x40] sm:$0xff] %vm397, %v1122
      %1155 = vst.msk [vmem:[#allocation3 + $0x48] sm:$0xff] %vm397, %v1123
      %1156 = vst.msk [vmem:[#allocation3 + $0x50] sm:$0xff] %vm397, %v1124
      %1157 = vst.msk [vmem:[#allocation3 + $0x58] sm:$0xff] %vm397, %v1125
      %1158 = vst.msk [vmem:[#allocation3 + $0x60] sm:$0xff] %vm397, %v1126
      %1159 = vst.msk [vmem:[#allocation3 + $0x68] sm:$0xff] %vm397, %v1127
      %1160 = vst.msk [vmem:[#allocation3 + $0x70] sm:$0xff] %vm397, %v1128
      %1161 = vst.msk [vmem:[#allocation3 + $0x78] sm:$0xff] %vm397, %v1129
      %1162 = vst.msk [vmem:[#allocation3 + $0x80] sm:$0xff] %vm397, %v1130
      %1163 = vst.msk [vmem:[#allocation3 + $0x88] sm:$0xff] %vm397, %v1131
      %1164 = vst.msk [vmem:[#allocation3 + $0x90] sm:$0xff] %vm397, %v1132
      %1165 = vst.msk [vmem:[#allocation3 + $0x98] sm:$0xff] %vm397, %v1133
      %1166 = vst.msk [vmem:[#allocation3 + $0xa0] sm:$0xff] %vm397, %v1134
      %1167 = vst.msk [vmem:[#allocation3 + $0xa8] sm:$0xff] %vm397, %v1135
      %1168 = vst.msk [vmem:[#allocation3 + $0xb0] sm:$0xff] %vm397, %v1136
      %1169 = vst.msk [vmem:[#allocation3 + $0xb8] sm:$0xff] %vm397, %v1137
      %1170 = vst.msk [vmem:[#allocation3 + $0xc0] sm:$0xff] %vm397, %v1138
      %1171 = vst.msk [vmem:[#allocation3 + $0xc8] sm:$0xff] %vm397, %v1139
      %1172 = vst.msk [vmem:[#allocation3 + $0xd0] sm:$0xff] %vm397, %v1140
      %1173 = vst.msk [vmem:[#allocation3 + $0xd8] sm:$0xff] %vm397, %v1141
      %1174 = vst.msk [vmem:[#allocation3 + $0xe0] sm:$0xff] %vm397, %v1142
      %1175 = vst.msk [vmem:[#allocation3 + $0xe8] sm:$0xff] %vm397, %v1143
      %1176 = vst.msk [vmem:[#allocation3 + $0xf0] sm:$0xff] %vm397, %v1144
      %1177 = vst.msk [vmem:[#allocation3 + $0xf8] sm:$0xff] %vm397, %v1145
      %v1178 = vld [vmem:[#allocation2 + $0x2] sm:$0xff]
      %v1179 = vld [vmem:[#allocation2 + $0xa] sm:$0xff]
      %v1180 = vld [vmem:[#allocation2 + $0x1a] sm:$0xff]
      %v1181 = vld [vmem:[#allocation2 + $0x22] sm:$0xff]
      %v1182 = vld [vmem:[#allocation2 + $0x32] sm:$0xff]
      %v1183 = vld [vmem:[#allocation2 + $0x3a] sm:$0xff]
      %v1184 = vld [vmem:[#allocation2 + $0x4a] sm:$0xff]
      %v1185 = vld [vmem:[#allocation2 + $0x52] sm:$0xff]
      %v1186 = vld [vmem:[#allocation2 + $0x62] sm:$0xff]
      %v1187 = vld [vmem:[#allocation2 + $0x6a] sm:$0xff]
      %v1188 = vld [vmem:[#allocation2 + $0x7a] sm:$0xff]
      %v1189 = vld [vmem:[#allocation2 + $0x82] sm:$0xff]
      %v1190 = vld [vmem:[#allocation2 + $0x92] sm:$0xff]
      %v1191 = vld [vmem:[#allocation2 + $0x9a] sm:$0xff]
      %v1192 = vld [vmem:[#allocation2 + $0xaa] sm:$0xff]
      %v1193 = vld [vmem:[#allocation2 + $0xb2] sm:$0xff]
      %v1194 = vld [vmem:[#allocation2 + $0xc2] sm:$0xff]
      %v1195 = vld [vmem:[#allocation2 + $0xca] sm:$0xff]
      %v1196 = vld [vmem:[#allocation2 + $0xda] sm:$0xff]
      %v1197 = vld [vmem:[#allocation2 + $0xe2] sm:$0xff]
      %v1198 = vld [vmem:[#allocation2 + $0xf2] sm:$0xff]
      %v1199 = vld [vmem:[#allocation2 + $0xfa] sm:$0xff]
      %v1200 = vld [vmem:[#allocation2 + $0x10a] sm:$0xff]
      %v1201 = vld [vmem:[#allocation2 + $0x112] sm:$0xff]
      %v1202 = vld [vmem:[#allocation2 + $0x122] sm:$0xff]
      %v1203 = vld [vmem:[#allocation2 + $0x12a] sm:$0xff]
      %v1204 = vld [vmem:[#allocation2 + $0x13a] sm:$0xff]
      %v1205 = vld [vmem:[#allocation2 + $0x142] sm:$0xff]
      %v1206 = vld [vmem:[#allocation2 + $0x152] sm:$0xff]
      %v1207 = vld [vmem:[#allocation2 + $0x15a] sm:$0xff]
      %v1208 = vld [vmem:[#allocation2 + $0x16a] sm:$0xff]
      %v1209 = vld [vmem:[#allocation2 + $0x172] sm:$0xff]
      %v1210 = vld [vmem:[#allocation3] sm:$0xff]
      %v1211 = vld [vmem:[#allocation3 + $0x8] sm:$0xff]
      %v1212 = vld [vmem:[#allocation3 + $0x10] sm:$0xff]
      %v1213 = vld [vmem:[#allocation3 + $0x18] sm:$0xff]
      %v1214 = vld [vmem:[#allocation3 + $0x20] sm:$0xff]
      %v1215 = vld [vmem:[#allocation3 + $0x28] sm:$0xff]
      %v1216 = vld [vmem:[#allocation3 + $0x30] sm:$0xff]
      %v1217 = vld [vmem:[#allocation3 + $0x38] sm:$0xff]
      %v1218 = vld [vmem:[#allocation3 + $0x40] sm:$0xff]
      %v1219 = vld [vmem:[#allocation3 + $0x48] sm:$0xff]
      %v1220 = vld [vmem:[#allocation3 + $0x50] sm:$0xff]
      %v1221 = vld [vmem:[#allocation3 + $0x58] sm:$0xff]
      %v1222 = vld [vmem:[#allocation3 + $0x60] sm:$0xff]
      %v1223 = vld [vmem:[#allocation3 + $0x68] sm:$0xff]
      %v1224 = vld [vmem:[#allocation3 + $0x70] sm:$0xff]
      %v1225 = vld [vmem:[#allocation3 + $0x78] sm:$0xff]
      %v1226 = vld [vmem:[#allocation3 + $0x80] sm:$0xff]
      %v1227 = vld [vmem:[#allocation3 + $0x88] sm:$0xff]
      %v1228 = vld [vmem:[#allocation3 + $0x90] sm:$0xff]
      %v1229 = vld [vmem:[#allocation3 + $0x98] sm:$0xff]
      %v1230 = vld [vmem:[#allocation3 + $0xa0] sm:$0xff]
      %v1231 = vld [vmem:[#allocation3 + $0xa8] sm:$0xff]
      %v1232 = vld [vmem:[#allocation3 + $0xb0] sm:$0xff]
      %v1233 = vld [vmem:[#allocation3 + $0xb8] sm:$0xff]
      %v1234 = vld [vmem:[#allocation3 + $0xc0] sm:$0xff]
      %v1235 = vld [vmem:[#allocation3 + $0xc8] sm:$0xff]
      %v1236 = vld [vmem:[#allocation3 + $0xd0] sm:$0xff]
      %v1237 = vld [vmem:[#allocation3 + $0xd8] sm:$0xff]
      %v1238 = vld [vmem:[#allocation3 + $0xe0] sm:$0xff]
      %v1239 = vld [vmem:[#allocation3 + $0xe8] sm:$0xff]
      %v1240 = vld [vmem:[#allocation3 + $0xf0] sm:$0xff]
      %v1241 = vld [vmem:[#allocation3 + $0xf8] sm:$0xff]
      %v1242 = vpack.c.bf16 %v1179, %v1178
      %v1243 = vpack.c.bf16 %v1181, %v1180
      %v1244 = vpack.c.bf16 %v1183, %v1182
      %v1245 = vpack.c.bf16 %v1185, %v1184
      %v1246 = vpack.c.bf16 %v1187, %v1186
      %v1247 = vpack.c.bf16 %v1189, %v1188
      %v1248 = vpack.c.bf16 %v1191, %v1190
      %v1249 = vpack.c.bf16 %v1193, %v1192
      %v1250 = vpack.c.bf16 %v1195, %v1194
      %v1251 = vpack.c.bf16 %v1197, %v1196
      %v1252 = vpack.c.bf16 %v1199, %v1198
      %v1253 = vpack.c.bf16 %v1201, %v1200
      %v1254 = vpack.c.bf16 %v1203, %v1202
      %v1255 = vpack.c.bf16 %v1205, %v1204
      %v1256 = vpack.c.bf16 %v1207, %v1206
      %v1257 = vpack.c.bf16 %v1209, %v1208
      %s1258 = scalar_lea.vmem %s2, 4
      %v1259 = vld [vmem:[%s1258] sm:$0x3]
      %v1261 = vsel %vm397, %v1242, 0
      %v1264 = vsel %vm397, %v1243, 0
      %v1267 = vsel %vm397, %v1244, 0
      %v1270 = vsel %vm397, %v1245, 0
      %v1273 = vsel %vm397, %v1246, 0
      %v1276 = vsel %vm397, %v1247, 0
      %v1279 = vsel %vm397, %v1248, 0
      %v1282 = vsel %vm397, %v1249, 0
      %v1285 = vsel %vm397, %v1250, 0
      %v1288 = vsel %vm397, %v1251, 0
      %v1291 = vsel %vm397, %v1252, 0
      %v1294 = vsel %vm397, %v1253, 0
      %v1297 = vsel %vm397, %v1254, 0
      %v1300 = vsel %vm397, %v1255, 0
      %v1303 = vsel %vm397, %v1256, 0
      %v1306 = vsel %vm397, %v1257, 0
      %v1309 = vsel %vm591, %v1259, 0
      %1311 = vmatprep.subr.bf16.mxu0 0
      %1312 = vmatpush1.bf16.msra.mxu0 %v1309
      %1313 = vmatprep.subr.bf16.mxu0 0
      %1314 = vmatpush1.bf16.msra.mxu0 0
      %1315 = vmatprep.subr.bf16.mxu0 0
      %1316 = vmatpush1.bf16.msra.mxu0 0
      %1317 = vmatprep.subr.bf16.mxu0 0
      %1318 = vmatpush1.bf16.msra.mxu0 0
      %1319 = vmatprep.subr.bf16.mxu0 0
      %1320 = vmatpush1.bf16.msra.mxu0 0
      %1321 = vmatprep.subr.bf16.mxu0 0
      %1322 = vmatpush1.bf16.msra.mxu0 0
      %1323 = vmatprep.subr.bf16.mxu0 0
      %1324 = vmatpush1.bf16.msra.mxu0 0
      %1325 = vmatprep.subr.bf16.mxu0 0
      %1326 = vmatpush1.bf16.msra.mxu0 0
      %1327 = vmatprep.subr.bf16.mxu0 0
      %1328 = vmatpush1.bf16.msra.mxu0 0
      %1329 = vmatprep.subr.bf16.mxu0 0
      %1330 = vmatpush1.bf16.msra.mxu0 0
      %1331 = vmatprep.subr.bf16.mxu0 0
      %1332 = vmatpush1.bf16.msra.mxu0 0
      %1333 = vmatprep.subr.bf16.mxu0 0
      %1334 = vmatpush1.bf16.msra.mxu0 0
      %1335 = vmatprep.subr.bf16.mxu0 0
      %1336 = vmatpush1.bf16.msra.mxu0 0
      %1337 = vmatprep.subr.bf16.mxu0 0
      %1338 = vmatpush1.bf16.msra.mxu0 0
      %1339 = vmatprep.subr.bf16.mxu0 0
      %1340 = vmatpush1.bf16.msra.mxu0 0
      %1341 = vmatprep.subr.bf16.mxu0 0
      %1342 = vmatpush1.bf16.msra.mxu0 0
      %1343 = vmatprep.mubr.bf16.mxu0 0
      %1344 = vmatmul.mubr.bf16.gmra.mrb[0].mxu0 %v1261
      %v1345 = vpop.f32.mrb[0].mxu0
      %v1346 = vadd.f32 0.0, %v1345
      %v1347 = vpop.f32.mrb[0].mxu0
      %v1348 = vpop.f32.mrb[0].mxu0
      %v1349 = vadd.f32 0.0, %v1348
      %v1350 = vpop.f32.mrb[0].mxu0
      %1351 = vmatprep.mubr.bf16.mxu0 0
      %1352 = vmatmul.mubr.bf16.gmra.mrb[0].mxu0 %v1264
      %v1353 = vpop.f32.mrb[0].mxu0
      %v1354 = vadd.f32 0.0, %v1353
      %v1355 = vpop.f32.mrb[0].mxu0
      %v1356 = vpop.f32.mrb[0].mxu0
      %v1357 = vadd.f32 0.0, %v1356
      %v1358 = vpop.f32.mrb[0].mxu0
      %1359 = vmatprep.mubr.bf16.mxu0 0
      %1360 = vmatmul.mubr.bf16.gmra.mrb[0].mxu0 %v1267
      %v1361 = vpop.f32.mrb[0].mxu0
      %v1362 = vadd.f32 0.0, %v1361
      %v1363 = vpop.f32.mrb[0].mxu0
      %v1364 = vpop.f32.mrb[0].mxu0
      %v1365 = vadd.f32 0.0, %v1364
      %v1366 = vpop.f32.mrb[0].mxu0
      %1367 = vmatprep.mubr.bf16.mxu0 0
      %1368 = vmatmul.mubr.bf16.gmra.mrb[0].mxu0 %v1270
      %v1369 = vpop.f32.mrb[0].mxu0
      %v1370 = vadd.f32 0.0, %v1369
      %v1371 = vpop.f32.mrb[0].mxu0
      %v1372 = vpop.f32.mrb[0].mxu0
      %v1373 = vadd.f32 0.0, %v1372
      %v1374 = vpop.f32.mrb[0].mxu0
      %1375 = vmatprep.mubr.bf16.mxu0 0
      %1376 = vmatmul.mubr.bf16.gmra.mrb[0].mxu0 %v1273
      %v1377 = vpop.f32.mrb[0].mxu0
      %v1378 = vadd.f32 0.0, %v1377
      %v1379 = vpop.f32.mrb[0].mxu0
      %v1380 = vpop.f32.mrb[0].mxu0
      %v1381 = vadd.f32 0.0, %v1380
      %v1382 = vpop.f32.mrb[0].mxu0
      %1383 = vmatprep.mubr.bf16.mxu0 0
      %1384 = vmatmul.mubr.bf16.gmra.mrb[0].mxu0 %v1276
      %v1385 = vpop.f32.mrb[0].mxu0
      %v1386 = vadd.f32 0.0, %v1385
      %v1387 = vpop.f32.mrb[0].mxu0
      %v1388 = vpop.f32.mrb[0].mxu0
      %v1389 = vadd.f32 0.0, %v1388
      %v1390 = vpop.f32.mrb[0].mxu0
      %1391 = vmatprep.mubr.bf16.mxu0 0
      %1392 = vmatmul.mubr.bf16.gmra.mrb[0].mxu0 %v1279
      %v1393 = vpop.f32.mrb[0].mxu0
      %v1394 = vadd.f32 0.0, %v1393
      %v1395 = vpop.f32.mrb[0].mxu0
      %v1396 = vpop.f32.mrb[0].mxu0
      %v1397 = vadd.f32 0.0, %v1396
      %v1398 = vpop.f32.mrb[0].mxu0
      %1399 = vmatprep.mubr.bf16.mxu0 0
      %1400 = vmatmul.mubr.bf16.gmra.mrb[0].mxu0 %v1282
      %v1401 = vpop.f32.mrb[0].mxu0
      %v1402 = vadd.f32 0.0, %v1401
      %v1403 = vpop.f32.mrb[0].mxu0
      %v1404 = vpop.f32.mrb[0].mxu0
      %v1405 = vadd.f32 0.0, %v1404
      %v1406 = vpop.f32.mrb[0].mxu0
      %1407 = vmatprep.mubr.bf16.mxu0 0
      %1408 = vmatmul.mubr.bf16.gmra.mrb[0].mxu0 %v1285
      %v1409 = vpop.f32.mrb[0].mxu0
      %v1410 = vadd.f32 0.0, %v1409
      %v1411 = vpop.f32.mrb[0].mxu0
      %v1412 = vpop.f32.mrb[0].mxu0
      %v1413 = vadd.f32 0.0, %v1412
      %v1414 = vpop.f32.mrb[0].mxu0
      %1415 = vmatprep.mubr.bf16.mxu0 0
      %1416 = vmatmul.mubr.bf16.gmra.mrb[0].mxu0 %v1288
      %v1417 = vpop.f32.mrb[0].mxu0
      %v1418 = vadd.f32 0.0, %v1417
      %v1419 = vpop.f32.mrb[0].mxu0
      %v1420 = vpop.f32.mrb[0].mxu0
      %v1421 = vadd.f32 0.0, %v1420
      %v1422 = vpop.f32.mrb[0].mxu0
      %1423 = vmatprep.mubr.bf16.mxu0 0
      %1424 = vmatmul.mubr.bf16.gmra.mrb[0].mxu0 %v1291
      %v1425 = vpop.f32.mrb[0].mxu0
      %v1426 = vadd.f32 0.0, %v1425
      %v1427 = vpop.f32.mrb[0].mxu0
      %v1428 = vpop.f32.mrb[0].mxu0
      %v1429 = vadd.f32 0.0, %v1428
      %v1430 = vpop.f32.mrb[0].mxu0
      %1431 = vmatprep.mubr.bf16.mxu0 0
      %1432 = vmatmul.mubr.bf16.gmra.mrb[0].mxu0 %v1294
      %v1433 = vpop.f32.mrb[0].mxu0
      %v1434 = vadd.f32 0.0, %v1433
      %v1435 = vpop.f32.mrb[0].mxu0
      %v1436 = vpop.f32.mrb[0].mxu0
      %v1437 = vadd.f32 0.0, %v1436
      %v1438 = vpop.f32.mrb[0].mxu0
      %1439 = vmatprep.mubr.bf16.mxu0 0
      %1440 = vmatmul.mubr.bf16.gmra.mrb[0].mxu0 %v1297
      %v1441 = vpop.f32.mrb[0].mxu0
      %v1442 = vadd.f32 0.0, %v1441
      %v1443 = vpop.f32.mrb[0].mxu0
      %v1444 = vpop.f32.mrb[0].mxu0
      %v1445 = vadd.f32 0.0, %v1444
      %v1446 = vpop.f32.mrb[0].mxu0
      %1447 = vmatprep.mubr.bf16.mxu0 0
      %1448 = vmatmul.mubr.bf16.gmra.mrb[0].mxu0 %v1300
      %v1449 = vpop.f32.mrb[0].mxu0
      %v1450 = vadd.f32 0.0, %v1449
      %v1451 = vpop.f32.mrb[0].mxu0
      %v1452 = vpop.f32.mrb[0].mxu0
      %v1453 = vadd.f32 0.0, %v1452
      %v1454 = vpop.f32.mrb[0].mxu0
      %1455 = vmatprep.mubr.bf16.mxu0 0
      %1456 = vmatmul.mubr.bf16.gmra.mrb[0].mxu0 %v1303
      %v1457 = vpop.f32.mrb[0].mxu0
      %v1458 = vadd.f32 0.0, %v1457
      %v1459 = vpop.f32.mrb[0].mxu0
      %v1460 = vpop.f32.mrb[0].mxu0
      %v1461 = vadd.f32 0.0, %v1460
      %v1462 = vpop.f32.mrb[0].mxu0
      %1463 = vmatprep.mubr.bf16.mxu0 0
      %1464 = vmatmul.mubr.bf16.gmra.mrb[0].mxu0 %v1306
      %v1465 = vpop.f32.mrb[0].mxu0
      %v1466 = vadd.f32 0.0, %v1465
      %v1467 = vpop.f32.mrb[0].mxu0
      %v1468 = vpop.f32.mrb[0].mxu0
      %v1469 = vadd.f32 0.0, %v1468
      %v1470 = vpop.f32.mrb[0].mxu0
      %1471 = vdwg.mxu0
      %v1472 = vadd.f32 %v1210, %v1346
      %v1473 = vadd.f32 %v1211, %v1349
      %v1474 = vadd.f32 %v1212, %v1354
      %v1475 = vadd.f32 %v1213, %v1357
      %v1476 = vadd.f32 %v1214, %v1362
      %v1477 = vadd.f32 %v1215, %v1365
      %v1478 = vadd.f32 %v1216, %v1370
      %v1479 = vadd.f32 %v1217, %v1373
      %v1480 = vadd.f32 %v1218, %v1378
      %v1481 = vadd.f32 %v1219, %v1381
      %v1482 = vadd.f32 %v1220, %v1386
      %v1483 = vadd.f32 %v1221, %v1389
      %v1484 = vadd.f32 %v1222, %v1394
      %v1485 = vadd.f32 %v1223, %v1397
      %v1486 = vadd.f32 %v1224, %v1402
      %v1487 = vadd.f32 %v1225, %v1405
      %v1488 = vadd.f32 %v1226, %v1410
      %v1489 = vadd.f32 %v1227, %v1413
      %v1490 = vadd.f32 %v1228, %v1418
      %v1491 = vadd.f32 %v1229, %v1421
      %v1492 = vadd.f32 %v1230, %v1426
      %v1493 = vadd.f32 %v1231, %v1429
      %v1494 = vadd.f32 %v1232, %v1434
      %v1495 = vadd.f32 %v1233, %v1437
      %v1496 = vadd.f32 %v1234, %v1442
      %v1497 = vadd.f32 %v1235, %v1445
      %v1498 = vadd.f32 %v1236, %v1450
      %v1499 = vadd.f32 %v1237, %v1453
      %v1500 = vadd.f32 %v1238, %v1458
      %v1501 = vadd.f32 %v1239, %v1461
      %v1502 = vadd.f32 %v1240, %v1466
      %v1503 = vadd.f32 %v1241, %v1469
      %1504 = vst.msk [vmem:[#allocation3] sm:$0xff] %vm397, %v1472
      %1505 = vst.msk [vmem:[#allocation3 + $0x8] sm:$0xff] %vm397, %v1473
      %1506 = vst.msk [vmem:[#allocation3 + $0x10] sm:$0xff] %vm397, %v1474
      %1507 = vst.msk [vmem:[#allocation3 + $0x18] sm:$0xff] %vm397, %v1475
      %1508 = vst.msk [vmem:[#allocation3 + $0x20] sm:$0xff] %vm397, %v1476
      %1509 = vst.msk [vmem:[#allocation3 + $0x28] sm:$0xff] %vm397, %v1477
      %1510 = vst.msk [vmem:[#allocation3 + $0x30] sm:$0xff] %vm397, %v1478
      %1511 = vst.msk [vmem:[#allocation3 + $0x38] sm:$0xff] %vm397, %v1479
      %1512 = vst.msk [vmem:[#allocation3 + $0x40] sm:$0xff] %vm397, %v1480
      %1513 = vst.msk [vmem:[#allocation3 + $0x48] sm:$0xff] %vm397, %v1481
      %1514 = vst.msk [vmem:[#allocation3 + $0x50] sm:$0xff] %vm397, %v1482
      %1515 = vst.msk [vmem:[#allocation3 + $0x58] sm:$0xff] %vm397, %v1483
      %1516 = vst.msk [vmem:[#allocation3 + $0x60] sm:$0xff] %vm397, %v1484
      %1517 = vst.msk [vmem:[#allocation3 + $0x68] sm:$0xff] %vm397, %v1485
      %1518 = vst.msk [vmem:[#allocation3 + $0x70] sm:$0xff] %vm397, %v1486
      %1519 = vst.msk [vmem:[#allocation3 + $0x78] sm:$0xff] %vm397, %v1487
      %1520 = vst.msk [vmem:[#allocation3 + $0x80] sm:$0xff] %vm397, %v1488
      %1521 = vst.msk [vmem:[#allocation3 + $0x88] sm:$0xff] %vm397, %v1489
      %1522 = vst.msk [vmem:[#allocation3 + $0x90] sm:$0xff] %vm397, %v1490
      %1523 = vst.msk [vmem:[#allocation3 + $0x98] sm:$0xff] %vm397, %v1491
      %1524 = vst.msk [vmem:[#allocation3 + $0xa0] sm:$0xff] %vm397, %v1492
      %1525 = vst.msk [vmem:[#allocation3 + $0xa8] sm:$0xff] %vm397, %v1493
      %1526 = vst.msk [vmem:[#allocation3 + $0xb0] sm:$0xff] %vm397, %v1494
      %1527 = vst.msk [vmem:[#allocation3 + $0xb8] sm:$0xff] %vm397, %v1495
      %1528 = vst.msk [vmem:[#allocation3 + $0xc0] sm:$0xff] %vm397, %v1496
      %1529 = vst.msk [vmem:[#allocation3 + $0xc8] sm:$0xff] %vm397, %v1497
      %1530 = vst.msk [vmem:[#allocation3 + $0xd0] sm:$0xff] %vm397, %v1498
      %1531 = vst.msk [vmem:[#allocation3 + $0xd8] sm:$0xff] %vm397, %v1499
      %1532 = vst.msk [vmem:[#allocation3 + $0xe0] sm:$0xff] %vm397, %v1500
      %1533 = vst.msk [vmem:[#allocation3 + $0xe8] sm:$0xff] %vm397, %v1501
      %1534 = vst.msk [vmem:[#allocation3 + $0xf0] sm:$0xff] %vm397, %v1502
      %1535 = vst.msk [vmem:[#allocation3 + $0xf8] sm:$0xff] %vm397, %v1503
      %v1536 = vld [vmem:[%s396] sm:$0xff]
      %v1537 = vld [vmem:[%s396 + $0x8] sm:$0xff]
      %v1538 = vld [vmem:[%s396 + $0x18] sm:$0xff]
      %v1539 = vld [vmem:[%s396 + $0x20] sm:$0xff]
      %v1540 = vld [vmem:[%s396 + $0x30] sm:$0xff]
      %v1541 = vld [vmem:[%s396 + $0x38] sm:$0xff]
      %v1542 = vld [vmem:[%s396 + $0x48] sm:$0xff]
      %v1543 = vld [vmem:[%s396 + $0x50] sm:$0xff]
      %v1544 = vld [vmem:[%s396 + $0x60] sm:$0xff]
      %v1545 = vld [vmem:[%s396 + $0x68] sm:$0xff]
      %v1546 = vld [vmem:[%s396 + $0x78] sm:$0xff]
      %v1547 = vld [vmem:[%s396 + $0x80] sm:$0xff]
      %v1548 = vld [vmem:[%s396 + $0x90] sm:$0xff]
      %v1549 = vld [vmem:[%s396 + $0x98] sm:$0xff]
      %v1550 = vld [vmem:[%s396 + $0xa8] sm:$0xff]
      %v1551 = vld [vmem:[%s396 + $0xb0] sm:$0xff]
      %v1552 = vld [vmem:[%s396 + $0xc0] sm:$0xff]
      %v1553 = vld [vmem:[%s396 + $0xc8] sm:$0xff]
      %v1554 = vld [vmem:[%s396 + $0xd8] sm:$0xff]
      %v1555 = vld [vmem:[%s396 + $0xe0] sm:$0xff]
      %v1556 = vld [vmem:[%s396 + $0xf0] sm:$0xff]
      %v1557 = vld [vmem:[%s396 + $0xf8] sm:$0xff]
      %v1558 = vld [vmem:[%s396 + $0x108] sm:$0xff]
      %v1559 = vld [vmem:[%s396 + $0x110] sm:$0xff]
      %v1560 = vld [vmem:[%s396 + $0x120] sm:$0xff]
      %v1561 = vld [vmem:[%s396 + $0x128] sm:$0xff]
      %v1562 = vld [vmem:[%s396 + $0x138] sm:$0xff]
      %v1563 = vld [vmem:[%s396 + $0x140] sm:$0xff]
      %v1564 = vld [vmem:[%s396 + $0x150] sm:$0xff]
      %v1565 = vld [vmem:[%s396 + $0x158] sm:$0xff]
      %v1566 = vld [vmem:[%s396 + $0x168] sm:$0xff]
      %v1567 = vld [vmem:[%s396 + $0x170] sm:$0xff]
      %v1568 = vld [vmem:[#allocation3] sm:$0xff]
      %v1569 = vld [vmem:[#allocation3 + $0x8] sm:$0xff]
      %v1570 = vld [vmem:[#allocation3 + $0x10] sm:$0xff]
      %v1571 = vld [vmem:[#allocation3 + $0x18] sm:$0xff]
      %v1572 = vld [vmem:[#allocation3 + $0x20] sm:$0xff]
      %v1573 = vld [vmem:[#allocation3 + $0x28] sm:$0xff]
      %v1574 = vld [vmem:[#allocation3 + $0x30] sm:$0xff]
      %v1575 = vld [vmem:[#allocation3 + $0x38] sm:$0xff]
      %v1576 = vld [vmem:[#allocation3 + $0x40] sm:$0xff]
      %v1577 = vld [vmem:[#allocation3 + $0x48] sm:$0xff]
      %v1578 = vld [vmem:[#allocation3 + $0x50] sm:$0xff]
      %v1579 = vld [vmem:[#allocation3 + $0x58] sm:$0xff]
      %v1580 = vld [vmem:[#allocation3 + $0x60] sm:$0xff]
      %v1581 = vld [vmem:[#allocation3 + $0x68] sm:$0xff]
      %v1582 = vld [vmem:[#allocation3 + $0x70] sm:$0xff]
      %v1583 = vld [vmem:[#allocation3 + $0x78] sm:$0xff]
      %v1584 = vld [vmem:[#allocation3 + $0x80] sm:$0xff]
      %v1585 = vld [vmem:[#allocation3 + $0x88] sm:$0xff]
      %v1586 = vld [vmem:[#allocation3 + $0x90] sm:$0xff]
      %v1587 = vld [vmem:[#allocation3 + $0x98] sm:$0xff]
      %v1588 = vld [vmem:[#allocation3 + $0xa0] sm:$0xff]
      %v1589 = vld [vmem:[#allocation3 + $0xa8] sm:$0xff]
      %v1590 = vld [vmem:[#allocation3 + $0xb0] sm:$0xff]
      %v1591 = vld [vmem:[#allocation3 + $0xb8] sm:$0xff]
      %v1592 = vld [vmem:[#allocation3 + $0xc0] sm:$0xff]
      %v1593 = vld [vmem:[#allocation3 + $0xc8] sm:$0xff]
      %v1594 = vld [vmem:[#allocation3 + $0xd0] sm:$0xff]
      %v1595 = vld [vmem:[#allocation3 + $0xd8] sm:$0xff]
      %v1596 = vld [vmem:[#allocation3 + $0xe0] sm:$0xff]
      %v1597 = vld [vmem:[#allocation3 + $0xe8] sm:$0xff]
      %v1598 = vld [vmem:[#allocation3 + $0xf0] sm:$0xff]
      %v1599 = vld [vmem:[#allocation3 + $0xf8] sm:$0xff]
      %v1600 = vpack.c.bf16 %v1537, %v1536
      %v1601 = vpack.c.bf16 %v1539, %v1538
      %v1602 = vpack.c.bf16 %v1541, %v1540
      %v1603 = vpack.c.bf16 %v1543, %v1542
      %v1604 = vpack.c.bf16 %v1545, %v1544
      %v1605 = vpack.c.bf16 %v1547, %v1546
      %v1606 = vpack.c.bf16 %v1549, %v1548
      %v1607 = vpack.c.bf16 %v1551, %v1550
      %v1608 = vpack.c.bf16 %v1553, %v1552
      %v1609 = vpack.c.bf16 %v1555, %v1554
      %v1610 = vpack.c.bf16 %v1557, %v1556
      %v1611 = vpack.c.bf16 %v1559, %v1558
      %v1612 = vpack.c.bf16 %v1561, %v1560
      %v1613 = vpack.c.bf16 %v1563, %v1562
      %v1614 = vpack.c.bf16 %v1565, %v1564
      %v1615 = vpack.c.bf16 %v1567, %v1566
      %s1616 = scalar_lea.vmem %s2, 6
      %v1617 = vld [vmem:[%s1616] sm:$0x3]
      %v1619 = vsel %vm397, %v1600, 0
      %v1622 = vsel %vm397, %v1601, 0
      %v1625 = vsel %vm397, %v1602, 0
      %v1628 = vsel %vm397, %v1603, 0
      %v1631 = vsel %vm397, %v1604, 0
      %v1634 = vsel %vm397, %v1605, 0
      %v1637 = vsel %vm397, %v1606, 0
      %v1640 = vsel %vm397, %v1607, 0
      %v1643 = vsel %vm397, %v1608, 0
      %v1646 = vsel %vm397, %v1609, 0
      %v1649 = vsel %vm397, %v1610, 0
      %v1652 = vsel %vm397, %v1611, 0
      %v1655 = vsel %vm397, %v1612, 0
      %v1658 = vsel %vm397, %v1613, 0
      %v1661 = vsel %vm397, %v1614, 0
      %v1664 = vsel %vm397, %v1615, 0
      %v1667 = vsel %vm591, %v1617, 0
      %1669 = vmatprep.subr.bf16.mxu0 0
      %1670 = vmatpush1.bf16.msra.mxu0 %v1667
      %1671 = vmatprep.subr.bf16.mxu0 0
      %1672 = vmatpush1.bf16.msra.mxu0 0
      %1673 = vmatprep.subr.bf16.mxu0 0
      %1674 = vmatpush1.bf16.msra.mxu0 0
      %1675 = vmatprep.subr.bf16.mxu0 0
      %1676 = vmatpush1.bf16.msra.mxu0 0
      %1677 = vmatprep.subr.bf16.mxu0 0
      %1678 = vmatpush1.bf16.msra.mxu0 0
      %1679 = vmatprep.subr.bf16.mxu0 0
      %1680 = vmatpush1.bf16.msra.mxu0 0
      %1681 = vmatprep.subr.bf16.mxu0 0
      %1682 = vmatpush1.bf16.msra.mxu0 0
      %1683 = vmatprep.subr.bf16.mxu0 0
      %1684 = vmatpush1.bf16.msra.mxu0 0
      %1685 = vmatprep.subr.bf16.mxu0 0
      %1686 = vmatpush1.bf16.msra.mxu0 0
      %1687 = vmatprep.subr.bf16.mxu0 0
      %1688 = vmatpush1.bf16.msra.mxu0 0
      %1689 = vmatprep.subr.bf16.mxu0 0
      %1690 = vmatpush1.bf16.msra.mxu0 0
      %1691 = vmatprep.subr.bf16.mxu0 0
      %1692 = vmatpush1.bf16.msra.mxu0 0
      %1693 = vmatprep.subr.bf16.mxu0 0
      %1694 = vmatpush1.bf16.msra.mxu0 0
      %1695 = vmatprep.subr.bf16.mxu0 0
      %1696 = vmatpush1.bf16.msra.mxu0 0
      %1697 = vmatprep.subr.bf16.mxu0 0
      %1698 = vmatpush1.bf16.msra.mxu0 0
      %1699 = vmatprep.subr.bf16.mxu0 0
      %1700 = vmatpush1.bf16.msra.mxu0 0
      %1701 = vmatprep.mubr.bf16.mxu0 0
      %1702 = vmatmul.mubr.bf16.gmra.mrb[0].mxu0 %v1619
      %v1703 = vpop.f32.mrb[0].mxu0
      %v1704 = vadd.f32 0.0, %v1703
      %v1705 = vpop.f32.mrb[0].mxu0
      %v1706 = vpop.f32.mrb[0].mxu0
      %v1707 = vadd.f32 0.0, %v1706
      %v1708 = vpop.f32.mrb[0].mxu0
      %1709 = vmatprep.mubr.bf16.mxu0 0
      %1710 = vmatmul.mubr.bf16.gmra.mrb[0].mxu0 %v1622
      %v1711 = vpop.f32.mrb[0].mxu0
      %v1712 = vadd.f32 0.0, %v1711
      %v1713 = vpop.f32.mrb[0].mxu0
      %v1714 = vpop.f32.mrb[0].mxu0
      %v1715 = vadd.f32 0.0, %v1714
      %v1716 = vpop.f32.mrb[0].mxu0
      %1717 = vmatprep.mubr.bf16.mxu0 0
      %1718 = vmatmul.mubr.bf16.gmra.mrb[0].mxu0 %v1625
      %v1719 = vpop.f32.mrb[0].mxu0
      %v1720 = vadd.f32 0.0, %v1719
      %v1721 = vpop.f32.mrb[0].mxu0
      %v1722 = vpop.f32.mrb[0].mxu0
      %v1723 = vadd.f32 0.0, %v1722
      %v1724 = vpop.f32.mrb[0].mxu0
      %1725 = vmatprep.mubr.bf16.mxu0 0
      %1726 = vmatmul.mubr.bf16.gmra.mrb[0].mxu0 %v1628
      %v1727 = vpop.f32.mrb[0].mxu0
      %v1728 = vadd.f32 0.0, %v1727
      %v1729 = vpop.f32.mrb[0].mxu0
      %v1730 = vpop.f32.mrb[0].mxu0
      %v1731 = vadd.f32 0.0, %v1730
      %v1732 = vpop.f32.mrb[0].mxu0
      %1733 = vmatprep.mubr.bf16.mxu0 0
      %1734 = vmatmul.mubr.bf16.gmra.mrb[0].mxu0 %v1631
      %v1735 = vpop.f32.mrb[0].mxu0
      %v1736 = vadd.f32 0.0, %v1735
      %v1737 = vpop.f32.mrb[0].mxu0
      %v1738 = vpop.f32.mrb[0].mxu0
      %v1739 = vadd.f32 0.0, %v1738
      %v1740 = vpop.f32.mrb[0].mxu0
      %1741 = vmatprep.mubr.bf16.mxu0 0
      %1742 = vmatmul.mubr.bf16.gmra.mrb[0].mxu0 %v1634
      %v1743 = vpop.f32.mrb[0].mxu0
      %v1744 = vadd.f32 0.0, %v1743
      %v1745 = vpop.f32.mrb[0].mxu0
      %v1746 = vpop.f32.mrb[0].mxu0
      %v1747 = vadd.f32 0.0, %v1746
      %v1748 = vpop.f32.mrb[0].mxu0
      %1749 = vmatprep.mubr.bf16.mxu0 0
      %1750 = vmatmul.mubr.bf16.gmra.mrb[0].mxu0 %v1637
      %v1751 = vpop.f32.mrb[0].mxu0
      %v1752 = vadd.f32 0.0, %v1751
      %v1753 = vpop.f32.mrb[0].mxu0
      %v1754 = vpop.f32.mrb[0].mxu0
      %v1755 = vadd.f32 0.0, %v1754
      %v1756 = vpop.f32.mrb[0].mxu0
      %1757 = vmatprep.mubr.bf16.mxu0 0
      %1758 = vmatmul.mubr.bf16.gmra.mrb[0].mxu0 %v1640
      %v1759 = vpop.f32.mrb[0].mxu0
      %v1760 = vadd.f32 0.0, %v1759
      %v1761 = vpop.f32.mrb[0].mxu0
      %v1762 = vpop.f32.mrb[0].mxu0
      %v1763 = vadd.f32 0.0, %v1762
      %v1764 = vpop.f32.mrb[0].mxu0
      %1765 = vmatprep.mubr.bf16.mxu0 0
      %1766 = vmatmul.mubr.bf16.gmra.mrb[0].mxu0 %v1643
      %v1767 = vpop.f32.mrb[0].mxu0
      %v1768 = vadd.f32 0.0, %v1767
      %v1769 = vpop.f32.mrb[0].mxu0
      %v1770 = vpop.f32.mrb[0].mxu0
      %v1771 = vadd.f32 0.0, %v1770
      %v1772 = vpop.f32.mrb[0].mxu0
      %1773 = vmatprep.mubr.bf16.mxu0 0
      %1774 = vmatmul.mubr.bf16.gmra.mrb[0].mxu0 %v1646
      %v1775 = vpop.f32.mrb[0].mxu0
      %v1776 = vadd.f32 0.0, %v1775
      %v1777 = vpop.f32.mrb[0].mxu0
      %v1778 = vpop.f32.mrb[0].mxu0
      %v1779 = vadd.f32 0.0, %v1778
      %v1780 = vpop.f32.mrb[0].mxu0
      %1781 = vmatprep.mubr.bf16.mxu0 0
      %1782 = vmatmul.mubr.bf16.gmra.mrb[0].mxu0 %v1649
      %v1783 = vpop.f32.mrb[0].mxu0
      %v1784 = vadd.f32 0.0, %v1783
      %v1785 = vpop.f32.mrb[0].mxu0
      %v1786 = vpop.f32.mrb[0].mxu0
      %v1787 = vadd.f32 0.0, %v1786
      %v1788 = vpop.f32.mrb[0].mxu0
      %1789 = vmatprep.mubr.bf16.mxu0 0
      %1790 = vmatmul.mubr.bf16.gmra.mrb[0].mxu0 %v1652
      %v1791 = vpop.f32.mrb[0].mxu0
      %v1792 = vadd.f32 0.0, %v1791
      %v1793 = vpop.f32.mrb[0].mxu0
      %v1794 = vpop.f32.mrb[0].mxu0
      %v1795 = vadd.f32 0.0, %v1794
      %v1796 = vpop.f32.mrb[0].mxu0
      %1797 = vmatprep.mubr.bf16.mxu0 0
      %1798 = vmatmul.mubr.bf16.gmra.mrb[0].mxu0 %v1655
      %v1799 = vpop.f32.mrb[0].mxu0
      %v1800 = vadd.f32 0.0, %v1799
      %v1801 = vpop.f32.mrb[0].mxu0
      %v1802 = vpop.f32.mrb[0].mxu0
      %v1803 = vadd.f32 0.0, %v1802
      %v1804 = vpop.f32.mrb[0].mxu0
      %1805 = vmatprep.mubr.bf16.mxu0 0
      %1806 = vmatmul.mubr.bf16.gmra.mrb[0].mxu0 %v1658
      %v1807 = vpop.f32.mrb[0].mxu0
      %v1808 = vadd.f32 0.0, %v1807
      %v1809 = vpop.f32.mrb[0].mxu0
      %v1810 = vpop.f32.mrb[0].mxu0
      %v1811 = vadd.f32 0.0, %v1810
      %v1812 = vpop.f32.mrb[0].mxu0
      %1813 = vmatprep.mubr.bf16.mxu0 0
      %1814 = vmatmul.mubr.bf16.gmra.mrb[0].mxu0 %v1661
      %v1815 = vpop.f32.mrb[0].mxu0
      %v1816 = vadd.f32 0.0, %v1815
      %v1817 = vpop.f32.mrb[0].mxu0
      %v1818 = vpop.f32.mrb[0].mxu0
      %v1819 = vadd.f32 0.0, %v1818
      %v1820 = vpop.f32.mrb[0].mxu0
      %1821 = vmatprep.mubr.bf16.mxu0 0
      %1822 = vmatmul.mubr.bf16.gmra.mrb[0].mxu0 %v1664
      %v1823 = vpop.f32.mrb[0].mxu0
      %v1824 = vadd.f32 0.0, %v1823
      %v1825 = vpop.f32.mrb[0].mxu0
      %v1826 = vpop.f32.mrb[0].mxu0
      %v1827 = vadd.f32 0.0, %v1826
      %v1828 = vpop.f32.mrb[0].mxu0
      %1829 = vdwg.mxu0
      %v1830 = vadd.f32 %v1568, %v1704
      %v1831 = vadd.f32 %v1569, %v1707
      %v1832 = vadd.f32 %v1570, %v1712
      %v1833 = vadd.f32 %v1571, %v1715
      %v1834 = vadd.f32 %v1572, %v1720
      %v1835 = vadd.f32 %v1573, %v1723
      %v1836 = vadd.f32 %v1574, %v1728
      %v1837 = vadd.f32 %v1575, %v1731
      %v1838 = vadd.f32 %v1576, %v1736
      %v1839 = vadd.f32 %v1577, %v1739
      %v1840 = vadd.f32 %v1578, %v1744
      %v1841 = vadd.f32 %v1579, %v1747
      %v1842 = vadd.f32 %v1580, %v1752
      %v1843 = vadd.f32 %v1581, %v1755
      %v1844 = vadd.f32 %v1582, %v1760
      %v1845 = vadd.f32 %v1583, %v1763
      %v1846 = vadd.f32 %v1584, %v1768
      %v1847 = vadd.f32 %v1585, %v1771
      %v1848 = vadd.f32 %v1586, %v1776
      %v1849 = vadd.f32 %v1587, %v1779
      %v1850 = vadd.f32 %v1588, %v1784
      %v1851 = vadd.f32 %v1589, %v1787
      %v1852 = vadd.f32 %v1590, %v1792
      %v1853 = vadd.f32 %v1591, %v1795
      %v1854 = vadd.f32 %v1592, %v1800
      %v1855 = vadd.f32 %v1593, %v1803
      %v1856 = vadd.f32 %v1594, %v1808
      %v1857 = vadd.f32 %v1595, %v1811
      %v1858 = vadd.f32 %v1596, %v1816
      %v1859 = vadd.f32 %v1597, %v1819
      %v1860 = vadd.f32 %v1598, %v1824
      %v1861 = vadd.f32 %v1599, %v1827
      %1862 = vst.msk [vmem:[#allocation3] sm:$0xff] %vm397, %v1830
      %1863 = vst.msk [vmem:[#allocation3 + $0x8] sm:$0xff] %vm397, %v1831
      %1864 = vst.msk [vmem:[#allocation3 + $0x10] sm:$0xff] %vm397, %v1832
      %1865 = vst.msk [vmem:[#allocation3 + $0x18] sm:$0xff] %vm397, %v1833
      %1866 = vst.msk [vmem:[#allocation3 + $0x20] sm:$0xff] %vm397, %v1834
      %1867 = vst.msk [vmem:[#allocation3 + $0x28] sm:$0xff] %vm397, %v1835
      %1868 = vst.msk [vmem:[#allocation3 + $0x30] sm:$0xff] %vm397, %v1836
      %1869 = vst.msk [vmem:[#allocation3 + $0x38] sm:$0xff] %vm397, %v1837
      %1870 = vst.msk [vmem:[#allocation3 + $0x40] sm:$0xff] %vm397, %v1838
      %1871 = vst.msk [vmem:[#allocation3 + $0x48] sm:$0xff] %vm397, %v1839
      %1872 = vst.msk [vmem:[#allocation3 + $0x50] sm:$0xff] %vm397, %v1840
      %1873 = vst.msk [vmem:[#allocation3 + $0x58] sm:$0xff] %vm397, %v1841
      %1874 = vst.msk [vmem:[#allocation3 + $0x60] sm:$0xff] %vm397, %v1842
      %1875 = vst.msk [vmem:[#allocation3 + $0x68] sm:$0xff] %vm397, %v1843
      %1876 = vst.msk [vmem:[#allocation3 + $0x70] sm:$0xff] %vm397, %v1844
      %1877 = vst.msk [vmem:[#allocation3 + $0x78] sm:$0xff] %vm397, %v1845
      %1878 = vst.msk [vmem:[#allocation3 + $0x80] sm:$0xff] %vm397, %v1846
      %1879 = vst.msk [vmem:[#allocation3 + $0x88] sm:$0xff] %vm397, %v1847
      %1880 = vst.msk [vmem:[#allocation3 + $0x90] sm:$0xff] %vm397, %v1848
      %1881 = vst.msk [vmem:[#allocation3 + $0x98] sm:$0xff] %vm397, %v1849
      %1882 = vst.msk [vmem:[#allocation3 + $0xa0] sm:$0xff] %vm397, %v1850
      %1883 = vst.msk [vmem:[#allocation3 + $0xa8] sm:$0xff] %vm397, %v1851
      %1884 = vst.msk [vmem:[#allocation3 + $0xb0] sm:$0xff] %vm397, %v1852
      %1885 = vst.msk [vmem:[#allocation3 + $0xb8] sm:$0xff] %vm397, %v1853
      %1886 = vst.msk [vmem:[#allocation3 + $0xc0] sm:$0xff] %vm397, %v1854
      %1887 = vst.msk [vmem:[#allocation3 + $0xc8] sm:$0xff] %vm397, %v1855
      %1888 = vst.msk [vmem:[#allocation3 + $0xd0] sm:$0xff] %vm397, %v1856
      %1889 = vst.msk [vmem:[#allocation3 + $0xd8] sm:$0xff] %vm397, %v1857
      %1890 = vst.msk [vmem:[#allocation3 + $0xe0] sm:$0xff] %vm397, %v1858
      %1891 = vst.msk [vmem:[#allocation3 + $0xe8] sm:$0xff] %vm397, %v1859
      %1892 = vst.msk [vmem:[#allocation3 + $0xf0] sm:$0xff] %vm397, %v1860
      %1893 = vst.msk [vmem:[#allocation3 + $0xf8] sm:$0xff] %vm397, %v1861
      %v1894 = vld [vmem:[%s396 + $0x1] sm:$0xff]
      %v1895 = vld [vmem:[%s396 + $0x9] sm:$0xff]
      %v1896 = vld [vmem:[%s396 + $0x19] sm:$0xff]
      %v1897 = vld [vmem:[%s396 + $0x21] sm:$0xff]
      %v1898 = vld [vmem:[%s396 + $0x31] sm:$0xff]
      %v1899 = vld [vmem:[%s396 + $0x39] sm:$0xff]
      %v1900 = vld [vmem:[%s396 + $0x49] sm:$0xff]
      %v1901 = vld [vmem:[%s396 + $0x51] sm:$0xff]
      %v1902 = vld [vmem:[%s396 + $0x61] sm:$0xff]
      %v1903 = vld [vmem:[%s396 + $0x69] sm:$0xff]
      %v1904 = vld [vmem:[%s396 + $0x79] sm:$0xff]
      %v1905 = vld [vmem:[%s396 + $0x81] sm:$0xff]
      %v1906 = vld [vmem:[%s396 + $0x91] sm:$0xff]
      %v1907 = vld [vmem:[%s396 + $0x99] sm:$0xff]
      %v1908 = vld [vmem:[%s396 + $0xa9] sm:$0xff]
      %v1909 = vld [vmem:[%s396 + $0xb1] sm:$0xff]
      %v1910 = vld [vmem:[%s396 + $0xc1] sm:$0xff]
      %v1911 = vld [vmem:[%s396 + $0xc9] sm:$0xff]
      %v1912 = vld [vmem:[%s396 + $0xd9] sm:$0xff]
      %v1913 = vld [vmem:[%s396 + $0xe1] sm:$0xff]
      %v1914 = vld [vmem:[%s396 + $0xf1] sm:$0xff]
      %v1915 = vld [vmem:[%s396 + $0xf9] sm:$0xff]
      %v1916 = vld [vmem:[%s396 + $0x109] sm:$0xff]
      %v1917 = vld [vmem:[%s396 + $0x111] sm:$0xff]
      %v1918 = vld [vmem:[%s396 + $0x121] sm:$0xff]
      %v1919 = vld [vmem:[%s396 + $0x129] sm:$0xff]
      %v1920 = vld [vmem:[%s396 + $0x139] sm:$0xff]
      %v1921 = vld [vmem:[%s396 + $0x141] sm:$0xff]
      %v1922 = vld [vmem:[%s396 + $0x151] sm:$0xff]
      %v1923 = vld [vmem:[%s396 + $0x159] sm:$0xff]
      %v1924 = vld [vmem:[%s396 + $0x169] sm:$0xff]
      %v1925 = vld [vmem:[%s396 + $0x171] sm:$0xff]
      %v1926 = vld [vmem:[#allocation3] sm:$0xff]
      %v1927 = vld [vmem:[#allocation3 + $0x8] sm:$0xff]
      %v1928 = vld [vmem:[#allocation3 + $0x10] sm:$0xff]
      %v1929 = vld [vmem:[#allocation3 + $0x18] sm:$0xff]
      %v1930 = vld [vmem:[#allocation3 + $0x20] sm:$0xff]
      %v1931 = vld [vmem:[#allocation3 + $0x28] sm:$0xff]
      %v1932 = vld [vmem:[#allocation3 + $0x30] sm:$0xff]
      %v1933 = vld [vmem:[#allocation3 + $0x38] sm:$0xff]
      %v1934 = vld [vmem:[#allocation3 + $0x40] sm:$0xff]
      %v1935 = vld [vmem:[#allocation3 + $0x48] sm:$0xff]
      %v1936 = vld [vmem:[#allocation3 + $0x50] sm:$0xff]
      %v1937 = vld [vmem:[#allocation3 + $0x58] sm:$0xff]
      %v1938 = vld [vmem:[#allocation3 + $0x60] sm:$0xff]
      %v1939 = vld [vmem:[#allocation3 + $0x68] sm:$0xff]
      %v1940 = vld [vmem:[#allocation3 + $0x70] sm:$0xff]
      %v1941 = vld [vmem:[#allocation3 + $0x78] sm:$0xff]
      %v1942 = vld [vmem:[#allocation3 + $0x80] sm:$0xff]
      %v1943 = vld [vmem:[#allocation3 + $0x88] sm:$0xff]
      %v1944 = vld [vmem:[#allocation3 + $0x90] sm:$0xff]
      %v1945 = vld [vmem:[#allocation3 + $0x98] sm:$0xff]
      %v1946 = vld [vmem:[#allocation3 + $0xa0] sm:$0xff]
      %v1947 = vld [vmem:[#allocation3 + $0xa8] sm:$0xff]
      %v1948 = vld [vmem:[#allocation3 + $0xb0] sm:$0xff]
      %v1949 = vld [vmem:[#allocation3 + $0xb8] sm:$0xff]
      %v1950 = vld [vmem:[#allocation3 + $0xc0] sm:$0xff]
      %v1951 = vld [vmem:[#allocation3 + $0xc8] sm:$0xff]
      %v1952 = vld [vmem:[#allocation3 + $0xd0] sm:$0xff]
      %v1953 = vld [vmem:[#allocation3 + $0xd8] sm:$0xff]
      %v1954 = vld [vmem:[#allocation3 + $0xe0] sm:$0xff]
      %v1955 = vld [vmem:[#allocation3 + $0xe8] sm:$0xff]
      %v1956 = vld [vmem:[#allocation3 + $0xf0] sm:$0xff]
      %v1957 = vld [vmem:[#allocation3 + $0xf8] sm:$0xff]
      %v1958 = vpack.c.bf16 %v1895, %v1894
      %v1959 = vpack.c.bf16 %v1897, %v1896
      %v1960 = vpack.c.bf16 %v1899, %v1898
      %v1961 = vpack.c.bf16 %v1901, %v1900
      %v1962 = vpack.c.bf16 %v1903, %v1902
      %v1963 = vpack.c.bf16 %v1905, %v1904
      %v1964 = vpack.c.bf16 %v1907, %v1906
      %v1965 = vpack.c.bf16 %v1909, %v1908
      %v1966 = vpack.c.bf16 %v1911, %v1910
      %v1967 = vpack.c.bf16 %v1913, %v1912
      %v1968 = vpack.c.bf16 %v1915, %v1914
      %v1969 = vpack.c.bf16 %v1917, %v1916
      %v1970 = vpack.c.bf16 %v1919, %v1918
      %v1971 = vpack.c.bf16 %v1921, %v1920
      %v1972 = vpack.c.bf16 %v1923, %v1922
      %v1973 = vpack.c.bf16 %v1925, %v1924
      %s1974 = scalar_lea.vmem %s2, 8
      %v1975 = vld [vmem:[%s1974] sm:$0x3]
      %v1977 = vsel %vm397, %v1958, 0
      %v1980 = vsel %vm397, %v1959, 0
      %v1983 = vsel %vm397, %v1960, 0
      %v1986 = vsel %vm397, %v1961, 0
      %v1989 = vsel %vm397, %v1962, 0
      %v1992 = vsel %vm397, %v1963, 0
      %v1995 = vsel %vm397, %v1964, 0
      %v1998 = vsel %vm397, %v1965, 0
      %v2001 = vsel %vm397, %v1966, 0
      %v2004 = vsel %vm397, %v1967, 0
      %v2007 = vsel %vm397, %v1968, 0
      %v2010 = vsel %vm397, %v1969, 0
      %v2013 = vsel %vm397, %v1970, 0
      %v2016 = vsel %vm397, %v1971, 0
      %v2019 = vsel %vm397, %v1972, 0
      %v2022 = vsel %vm397, %v1973, 0
      %v2025 = vsel %vm591, %v1975, 0
      %2027 = vmatprep.subr.bf16.mxu0 0
      %2028 = vmatpush1.bf16.msra.mxu0 %v2025
      %2029 = vmatprep.subr.bf16.mxu0 0
      %2030 = vmatpush1.bf16.msra.mxu0 0
      %2031 = vmatprep.subr.bf16.mxu0 0
      %2032 = vmatpush1.bf16.msra.mxu0 0
      %2033 = vmatprep.subr.bf16.mxu0 0
      %2034 = vmatpush1.bf16.msra.mxu0 0
      %2035 = vmatprep.subr.bf16.mxu0 0
      %2036 = vmatpush1.bf16.msra.mxu0 0
      %2037 = vmatprep.subr.bf16.mxu0 0
      %2038 = vmatpush1.bf16.msra.mxu0 0
      %2039 = vmatprep.subr.bf16.mxu0 0
      %2040 = vmatpush1.bf16.msra.mxu0 0
      %2041 = vmatprep.subr.bf16.mxu0 0
      %2042 = vmatpush1.bf16.msra.mxu0 0
      %2043 = vmatprep.subr.bf16.mxu0 0
      %2044 = vmatpush1.bf16.msra.mxu0 0
      %2045 = vmatprep.subr.bf16.mxu0 0
      %2046 = vmatpush1.bf16.msra.mxu0 0
      %2047 = vmatprep.subr.bf16.mxu0 0
      %2048 = vmatpush1.bf16.msra.mxu0 0
      %2049 = vmatprep.subr.bf16.mxu0 0
      %2050 = vmatpush1.bf16.msra.mxu0 0
      %2051 = vmatprep.subr.bf16.mxu0 0
      %2052 = vmatpush1.bf16.msra.mxu0 0
      %2053 = vmatprep.subr.bf16.mxu0 0
      %2054 = vmatpush1.bf16.msra.mxu0 0
      %2055 = vmatprep.subr.bf16.mxu0 0
      %2056 = vmatpush1.bf16.msra.mxu0 0
      %2057 = vmatprep.subr.bf16.mxu0 0
      %2058 = vmatpush1.bf16.msra.mxu0 0
      %2059 = vmatprep.mubr.bf16.mxu0 0
      %2060 = vmatmul.mubr.bf16.gmra.mrb[0].mxu0 %v1977
      %v2061 = vpop.f32.mrb[0].mxu0
      %v2062 = vadd.f32 0.0, %v2061
      %v2063 = vpop.f32.mrb[0].mxu0
      %v2064 = vpop.f32.mrb[0].mxu0
      %v2065 = vadd.f32 0.0, %v2064
      %v2066 = vpop.f32.mrb[0].mxu0
      %2067 = vmatprep.mubr.bf16.mxu0 0
      %2068 = vmatmul.mubr.bf16.gmra.mrb[0].mxu0 %v1980
      %v2069 = vpop.f32.mrb[0].mxu0
      %v2070 = vadd.f32 0.0, %v2069
      %v2071 = vpop.f32.mrb[0].mxu0
      %v2072 = vpop.f32.mrb[0].mxu0
      %v2073 = vadd.f32 0.0, %v2072
      %v2074 = vpop.f32.mrb[0].mxu0
      %2075 = vmatprep.mubr.bf16.mxu0 0
      %2076 = vmatmul.mubr.bf16.gmra.mrb[0].mxu0 %v1983
      %v2077 = vpop.f32.mrb[0].mxu0
      %v2078 = vadd.f32 0.0, %v2077
      %v2079 = vpop.f32.mrb[0].mxu0
      %v2080 = vpop.f32.mrb[0].mxu0
      %v2081 = vadd.f32 0.0, %v2080
      %v2082 = vpop.f32.mrb[0].mxu0
      %2083 = vmatprep.mubr.bf16.mxu0 0
      %2084 = vmatmul.mubr.bf16.gmra.mrb[0].mxu0 %v1986
      %v2085 = vpop.f32.mrb[0].mxu0
      %v2086 = vadd.f32 0.0, %v2085
      %v2087 = vpop.f32.mrb[0].mxu0
      %v2088 = vpop.f32.mrb[0].mxu0
      %v2089 = vadd.f32 0.0, %v2088
      %v2090 = vpop.f32.mrb[0].mxu0
      %2091 = vmatprep.mubr.bf16.mxu0 0
      %2092 = vmatmul.mubr.bf16.gmra.mrb[0].mxu0 %v1989
      %v2093 = vpop.f32.mrb[0].mxu0
      %v2094 = vadd.f32 0.0, %v2093
      %v2095 = vpop.f32.mrb[0].mxu0
      %v2096 = vpop.f32.mrb[0].mxu0
      %v2097 = vadd.f32 0.0, %v2096
      %v2098 = vpop.f32.mrb[0].mxu0
      %2099 = vmatprep.mubr.bf16.mxu0 0
      %2100 = vmatmul.mubr.bf16.gmra.mrb[0].mxu0 %v1992
      %v2101 = vpop.f32.mrb[0].mxu0
      %v2102 = vadd.f32 0.0, %v2101
      %v2103 = vpop.f32.mrb[0].mxu0
      %v2104 = vpop.f32.mrb[0].mxu0
      %v2105 = vadd.f32 0.0, %v2104
      %v2106 = vpop.f32.mrb[0].mxu0
      %2107 = vmatprep.mubr.bf16.mxu0 0
      %2108 = vmatmul.mubr.bf16.gmra.mrb[0].mxu0 %v1995
      %v2109 = vpop.f32.mrb[0].mxu0
      %v2110 = vadd.f32 0.0, %v2109
      %v2111 = vpop.f32.mrb[0].mxu0
      %v2112 = vpop.f32.mrb[0].mxu0
      %v2113 = vadd.f32 0.0, %v2112
      %v2114 = vpop.f32.mrb[0].mxu0
      %2115 = vmatprep.mubr.bf16.mxu0 0
      %2116 = vmatmul.mubr.bf16.gmra.mrb[0].mxu0 %v1998
      %v2117 = vpop.f32.mrb[0].mxu0
      %v2118 = vadd.f32 0.0, %v2117
      %v2119 = vpop.f32.mrb[0].mxu0
      %v2120 = vpop.f32.mrb[0].mxu0
      %v2121 = vadd.f32 0.0, %v2120
      %v2122 = vpop.f32.mrb[0].mxu0
      %2123 = vmatprep.mubr.bf16.mxu0 0
      %2124 = vmatmul.mubr.bf16.gmra.mrb[0].mxu0 %v2001
      %v2125 = vpop.f32.mrb[0].mxu0
      %v2126 = vadd.f32 0.0, %v2125
      %v2127 = vpop.f32.mrb[0].mxu0
      %v2128 = vpop.f32.mrb[0].mxu0
      %v2129 = vadd.f32 0.0, %v2128
      %v2130 = vpop.f32.mrb[0].mxu0
      %2131 = vmatprep.mubr.bf16.mxu0 0
      %2132 = vmatmul.mubr.bf16.gmra.mrb[0].mxu0 %v2004
      %v2133 = vpop.f32.mrb[0].mxu0
      %v2134 = vadd.f32 0.0, %v2133
      %v2135 = vpop.f32.mrb[0].mxu0
      %v2136 = vpop.f32.mrb[0].mxu0
      %v2137 = vadd.f32 0.0, %v2136
      %v2138 = vpop.f32.mrb[0].mxu0
      %2139 = vmatprep.mubr.bf16.mxu0 0
      %2140 = vmatmul.mubr.bf16.gmra.mrb[0].mxu0 %v2007
      %v2141 = vpop.f32.mrb[0].mxu0
      %v2142 = vadd.f32 0.0, %v2141
      %v2143 = vpop.f32.mrb[0].mxu0
      %v2144 = vpop.f32.mrb[0].mxu0
      %v2145 = vadd.f32 0.0, %v2144
      %v2146 = vpop.f32.mrb[0].mxu0
      %2147 = vmatprep.mubr.bf16.mxu0 0
      %2148 = vmatmul.mubr.bf16.gmra.mrb[0].mxu0 %v2010
      %v2149 = vpop.f32.mrb[0].mxu0
      %v2150 = vadd.f32 0.0, %v2149
      %v2151 = vpop.f32.mrb[0].mxu0
      %v2152 = vpop.f32.mrb[0].mxu0
      %v2153 = vadd.f32 0.0, %v2152
      %v2154 = vpop.f32.mrb[0].mxu0
      %2155 = vmatprep.mubr.bf16.mxu0 0
      %2156 = vmatmul.mubr.bf16.gmra.mrb[0].mxu0 %v2013
      %v2157 = vpop.f32.mrb[0].mxu0
      %v2158 = vadd.f32 0.0, %v2157
      %v2159 = vpop.f32.mrb[0].mxu0
      %v2160 = vpop.f32.mrb[0].mxu0
      %v2161 = vadd.f32 0.0, %v2160
      %v2162 = vpop.f32.mrb[0].mxu0
      %2163 = vmatprep.mubr.bf16.mxu0 0
      %2164 = vmatmul.mubr.bf16.gmra.mrb[0].mxu0 %v2016
      %v2165 = vpop.f32.mrb[0].mxu0
      %v2166 = vadd.f32 0.0, %v2165
      %v2167 = vpop.f32.mrb[0].mxu0
      %v2168 = vpop.f32.mrb[0].mxu0
      %v2169 = vadd.f32 0.0, %v2168
      %v2170 = vpop.f32.mrb[0].mxu0
      %2171 = vmatprep.mubr.bf16.mxu0 0
      %2172 = vmatmul.mubr.bf16.gmra.mrb[0].mxu0 %v2019
      %v2173 = vpop.f32.mrb[0].mxu0
      %v2174 = vadd.f32 0.0, %v2173
      %v2175 = vpop.f32.mrb[0].mxu0
      %v2176 = vpop.f32.mrb[0].mxu0
      %v2177 = vadd.f32 0.0, %v2176
      %v2178 = vpop.f32.mrb[0].mxu0
      %2179 = vmatprep.mubr.bf16.mxu0 0
      %2180 = vmatmul.mubr.bf16.gmra.mrb[0].mxu0 %v2022
      %v2181 = vpop.f32.mrb[0].mxu0
      %v2182 = vadd.f32 0.0, %v2181
      %v2183 = vpop.f32.mrb[0].mxu0
      %v2184 = vpop.f32.mrb[0].mxu0
      %v2185 = vadd.f32 0.0, %v2184
      %v2186 = vpop.f32.mrb[0].mxu0
      %2187 = vdwg.mxu0
      %v2188 = vadd.f32 %v1926, %v2062
      %v2189 = vadd.f32 %v1927, %v2065
      %v2190 = vadd.f32 %v1928, %v2070
      %v2191 = vadd.f32 %v1929, %v2073
      %v2192 = vadd.f32 %v1930, %v2078
      %v2193 = vadd.f32 %v1931, %v2081
      %v2194 = vadd.f32 %v1932, %v2086
      %v2195 = vadd.f32 %v1933, %v2089
      %v2196 = vadd.f32 %v1934, %v2094
      %v2197 = vadd.f32 %v1935, %v2097
      %v2198 = vadd.f32 %v1936, %v2102
      %v2199 = vadd.f32 %v1937, %v2105
      %v2200 = vadd.f32 %v1938, %v2110
      %v2201 = vadd.f32 %v1939, %v2113
      %v2202 = vadd.f32 %v1940, %v2118
      %v2203 = vadd.f32 %v1941, %v2121
      %v2204 = vadd.f32 %v1942, %v2126
      %v2205 = vadd.f32 %v1943, %v2129
      %v2206 = vadd.f32 %v1944, %v2134
      %v2207 = vadd.f32 %v1945, %v2137
      %v2208 = vadd.f32 %v1946, %v2142
      %v2209 = vadd.f32 %v1947, %v2145
      %v2210 = vadd.f32 %v1948, %v2150
      %v2211 = vadd.f32 %v1949, %v2153
      %v2212 = vadd.f32 %v1950, %v2158
      %v2213 = vadd.f32 %v1951, %v2161
      %v2214 = vadd.f32 %v1952, %v2166
      %v2215 = vadd.f32 %v1953, %v2169
      %v2216 = vadd.f32 %v1954, %v2174
      %v2217 = vadd.f32 %v1955, %v2177
      %v2218 = vadd.f32 %v1956, %v2182
      %v2219 = vadd.f32 %v1957, %v2185
      %2220 = vst.msk [vmem:[#allocation3] sm:$0xff] %vm397, %v2188
      %2221 = vst.msk [vmem:[#allocation3 + $0x8] sm:$0xff] %vm397, %v2189
      %2222 = vst.msk [vmem:[#allocation3 + $0x10] sm:$0xff] %vm397, %v2190
      %2223 = vst.msk [vmem:[#allocation3 + $0x18] sm:$0xff] %vm397, %v2191
      %2224 = vst.msk [vmem:[#allocation3 + $0x20] sm:$0xff] %vm397, %v2192
      %2225 = vst.msk [vmem:[#allocation3 + $0x28] sm:$0xff] %vm397, %v2193
      %2226 = vst.msk [vmem:[#allocation3 + $0x30] sm:$0xff] %vm397, %v2194
      %2227 = vst.msk [vmem:[#allocation3 + $0x38] sm:$0xff] %vm397, %v2195
      %2228 = vst.msk [vmem:[#allocation3 + $0x40] sm:$0xff] %vm397, %v2196
      %2229 = vst.msk [vmem:[#allocation3 + $0x48] sm:$0xff] %vm397, %v2197
      %2230 = vst.msk [vmem:[#allocation3 + $0x50] sm:$0xff] %vm397, %v2198
      %2231 = vst.msk [vmem:[#allocation3 + $0x58] sm:$0xff] %vm397, %v2199
      %2232 = vst.msk [vmem:[#allocation3 + $0x60] sm:$0xff] %vm397, %v2200
      %2233 = vst.msk [vmem:[#allocation3 + $0x68] sm:$0xff] %vm397, %v2201
      %2234 = vst.msk [vmem:[#allocation3 + $0x70] sm:$0xff] %vm397, %v2202
      %2235 = vst.msk [vmem:[#allocation3 + $0x78] sm:$0xff] %vm397, %v2203
      %2236 = vst.msk [vmem:[#allocation3 + $0x80] sm:$0xff] %vm397, %v2204
      %2237 = vst.msk [vmem:[#allocation3 + $0x88] sm:$0xff] %vm397, %v2205
      %2238 = vst.msk [vmem:[#allocation3 + $0x90] sm:$0xff] %vm397, %v2206
      %2239 = vst.msk [vmem:[#allocation3 + $0x98] sm:$0xff] %vm397, %v2207
      %2240 = vst.msk [vmem:[#allocation3 + $0xa0] sm:$0xff] %vm397, %v2208
      %2241 = vst.msk [vmem:[#allocation3 + $0xa8] sm:$0xff] %vm397, %v2209
      %2242 = vst.msk [vmem:[#allocation3 + $0xb0] sm:$0xff] %vm397, %v2210
      %2243 = vst.msk [vmem:[#allocation3 + $0xb8] sm:$0xff] %vm397, %v2211
      %2244 = vst.msk [vmem:[#allocation3 + $0xc0] sm:$0xff] %vm397, %v2212
      %2245 = vst.msk [vmem:[#allocation3 + $0xc8] sm:$0xff] %vm397, %v2213
      %2246 = vst.msk [vmem:[#allocation3 + $0xd0] sm:$0xff] %vm397, %v2214
      %2247 = vst.msk [vmem:[#allocation3 + $0xd8] sm:$0xff] %vm397, %v2215
      %2248 = vst.msk [vmem:[#allocation3 + $0xe0] sm:$0xff] %vm397, %v2216
      %2249 = vst.msk [vmem:[#allocation3 + $0xe8] sm:$0xff] %vm397, %v2217
      %2250 = vst.msk [vmem:[#allocation3 + $0xf0] sm:$0xff] %vm397, %v2218
      %2251 = vst.msk [vmem:[#allocation3 + $0xf8] sm:$0xff] %vm397, %v2219
      %v2252 = vld [vmem:[%s396 + $0x2] sm:$0xff]
      %v2253 = vld [vmem:[%s396 + $0xa] sm:$0xff]
      %v2254 = vld [vmem:[%s396 + $0x1a] sm:$0xff]
      %v2255 = vld [vmem:[%s396 + $0x22] sm:$0xff]
      %v2256 = vld [vmem:[%s396 + $0x32] sm:$0xff]
      %v2257 = vld [vmem:[%s396 + $0x3a] sm:$0xff]
      %v2258 = vld [vmem:[%s396 + $0x4a] sm:$0xff]
      %v2259 = vld [vmem:[%s396 + $0x52] sm:$0xff]
      %v2260 = vld [vmem:[%s396 + $0x62] sm:$0xff]
      %v2261 = vld [vmem:[%s396 + $0x6a] sm:$0xff]
      %v2262 = vld [vmem:[%s396 + $0x7a] sm:$0xff]
      %v2263 = vld [vmem:[%s396 + $0x82] sm:$0xff]
      %v2264 = vld [vmem:[%s396 + $0x92] sm:$0xff]
      %v2265 = vld [vmem:[%s396 + $0x9a] sm:$0xff]
      %v2266 = vld [vmem:[%s396 + $0xaa] sm:$0xff]
      %v2267 = vld [vmem:[%s396 + $0xb2] sm:$0xff]
      %v2268 = vld [vmem:[%s396 + $0xc2] sm:$0xff]
      %v2269 = vld [vmem:[%s396 + $0xca] sm:$0xff]
      %v2270 = vld [vmem:[%s396 + $0xda] sm:$0xff]
      %v2271 = vld [vmem:[%s396 + $0xe2] sm:$0xff]
      %v2272 = vld [vmem:[%s396 + $0xf2] sm:$0xff]
      %v2273 = vld [vmem:[%s396 + $0xfa] sm:$0xff]
      %v2274 = vld [vmem:[%s396 + $0x10a] sm:$0xff]
      %v2275 = vld [vmem:[%s396 + $0x112] sm:$0xff]
      %v2276 = vld [vmem:[%s396 + $0x122] sm:$0xff]
      %v2277 = vld [vmem:[%s396 + $0x12a] sm:$0xff]
      %v2278 = vld [vmem:[%s396 + $0x13a] sm:$0xff]
      %v2279 = vld [vmem:[%s396 + $0x142] sm:$0xff]
      %v2280 = vld [vmem:[%s396 + $0x152] sm:$0xff]
      %v2281 = vld [vmem:[%s396 + $0x15a] sm:$0xff]
      %v2282 = vld [vmem:[%s396 + $0x16a] sm:$0xff]
      %v2283 = vld [vmem:[%s396 + $0x172] sm:$0xff]
      %v2284 = vld [vmem:[#allocation3] sm:$0xff]
      %v2285 = vld [vmem:[#allocation3 + $0x8] sm:$0xff]
      %v2286 = vld [vmem:[#allocation3 + $0x10] sm:$0xff]
      %v2287 = vld [vmem:[#allocation3 + $0x18] sm:$0xff]
      %v2288 = vld [vmem:[#allocation3 + $0x20] sm:$0xff]
      %v2289 = vld [vmem:[#allocation3 + $0x28] sm:$0xff]
      %v2290 = vld [vmem:[#allocation3 + $0x30] sm:$0xff]
      %v2291 = vld [vmem:[#allocation3 + $0x38] sm:$0xff]
      %v2292 = vld [vmem:[#allocation3 + $0x40] sm:$0xff]
      %v2293 = vld [vmem:[#allocation3 + $0x48] sm:$0xff]
      %v2294 = vld [vmem:[#allocation3 + $0x50] sm:$0xff]
      %v2295 = vld [vmem:[#allocation3 + $0x58] sm:$0xff]
      %v2296 = vld [vmem:[#allocation3 + $0x60] sm:$0xff]
      %v2297 = vld [vmem:[#allocation3 + $0x68] sm:$0xff]
      %v2298 = vld [vmem:[#allocation3 + $0x70] sm:$0xff]
      %v2299 = vld [vmem:[#allocation3 + $0x78] sm:$0xff]
      %v2300 = vld [vmem:[#allocation3 + $0x80] sm:$0xff]
      %v2301 = vld [vmem:[#allocation3 + $0x88] sm:$0xff]
      %v2302 = vld [vmem:[#allocation3 + $0x90] sm:$0xff]
      %v2303 = vld [vmem:[#allocation3 + $0x98] sm:$0xff]
      %v2304 = vld [vmem:[#allocation3 + $0xa0] sm:$0xff]
      %v2305 = vld [vmem:[#allocation3 + $0xa8] sm:$0xff]
      %v2306 = vld [vmem:[#allocation3 + $0xb0] sm:$0xff]
      %v2307 = vld [vmem:[#allocation3 + $0xb8] sm:$0xff]
      %v2308 = vld [vmem:[#allocation3 + $0xc0] sm:$0xff]
      %v2309 = vld [vmem:[#allocation3 + $0xc8] sm:$0xff]
      %v2310 = vld [vmem:[#allocation3 + $0xd0] sm:$0xff]
      %v2311 = vld [vmem:[#allocation3 + $0xd8] sm:$0xff]
      %v2312 = vld [vmem:[#allocation3 + $0xe0] sm:$0xff]
      %v2313 = vld [vmem:[#allocation3 + $0xe8] sm:$0xff]
      %v2314 = vld [vmem:[#allocation3 + $0xf0] sm:$0xff]
      %v2315 = vld [vmem:[#allocation3 + $0xf8] sm:$0xff]
      %v2316 = vpack.c.bf16 %v2253, %v2252
      %v2317 = vpack.c.bf16 %v2255, %v2254
      %v2318 = vpack.c.bf16 %v2257, %v2256
      %v2319 = vpack.c.bf16 %v2259, %v2258
      %v2320 = vpack.c.bf16 %v2261, %v2260
      %v2321 = vpack.c.bf16 %v2263, %v2262
      %v2322 = vpack.c.bf16 %v2265, %v2264
      %v2323 = vpack.c.bf16 %v2267, %v2266
      %v2324 = vpack.c.bf16 %v2269, %v2268
      %v2325 = vpack.c.bf16 %v2271, %v2270
      %v2326 = vpack.c.bf16 %v2273, %v2272
      %v2327 = vpack.c.bf16 %v2275, %v2274
      %v2328 = vpack.c.bf16 %v2277, %v2276
      %v2329 = vpack.c.bf16 %v2279, %v2278
      %v2330 = vpack.c.bf16 %v2281, %v2280
      %v2331 = vpack.c.bf16 %v2283, %v2282
      %s2332 = scalar_lea.vmem %s2, 10
      %v2333 = vld [vmem:[%s2332] sm:$0x3]
      %v2335 = vsel %vm397, %v2316, 0
      %v2338 = vsel %vm397, %v2317, 0
      %v2341 = vsel %vm397, %v2318, 0
      %v2344 = vsel %vm397, %v2319, 0
      %v2347 = vsel %vm397, %v2320, 0
      %v2350 = vsel %vm397, %v2321, 0
      %v2353 = vsel %vm397, %v2322, 0
      %v2356 = vsel %vm397, %v2323, 0
      %v2359 = vsel %vm397, %v2324, 0
      %v2362 = vsel %vm397, %v2325, 0
      %v2365 = vsel %vm397, %v2326, 0
      %v2368 = vsel %vm397, %v2327, 0
      %v2371 = vsel %vm397, %v2328, 0
      %v2374 = vsel %vm397, %v2329, 0
      %v2377 = vsel %vm397, %v2330, 0
      %v2380 = vsel %vm397, %v2331, 0
      %v2383 = vsel %vm591, %v2333, 0
      %2385 = vmatprep.subr.bf16.mxu0 0
      %2386 = vmatpush1.bf16.msra.mxu0 %v2383
      %2387 = vmatprep.subr.bf16.mxu0 0
      %2388 = vmatpush1.bf16.msra.mxu0 0
      %2389 = vmatprep.subr.bf16.mxu0 0
      %2390 = vmatpush1.bf16.msra.mxu0 0
      %2391 = vmatprep.subr.bf16.mxu0 0
      %2392 = vmatpush1.bf16.msra.mxu0 0
      %2393 = vmatprep.subr.bf16.mxu0 0
      %2394 = vmatpush1.bf16.msra.mxu0 0
      %2395 = vmatprep.subr.bf16.mxu0 0
      %2396 = vmatpush1.bf16.msra.mxu0 0
      %2397 = vmatprep.subr.bf16.mxu0 0
      %2398 = vmatpush1.bf16.msra.mxu0 0
      %2399 = vmatprep.subr.bf16.mxu0 0
      %2400 = vmatpush1.bf16.msra.mxu0 0
      %2401 = vmatprep.subr.bf16.mxu0 0
      %2402 = vmatpush1.bf16.msra.mxu0 0
      %2403 = vmatprep.subr.bf16.mxu0 0
      %2404 = vmatpush1.bf16.msra.mxu0 0
      %2405 = vmatprep.subr.bf16.mxu0 0
      %2406 = vmatpush1.bf16.msra.mxu0 0
      %2407 = vmatprep.subr.bf16.mxu0 0
      %2408 = vmatpush1.bf16.msra.mxu0 0
      %2409 = vmatprep.subr.bf16.mxu0 0
      %2410 = vmatpush1.bf16.msra.mxu0 0
      %2411 = vmatprep.subr.bf16.mxu0 0
      %2412 = vmatpush1.bf16.msra.mxu0 0
      %2413 = vmatprep.subr.bf16.mxu0 0
      %2414 = vmatpush1.bf16.msra.mxu0 0
      %2415 = vmatprep.subr.bf16.mxu0 0
      %2416 = vmatpush1.bf16.msra.mxu0 0
      %2417 = vmatprep.mubr.bf16.mxu0 0
      %2418 = vmatmul.mubr.bf16.gmra.mrb[0].mxu0 %v2335
      %v2419 = vpop.f32.mrb[0].mxu0
      %v2420 = vadd.f32 0.0, %v2419
      %v2421 = vpop.f32.mrb[0].mxu0
      %v2422 = vpop.f32.mrb[0].mxu0
      %v2423 = vadd.f32 0.0, %v2422
      %v2424 = vpop.f32.mrb[0].mxu0
      %2425 = vmatprep.mubr.bf16.mxu0 0
      %2426 = vmatmul.mubr.bf16.gmra.mrb[0].mxu0 %v2338
      %v2427 = vpop.f32.mrb[0].mxu0
      %v2428 = vadd.f32 0.0, %v2427
      %v2429 = vpop.f32.mrb[0].mxu0
      %v2430 = vpop.f32.mrb[0].mxu0
      %v2431 = vadd.f32 0.0, %v2430
      %v2432 = vpop.f32.mrb[0].mxu0
      %2433 = vmatprep.mubr.bf16.mxu0 0
      %2434 = vmatmul.mubr.bf16.gmra.mrb[0].mxu0 %v2341
      %v2435 = vpop.f32.mrb[0].mxu0
      %v2436 = vadd.f32 0.0, %v2435
      %v2437 = vpop.f32.mrb[0].mxu0
      %v2438 = vpop.f32.mrb[0].mxu0
      %v2439 = vadd.f32 0.0, %v2438
      %v2440 = vpop.f32.mrb[0].mxu0
      %2441 = vmatprep.mubr.bf16.mxu0 0
      %2442 = vmatmul.mubr.bf16.gmra.mrb[0].mxu0 %v2344
      %v2443 = vpop.f32.mrb[0].mxu0
      %v2444 = vadd.f32 0.0, %v2443
      %v2445 = vpop.f32.mrb[0].mxu0
      %v2446 = vpop.f32.mrb[0].mxu0
      %v2447 = vadd.f32 0.0, %v2446
      %v2448 = vpop.f32.mrb[0].mxu0
      %2449 = vmatprep.mubr.bf16.mxu0 0
      %2450 = vmatmul.mubr.bf16.gmra.mrb[0].mxu0 %v2347
      %v2451 = vpop.f32.mrb[0].mxu0
      %v2452 = vadd.f32 0.0, %v2451
      %v2453 = vpop.f32.mrb[0].mxu0
      %v2454 = vpop.f32.mrb[0].mxu0
      %v2455 = vadd.f32 0.0, %v2454
      %v2456 = vpop.f32.mrb[0].mxu0
      %2457 = vmatprep.mubr.bf16.mxu0 0
      %2458 = vmatmul.mubr.bf16.gmra.mrb[0].mxu0 %v2350
      %v2459 = vpop.f32.mrb[0].mxu0
      %v2460 = vadd.f32 0.0, %v2459
      %v2461 = vpop.f32.mrb[0].mxu0
      %v2462 = vpop.f32.mrb[0].mxu0
      %v2463 = vadd.f32 0.0, %v2462
      %v2464 = vpop.f32.mrb[0].mxu0
      %2465 = vmatprep.mubr.bf16.mxu0 0
      %2466 = vmatmul.mubr.bf16.gmra.mrb[0].mxu0 %v2353
      %v2467 = vpop.f32.mrb[0].mxu0
      %v2468 = vadd.f32 0.0, %v2467
      %v2469 = vpop.f32.mrb[0].mxu0
      %v2470 = vpop.f32.mrb[0].mxu0
      %v2471 = vadd.f32 0.0, %v2470
      %v2472 = vpop.f32.mrb[0].mxu0
      %2473 = vmatprep.mubr.bf16.mxu0 0
      %2474 = vmatmul.mubr.bf16.gmra.mrb[0].mxu0 %v2356
      %v2475 = vpop.f32.mrb[0].mxu0
      %v2476 = vadd.f32 0.0, %v2475
      %v2477 = vpop.f32.mrb[0].mxu0
      %v2478 = vpop.f32.mrb[0].mxu0
      %v2479 = vadd.f32 0.0, %v2478
      %v2480 = vpop.f32.mrb[0].mxu0
      %2481 = vmatprep.mubr.bf16.mxu0 0
      %2482 = vmatmul.mubr.bf16.gmra.mrb[0].mxu0 %v2359
      %v2483 = vpop.f32.mrb[0].mxu0
      %v2484 = vadd.f32 0.0, %v2483
      %v2485 = vpop.f32.mrb[0].mxu0
      %v2486 = vpop.f32.mrb[0].mxu0
      %v2487 = vadd.f32 0.0, %v2486
      %v2488 = vpop.f32.mrb[0].mxu0
      %2489 = vmatprep.mubr.bf16.mxu0 0
      %2490 = vmatmul.mubr.bf16.gmra.mrb[0].mxu0 %v2362
      %v2491 = vpop.f32.mrb[0].mxu0
      %v2492 = vadd.f32 0.0, %v2491
      %v2493 = vpop.f32.mrb[0].mxu0
      %v2494 = vpop.f32.mrb[0].mxu0
      %v2495 = vadd.f32 0.0, %v2494
      %v2496 = vpop.f32.mrb[0].mxu0
      %2497 = vmatprep.mubr.bf16.mxu0 0
      %2498 = vmatmul.mubr.bf16.gmra.mrb[0].mxu0 %v2365
      %v2499 = vpop.f32.mrb[0].mxu0
      %v2500 = vadd.f32 0.0, %v2499
      %v2501 = vpop.f32.mrb[0].mxu0
      %v2502 = vpop.f32.mrb[0].mxu0
      %v2503 = vadd.f32 0.0, %v2502
      %v2504 = vpop.f32.mrb[0].mxu0
      %2505 = vmatprep.mubr.bf16.mxu0 0
      %2506 = vmatmul.mubr.bf16.gmra.mrb[0].mxu0 %v2368
      %v2507 = vpop.f32.mrb[0].mxu0
      %v2508 = vadd.f32 0.0, %v2507
      %v2509 = vpop.f32.mrb[0].mxu0
      %v2510 = vpop.f32.mrb[0].mxu0
      %v2511 = vadd.f32 0.0, %v2510
      %v2512 = vpop.f32.mrb[0].mxu0
      %2513 = vmatprep.mubr.bf16.mxu0 0
      %2514 = vmatmul.mubr.bf16.gmra.mrb[0].mxu0 %v2371
      %v2515 = vpop.f32.mrb[0].mxu0
      %v2516 = vadd.f32 0.0, %v2515
      %v2517 = vpop.f32.mrb[0].mxu0
      %v2518 = vpop.f32.mrb[0].mxu0
      %v2519 = vadd.f32 0.0, %v2518
      %v2520 = vpop.f32.mrb[0].mxu0
      %2521 = vmatprep.mubr.bf16.mxu0 0
      %2522 = vmatmul.mubr.bf16.gmra.mrb[0].mxu0 %v2374
      %v2523 = vpop.f32.mrb[0].mxu0
      %v2524 = vadd.f32 0.0, %v2523
      %v2525 = vpop.f32.mrb[0].mxu0
      %v2526 = vpop.f32.mrb[0].mxu0
      %v2527 = vadd.f32 0.0, %v2526
      %v2528 = vpop.f32.mrb[0].mxu0
      %2529 = vmatprep.mubr.bf16.mxu0 0
      %2530 = vmatmul.mubr.bf16.gmra.mrb[0].mxu0 %v2377
      %v2531 = vpop.f32.mrb[0].mxu0
      %v2532 = vadd.f32 0.0, %v2531
      %v2533 = vpop.f32.mrb[0].mxu0
      %v2534 = vpop.f32.mrb[0].mxu0
      %v2535 = vadd.f32 0.0, %v2534
      %v2536 = vpop.f32.mrb[0].mxu0
      %2537 = vmatprep.mubr.bf16.mxu0 0
      %2538 = vmatmul.mubr.bf16.gmra.mrb[0].mxu0 %v2380
      %v2539 = vpop.f32.mrb[0].mxu0
      %v2540 = vadd.f32 0.0, %v2539
      %v2541 = vpop.f32.mrb[0].mxu0
      %v2542 = vpop.f32.mrb[0].mxu0
      %v2543 = vadd.f32 0.0, %v2542
      %v2544 = vpop.f32.mrb[0].mxu0
      %2545 = vdwg.mxu0
      %v2546 = vadd.f32 %v2284, %v2420
      %v2547 = vadd.f32 %v2285, %v2423
      %v2548 = vadd.f32 %v2286, %v2428
      %v2549 = vadd.f32 %v2287, %v2431
      %v2550 = vadd.f32 %v2288, %v2436
      %v2551 = vadd.f32 %v2289, %v2439
      %v2552 = vadd.f32 %v2290, %v2444
      %v2553 = vadd.f32 %v2291, %v2447
      %v2554 = vadd.f32 %v2292, %v2452
      %v2555 = vadd.f32 %v2293, %v2455
      %v2556 = vadd.f32 %v2294, %v2460
      %v2557 = vadd.f32 %v2295, %v2463
      %v2558 = vadd.f32 %v2296, %v2468
      %v2559 = vadd.f32 %v2297, %v2471
      %v2560 = vadd.f32 %v2298, %v2476
      %v2561 = vadd.f32 %v2299, %v2479
      %v2562 = vadd.f32 %v2300, %v2484
      %v2563 = vadd.f32 %v2301, %v2487
      %v2564 = vadd.f32 %v2302, %v2492
      %v2565 = vadd.f32 %v2303, %v2495
      %v2566 = vadd.f32 %v2304, %v2500
      %v2567 = vadd.f32 %v2305, %v2503
      %v2568 = vadd.f32 %v2306, %v2508
      %v2569 = vadd.f32 %v2307, %v2511
      %v2570 = vadd.f32 %v2308, %v2516
      %v2571 = vadd.f32 %v2309, %v2519
      %v2572 = vadd.f32 %v2310, %v2524
      %v2573 = vadd.f32 %v2311, %v2527
      %v2574 = vadd.f32 %v2312, %v2532
      %v2575 = vadd.f32 %v2313, %v2535
      %v2576 = vadd.f32 %v2314, %v2540
      %v2577 = vadd.f32 %v2315, %v2543
      %2578 = vst.msk [vmem:[#allocation3] sm:$0xff] %vm397, %v2546
      %2579 = vst.msk [vmem:[#allocation3 + $0x8] sm:$0xff] %vm397, %v2547
      %2580 = vst.msk [vmem:[#allocation3 + $0x10] sm:$0xff] %vm397, %v2548
      %2581 = vst.msk [vmem:[#allocation3 + $0x18] sm:$0xff] %vm397, %v2549
      %2582 = vst.msk [vmem:[#allocation3 + $0x20] sm:$0xff] %vm397, %v2550
      %2583 = vst.msk [vmem:[#allocation3 + $0x28] sm:$0xff] %vm397, %v2551
      %2584 = vst.msk [vmem:[#allocation3 + $0x30] sm:$0xff] %vm397, %v2552
      %2585 = vst.msk [vmem:[#allocation3 + $0x38] sm:$0xff] %vm397, %v2553
      %2586 = vst.msk [vmem:[#allocation3 + $0x40] sm:$0xff] %vm397, %v2554
      %2587 = vst.msk [vmem:[#allocation3 + $0x48] sm:$0xff] %vm397, %v2555
      %2588 = vst.msk [vmem:[#allocation3 + $0x50] sm:$0xff] %vm397, %v2556
      %2589 = vst.msk [vmem:[#allocation3 + $0x58] sm:$0xff] %vm397, %v2557
      %2590 = vst.msk [vmem:[#allocation3 + $0x60] sm:$0xff] %vm397, %v2558
      %2591 = vst.msk [vmem:[#allocation3 + $0x68] sm:$0xff] %vm397, %v2559
      %2592 = vst.msk [vmem:[#allocation3 + $0x70] sm:$0xff] %vm397, %v2560
      %2593 = vst.msk [vmem:[#allocation3 + $0x78] sm:$0xff] %vm397, %v2561
      %2594 = vst.msk [vmem:[#allocation3 + $0x80] sm:$0xff] %vm397, %v2562
      %2595 = vst.msk [vmem:[#allocation3 + $0x88] sm:$0xff] %vm397, %v2563
      %2596 = vst.msk [vmem:[#allocation3 + $0x90] sm:$0xff] %vm397, %v2564
      %2597 = vst.msk [vmem:[#allocation3 + $0x98] sm:$0xff] %vm397, %v2565
      %2598 = vst.msk [vmem:[#allocation3 + $0xa0] sm:$0xff] %vm397, %v2566
      %2599 = vst.msk [vmem:[#allocation3 + $0xa8] sm:$0xff] %vm397, %v2567
      %2600 = vst.msk [vmem:[#allocation3 + $0xb0] sm:$0xff] %vm397, %v2568
      %2601 = vst.msk [vmem:[#allocation3 + $0xb8] sm:$0xff] %vm397, %v2569
      %2602 = vst.msk [vmem:[#allocation3 + $0xc0] sm:$0xff] %vm397, %v2570
      %2603 = vst.msk [vmem:[#allocation3 + $0xc8] sm:$0xff] %vm397, %v2571
      %2604 = vst.msk [vmem:[#allocation3 + $0xd0] sm:$0xff] %vm397, %v2572
      %2605 = vst.msk [vmem:[#allocation3 + $0xd8] sm:$0xff] %vm397, %v2573
      %2606 = vst.msk [vmem:[#allocation3 + $0xe0] sm:$0xff] %vm397, %v2574
      %2607 = vst.msk [vmem:[#allocation3 + $0xe8] sm:$0xff] %vm397, %v2575
      %2608 = vst.msk [vmem:[#allocation3 + $0xf0] sm:$0xff] %vm397, %v2576
      %2609 = vst.msk [vmem:[#allocation3 + $0xf8] sm:$0xff] %vm397, %v2577
      %s2610 = scalar_lea.vmem [#allocation2], 48
      %v2611 = vld [vmem:[%s2610] sm:$0xff]
      %v2612 = vld [vmem:[%s2610 + $0x8] sm:$0xff]
      %v2613 = vld [vmem:[%s2610 + $0x18] sm:$0xff]
      %v2614 = vld [vmem:[%s2610 + $0x20] sm:$0xff]
      %v2615 = vld [vmem:[%s2610 + $0x30] sm:$0xff]
      %v2616 = vld [vmem:[%s2610 + $0x38] sm:$0xff]
      %v2617 = vld [vmem:[%s2610 + $0x48] sm:$0xff]
      %v2618 = vld [vmem:[%s2610 + $0x50] sm:$0xff]
      %v2619 = vld [vmem:[%s2610 + $0x60] sm:$0xff]
      %v2620 = vld [vmem:[%s2610 + $0x68] sm:$0xff]
      %v2621 = vld [vmem:[%s2610 + $0x78] sm:$0xff]
      %v2622 = vld [vmem:[%s2610 + $0x80] sm:$0xff]
      %v2623 = vld [vmem:[%s2610 + $0x90] sm:$0xff]
      %v2624 = vld [vmem:[%s2610 + $0x98] sm:$0xff]
      %v2625 = vld [vmem:[%s2610 + $0xa8] sm:$0xff]
      %v2626 = vld [vmem:[%s2610 + $0xb0] sm:$0xff]
      %v2627 = vld [vmem:[%s2610 + $0xc0] sm:$0xff]
      %v2628 = vld [vmem:[%s2610 + $0xc8] sm:$0xff]
      %v2629 = vld [vmem:[%s2610 + $0xd8] sm:$0xff]
      %v2630 = vld [vmem:[%s2610 + $0xe0] sm:$0xff]
      %v2631 = vld [vmem:[%s2610 + $0xf0] sm:$0xff]
      %v2632 = vld [vmem:[%s2610 + $0xf8] sm:$0xff]
      %v2633 = vld [vmem:[%s2610 + $0x108] sm:$0xff]
      %v2634 = vld [vmem:[%s2610 + $0x110] sm:$0xff]
      %v2635 = vld [vmem:[%s2610 + $0x120] sm:$0xff]
      %v2636 = vld [vmem:[%s2610 + $0x128] sm:$0xff]
      %v2637 = vld [vmem:[%s2610 + $0x138] sm:$0xff]
      %v2638 = vld [vmem:[%s2610 + $0x140] sm:$0xff]
      %v2639 = vld [vmem:[%s2610 + $0x150] sm:$0xff]
      %v2640 = vld [vmem:[%s2610 + $0x158] sm:$0xff]
      %v2641 = vld [vmem:[%s2610 + $0x168] sm:$0xff]
      %v2642 = vld [vmem:[%s2610 + $0x170] sm:$0xff]
      %v2643 = vld [vmem:[#allocation3] sm:$0xff]
      %v2644 = vld [vmem:[#allocation3 + $0x8] sm:$0xff]
      %v2645 = vld [vmem:[#allocation3 + $0x10] sm:$0xff]
      %v2646 = vld [vmem:[#allocation3 + $0x18] sm:$0xff]
      %v2647 = vld [vmem:[#allocation3 + $0x20] sm:$0xff]
      %v2648 = vld [vmem:[#allocation3 + $0x28] sm:$0xff]
      %v2649 = vld [vmem:[#allocation3 + $0x30] sm:$0xff]
      %v2650 = vld [vmem:[#allocation3 + $0x38] sm:$0xff]
      %v2651 = vld [vmem:[#allocation3 + $0x40] sm:$0xff]
      %v2652 = vld [vmem:[#allocation3 + $0x48] sm:$0xff]
      %v2653 = vld [vmem:[#allocation3 + $0x50] sm:$0xff]
      %v2654 = vld [vmem:[#allocation3 + $0x58] sm:$0xff]
      %v2655 = vld [vmem:[#allocation3 + $0x60] sm:$0xff]
      %v2656 = vld [vmem:[#allocation3 + $0x68] sm:$0xff]
      %v2657 = vld [vmem:[#allocation3 + $0x70] sm:$0xff]
      %v2658 = vld [vmem:[#allocation3 + $0x78] sm:$0xff]
      %v2659 = vld [vmem:[#allocation3 + $0x80] sm:$0xff]
      %v2660 = vld [vmem:[#allocation3 + $0x88] sm:$0xff]
      %v2661 = vld [vmem:[#allocation3 + $0x90] sm:$0xff]
      %v2662 = vld [vmem:[#allocation3 + $0x98] sm:$0xff]
      %v2663 = vld [vmem:[#allocation3 + $0xa0] sm:$0xff]
      %v2664 = vld [vmem:[#allocation3 + $0xa8] sm:$0xff]
      %v2665 = vld [vmem:[#allocation3 + $0xb0] sm:$0xff]
      %v2666 = vld [vmem:[#allocation3 + $0xb8] sm:$0xff]
      %v2667 = vld [vmem:[#allocation3 + $0xc0] sm:$0xff]
      %v2668 = vld [vmem:[#allocation3 + $0xc8] sm:$0xff]
      %v2669 = vld [vmem:[#allocation3 + $0xd0] sm:$0xff]
      %v2670 = vld [vmem:[#allocation3 + $0xd8] sm:$0xff]
      %v2671 = vld [vmem:[#allocation3 + $0xe0] sm:$0xff]
      %v2672 = vld [vmem:[#allocation3 + $0xe8] sm:$0xff]
      %v2673 = vld [vmem:[#allocation3 + $0xf0] sm:$0xff]
      %v2674 = vld [vmem:[#allocation3 + $0xf8] sm:$0xff]
      %v2675 = vpack.c.bf16 %v2612, %v2611
      %v2676 = vpack.c.bf16 %v2614, %v2613
      %v2677 = vpack.c.bf16 %v2616, %v2615
      %v2678 = vpack.c.bf16 %v2618, %v2617
      %v2679 = vpack.c.bf16 %v2620, %v2619
      %v2680 = vpack.c.bf16 %v2622, %v2621
      %v2681 = vpack.c.bf16 %v2624, %v2623
      %v2682 = vpack.c.bf16 %v2626, %v2625
      %v2683 = vpack.c.bf16 %v2628, %v2627
      %v2684 = vpack.c.bf16 %v2630, %v2629
      %v2685 = vpack.c.bf16 %v2632, %v2631
      %v2686 = vpack.c.bf16 %v2634, %v2633
      %v2687 = vpack.c.bf16 %v2636, %v2635
      %v2688 = vpack.c.bf16 %v2638, %v2637
      %v2689 = vpack.c.bf16 %v2640, %v2639
      %v2690 = vpack.c.bf16 %v2642, %v2641
      %s2691 = scalar_lea.vmem %s2, 12
      %v2692 = vld [vmem:[%s2691] sm:$0x3]
      %v2694 = vsel %vm397, %v2675, 0
      %v2697 = vsel %vm397, %v2676, 0
      %v2700 = vsel %vm397, %v2677, 0
      %v2703 = vsel %vm397, %v2678, 0
      %v2706 = vsel %vm397, %v2679, 0
      %v2709 = vsel %vm397, %v2680, 0
      %v2712 = vsel %vm397, %v2681, 0
      %v2715 = vsel %vm397, %v2682, 0
      %v2718 = vsel %vm397, %v2683, 0
      %v2721 = vsel %vm397, %v2684, 0
      %v2724 = vsel %vm397, %v2685, 0
      %v2727 = vsel %vm397, %v2686, 0
      %v2730 = vsel %vm397, %v2687, 0
      %v2733 = vsel %vm397, %v2688, 0
      %v2736 = vsel %vm397, %v2689, 0
      %v2739 = vsel %vm397, %v2690, 0
      %v2742 = vsel %vm591, %v2692, 0
      %2744 = vmatprep.subr.bf16.mxu0 0
      %2745 = vmatpush1.bf16.msra.mxu0 %v2742
      %2746 = vmatprep.subr.bf16.mxu0 0
      %2747 = vmatpush1.bf16.msra.mxu0 0
      %2748 = vmatprep.subr.bf16.mxu0 0
      %2749 = vmatpush1.bf16.msra.mxu0 0
      %2750 = vmatprep.subr.bf16.mxu0 0
      %2751 = vmatpush1.bf16.msra.mxu0 0
      %2752 = vmatprep.subr.bf16.mxu0 0
      %2753 = vmatpush1.bf16.msra.mxu0 0
      %2754 = vmatprep.subr.bf16.mxu0 0
      %2755 = vmatpush1.bf16.msra.mxu0 0
      %2756 = vmatprep.subr.bf16.mxu0 0
      %2757 = vmatpush1.bf16.msra.mxu0 0
      %2758 = vmatprep.subr.bf16.mxu0 0
      %2759 = vmatpush1.bf16.msra.mxu0 0
      %2760 = vmatprep.subr.bf16.mxu0 0
      %2761 = vmatpush1.bf16.msra.mxu0 0
      %2762 = vmatprep.subr.bf16.mxu0 0
      %2763 = vmatpush1.bf16.msra.mxu0 0
      %2764 = vmatprep.subr.bf16.mxu0 0
      %2765 = vmatpush1.bf16.msra.mxu0 0
      %2766 = vmatprep.subr.bf16.mxu0 0
      %2767 = vmatpush1.bf16.msra.mxu0 0
      %2768 = vmatprep.subr.bf16.mxu0 0
      %2769 = vmatpush1.bf16.msra.mxu0 0
      %2770 = vmatprep.subr.bf16.mxu0 0
      %2771 = vmatpush1.bf16.msra.mxu0 0
      %2772 = vmatprep.subr.bf16.mxu0 0
      %2773 = vmatpush1.bf16.msra.mxu0 0
      %2774 = vmatprep.subr.bf16.mxu0 0
      %2775 = vmatpush1.bf16.msra.mxu0 0
      %2776 = vmatprep.mubr.bf16.mxu0 0
      %2777 = vmatmul.mubr.bf16.gmra.mrb[0].mxu0 %v2694
      %v2778 = vpop.f32.mrb[0].mxu0
      %v2779 = vadd.f32 0.0, %v2778
      %v2780 = vpop.f32.mrb[0].mxu0
      %v2781 = vpop.f32.mrb[0].mxu0
      %v2782 = vadd.f32 0.0, %v2781
      %v2783 = vpop.f32.mrb[0].mxu0
      %2784 = vmatprep.mubr.bf16.mxu0 0
      %2785 = vmatmul.mubr.bf16.gmra.mrb[0].mxu0 %v2697
      %v2786 = vpop.f32.mrb[0].mxu0
      %v2787 = vadd.f32 0.0, %v2786
      %v2788 = vpop.f32.mrb[0].mxu0
      %v2789 = vpop.f32.mrb[0].mxu0
      %v2790 = vadd.f32 0.0, %v2789
      %v2791 = vpop.f32.mrb[0].mxu0
      %2792 = vmatprep.mubr.bf16.mxu0 0
      %2793 = vmatmul.mubr.bf16.gmra.mrb[0].mxu0 %v2700
      %v2794 = vpop.f32.mrb[0].mxu0
      %v2795 = vadd.f32 0.0, %v2794
      %v2796 = vpop.f32.mrb[0].mxu0
      %v2797 = vpop.f32.mrb[0].mxu0
      %v2798 = vadd.f32 0.0, %v2797
      %v2799 = vpop.f32.mrb[0].mxu0
      %2800 = vmatprep.mubr.bf16.mxu0 0
      %2801 = vmatmul.mubr.bf16.gmra.mrb[0].mxu0 %v2703
      %v2802 = vpop.f32.mrb[0].mxu0
      %v2803 = vadd.f32 0.0, %v2802
      %v2804 = vpop.f32.mrb[0].mxu0
      %v2805 = vpop.f32.mrb[0].mxu0
      %v2806 = vadd.f32 0.0, %v2805
      %v2807 = vpop.f32.mrb[0].mxu0
      %2808 = vmatprep.mubr.bf16.mxu0 0
      %2809 = vmatmul.mubr.bf16.gmra.mrb[0].mxu0 %v2706
      %v2810 = vpop.f32.mrb[0].mxu0
      %v2811 = vadd.f32 0.0, %v2810
      %v2812 = vpop.f32.mrb[0].mxu0
      %v2813 = vpop.f32.mrb[0].mxu0
      %v2814 = vadd.f32 0.0, %v2813
      %v2815 = vpop.f32.mrb[0].mxu0
      %2816 = vmatprep.mubr.bf16.mxu0 0
      %2817 = vmatmul.mubr.bf16.gmra.mrb[0].mxu0 %v2709
      %v2818 = vpop.f32.mrb[0].mxu0
      %v2819 = vadd.f32 0.0, %v2818
      %v2820 = vpop.f32.mrb[0].mxu0
      %v2821 = vpop.f32.mrb[0].mxu0
      %v2822 = vadd.f32 0.0, %v2821
      %v2823 = vpop.f32.mrb[0].mxu0
      %2824 = vmatprep.mubr.bf16.mxu0 0
      %2825 = vmatmul.mubr.bf16.gmra.mrb[0].mxu0 %v2712
      %v2826 = vpop.f32.mrb[0].mxu0
      %v2827 = vadd.f32 0.0, %v2826
      %v2828 = vpop.f32.mrb[0].mxu0
      %v2829 = vpop.f32.mrb[0].mxu0
      %v2830 = vadd.f32 0.0, %v2829
      %v2831 = vpop.f32.mrb[0].mxu0
      %2832 = vmatprep.mubr.bf16.mxu0 0
      %2833 = vmatmul.mubr.bf16.gmra.mrb[0].mxu0 %v2715
      %v2834 = vpop.f32.mrb[0].mxu0
      %v2835 = vadd.f32 0.0, %v2834
      %v2836 = vpop.f32.mrb[0].mxu0
      %v2837 = vpop.f32.mrb[0].mxu0
      %v2838 = vadd.f32 0.0, %v2837
      %v2839 = vpop.f32.mrb[0].mxu0
      %2840 = vmatprep.mubr.bf16.mxu0 0
      %2841 = vmatmul.mubr.bf16.gmra.mrb[0].mxu0 %v2718
      %v2842 = vpop.f32.mrb[0].mxu0
      %v2843 = vadd.f32 0.0, %v2842
      %v2844 = vpop.f32.mrb[0].mxu0
      %v2845 = vpop.f32.mrb[0].mxu0
      %v2846 = vadd.f32 0.0, %v2845
      %v2847 = vpop.f32.mrb[0].mxu0
      %2848 = vmatprep.mubr.bf16.mxu0 0
      %2849 = vmatmul.mubr.bf16.gmra.mrb[0].mxu0 %v2721
      %v2850 = vpop.f32.mrb[0].mxu0
      %v2851 = vadd.f32 0.0, %v2850
      %v2852 = vpop.f32.mrb[0].mxu0
      %v2853 = vpop.f32.mrb[0].mxu0
      %v2854 = vadd.f32 0.0, %v2853
      %v2855 = vpop.f32.mrb[0].mxu0
      %2856 = vmatprep.mubr.bf16.mxu0 0
      %2857 = vmatmul.mubr.bf16.gmra.mrb[0].mxu0 %v2724
      %v2858 = vpop.f32.mrb[0].mxu0
      %v2859 = vadd.f32 0.0, %v2858
      %v2860 = vpop.f32.mrb[0].mxu0
      %v2861 = vpop.f32.mrb[0].mxu0
      %v2862 = vadd.f32 0.0, %v2861
      %v2863 = vpop.f32.mrb[0].mxu0
      %2864 = vmatprep.mubr.bf16.mxu0 0
      %2865 = vmatmul.mubr.bf16.gmra.mrb[0].mxu0 %v2727
      %v2866 = vpop.f32.mrb[0].mxu0
      %v2867 = vadd.f32 0.0, %v2866
      %v2868 = vpop.f32.mrb[0].mxu0
      %v2869 = vpop.f32.mrb[0].mxu0
      %v2870 = vadd.f32 0.0, %v2869
      %v2871 = vpop.f32.mrb[0].mxu0
      %2872 = vmatprep.mubr.bf16.mxu0 0
      %2873 = vmatmul.mubr.bf16.gmra.mrb[0].mxu0 %v2730
      %v2874 = vpop.f32.mrb[0].mxu0
      %v2875 = vadd.f32 0.0, %v2874
      %v2876 = vpop.f32.mrb[0].mxu0
      %v2877 = vpop.f32.mrb[0].mxu0
      %v2878 = vadd.f32 0.0, %v2877
      %v2879 = vpop.f32.mrb[0].mxu0
      %2880 = vmatprep.mubr.bf16.mxu0 0
      %2881 = vmatmul.mubr.bf16.gmra.mrb[0].mxu0 %v2733
      %v2882 = vpop.f32.mrb[0].mxu0
      %v2883 = vadd.f32 0.0, %v2882
      %v2884 = vpop.f32.mrb[0].mxu0
      %v2885 = vpop.f32.mrb[0].mxu0
      %v2886 = vadd.f32 0.0, %v2885
      %v2887 = vpop.f32.mrb[0].mxu0
      %2888 = vmatprep.mubr.bf16.mxu0 0
      %2889 = vmatmul.mubr.bf16.gmra.mrb[0].mxu0 %v2736
      %v2890 = vpop.f32.mrb[0].mxu0
      %v2891 = vadd.f32 0.0, %v2890
      %v2892 = vpop.f32.mrb[0].mxu0
      %v2893 = vpop.f32.mrb[0].mxu0
      %v2894 = vadd.f32 0.0, %v2893
      %v2895 = vpop.f32.mrb[0].mxu0
      %2896 = vmatprep.mubr.bf16.mxu0 0
      %2897 = vmatmul.mubr.bf16.gmra.mrb[0].mxu0 %v2739
      %v2898 = vpop.f32.mrb[0].mxu0
      %v2899 = vadd.f32 0.0, %v2898
      %v2900 = vpop.f32.mrb[0].mxu0
      %v2901 = vpop.f32.mrb[0].mxu0
      %v2902 = vadd.f32 0.0, %v2901
      %v2903 = vpop.f32.mrb[0].mxu0
      %2904 = vdwg.mxu0
      %v2905 = vadd.f32 %v2643, %v2779
      %v2906 = vadd.f32 %v2644, %v2782
      %v2907 = vadd.f32 %v2645, %v2787
      %v2908 = vadd.f32 %v2646, %v2790
      %v2909 = vadd.f32 %v2647, %v2795
      %v2910 = vadd.f32 %v2648, %v2798
      %v2911 = vadd.f32 %v2649, %v2803
      %v2912 = vadd.f32 %v2650, %v2806
      %v2913 = vadd.f32 %v2651, %v2811
      %v2914 = vadd.f32 %v2652, %v2814
      %v2915 = vadd.f32 %v2653, %v2819
      %v2916 = vadd.f32 %v2654, %v2822
      %v2917 = vadd.f32 %v2655, %v2827
      %v2918 = vadd.f32 %v2656, %v2830
      %v2919 = vadd.f32 %v2657, %v2835
      %v2920 = vadd.f32 %v2658, %v2838
      %v2921 = vadd.f32 %v2659, %v2843
      %v2922 = vadd.f32 %v2660, %v2846
      %v2923 = vadd.f32 %v2661, %v2851
      %v2924 = vadd.f32 %v2662, %v2854
      %v2925 = vadd.f32 %v2663, %v2859
      %v2926 = vadd.f32 %v2664, %v2862
      %v2927 = vadd.f32 %v2665, %v2867
      %v2928 = vadd.f32 %v2666, %v2870
      %v2929 = vadd.f32 %v2667, %v2875
      %v2930 = vadd.f32 %v2668, %v2878
      %v2931 = vadd.f32 %v2669, %v2883
      %v2932 = vadd.f32 %v2670, %v2886
      %v2933 = vadd.f32 %v2671, %v2891
      %v2934 = vadd.f32 %v2672, %v2894
      %v2935 = vadd.f32 %v2673, %v2899
      %v2936 = vadd.f32 %v2674, %v2902
      %2937 = vst.msk [vmem:[#allocation3] sm:$0xff] %vm397, %v2905
      %2938 = vst.msk [vmem:[#allocation3 + $0x8] sm:$0xff] %vm397, %v2906
      %2939 = vst.msk [vmem:[#allocation3 + $0x10] sm:$0xff] %vm397, %v2907
      %2940 = vst.msk [vmem:[#allocation3 + $0x18] sm:$0xff] %vm397, %v2908
      %2941 = vst.msk [vmem:[#allocation3 + $0x20] sm:$0xff] %vm397, %v2909
      %2942 = vst.msk [vmem:[#allocation3 + $0x28] sm:$0xff] %vm397, %v2910
      %2943 = vst.msk [vmem:[#allocation3 + $0x30] sm:$0xff] %vm397, %v2911
      %2944 = vst.msk [vmem:[#allocation3 + $0x38] sm:$0xff] %vm397, %v2912
      %2945 = vst.msk [vmem:[#allocation3 + $0x40] sm:$0xff] %vm397, %v2913
      %2946 = vst.msk [vmem:[#allocation3 + $0x48] sm:$0xff] %vm397, %v2914
      %2947 = vst.msk [vmem:[#allocation3 + $0x50] sm:$0xff] %vm397, %v2915
      %2948 = vst.msk [vmem:[#allocation3 + $0x58] sm:$0xff] %vm397, %v2916
      %2949 = vst.msk [vmem:[#allocation3 + $0x60] sm:$0xff] %vm397, %v2917
      %2950 = vst.msk [vmem:[#allocation3 + $0x68] sm:$0xff] %vm397, %v2918
      %2951 = vst.msk [vmem:[#allocation3 + $0x70] sm:$0xff] %vm397, %v2919
      %2952 = vst.msk [vmem:[#allocation3 + $0x78] sm:$0xff] %vm397, %v2920
      %2953 = vst.msk [vmem:[#allocation3 + $0x80] sm:$0xff] %vm397, %v2921
      %2954 = vst.msk [vmem:[#allocation3 + $0x88] sm:$0xff] %vm397, %v2922
      %2955 = vst.msk [vmem:[#allocation3 + $0x90] sm:$0xff] %vm397, %v2923
      %2956 = vst.msk [vmem:[#allocation3 + $0x98] sm:$0xff] %vm397, %v2924
      %2957 = vst.msk [vmem:[#allocation3 + $0xa0] sm:$0xff] %vm397, %v2925
      %2958 = vst.msk [vmem:[#allocation3 + $0xa8] sm:$0xff] %vm397, %v2926
      %2959 = vst.msk [vmem:[#allocation3 + $0xb0] sm:$0xff] %vm397, %v2927
      %2960 = vst.msk [vmem:[#allocation3 + $0xb8] sm:$0xff] %vm397, %v2928
      %2961 = vst.msk [vmem:[#allocation3 + $0xc0] sm:$0xff] %vm397, %v2929
      %2962 = vst.msk [vmem:[#allocation3 + $0xc8] sm:$0xff] %vm397, %v2930
      %2963 = vst.msk [vmem:[#allocation3 + $0xd0] sm:$0xff] %vm397, %v2931
      %2964 = vst.msk [vmem:[#allocation3 + $0xd8] sm:$0xff] %vm397, %v2932
      %2965 = vst.msk [vmem:[#allocation3 + $0xe0] sm:$0xff] %vm397, %v2933
      %2966 = vst.msk [vmem:[#allocation3 + $0xe8] sm:$0xff] %vm397, %v2934
      %2967 = vst.msk [vmem:[#allocation3 + $0xf0] sm:$0xff] %vm397, %v2935
      %2968 = vst.msk [vmem:[#allocation3 + $0xf8] sm:$0xff] %vm397, %v2936
      %v2969 = vld [vmem:[%s2610 + $0x1] sm:$0xff]
      %v2970 = vld [vmem:[%s2610 + $0x9] sm:$0xff]
      %v2971 = vld [vmem:[%s2610 + $0x19] sm:$0xff]
      %v2972 = vld [vmem:[%s2610 + $0x21] sm:$0xff]
      %v2973 = vld [vmem:[%s2610 + $0x31] sm:$0xff]
      %v2974 = vld [vmem:[%s2610 + $0x39] sm:$0xff]
      %v2975 = vld [vmem:[%s2610 + $0x49] sm:$0xff]
      %v2976 = vld [vmem:[%s2610 + $0x51] sm:$0xff]
      %v2977 = vld [vmem:[%s2610 + $0x61] sm:$0xff]
      %v2978 = vld [vmem:[%s2610 + $0x69] sm:$0xff]
      %v2979 = vld [vmem:[%s2610 + $0x79] sm:$0xff]
      %v2980 = vld [vmem:[%s2610 + $0x81] sm:$0xff]
      %v2981 = vld [vmem:[%s2610 + $0x91] sm:$0xff]
      %v2982 = vld [vmem:[%s2610 + $0x99] sm:$0xff]
      %v2983 = vld [vmem:[%s2610 + $0xa9] sm:$0xff]
      %v2984 = vld [vmem:[%s2610 + $0xb1] sm:$0xff]
      %v2985 = vld [vmem:[%s2610 + $0xc1] sm:$0xff]
      %v2986 = vld [vmem:[%s2610 + $0xc9] sm:$0xff]
      %v2987 = vld [vmem:[%s2610 + $0xd9] sm:$0xff]
      %v2988 = vld [vmem:[%s2610 + $0xe1] sm:$0xff]
      %v2989 = vld [vmem:[%s2610 + $0xf1] sm:$0xff]
      %v2990 = vld [vmem:[%s2610 + $0xf9] sm:$0xff]
      %v2991 = vld [vmem:[%s2610 + $0x109] sm:$0xff]
      %v2992 = vld [vmem:[%s2610 + $0x111] sm:$0xff]
      %v2993 = vld [vmem:[%s2610 + $0x121] sm:$0xff]
      %v2994 = vld [vmem:[%s2610 + $0x129] sm:$0xff]
      %v2995 = vld [vmem:[%s2610 + $0x139] sm:$0xff]
      %v2996 = vld [vmem:[%s2610 + $0x141] sm:$0xff]
      %v2997 = vld [vmem:[%s2610 + $0x151] sm:$0xff]
      %v2998 = vld [vmem:[%s2610 + $0x159] sm:$0xff]
      %v2999 = vld [vmem:[%s2610 + $0x169] sm:$0xff]
      %v3000 = vld [vmem:[%s2610 + $0x171] sm:$0xff]
      %v3001 = vld [vmem:[#allocation3] sm:$0xff]
      %v3002 = vld [vmem:[#allocation3 + $0x8] sm:$0xff]
      %v3003 = vld [vmem:[#allocation3 + $0x10] sm:$0xff]
      %v3004 = vld [vmem:[#allocation3 + $0x18] sm:$0xff]
      %v3005 = vld [vmem:[#allocation3 + $0x20] sm:$0xff]
      %v3006 = vld [vmem:[#allocation3 + $0x28] sm:$0xff]
      %v3007 = vld [vmem:[#allocation3 + $0x30] sm:$0xff]
      %v3008 = vld [vmem:[#allocation3 + $0x38] sm:$0xff]
      %v3009 = vld [vmem:[#allocation3 + $0x40] sm:$0xff]
      %v3010 = vld [vmem:[#allocation3 + $0x48] sm:$0xff]
      %v3011 = vld [vmem:[#allocation3 + $0x50] sm:$0xff]
      %v3012 = vld [vmem:[#allocation3 + $0x58] sm:$0xff]
      %v3013 = vld [vmem:[#allocation3 + $0x60] sm:$0xff]
      %v3014 = vld [vmem:[#allocation3 + $0x68] sm:$0xff]
      %v3015 = vld [vmem:[#allocation3 + $0x70] sm:$0xff]
      %v3016 = vld [vmem:[#allocation3 + $0x78] sm:$0xff]
      %v3017 = vld [vmem:[#allocation3 + $0x80] sm:$0xff]
      %v3018 = vld [vmem:[#allocation3 + $0x88] sm:$0xff]
      %v3019 = vld [vmem:[#allocation3 + $0x90] sm:$0xff]
      %v3020 = vld [vmem:[#allocation3 + $0x98] sm:$0xff]
      %v3021 = vld [vmem:[#allocation3 + $0xa0] sm:$0xff]
      %v3022 = vld [vmem:[#allocation3 + $0xa8] sm:$0xff]
      %v3023 = vld [vmem:[#allocation3 + $0xb0] sm:$0xff]
      %v3024 = vld [vmem:[#allocation3 + $0xb8] sm:$0xff]
      %v3025 = vld [vmem:[#allocation3 + $0xc0] sm:$0xff]
      %v3026 = vld [vmem:[#allocation3 + $0xc8] sm:$0xff]
      %v3027 = vld [vmem:[#allocation3 + $0xd0] sm:$0xff]
      %v3028 = vld [vmem:[#allocation3 + $0xd8] sm:$0xff]
      %v3029 = vld [vmem:[#allocation3 + $0xe0] sm:$0xff]
      %v3030 = vld [vmem:[#allocation3 + $0xe8] sm:$0xff]
      %v3031 = vld [vmem:[#allocation3 + $0xf0] sm:$0xff]
      %v3032 = vld [vmem:[#allocation3 + $0xf8] sm:$0xff]
      %v3033 = vpack.c.bf16 %v2970, %v2969
      %v3034 = vpack.c.bf16 %v2972, %v2971
      %v3035 = vpack.c.bf16 %v2974, %v2973
      %v3036 = vpack.c.bf16 %v2976, %v2975
      %v3037 = vpack.c.bf16 %v2978, %v2977
      %v3038 = vpack.c.bf16 %v2980, %v2979
      %v3039 = vpack.c.bf16 %v2982, %v2981
      %v3040 = vpack.c.bf16 %v2984, %v2983
      %v3041 = vpack.c.bf16 %v2986, %v2985
      %v3042 = vpack.c.bf16 %v2988, %v2987
      %v3043 = vpack.c.bf16 %v2990, %v2989
      %v3044 = vpack.c.bf16 %v2992, %v2991
      %v3045 = vpack.c.bf16 %v2994, %v2993
      %v3046 = vpack.c.bf16 %v2996, %v2995
      %v3047 = vpack.c.bf16 %v2998, %v2997
      %v3048 = vpack.c.bf16 %v3000, %v2999
      %s3049 = scalar_lea.vmem %s2, 14
      %v3050 = vld [vmem:[%s3049] sm:$0x3]
      %v3052 = vsel %vm397, %v3033, 0
      %v3055 = vsel %vm397, %v3034, 0
      %v3058 = vsel %vm397, %v3035, 0
      %v3061 = vsel %vm397, %v3036, 0
      %v3064 = vsel %vm397, %v3037, 0
      %v3067 = vsel %vm397, %v3038, 0
      %v3070 = vsel %vm397, %v3039, 0
      %v3073 = vsel %vm397, %v3040, 0
      %v3076 = vsel %vm397, %v3041, 0
      %v3079 = vsel %vm397, %v3042, 0
      %v3082 = vsel %vm397, %v3043, 0
      %v3085 = vsel %vm397, %v3044, 0
      %v3088 = vsel %vm397, %v3045, 0
      %v3091 = vsel %vm397, %v3046, 0
      %v3094 = vsel %vm397, %v3047, 0
      %v3097 = vsel %vm397, %v3048, 0
      %v3100 = vsel %vm591, %v3050, 0
      %3102 = vmatprep.subr.bf16.mxu0 0
      %3103 = vmatpush1.bf16.msra.mxu0 %v3100
      %3104 = vmatprep.subr.bf16.mxu0 0
      %3105 = vmatpush1.bf16.msra.mxu0 0
      %3106 = vmatprep.subr.bf16.mxu0 0
      %3107 = vmatpush1.bf16.msra.mxu0 0
      %3108 = vmatprep.subr.bf16.mxu0 0
      %3109 = vmatpush1.bf16.msra.mxu0 0
      %3110 = vmatprep.subr.bf16.mxu0 0
      %3111 = vmatpush1.bf16.msra.mxu0 0
      %3112 = vmatprep.subr.bf16.mxu0 0
      %3113 = vmatpush1.bf16.msra.mxu0 0
      %3114 = vmatprep.subr.bf16.mxu0 0
      %3115 = vmatpush1.bf16.msra.mxu0 0
      %3116 = vmatprep.subr.bf16.mxu0 0
      %3117 = vmatpush1.bf16.msra.mxu0 0
      %3118 = vmatprep.subr.bf16.mxu0 0
      %3119 = vmatpush1.bf16.msra.mxu0 0
      %3120 = vmatprep.subr.bf16.mxu0 0
      %3121 = vmatpush1.bf16.msra.mxu0 0
      %3122 = vmatprep.subr.bf16.mxu0 0
      %3123 = vmatpush1.bf16.msra.mxu0 0
      %3124 = vmatprep.subr.bf16.mxu0 0
      %3125 = vmatpush1.bf16.msra.mxu0 0
      %3126 = vmatprep.subr.bf16.mxu0 0
      %3127 = vmatpush1.bf16.msra.mxu0 0
      %3128 = vmatprep.subr.bf16.mxu0 0
      %3129 = vmatpush1.bf16.msra.mxu0 0
      %3130 = vmatprep.subr.bf16.mxu0 0
      %3131 = vmatpush1.bf16.msra.mxu0 0
      %3132 = vmatprep.subr.bf16.mxu0 0
      %3133 = vmatpush1.bf16.msra.mxu0 0
      %3134 = vmatprep.mubr.bf16.mxu0 0
      %3135 = vmatmul.mubr.bf16.gmra.mrb[0].mxu0 %v3052
      %v3136 = vpop.f32.mrb[0].mxu0
      %v3137 = vadd.f32 0.0, %v3136
      %v3138 = vpop.f32.mrb[0].mxu0
      %v3139 = vpop.f32.mrb[0].mxu0
      %v3140 = vadd.f32 0.0, %v3139
      %v3141 = vpop.f32.mrb[0].mxu0
      %3142 = vmatprep.mubr.bf16.mxu0 0
      %3143 = vmatmul.mubr.bf16.gmra.mrb[0].mxu0 %v3055
      %v3144 = vpop.f32.mrb[0].mxu0
      %v3145 = vadd.f32 0.0, %v3144
      %v3146 = vpop.f32.mrb[0].mxu0
      %v3147 = vpop.f32.mrb[0].mxu0
      %v3148 = vadd.f32 0.0, %v3147
      %v3149 = vpop.f32.mrb[0].mxu0
      %3150 = vmatprep.mubr.bf16.mxu0 0
      %3151 = vmatmul.mubr.bf16.gmra.mrb[0].mxu0 %v3058
      %v3152 = vpop.f32.mrb[0].mxu0
      %v3153 = vadd.f32 0.0, %v3152
      %v3154 = vpop.f32.mrb[0].mxu0
      %v3155 = vpop.f32.mrb[0].mxu0
      %v3156 = vadd.f32 0.0, %v3155
      %v3157 = vpop.f32.mrb[0].mxu0
      %3158 = vmatprep.mubr.bf16.mxu0 0
      %3159 = vmatmul.mubr.bf16.gmra.mrb[0].mxu0 %v3061
      %v3160 = vpop.f32.mrb[0].mxu0
      %v3161 = vadd.f32 0.0, %v3160
      %v3162 = vpop.f32.mrb[0].mxu0
      %v3163 = vpop.f32.mrb[0].mxu0
      %v3164 = vadd.f32 0.0, %v3163
      %v3165 = vpop.f32.mrb[0].mxu0
      %3166 = vmatprep.mubr.bf16.mxu0 0
      %3167 = vmatmul.mubr.bf16.gmra.mrb[0].mxu0 %v3064
      %v3168 = vpop.f32.mrb[0].mxu0
      %v3169 = vadd.f32 0.0, %v3168
      %v3170 = vpop.f32.mrb[0].mxu0
      %v3171 = vpop.f32.mrb[0].mxu0
      %v3172 = vadd.f32 0.0, %v3171
      %v3173 = vpop.f32.mrb[0].mxu0
      %3174 = vmatprep.mubr.bf16.mxu0 0
      %3175 = vmatmul.mubr.bf16.gmra.mrb[0].mxu0 %v3067
      %v3176 = vpop.f32.mrb[0].mxu0
      %v3177 = vadd.f32 0.0, %v3176
      %v3178 = vpop.f32.mrb[0].mxu0
      %v3179 = vpop.f32.mrb[0].mxu0
      %v3180 = vadd.f32 0.0, %v3179
      %v3181 = vpop.f32.mrb[0].mxu0
      %3182 = vmatprep.mubr.bf16.mxu0 0
      %3183 = vmatmul.mubr.bf16.gmra.mrb[0].mxu0 %v3070
      %v3184 = vpop.f32.mrb[0].mxu0
      %v3185 = vadd.f32 0.0, %v3184
      %v3186 = vpop.f32.mrb[0].mxu0
      %v3187 = vpop.f32.mrb[0].mxu0
      %v3188 = vadd.f32 0.0, %v3187
      %v3189 = vpop.f32.mrb[0].mxu0
      %3190 = vmatprep.mubr.bf16.mxu0 0
      %3191 = vmatmul.mubr.bf16.gmra.mrb[0].mxu0 %v3073
      %v3192 = vpop.f32.mrb[0].mxu0
      %v3193 = vadd.f32 0.0, %v3192
      %v3194 = vpop.f32.mrb[0].mxu0
      %v3195 = vpop.f32.mrb[0].mxu0
      %v3196 = vadd.f32 0.0, %v3195
      %v3197 = vpop.f32.mrb[0].mxu0
      %3198 = vmatprep.mubr.bf16.mxu0 0
      %3199 = vmatmul.mubr.bf16.gmra.mrb[0].mxu0 %v3076
      %v3200 = vpop.f32.mrb[0].mxu0
      %v3201 = vadd.f32 0.0, %v3200
      %v3202 = vpop.f32.mrb[0].mxu0
      %v3203 = vpop.f32.mrb[0].mxu0
      %v3204 = vadd.f32 0.0, %v3203
      %v3205 = vpop.f32.mrb[0].mxu0
      %3206 = vmatprep.mubr.bf16.mxu0 0
      %3207 = vmatmul.mubr.bf16.gmra.mrb[0].mxu0 %v3079
      %v3208 = vpop.f32.mrb[0].mxu0
      %v3209 = vadd.f32 0.0, %v3208
      %v3210 = vpop.f32.mrb[0].mxu0
      %v3211 = vpop.f32.mrb[0].mxu0
      %v3212 = vadd.f32 0.0, %v3211
      %v3213 = vpop.f32.mrb[0].mxu0
      %3214 = vmatprep.mubr.bf16.mxu0 0
      %3215 = vmatmul.mubr.bf16.gmra.mrb[0].mxu0 %v3082
      %v3216 = vpop.f32.mrb[0].mxu0
      %v3217 = vadd.f32 0.0, %v3216
      %v3218 = vpop.f32.mrb[0].mxu0
      %v3219 = vpop.f32.mrb[0].mxu0
      %v3220 = vadd.f32 0.0, %v3219
      %v3221 = vpop.f32.mrb[0].mxu0
      %3222 = vmatprep.mubr.bf16.mxu0 0
      %3223 = vmatmul.mubr.bf16.gmra.mrb[0].mxu0 %v3085
      %v3224 = vpop.f32.mrb[0].mxu0
      %v3225 = vadd.f32 0.0, %v3224
      %v3226 = vpop.f32.mrb[0].mxu0
      %v3227 = vpop.f32.mrb[0].mxu0
      %v3228 = vadd.f32 0.0, %v3227
      %v3229 = vpop.f32.mrb[0].mxu0
      %3230 = vmatprep.mubr.bf16.mxu0 0
      %3231 = vmatmul.mubr.bf16.gmra.mrb[0].mxu0 %v3088
      %v3232 = vpop.f32.mrb[0].mxu0
      %v3233 = vadd.f32 0.0, %v3232
      %v3234 = vpop.f32.mrb[0].mxu0
      %v3235 = vpop.f32.mrb[0].mxu0
      %v3236 = vadd.f32 0.0, %v3235
      %v3237 = vpop.f32.mrb[0].mxu0
      %3238 = vmatprep.mubr.bf16.mxu0 0
      %3239 = vmatmul.mubr.bf16.gmra.mrb[0].mxu0 %v3091
      %v3240 = vpop.f32.mrb[0].mxu0
      %v3241 = vadd.f32 0.0, %v3240
      %v3242 = vpop.f32.mrb[0].mxu0
      %v3243 = vpop.f32.mrb[0].mxu0
      %v3244 = vadd.f32 0.0, %v3243
      %v3245 = vpop.f32.mrb[0].mxu0
      %3246 = vmatprep.mubr.bf16.mxu0 0
      %3247 = vmatmul.mubr.bf16.gmra.mrb[0].mxu0 %v3094
      %v3248 = vpop.f32.mrb[0].mxu0
      %v3249 = vadd.f32 0.0, %v3248
      %v3250 = vpop.f32.mrb[0].mxu0
      %v3251 = vpop.f32.mrb[0].mxu0
      %v3252 = vadd.f32 0.0, %v3251
      %v3253 = vpop.f32.mrb[0].mxu0
      %3254 = vmatprep.mubr.bf16.mxu0 0
      %3255 = vmatmul.mubr.bf16.gmra.mrb[0].mxu0 %v3097
      %v3256 = vpop.f32.mrb[0].mxu0
      %v3257 = vadd.f32 0.0, %v3256
      %v3258 = vpop.f32.mrb[0].mxu0
      %v3259 = vpop.f32.mrb[0].mxu0
      %v3260 = vadd.f32 0.0, %v3259
      %v3261 = vpop.f32.mrb[0].mxu0
      %3262 = vdwg.mxu0
      %v3263 = vadd.f32 %v3001, %v3137
      %v3264 = vadd.f32 %v3002, %v3140
      %v3265 = vadd.f32 %v3003, %v3145
      %v3266 = vadd.f32 %v3004, %v3148
      %v3267 = vadd.f32 %v3005, %v3153
      %v3268 = vadd.f32 %v3006, %v3156
      %v3269 = vadd.f32 %v3007, %v3161
      %v3270 = vadd.f32 %v3008, %v3164
      %v3271 = vadd.f32 %v3009, %v3169
      %v3272 = vadd.f32 %v3010, %v3172
      %v3273 = vadd.f32 %v3011, %v3177
      %v3274 = vadd.f32 %v3012, %v3180
      %v3275 = vadd.f32 %v3013, %v3185
      %v3276 = vadd.f32 %v3014, %v3188
      %v3277 = vadd.f32 %v3015, %v3193
      %v3278 = vadd.f32 %v3016, %v3196
      %v3279 = vadd.f32 %v3017, %v3201
      %v3280 = vadd.f32 %v3018, %v3204
      %v3281 = vadd.f32 %v3019, %v3209
      %v3282 = vadd.f32 %v3020, %v3212
      %v3283 = vadd.f32 %v3021, %v3217
      %v3284 = vadd.f32 %v3022, %v3220
      %v3285 = vadd.f32 %v3023, %v3225
      %v3286 = vadd.f32 %v3024, %v3228
      %v3287 = vadd.f32 %v3025, %v3233
      %v3288 = vadd.f32 %v3026, %v3236
      %v3289 = vadd.f32 %v3027, %v3241
      %v3290 = vadd.f32 %v3028, %v3244
      %v3291 = vadd.f32 %v3029, %v3249
      %v3292 = vadd.f32 %v3030, %v3252
      %v3293 = vadd.f32 %v3031, %v3257
      %v3294 = vadd.f32 %v3032, %v3260
      %3295 = vst.msk [vmem:[#allocation3] sm:$0xff] %vm397, %v3263
      %3296 = vst.msk [vmem:[#allocation3 + $0x8] sm:$0xff] %vm397, %v3264
      %3297 = vst.msk [vmem:[#allocation3 + $0x10] sm:$0xff] %vm397, %v3265
      %3298 = vst.msk [vmem:[#allocation3 + $0x18] sm:$0xff] %vm397, %v3266
      %3299 = vst.msk [vmem:[#allocation3 + $0x20] sm:$0xff] %vm397, %v3267
      %3300 = vst.msk [vmem:[#allocation3 + $0x28] sm:$0xff] %vm397, %v3268
      %3301 = vst.msk [vmem:[#allocation3 + $0x30] sm:$0xff] %vm397, %v3269
      %3302 = vst.msk [vmem:[#allocation3 + $0x38] sm:$0xff] %vm397, %v3270
      %3303 = vst.msk [vmem:[#allocation3 + $0x40] sm:$0xff] %vm397, %v3271
      %3304 = vst.msk [vmem:[#allocation3 + $0x48] sm:$0xff] %vm397, %v3272
      %3305 = vst.msk [vmem:[#allocation3 + $0x50] sm:$0xff] %vm397, %v3273
      %3306 = vst.msk [vmem:[#allocation3 + $0x58] sm:$0xff] %vm397, %v3274
      %3307 = vst.msk [vmem:[#allocation3 + $0x60] sm:$0xff] %vm397, %v3275
      %3308 = vst.msk [vmem:[#allocation3 + $0x68] sm:$0xff] %vm397, %v3276
      %3309 = vst.msk [vmem:[#allocation3 + $0x70] sm:$0xff] %vm397, %v3277
      %3310 = vst.msk [vmem:[#allocation3 + $0x78] sm:$0xff] %vm397, %v3278
      %3311 = vst.msk [vmem:[#allocation3 + $0x80] sm:$0xff] %vm397, %v3279
      %3312 = vst.msk [vmem:[#allocation3 + $0x88] sm:$0xff] %vm397, %v3280
      %3313 = vst.msk [vmem:[#allocation3 + $0x90] sm:$0xff] %vm397, %v3281
      %3314 = vst.msk [vmem:[#allocation3 + $0x98] sm:$0xff] %vm397, %v3282
      %3315 = vst.msk [vmem:[#allocation3 + $0xa0] sm:$0xff] %vm397, %v3283
      %3316 = vst.msk [vmem:[#allocation3 + $0xa8] sm:$0xff] %vm397, %v3284
      %3317 = vst.msk [vmem:[#allocation3 + $0xb0] sm:$0xff] %vm397, %v3285
      %3318 = vst.msk [vmem:[#allocation3 + $0xb8] sm:$0xff] %vm397, %v3286
      %3319 = vst.msk [vmem:[#allocation3 + $0xc0] sm:$0xff] %vm397, %v3287
      %3320 = vst.msk [vmem:[#allocation3 + $0xc8] sm:$0xff] %vm397, %v3288
      %3321 = vst.msk [vmem:[#allocation3 + $0xd0] sm:$0xff] %vm397, %v3289
      %3322 = vst.msk [vmem:[#allocation3 + $0xd8] sm:$0xff] %vm397, %v3290
      %3323 = vst.msk [vmem:[#allocation3 + $0xe0] sm:$0xff] %vm397, %v3291
      %3324 = vst.msk [vmem:[#allocation3 + $0xe8] sm:$0xff] %vm397, %v3292
      %3325 = vst.msk [vmem:[#allocation3 + $0xf0] sm:$0xff] %vm397, %v3293
      %3326 = vst.msk [vmem:[#allocation3 + $0xf8] sm:$0xff] %vm397, %v3294
      %v3327 = vld [vmem:[%s2610 + $0x2] sm:$0xff]
      %v3328 = vld [vmem:[%s2610 + $0xa] sm:$0xff]
      %v3329 = vld [vmem:[%s2610 + $0x1a] sm:$0xff]
      %v3330 = vld [vmem:[%s2610 + $0x22] sm:$0xff]
      %v3331 = vld [vmem:[%s2610 + $0x32] sm:$0xff]
      %v3332 = vld [vmem:[%s2610 + $0x3a] sm:$0xff]
      %v3333 = vld [vmem:[%s2610 + $0x4a] sm:$0xff]
      %v3334 = vld [vmem:[%s2610 + $0x52] sm:$0xff]
      %v3335 = vld [vmem:[%s2610 + $0x62] sm:$0xff]
      %v3336 = vld [vmem:[%s2610 + $0x6a] sm:$0xff]
      %v3337 = vld [vmem:[%s2610 + $0x7a] sm:$0xff]
      %v3338 = vld [vmem:[%s2610 + $0x82] sm:$0xff]
      %v3339 = vld [vmem:[%s2610 + $0x92] sm:$0xff]
      %v3340 = vld [vmem:[%s2610 + $0x9a] sm:$0xff]
      %v3341 = vld [vmem:[%s2610 + $0xaa] sm:$0xff]
      %v3342 = vld [vmem:[%s2610 + $0xb2] sm:$0xff]
      %v3343 = vld [vmem:[%s2610 + $0xc2] sm:$0xff]
      %v3344 = vld [vmem:[%s2610 + $0xca] sm:$0xff]
      %v3345 = vld [vmem:[%s2610 + $0xda] sm:$0xff]
      %v3346 = vld [vmem:[%s2610 + $0xe2] sm:$0xff]
      %v3347 = vld [vmem:[%s2610 + $0xf2] sm:$0xff]
      %v3348 = vld [vmem:[%s2610 + $0xfa] sm:$0xff]
      %v3349 = vld [vmem:[%s2610 + $0x10a] sm:$0xff]
      %v3350 = vld [vmem:[%s2610 + $0x112] sm:$0xff]
      %v3351 = vld [vmem:[%s2610 + $0x122] sm:$0xff]
      %v3352 = vld [vmem:[%s2610 + $0x12a] sm:$0xff]
      %v3353 = vld [vmem:[%s2610 + $0x13a] sm:$0xff]
      %v3354 = vld [vmem:[%s2610 + $0x142] sm:$0xff]
      %v3355 = vld [vmem:[%s2610 + $0x152] sm:$0xff]
      %v3356 = vld [vmem:[%s2610 + $0x15a] sm:$0xff]
      %v3357 = vld [vmem:[%s2610 + $0x16a] sm:$0xff]
      %v3358 = vld [vmem:[%s2610 + $0x172] sm:$0xff]
      %v3359 = vld [vmem:[#allocation3] sm:$0xff]
      %v3360 = vld [vmem:[#allocation3 + $0x8] sm:$0xff]
      %v3361 = vld [vmem:[#allocation3 + $0x10] sm:$0xff]
      %v3362 = vld [vmem:[#allocation3 + $0x18] sm:$0xff]
      %v3363 = vld [vmem:[#allocation3 + $0x20] sm:$0xff]
      %v3364 = vld [vmem:[#allocation3 + $0x28] sm:$0xff]
      %v3365 = vld [vmem:[#allocation3 + $0x30] sm:$0xff]
      %v3366 = vld [vmem:[#allocation3 + $0x38] sm:$0xff]
      %v3367 = vld [vmem:[#allocation3 + $0x40] sm:$0xff]
      %v3368 = vld [vmem:[#allocation3 + $0x48] sm:$0xff]
      %v3369 = vld [vmem:[#allocation3 + $0x50] sm:$0xff]
      %v3370 = vld [vmem:[#allocation3 + $0x58] sm:$0xff]
      %v3371 = vld [vmem:[#allocation3 + $0x60] sm:$0xff]
      %v3372 = vld [vmem:[#allocation3 + $0x68] sm:$0xff]
      %v3373 = vld [vmem:[#allocation3 + $0x70] sm:$0xff]
      %v3374 = vld [vmem:[#allocation3 + $0x78] sm:$0xff]
      %v3375 = vld [vmem:[#allocation3 + $0x80] sm:$0xff]
      %v3376 = vld [vmem:[#allocation3 + $0x88] sm:$0xff]
      %v3377 = vld [vmem:[#allocation3 + $0x90] sm:$0xff]
      %v3378 = vld [vmem:[#allocation3 + $0x98] sm:$0xff]
      %v3379 = vld [vmem:[#allocation3 + $0xa0] sm:$0xff]
      %v3380 = vld [vmem:[#allocation3 + $0xa8] sm:$0xff]
      %v3381 = vld [vmem:[#allocation3 + $0xb0] sm:$0xff]
      %v3382 = vld [vmem:[#allocation3 + $0xb8] sm:$0xff]
      %v3383 = vld [vmem:[#allocation3 + $0xc0] sm:$0xff]
      %v3384 = vld [vmem:[#allocation3 + $0xc8] sm:$0xff]
      %v3385 = vld [vmem:[#allocation3 + $0xd0] sm:$0xff]
      %v3386 = vld [vmem:[#allocation3 + $0xd8] sm:$0xff]
      %v3387 = vld [vmem:[#allocation3 + $0xe0] sm:$0xff]
      %v3388 = vld [vmem:[#allocation3 + $0xe8] sm:$0xff]
      %v3389 = vld [vmem:[#allocation3 + $0xf0] sm:$0xff]
      %v3390 = vld [vmem:[#allocation3 + $0xf8] sm:$0xff]
      %v3391 = vpack.c.bf16 %v3328, %v3327
      %v3392 = vpack.c.bf16 %v3330, %v3329
      %v3393 = vpack.c.bf16 %v3332, %v3331
      %v3394 = vpack.c.bf16 %v3334, %v3333
      %v3395 = vpack.c.bf16 %v3336, %v3335
      %v3396 = vpack.c.bf16 %v3338, %v3337
      %v3397 = vpack.c.bf16 %v3340, %v3339
      %v3398 = vpack.c.bf16 %v3342, %v3341
      %v3399 = vpack.c.bf16 %v3344, %v3343
      %v3400 = vpack.c.bf16 %v3346, %v3345
      %v3401 = vpack.c.bf16 %v3348, %v3347
      %v3402 = vpack.c.bf16 %v3350, %v3349
      %v3403 = vpack.c.bf16 %v3352, %v3351
      %v3404 = vpack.c.bf16 %v3354, %v3353
      %v3405 = vpack.c.bf16 %v3356, %v3355
      %v3406 = vpack.c.bf16 %v3358, %v3357
      %s3407 = scalar_lea.vmem %s2, 16
      %v3408 = vld [vmem:[%s3407] sm:$0x3]
      %v3410 = vsel %vm397, %v3391, 0
      %v3413 = vsel %vm397, %v3392, 0
      %v3416 = vsel %vm397, %v3393, 0
      %v3419 = vsel %vm397, %v3394, 0
      %v3422 = vsel %vm397, %v3395, 0
      %v3425 = vsel %vm397, %v3396, 0
      %v3428 = vsel %vm397, %v3397, 0
      %v3431 = vsel %vm397, %v3398, 0
      %v3434 = vsel %vm397, %v3399, 0
      %v3437 = vsel %vm397, %v3400, 0
      %v3440 = vsel %vm397, %v3401, 0
      %v3443 = vsel %vm397, %v3402, 0
      %v3446 = vsel %vm397, %v3403, 0
      %v3449 = vsel %vm397, %v3404, 0
      %v3452 = vsel %vm397, %v3405, 0
      %v3455 = vsel %vm397, %v3406, 0
      %v3458 = vsel %vm591, %v3408, 0
      %3460 = vmatprep.subr.bf16.mxu0 0
      %3461 = vmatpush1.bf16.msra.mxu0 %v3458
      %3462 = vmatprep.subr.bf16.mxu0 0
      %3463 = vmatpush1.bf16.msra.mxu0 0
      %3464 = vmatprep.subr.bf16.mxu0 0
      %3465 = vmatpush1.bf16.msra.mxu0 0
      %3466 = vmatprep.subr.bf16.mxu0 0
      %3467 = vmatpush1.bf16.msra.mxu0 0
      %3468 = vmatprep.subr.bf16.mxu0 0
      %3469 = vmatpush1.bf16.msra.mxu0 0
      %3470 = vmatprep.subr.bf16.mxu0 0
      %3471 = vmatpush1.bf16.msra.mxu0 0
      %3472 = vmatprep.subr.bf16.mxu0 0
      %3473 = vmatpush1.bf16.msra.mxu0 0
      %3474 = vmatprep.subr.bf16.mxu0 0
      %3475 = vmatpush1.bf16.msra.mxu0 0
      %3476 = vmatprep.subr.bf16.mxu0 0
      %3477 = vmatpush1.bf16.msra.mxu0 0
      %3478 = vmatprep.subr.bf16.mxu0 0
      %3479 = vmatpush1.bf16.msra.mxu0 0
      %3480 = vmatprep.subr.bf16.mxu0 0
      %3481 = vmatpush1.bf16.msra.mxu0 0
      %3482 = vmatprep.subr.bf16.mxu0 0
      %3483 = vmatpush1.bf16.msra.mxu0 0
      %3484 = vmatprep.subr.bf16.mxu0 0
      %3485 = vmatpush1.bf16.msra.mxu0 0
      %3486 = vmatprep.subr.bf16.mxu0 0
      %3487 = vmatpush1.bf16.msra.mxu0 0
      %3488 = vmatprep.subr.bf16.mxu0 0
      %3489 = vmatpush1.bf16.msra.mxu0 0
      %3490 = vmatprep.subr.bf16.mxu0 0
      %3491 = vmatpush1.bf16.msra.mxu0 0
      %3492 = vmatprep.mubr.bf16.mxu0 0
      %3493 = vmatmul.mubr.bf16.gmra.mrb[0].mxu0 %v3410
      %v3494 = vpop.f32.mrb[0].mxu0
      %v3495 = vadd.f32 0.0, %v3494
      %v3496 = vpop.f32.mrb[0].mxu0
      %v3497 = vpop.f32.mrb[0].mxu0
      %v3498 = vadd.f32 0.0, %v3497
      %v3499 = vpop.f32.mrb[0].mxu0
      %3500 = vmatprep.mubr.bf16.mxu0 0
      %3501 = vmatmul.mubr.bf16.gmra.mrb[0].mxu0 %v3413
      %v3502 = vpop.f32.mrb[0].mxu0
      %v3503 = vadd.f32 0.0, %v3502
      %v3504 = vpop.f32.mrb[0].mxu0
      %v3505 = vpop.f32.mrb[0].mxu0
      %v3506 = vadd.f32 0.0, %v3505
      %v3507 = vpop.f32.mrb[0].mxu0
      %3508 = vmatprep.mubr.bf16.mxu0 0
      %3509 = vmatmul.mubr.bf16.gmra.mrb[0].mxu0 %v3416
      %v3510 = vpop.f32.mrb[0].mxu0
      %v3511 = vadd.f32 0.0, %v3510
      %v3512 = vpop.f32.mrb[0].mxu0
      %v3513 = vpop.f32.mrb[0].mxu0
      %v3514 = vadd.f32 0.0, %v3513
      %v3515 = vpop.f32.mrb[0].mxu0
      %3516 = vmatprep.mubr.bf16.mxu0 0
      %3517 = vmatmul.mubr.bf16.gmra.mrb[0].mxu0 %v3419
      %v3518 = vpop.f32.mrb[0].mxu0
      %v3519 = vadd.f32 0.0, %v3518
      %v3520 = vpop.f32.mrb[0].mxu0
      %v3521 = vpop.f32.mrb[0].mxu0
      %v3522 = vadd.f32 0.0, %v3521
      %v3523 = vpop.f32.mrb[0].mxu0
      %3524 = vmatprep.mubr.bf16.mxu0 0
      %3525 = vmatmul.mubr.bf16.gmra.mrb[0].mxu0 %v3422
      %v3526 = vpop.f32.mrb[0].mxu0
      %v3527 = vadd.f32 0.0, %v3526
      %v3528 = vpop.f32.mrb[0].mxu0
      %v3529 = vpop.f32.mrb[0].mxu0
      %v3530 = vadd.f32 0.0, %v3529
      %v3531 = vpop.f32.mrb[0].mxu0
      %3532 = vmatprep.mubr.bf16.mxu0 0
      %3533 = vmatmul.mubr.bf16.gmra.mrb[0].mxu0 %v3425
      %v3534 = vpop.f32.mrb[0].mxu0
      %v3535 = vadd.f32 0.0, %v3534
      %v3536 = vpop.f32.mrb[0].mxu0
      %v3537 = vpop.f32.mrb[0].mxu0
      %v3538 = vadd.f32 0.0, %v3537
      %v3539 = vpop.f32.mrb[0].mxu0
      %3540 = vmatprep.mubr.bf16.mxu0 0
      %3541 = vmatmul.mubr.bf16.gmra.mrb[0].mxu0 %v3428
      %v3542 = vpop.f32.mrb[0].mxu0
      %v3543 = vadd.f32 0.0, %v3542
      %v3544 = vpop.f32.mrb[0].mxu0
      %v3545 = vpop.f32.mrb[0].mxu0
      %v3546 = vadd.f32 0.0, %v3545
      %v3547 = vpop.f32.mrb[0].mxu0
      %3548 = vmatprep.mubr.bf16.mxu0 0
      %3549 = vmatmul.mubr.bf16.gmra.mrb[0].mxu0 %v3431
      %v3550 = vpop.f32.mrb[0].mxu0
      %v3551 = vadd.f32 0.0, %v3550
      %v3552 = vpop.f32.mrb[0].mxu0
      %v3553 = vpop.f32.mrb[0].mxu0
      %v3554 = vadd.f32 0.0, %v3553
      %v3555 = vpop.f32.mrb[0].mxu0
      %3556 = vmatprep.mubr.bf16.mxu0 0
      %3557 = vmatmul.mubr.bf16.gmra.mrb[0].mxu0 %v3434
      %v3558 = vpop.f32.mrb[0].mxu0
      %v3559 = vadd.f32 0.0, %v3558
      %v3560 = vpop.f32.mrb[0].mxu0
      %v3561 = vpop.f32.mrb[0].mxu0
      %v3562 = vadd.f32 0.0, %v3561
      %v3563 = vpop.f32.mrb[0].mxu0
      %3564 = vmatprep.mubr.bf16.mxu0 0
      %3565 = vmatmul.mubr.bf16.gmra.mrb[0].mxu0 %v3437
      %v3566 = vpop.f32.mrb[0].mxu0
      %v3567 = vadd.f32 0.0, %v3566
      %v3568 = vpop.f32.mrb[0].mxu0
      %v3569 = vpop.f32.mrb[0].mxu0
      %v3570 = vadd.f32 0.0, %v3569
      %v3571 = vpop.f32.mrb[0].mxu0
      %3572 = vmatprep.mubr.bf16.mxu0 0
      %3573 = vmatmul.mubr.bf16.gmra.mrb[0].mxu0 %v3440
      %v3574 = vpop.f32.mrb[0].mxu0
      %v3575 = vadd.f32 0.0, %v3574
      %v3576 = vpop.f32.mrb[0].mxu0
      %v3577 = vpop.f32.mrb[0].mxu0
      %v3578 = vadd.f32 0.0, %v3577
      %v3579 = vpop.f32.mrb[0].mxu0
      %3580 = vmatprep.mubr.bf16.mxu0 0
      %3581 = vmatmul.mubr.bf16.gmra.mrb[0].mxu0 %v3443
      %v3582 = vpop.f32.mrb[0].mxu0
      %v3583 = vadd.f32 0.0, %v3582
      %v3584 = vpop.f32.mrb[0].mxu0
      %v3585 = vpop.f32.mrb[0].mxu0
      %v3586 = vadd.f32 0.0, %v3585
      %v3587 = vpop.f32.mrb[0].mxu0
      %3588 = vmatprep.mubr.bf16.mxu0 0
      %3589 = vmatmul.mubr.bf16.gmra.mrb[0].mxu0 %v3446
      %v3590 = vpop.f32.mrb[0].mxu0
      %v3591 = vadd.f32 0.0, %v3590
      %v3592 = vpop.f32.mrb[0].mxu0
      %v3593 = vpop.f32.mrb[0].mxu0
      %v3594 = vadd.f32 0.0, %v3593
      %v3595 = vpop.f32.mrb[0].mxu0
      %3596 = vmatprep.mubr.bf16.mxu0 0
      %3597 = vmatmul.mubr.bf16.gmra.mrb[0].mxu0 %v3449
      %v3598 = vpop.f32.mrb[0].mxu0
      %v3599 = vadd.f32 0.0, %v3598
      %v3600 = vpop.f32.mrb[0].mxu0
      %v3601 = vpop.f32.mrb[0].mxu0
      %v3602 = vadd.f32 0.0, %v3601
      %v3603 = vpop.f32.mrb[0].mxu0
      %3604 = vmatprep.mubr.bf16.mxu0 0
      %3605 = vmatmul.mubr.bf16.gmra.mrb[0].mxu0 %v3452
      %v3606 = vpop.f32.mrb[0].mxu0
      %v3607 = vadd.f32 0.0, %v3606
      %v3608 = vpop.f32.mrb[0].mxu0
      %v3609 = vpop.f32.mrb[0].mxu0
      %v3610 = vadd.f32 0.0, %v3609
      %v3611 = vpop.f32.mrb[0].mxu0
      %3612 = vmatprep.mubr.bf16.mxu0 0
      %3613 = vmatmul.mubr.bf16.gmra.mrb[0].mxu0 %v3455
      %v3614 = vpop.f32.mrb[0].mxu0
      %v3615 = vadd.f32 0.0, %v3614
      %v3616 = vpop.f32.mrb[0].mxu0
      %v3617 = vpop.f32.mrb[0].mxu0
      %v3618 = vadd.f32 0.0, %v3617
      %v3619 = vpop.f32.mrb[0].mxu0
      %3620 = vdwg.mxu0
      %v3621 = vadd.f32 %v3359, %v3495
      %v3622 = vadd.f32 %v3360, %v3498
      %v3623 = vadd.f32 %v3361, %v3503
      %v3624 = vadd.f32 %v3362, %v3506
      %v3625 = vadd.f32 %v3363, %v3511
      %v3626 = vadd.f32 %v3364, %v3514
      %v3627 = vadd.f32 %v3365, %v3519
      %v3628 = vadd.f32 %v3366, %v3522
      %v3629 = vadd.f32 %v3367, %v3527
      %v3630 = vadd.f32 %v3368, %v3530
      %v3631 = vadd.f32 %v3369, %v3535
      %v3632 = vadd.f32 %v3370, %v3538
      %v3633 = vadd.f32 %v3371, %v3543
      %v3634 = vadd.f32 %v3372, %v3546
      %v3635 = vadd.f32 %v3373, %v3551
      %v3636 = vadd.f32 %v3374, %v3554
      %v3637 = vadd.f32 %v3375, %v3559
      %v3638 = vadd.f32 %v3376, %v3562
      %v3639 = vadd.f32 %v3377, %v3567
      %v3640 = vadd.f32 %v3378, %v3570
      %v3641 = vadd.f32 %v3379, %v3575
      %v3642 = vadd.f32 %v3380, %v3578
      %v3643 = vadd.f32 %v3381, %v3583
      %v3644 = vadd.f32 %v3382, %v3586
      %v3645 = vadd.f32 %v3383, %v3591
      %v3646 = vadd.f32 %v3384, %v3594
      %v3647 = vadd.f32 %v3385, %v3599
      %v3648 = vadd.f32 %v3386, %v3602
      %v3649 = vadd.f32 %v3387, %v3607
      %v3650 = vadd.f32 %v3388, %v3610
      %v3651 = vadd.f32 %v3389, %v3615
      %v3652 = vadd.f32 %v3390, %v3618
      %3653 = vst.msk [vmem:[#allocation3] sm:$0xff] %vm397, %v3621
      %3654 = vst.msk [vmem:[#allocation3 + $0x8] sm:$0xff] %vm397, %v3622
      %3655 = vst.msk [vmem:[#allocation3 + $0x10] sm:$0xff] %vm397, %v3623
      %3656 = vst.msk [vmem:[#allocation3 + $0x18] sm:$0xff] %vm397, %v3624
      %3657 = vst.msk [vmem:[#allocation3 + $0x20] sm:$0xff] %vm397, %v3625
      %3658 = vst.msk [vmem:[#allocation3 + $0x28] sm:$0xff] %vm397, %v3626
      %3659 = vst.msk [vmem:[#allocation3 + $0x30] sm:$0xff] %vm397, %v3627
      %3660 = vst.msk [vmem:[#allocation3 + $0x38] sm:$0xff] %vm397, %v3628
      %3661 = vst.msk [vmem:[#allocation3 + $0x40] sm:$0xff] %vm397, %v3629
      %3662 = vst.msk [vmem:[#allocation3 + $0x48] sm:$0xff] %vm397, %v3630
      %3663 = vst.msk [vmem:[#allocation3 + $0x50] sm:$0xff] %vm397, %v3631
      %3664 = vst.msk [vmem:[#allocation3 + $0x58] sm:$0xff] %vm397, %v3632
      %3665 = vst.msk [vmem:[#allocation3 + $0x60] sm:$0xff] %vm397, %v3633
      %3666 = vst.msk [vmem:[#allocation3 + $0x68] sm:$0xff] %vm397, %v3634
      %3667 = vst.msk [vmem:[#allocation3 + $0x70] sm:$0xff] %vm397, %v3635
      %3668 = vst.msk [vmem:[#allocation3 + $0x78] sm:$0xff] %vm397, %v3636
      %3669 = vst.msk [vmem:[#allocation3 + $0x80] sm:$0xff] %vm397, %v3637
      %3670 = vst.msk [vmem:[#allocation3 + $0x88] sm:$0xff] %vm397, %v3638
      %3671 = vst.msk [vmem:[#allocation3 + $0x90] sm:$0xff] %vm397, %v3639
      %3672 = vst.msk [vmem:[#allocation3 + $0x98] sm:$0xff] %vm397, %v3640
      %3673 = vst.msk [vmem:[#allocation3 + $0xa0] sm:$0xff] %vm397, %v3641
      %3674 = vst.msk [vmem:[#allocation3 + $0xa8] sm:$0xff] %vm397, %v3642
      %3675 = vst.msk [vmem:[#allocation3 + $0xb0] sm:$0xff] %vm397, %v3643
      %3676 = vst.msk [vmem:[#allocation3 + $0xb8] sm:$0xff] %vm397, %v3644
      %3677 = vst.msk [vmem:[#allocation3 + $0xc0] sm:$0xff] %vm397, %v3645
      %3678 = vst.msk [vmem:[#allocation3 + $0xc8] sm:$0xff] %vm397, %v3646
      %3679 = vst.msk [vmem:[#allocation3 + $0xd0] sm:$0xff] %vm397, %v3647
      %3680 = vst.msk [vmem:[#allocation3 + $0xd8] sm:$0xff] %vm397, %v3648
      %3681 = vst.msk [vmem:[#allocation3 + $0xe0] sm:$0xff] %vm397, %v3649
      %3682 = vst.msk [vmem:[#allocation3 + $0xe8] sm:$0xff] %vm397, %v3650
      %3683 = vst.msk [vmem:[#allocation3 + $0xf0] sm:$0xff] %vm397, %v3651
      %3684 = vst.msk [vmem:[#allocation3 + $0xf8] sm:$0xff] %vm397, %v3652
      %v3685 = vld [vmem:[#allocation3] sm:$0xff]
      %v3686 = vld [vmem:[#allocation3 + $0x8] sm:$0xff]
      %v3687 = vld [vmem:[#allocation3 + $0x10] sm:$0xff]
      %v3688 = vld [vmem:[#allocation3 + $0x18] sm:$0xff]
      %v3689 = vld [vmem:[#allocation3 + $0x20] sm:$0xff]
      %v3690 = vld [vmem:[#allocation3 + $0x28] sm:$0xff]
      %v3691 = vld [vmem:[#allocation3 + $0x30] sm:$0xff]
      %v3692 = vld [vmem:[#allocation3 + $0x38] sm:$0xff]
      %v3693 = vld [vmem:[#allocation3 + $0x40] sm:$0xff]
      %v3694 = vld [vmem:[#allocation3 + $0x48] sm:$0xff]
      %v3695 = vld [vmem:[#allocation3 + $0x50] sm:$0xff]
      %v3696 = vld [vmem:[#allocation3 + $0x58] sm:$0xff]
      %v3697 = vld [vmem:[#allocation3 + $0x60] sm:$0xff]
      %v3698 = vld [vmem:[#allocation3 + $0x68] sm:$0xff]
      %v3699 = vld [vmem:[#allocation3 + $0x70] sm:$0xff]
      %v3700 = vld [vmem:[#allocation3 + $0x78] sm:$0xff]
      %v3701 = vld [vmem:[#allocation3 + $0x80] sm:$0xff]
      %v3702 = vld [vmem:[#allocation3 + $0x88] sm:$0xff]
      %v3703 = vld [vmem:[#allocation3 + $0x90] sm:$0xff]
      %v3704 = vld [vmem:[#allocation3 + $0x98] sm:$0xff]
      %v3705 = vld [vmem:[#allocation3 + $0xa0] sm:$0xff]
      %v3706 = vld [vmem:[#allocation3 + $0xa8] sm:$0xff]
      %v3707 = vld [vmem:[#allocation3 + $0xb0] sm:$0xff]
      %v3708 = vld [vmem:[#allocation3 + $0xb8] sm:$0xff]
      %v3709 = vld [vmem:[#allocation3 + $0xc0] sm:$0xff]
      %v3710 = vld [vmem:[#allocation3 + $0xc8] sm:$0xff]
      %v3711 = vld [vmem:[#allocation3 + $0xd0] sm:$0xff]
      %v3712 = vld [vmem:[#allocation3 + $0xd8] sm:$0xff]
      %v3713 = vld [vmem:[#allocation3 + $0xe0] sm:$0xff]
      %v3714 = vld [vmem:[#allocation3 + $0xe8] sm:$0xff]
      %v3715 = vld [vmem:[#allocation3 + $0xf0] sm:$0xff]
      %v3716 = vld [vmem:[#allocation3 + $0xf8] sm:$0xff]
      %3717 = vst.msk [vmem:[%s195] sm:$0xff] %vm397, %v3685
      %3718 = vst.msk [vmem:[%s195 + $0x8] sm:$0xff] %vm397, %v3686
      %3719 = vst.msk [vmem:[%s195 + $0x10] sm:$0xff] %vm397, %v3687
      %3720 = vst.msk [vmem:[%s195 + $0x18] sm:$0xff] %vm397, %v3688
      %3721 = vst.msk [vmem:[%s195 + $0x20] sm:$0xff] %vm397, %v3689
      %3722 = vst.msk [vmem:[%s195 + $0x28] sm:$0xff] %vm397, %v3690
      %3723 = vst.msk [vmem:[%s195 + $0x30] sm:$0xff] %vm397, %v3691
      %3724 = vst.msk [vmem:[%s195 + $0x38] sm:$0xff] %vm397, %v3692
      %3725 = vst.msk [vmem:[%s195 + $0x40] sm:$0xff] %vm397, %v3693
      %3726 = vst.msk [vmem:[%s195 + $0x48] sm:$0xff] %vm397, %v3694
      %3727 = vst.msk [vmem:[%s195 + $0x50] sm:$0xff] %vm397, %v3695
      %3728 = vst.msk [vmem:[%s195 + $0x58] sm:$0xff] %vm397, %v3696
      %3729 = vst.msk [vmem:[%s195 + $0x60] sm:$0xff] %vm397, %v3697
      %3730 = vst.msk [vmem:[%s195 + $0x68] sm:$0xff] %vm397, %v3698
      %3731 = vst.msk [vmem:[%s195 + $0x70] sm:$0xff] %vm397, %v3699
      %3732 = vst.msk [vmem:[%s195 + $0x78] sm:$0xff] %vm397, %v3700
      %3733 = vst.msk [vmem:[%s195 + $0x80] sm:$0xff] %vm397, %v3701
      %3734 = vst.msk [vmem:[%s195 + $0x88] sm:$0xff] %vm397, %v3702
      %3735 = vst.msk [vmem:[%s195 + $0x90] sm:$0xff] %vm397, %v3703
      %3736 = vst.msk [vmem:[%s195 + $0x98] sm:$0xff] %vm397, %v3704
      %3737 = vst.msk [vmem:[%s195 + $0xa0] sm:$0xff] %vm397, %v3705
      %3738 = vst.msk [vmem:[%s195 + $0xa8] sm:$0xff] %vm397, %v3706
      %3739 = vst.msk [vmem:[%s195 + $0xb0] sm:$0xff] %vm397, %v3707
      %3740 = vst.msk [vmem:[%s195 + $0xb8] sm:$0xff] %vm397, %v3708
      %3741 = vst.msk [vmem:[%s195 + $0xc0] sm:$0xff] %vm397, %v3709
      %3742 = vst.msk [vmem:[%s195 + $0xc8] sm:$0xff] %vm397, %v3710
      %3743 = vst.msk [vmem:[%s195 + $0xd0] sm:$0xff] %vm397, %v3711
      %3744 = vst.msk [vmem:[%s195 + $0xd8] sm:$0xff] %vm397, %v3712
      %3745 = vst.msk [vmem:[%s195 + $0xe0] sm:$0xff] %vm397, %v3713
      %3746 = vst.msk [vmem:[%s195 + $0xe8] sm:$0xff] %vm397, %v3714
      %3747 = vst.msk [vmem:[%s195 + $0xf0] sm:$0xff] %vm397, %v3715
      %3748 = vst.msk [vmem:[%s195 + $0xf8] sm:$0xff] %vm397, %v3716
      %v3749 = vld [vmem:[%s4] sm:$0x3]
      %v3750 = vsel %vm397, %v3685, 0.0
      %v3751 = vsel %vm397, %v3686, 0.0
      %v3752 = vadd.f32 %v3750, %v3751
      %v3753 = vsel %vm397, %v3687, 0.0
      %v3754 = vadd.f32 %v3752, %v3753
      %v3755 = vsel %vm397, %v3688, 0.0
      %v3756 = vadd.f32 %v3754, %v3755
      %v3757 = vsel %vm397, %v3689, 0.0
      %v3758 = vadd.f32 %v3756, %v3757
      %v3759 = vsel %vm397, %v3690, 0.0
      %v3760 = vadd.f32 %v3758, %v3759
      %v3761 = vsel %vm397, %v3691, 0.0
      %v3762 = vadd.f32 %v3760, %v3761
      %v3763 = vsel %vm397, %v3692, 0.0
      %v3764 = vadd.f32 %v3762, %v3763
      %v3765 = vsel %vm397, %v3693, 0.0
      %v3766 = vadd.f32 %v3764, %v3765
      %v3767 = vsel %vm397, %v3694, 0.0
      %v3768 = vadd.f32 %v3766, %v3767
      %v3769 = vsel %vm397, %v3695, 0.0
      %v3770 = vadd.f32 %v3768, %v3769
      %v3771 = vsel %vm397, %v3696, 0.0
      %v3772 = vadd.f32 %v3770, %v3771
      %v3773 = vsel %vm397, %v3697, 0.0
      %v3774 = vadd.f32 %v3772, %v3773
      %v3775 = vsel %vm397, %v3698, 0.0
      %v3776 = vadd.f32 %v3774, %v3775
      %v3777 = vsel %vm397, %v3699, 0.0
      %v3778 = vadd.f32 %v3776, %v3777
      %v3779 = vsel %vm397, %v3700, 0.0
      %v3780 = vadd.f32 %v3778, %v3779
      %v3781 = vsel %vm397, %v3701, 0.0
      %v3782 = vadd.f32 %v3780, %v3781
      %v3783 = vsel %vm397, %v3702, 0.0
      %v3784 = vadd.f32 %v3782, %v3783
      %v3785 = vsel %vm397, %v3703, 0.0
      %v3786 = vadd.f32 %v3784, %v3785
      %v3787 = vsel %vm397, %v3704, 0.0
      %v3788 = vadd.f32 %v3786, %v3787
      %v3789 = vsel %vm397, %v3705, 0.0
      %v3790 = vadd.f32 %v3788, %v3789
      %v3791 = vsel %vm397, %v3706, 0.0
      %v3792 = vadd.f32 %v3790, %v3791
      %v3793 = vsel %vm397, %v3707, 0.0
      %v3794 = vadd.f32 %v3792, %v3793
      %v3795 = vsel %vm397, %v3708, 0.0
      %v3796 = vadd.f32 %v3794, %v3795
      %v3797 = vsel %vm397, %v3709, 0.0
      %v3798 = vadd.f32 %v3796, %v3797
      %v3799 = vsel %vm397, %v3710, 0.0
      %v3800 = vadd.f32 %v3798, %v3799
      %v3801 = vsel %vm397, %v3711, 0.0
      %v3802 = vadd.f32 %v3800, %v3801
      %v3803 = vsel %vm397, %v3712, 0.0
      %v3804 = vadd.f32 %v3802, %v3803
      %v3805 = vsel %vm397, %v3713, 0.0
      %v3806 = vadd.f32 %v3804, %v3805
      %v3807 = vsel %vm397, %v3714, 0.0
      %v3808 = vadd.f32 %v3806, %v3807
      %v3809 = vsel %vm397, %v3715, 0.0
      %v3810 = vadd.f32 %v3808, %v3809
      %v3811 = vsel %vm397, %v3716, 0.0
      %v3812 = vadd.f32 %v3810, %v3811
      %v3813 = vrot.slane %v3812, 4
      %v3814 = vadd.f32 %v3812, %v3813
      %v3815 = vrot.slane %v3814, 2
      %v3816 = vadd.f32 %v3814, %v3815
      %v3817 = vrot.slane %v3816, 1
      %v3818 = vadd.f32 %v3816, %v3817
      %v3819 = vmul.f32 %v3685, %v3685
      %v3820 = vmul.f32 %v3686, %v3686
      %v3821 = vmul.f32 %v3687, %v3687
      %v3822 = vmul.f32 %v3688, %v3688
      %v3823 = vmul.f32 %v3689, %v3689
      %v3824 = vmul.f32 %v3690, %v3690
      %v3825 = vmul.f32 %v3691, %v3691
      %v3826 = vmul.f32 %v3692, %v3692
      %v3827 = vmul.f32 %v3693, %v3693
      %v3828 = vmul.f32 %v3694, %v3694
      %v3829 = vmul.f32 %v3695, %v3695
      %v3830 = vmul.f32 %v3696, %v3696
      %v3831 = vmul.f32 %v3697, %v3697
      %v3832 = vmul.f32 %v3698, %v3698
      %v3833 = vmul.f32 %v3699, %v3699
      %v3834 = vmul.f32 %v3700, %v3700
      %v3835 = vmul.f32 %v3701, %v3701
      %v3836 = vmul.f32 %v3702, %v3702
      %v3837 = vmul.f32 %v3703, %v3703
      %v3838 = vmul.f32 %v3704, %v3704
      %v3839 = vmul.f32 %v3705, %v3705
      %v3840 = vmul.f32 %v3706, %v3706
      %v3841 = vmul.f32 %v3707, %v3707
      %v3842 = vmul.f32 %v3708, %v3708
      %v3843 = vmul.f32 %v3709, %v3709
      %v3844 = vmul.f32 %v3710, %v3710
      %v3845 = vmul.f32 %v3711, %v3711
      %v3846 = vmul.f32 %v3712, %v3712
      %v3847 = vmul.f32 %v3713, %v3713
      %v3848 = vmul.f32 %v3714, %v3714
      %v3849 = vmul.f32 %v3715, %v3715
      %v3850 = vmul.f32 %v3716, %v3716
      %v3851 = vsel %vm397, %v3819, 0.0
      %v3852 = vsel %vm397, %v3820, 0.0
      %v3853 = vadd.f32 %v3851, %v3852
      %v3854 = vsel %vm397, %v3821, 0.0
      %v3855 = vadd.f32 %v3853, %v3854
      %v3856 = vsel %vm397, %v3822, 0.0
      %v3857 = vadd.f32 %v3855, %v3856
      %v3858 = vsel %vm397, %v3823, 0.0
      %v3859 = vadd.f32 %v3857, %v3858
      %v3860 = vsel %vm397, %v3824, 0.0
      %v3861 = vadd.f32 %v3859, %v3860
      %v3862 = vsel %vm397, %v3825, 0.0
      %v3863 = vadd.f32 %v3861, %v3862
      %v3864 = vsel %vm397, %v3826, 0.0
      %v3865 = vadd.f32 %v3863, %v3864
      %v3866 = vsel %vm397, %v3827, 0.0
      %v3867 = vadd.f32 %v3865, %v3866
      %v3868 = vsel %vm397, %v3828, 0.0
      %v3869 = vadd.f32 %v3867, %v3868
      %v3870 = vsel %vm397, %v3829, 0.0
      %v3871 = vadd.f32 %v3869, %v3870
      %v3872 = vsel %vm397, %v3830, 0.0
      %v3873 = vadd.f32 %v3871, %v3872
      %v3874 = vsel %vm397, %v3831, 0.0
      %v3875 = vadd.f32 %v3873, %v3874
      %v3876 = vsel %vm397, %v3832, 0.0
      %v3877 = vadd.f32 %v3875, %v3876
      %v3878 = vsel %vm397, %v3833, 0.0
      %v3879 = vadd.f32 %v3877, %v3878
      %v3880 = vsel %vm397, %v3834, 0.0
      %v3881 = vadd.f32 %v3879, %v3880
      %v3882 = vsel %vm397, %v3835, 0.0
      %v3883 = vadd.f32 %v3881, %v3882
      %v3884 = vsel %vm397, %v3836, 0.0
      %v3885 = vadd.f32 %v3883, %v3884
      %v3886 = vsel %vm397, %v3837, 0.0
      %v3887 = vadd.f32 %v3885, %v3886
      %v3888 = vsel %vm397, %v3838, 0.0
      %v3889 = vadd.f32 %v3887, %v3888
      %v3890 = vsel %vm397, %v3839, 0.0
      %v3891 = vadd.f32 %v3889, %v3890
      %v3892 = vsel %vm397, %v3840, 0.0
      %v3893 = vadd.f32 %v3891, %v3892
      %v3894 = vsel %vm397, %v3841, 0.0
      %v3895 = vadd.f32 %v3893, %v3894
      %v3896 = vsel %vm397, %v3842, 0.0
      %v3897 = vadd.f32 %v3895, %v3896
      %v3898 = vsel %vm397, %v3843, 0.0
      %v3899 = vadd.f32 %v3897, %v3898
      %v3900 = vsel %vm397, %v3844, 0.0
      %v3901 = vadd.f32 %v3899, %v3900
      %v3902 = vsel %vm397, %v3845, 0.0
      %v3903 = vadd.f32 %v3901, %v3902
      %v3904 = vsel %vm397, %v3846, 0.0
      %v3905 = vadd.f32 %v3903, %v3904
      %v3906 = vsel %vm397, %v3847, 0.0
      %v3907 = vadd.f32 %v3905, %v3906
      %v3908 = vsel %vm397, %v3848, 0.0
      %v3909 = vadd.f32 %v3907, %v3908
      %v3910 = vsel %vm397, %v3849, 0.0
      %v3911 = vadd.f32 %v3909, %v3910
      %v3912 = vsel %vm397, %v3850, 0.0
      %v3913 = vadd.f32 %v3911, %v3912
      %v3914 = vrot.slane %v3913, 4
      %v3915 = vadd.f32 %v3913, %v3914
      %v3916 = vrot.slane %v3915, 2
      %v3917 = vadd.f32 %v3915, %v3916
      %v3918 = vrot.slane %v3917, 1
      %v3919 = vadd.f32 %v3917, %v3918
      %vm3920 = vcmask 1040384
      %v3921 = vsel %vm3920, %v3818, %v3919
      %v3922 = vadd.f32 %v3749, %v3921
      %vm3923 = vcmask 25600
      %3924 = vst.msk [vmem:[%s4] sm:$0x3] %vm3923, %v3922
      %p3925 = scmp.lt.s32.totalorder %s16, 1
      %s3926 = scalar_select %p3925, %s16, 1
      %s3927 = smul.addr %s3926, 32
      %s3928 = smul.addr %s3927, 8
      %s3929 = scalar_lea.vmem %s3, %s3928
      // Predicated region
      $region37: #{bottleneck_forward.5} parent=31 // pred_check
        %p3930 = pneg %p102
      $region38: #{bottleneck_forward.5} parent=31 // pred_check_branch
        %3932 = sbr.rel (%p3930) target = $region40
      $region39: #{bottleneck_forward.5} parent=31 // pred_region
        _
      $region40: #{bottleneck_forward.5} parent=31 // pred_fallthru
        _
      // Predicated region
      $region41: #{bottleneck_forward.5} parent=31 // pred_check
        %p3933 = pneg %p123
      $region42: #{bottleneck_forward.5} parent=31 // pred_check_branch
        %3935 = sbr.rel (%p3933) target = $region44
      $region43: #{bottleneck_forward.5} parent=31 // pred_region
        _
      $region44: #{bottleneck_forward.5} parent=31 // pred_fallthru
        _
      // Predicated region
      $region45: #{bottleneck_forward.5} parent=31 // pred_check
        %p3936 = pneg %p123
      $region46: #{bottleneck_forward.5} parent=31 // pred_check_branch
        %3938 = sbr.rel (%p3936) target = $region48
      $region47: #{bottleneck_forward.5} parent=31 // pred_region
        _
      $region48: #{bottleneck_forward.5} parent=31 // pred_fallthru
        _
    $region32: #{bottleneck_forward.5} parent=5 // pred_fallthru
      _
    %p3939 = scmp.le.s32.totalorder 2, %s11
    // Predicated region
    $region49: #{bottleneck_forward.5} parent=5 // pred_check
      %p3940 = pneg %p3939
    $region50: #{bottleneck_forward.5} parent=5 // pred_check_branch
      %3942 = sbr.rel (%p3940) target = $region52
    $region51: #{bottleneck_forward.5} parent=5 // pred_region
      %s3943 = ssub.s32 %s11, 2
      // Predicated region
      $region53: #{bottleneck_forward.5} parent=51 // pred_check
        %p3944 = pneg %p108
      $region54: #{bottleneck_forward.5} parent=51 // pred_check_branch
        %3946 = sbr.rel (%p3944) target = $region56
      $region55: #{bottleneck_forward.5} parent=51 // pred_region
        %p3947 = scmp.lt.s32.totalorder %s17, 1
        %s3948 = scalar_select %p3947, %s17, 1
        %s3949 = smul.addr %s3948, 32
        %s3950 = smul.addr %s3949, 8
        %s3951 = scalar_lea.vmem %s3, %s3950
      $region56: #{bottleneck_forward.5} parent=51 // pred_fallthru
        _
    $region52: #{bottleneck_forward.5} parent=5 // pred_fallthru
      _
  $region6: #{bottleneck_forward.5} parent=0 // loop_footer
    %s15 = sadd.s32 1, %s11
  $region7: #{bottleneck_forward.5} parent=0 // loop_footer_branch
    %10 = sbr.rel target = $region3
  $region8: #{bottleneck_forward.5} parent=0 // loop_exit
    _

</llo_original>
